<compile_context>
chip_gen: v6e
topology: v6e:2x2x1
jax: 0.10.0
libtpu: 0.0.40
codegen_flags: <defaults>
</compile_context>

<pallas_src>
import functools

import jax
import jax.numpy as jnp
from jax.experimental import pallas as pl
from jax.experimental.pallas import tpu as pltpu


# --------------------------------------------------------------------- helpers
def _round_up(a, b):
    return (a + b - 1) // b * b


def _pick_tile(dim, candidates):
    for c in candidates:
        if c <= dim and dim % c == 0:
            return c
    return dim


def _pick_vmem_limit():
    """Generation-aware scoped-VMEM budget (~3/4 of physical, clamped)."""
    cap = 0
    try:
        info = pltpu.get_tpu_info()
        cap = int(getattr(info, "vmem_capacity_bytes", 0) or 0)
    except Exception:
        cap = 0
    if cap <= 0:
        return 32 * 1024 * 1024  # conservative, known-good fallback
    return max(32 * 1024 * 1024, min((cap * 3) // 4, 100 * 1024 * 1024))


_VMEM_LIMIT = _pick_vmem_limit()


# ------------------------------------------------ kernel A: direct conv (s = 1)
def _make_direct_conv_kernel(k, OH, OW, relu, has_residual):
    """relu((sum_t window_t @ w_t) + shift [+ residual]) for a stride-1 conv.

    The k*k taps are sliced from the padded NHWC image already resident in
    VMEM (no im2col in HBM); BN scale is pre-folded into the weights.
    """
    taps = k * k
    M = OH * OW

    def kernel(*refs):
        if has_residual:
            x_ref, w_ref, b_ref, r_ref, o_ref = refs
        else:
            x_ref, w_ref, b_ref, o_ref = refs
        tn = o_ref.shape[-1]
        # Initialise the accumulator with shift (+ residual): shortens the tail.
        acc = jnp.broadcast_to(b_ref[...], (M, tn)).astype(jnp.float32)
        if has_residual:
            acc = acc + r_ref[0].astype(jnp.float32)
        for t in range(taps):  # static unroll: k*k MXU matmuls
            di, dj = divmod(t, k)
            win = x_ref[0, di:di + OH, dj:dj + OW, :]  # (OH, OW, Cp) bf16
            acc = acc + jnp.dot(win.reshape(M, win.shape[-1]), w_ref[t],
                                preferred_element_type=jnp.float32)
        if relu:
            acc = jnp.maximum(acc, 0.0)
        o_ref[0] = acc.astype(o_ref.dtype)

    return kernel


def direct_conv(x4, w3, shift, OH, OW, k, relu=False, residual=None):
    """x4: (N,Hp,Wp,Cp) bf16 spatially padded; w3: (k*k,Cp,OCp) bf16 (BN scale
    folded in); shift: (1,OCp) f32; residual: (N,OH*OW,OCp) bf16 or None.
    Returns (N, OH*OW, OCp) bf16."""
    N, Hp, Wp, Cp = x4.shape
    _, _, OCp = w3.shape
    M = OH * OW

    tn = _pick_tile(OCp, (512, 256, 128))
    # v7x has 2 TensorCores: keep >= 2 parallel output blocks when possible.
    if N * (OCp // tn) < 2:
        for cand in (256, 128):
            if cand < tn and OCp % cand == 0:
                tn = cand
                break

    has_res = residual is not None
    args = [x4, w3, shift]
    in_specs = [
        pl.BlockSpec((1, Hp, Wp, Cp), lambda n, j: (n, 0, 0, 0)),
        pl.BlockSpec((k * k, Cp, tn), lambda n, j: (0, 0, j)),
        pl.BlockSpec((1, tn), lambda n, j: (0, j)),
    ]
    if has_res:
        args.append(residual)
        in_specs.append(pl.BlockSpec((1, M, tn), lambda n, j: (n, 0, j)))

    flops = 2 * N * M * (k * k * Cp) * OCp
    bytes_accessed = (N * Hp * Wp * Cp * 2 + N * k * k * Cp * OCp * 2
                      + N * M * OCp * 2 + (N * M * OCp * 2 if has_res else 0)
                      + OCp * 4)

    return pl.pallas_call(
        _make_direct_conv_kernel(k, OH, OW, relu, has_res),
        out_shape=jax.ShapeDtypeStruct((N, M, OCp), jnp.bfloat16),
        grid_spec=pltpu.PrefetchScalarGridSpec(
            num_scalar_prefetch=0,
            grid=(N, OCp // tn),
            in_specs=in_specs,
            out_specs=pl.BlockSpec((1, M, tn), lambda n, j: (n, 0, j)),
        ),
        compiler_params=pltpu.CompilerParams(
            dimension_semantics=("parallel", "parallel"),
            vmem_limit_bytes=_VMEM_LIMIT,
        ),
        cost_estimate=pl.CostEstimate(
            flops=flops, transcendentals=0, bytes_accessed=bytes_accessed),
    )(*args)


# -------------------------------------- kernel B: tiled matmul (stride-2 convs)
def _make_matmul_kernel(relu):
    def kernel(x_ref, w_ref, b_ref, o_ref, acc_ref):
        kk = pl.program_id(2)

        @pl.when(kk == 0)
        def _init():
            acc_ref[...] = jnp.zeros_like(acc_ref)

        acc_ref[...] += jnp.dot(x_ref[...], w_ref[...],
                                preferred_element_type=jnp.float32)

        @pl.when(kk == pl.num_programs(2) - 1)
        def _finalize():
            y = acc_ref[...] + b_ref[...]
            if relu:
                y = jnp.maximum(y, 0.0)
            o_ref[...] = y.astype(o_ref.dtype)

    return kernel


def fused_matmul(x2d, w2d, shift, relu=False):
    """x2d: (M,K) bf16 (K already a multiple of 128); w2d: (K,OCp) bf16 with
    BN scale folded in; shift: (1,OCp) f32.  Returns (M, OCp) bf16."""
    M, K = x2d.shape
    _, OCp = w2d.shape

    tk = _pick_tile(K, (512, 384, 256, 128))
    tn = _pick_tile(OCp, (512, 256, 128))
    tm_cap = 512 if _VMEM_LIMIT >= 64 * 1024 * 1024 else 256
    tm = min(tm_cap, _round_up(M, 8))
    # v7x has 2 TensorCores: keep >= 2 parallel output blocks when possible.
    if pl.cdiv(M, tm) * (OCp // tn) < 2 and tm >= 16:
        tm = _round_up(pl.cdiv(tm, 2), 8)

    grid = (pl.cdiv(M, tm), OCp // tn, K // tk)
    flops = 2 * M * K * OCp
    bytes_accessed = M * K * 2 + K * OCp * 2 + M * OCp * 2 + OCp * 4

    return pl.pallas_call(
        _make_matmul_kernel(relu),
        out_shape=jax.ShapeDtypeStruct((M, OCp), jnp.bfloat16),
        grid_spec=pltpu.PrefetchScalarGridSpec(
            num_scalar_prefetch=0,
            grid=grid,
            in_specs=[
                pl.BlockSpec((tm, tk), lambda i, j, kk: (i, kk)),
                pl.BlockSpec((tk, tn), lambda i, j, kk: (kk, j)),
                pl.BlockSpec((1, tn), lambda i, j, kk: (0, j)),
            ],
            out_specs=pl.BlockSpec((tm, tn), lambda i, j, kk: (i, j)),
            scratch_shapes=[pltpu.VMEM((tm, tn), jnp.float32)],
        ),
        compiler_params=pltpu.CompilerParams(
            dimension_semantics=("parallel", "parallel", "arbitrary"),
            vmem_limit_bytes=_VMEM_LIMIT,
        ),
        cost_estimate=pl.CostEstimate(
            flops=flops, transcendentals=0, bytes_accessed=bytes_accessed),
    )(x2d, w2d, shift)


# ----------------------------------------------- wrapper-side im2col (stride>1)
def _im2col(x4, k, stride):
    """x4 already spatially padded (N,Hp,Wp,Cp) bf16.  Tap-major/channel-minor
    patches, matching the (k*k, Cp, OCp) weight layout."""
    N, Hp, Wp, Cp = x4.shape
    OH = (Hp - k) // stride + 1
    OW = (Wp - k) // stride + 1
    cols = []
    for di in range(k):
        for dj in range(k):
            cols.append(x4[:, di:di + stride * (OH - 1) + 1:stride,
                           dj:dj + stride * (OW - 1) + 1:stride, :])
    patches = jnp.concatenate(cols, axis=-1)  # (N, OH, OW, k*k*Cp)
    return patches.reshape(N * OH * OW, k * k * Cp)


# ---------------------------------------------------------------- model forward
def conv_bn_forward(x_act, hw, p, stride, pad, relu=False, residual=None):
    """x_act: (N, H*W, Cp) bf16 channel-padded activation carried between
    layers.  Returns ((N, OH*OW, OCp) bf16, (OH, OW))."""
    N = x_act.shape[0]
    H, W = hw
    Cp = x_act.shape[-1]
    k = p["k"]
    OCp = p["w3"].shape[-1]
    OH = (H + 2 * pad - k) // stride + 1
    OW = (W + 2 * pad - k) // stride + 1

    x4 = x_act.reshape(N, H, W, Cp)
    if pad > 0:
        x4 = jnp.pad(x4, ((0, 0), (pad, pad), (pad, pad), (0, 0)))

    if stride == 1:
        out = direct_conv(x4, p["w3"], p["shift"], OH, OW, k,
                          relu=relu, residual=residual)
    else:
        assert residual is None  # the residual-fused conv is always stride 1
        # TODO(synk): fold the strided (stride>1) 3x3 tap gather into the kernel
        # too; only a handful of such convs exist in ResNet-34, so the im2col
        # HBM blow-up is confined to them.  The 1x1 shortcut is a subsample.
        if k == 1:
            patches = x4[:, ::stride, ::stride, :].reshape(N * OH * OW, Cp)
        else:
            patches = _im2col(x4, k, stride)
        out = fused_matmul(patches, p["w2"], p["shift"], relu=relu)
        out = out.reshape(N, OH * OW, OCp)
    return out, (OH, OW)


def basic_block_forward(blk, x_act, hw):
    stride = blk["stride"]
    out, ohw = conv_bn_forward(x_act, hw, blk["conv1"], stride=stride, pad=1,
                               relu=True)
    if blk["is_shortcut"]:
        sc, _ = conv_bn_forward(x_act, hw, blk["short"], stride=stride, pad=0,
                                relu=False)
    else:
        sc = x_act  # identity shortcut: already padded bf16, zero extra copies
    # conv_bn2 fused with residual add + ReLU: relu(conv_bn2(out) + shortcut)
    return conv_bn_forward(out, ohw, blk["conv2"], stride=1, pad=1, relu=True,
                           residual=sc)


def basic_block_apply(blk, x_nchw):
    """NCHW f32 in/out (PyTorch interface); padded bf16 NHWC inside.  For a
    full network these edge conversions would be hoisted to the network ends."""
    N, C, H, W = x_nchw.shape
    Cp = blk["conv1"]["w3"].shape[1]
    oc = blk["conv2"]["oc"]
    x = jnp.transpose(x_nchw, (0, 2, 3, 1)).astype(jnp.bfloat16)   # NCHW->NHWC
    x = jnp.pad(x, ((0, 0), (0, 0), (0, 0), (0, Cp - C)))
    y_act, (OH, OW) = basic_block_forward(blk, x.reshape(N, H * W, Cp), (H, W))
    y = y_act.reshape(N, OH, OW, -1)[..., :oc].astype(jnp.float32)
    return jnp.transpose(y, (0, 3, 1, 2))                          # NHWC->NCHW


# -------------------------------------------------------------- parameter init
def init_convbn(key, ic, oc, k, eps=1e-5):
    kw_, kg_, kb_, km_, kv_ = jax.random.split(key, 5)
    w = jax.random.normal(kw_, (oc, ic, k, k), jnp.float32) * 0.05
    gamma = 1.0 + 0.1 * jax.random.normal(kg_, (oc,), jnp.float32)
    beta = 0.1 * jax.random.normal(kb_, (oc,), jnp.float32)
    running_mean = 0.1 * jax.random.normal(km_, (oc,), jnp.float32)
    running_var = 1.0 + 0.1 * jax.random.uniform(kv_, (oc,), jnp.float32)
    scale = gamma / jnp.sqrt(running_var + eps)
    shift = beta - running_mean * scale

    # (OC,IC,KH,KW) -> (KH,KW,IC,OC); fold BN scale into the weights so the
    # kernel epilogue is a single add (+residual) + relu.
    w_hwio = jnp.transpose(w, (2, 3, 1, 0))
    w_folded = (w_hwio * scale).reshape(k * k, ic, oc)

    # Pre-pad / pre-layout ONCE at init (channel-padded to 128 lanes).
    Cp = _round_up(ic, 128)
    OCp = _round_up(oc, 128)
    w3 = (jnp.zeros((k * k, Cp, OCp), jnp.bfloat16)
          .at[:, :ic, :oc].set(w_folded.astype(jnp.bfloat16)))
    shift_pad = jnp.zeros((1, OCp), jnp.float32).at[0, :oc].set(shift)
    return {
        "k": k, "ic": ic, "oc": oc,
        "w3": w3,                           # (k*k, Cp, OCp) for direct conv
        "w2": w3.reshape(k * k * Cp, OCp),  # (K, OCp) for the matmul path
        "shift": shift_pad,
        # unpadded f32 copies, only used by the pure-JAX reference check
        "w_hwio": w_hwio, "scale_raw": scale, "shift_raw": shift,
    }


def init_basic_block(key, in_channel, hidden_channel, out_channel,
                     stride=1, is_shortcut=False):
    k1, k2, k3 = jax.random.split(key, 3)
    blk = {
        "conv1": init_convbn(k1, in_channel, hidden_channel, 3),
        "conv2": init_convbn(k2, hidden_channel, out_channel, 3),
        "stride": stride,
        "is_shortcut": is_shortcut,
    }
    if is_shortcut:
        blk["short"] = init_convbn(k3, in_channel, out_channel, 1)
    return blk


# ------------------------------------------------------- pure-JAX reference path
def _ref_conv_bn(x, p, stride, pad, relu=False, residual=None):
    y = jax.lax.conv_general_dilated(
        x, p["w_hwio"], window_strides=(stride, stride),
        padding=[(pad, pad), (pad, pad)],
        dimension_numbers=("NHWC", "HWIO", "NHWC"),
        precision=jax.lax.Precision.HIGHEST,
    )
    y = y * p["scale_raw"] + p["shift_raw"]
    if residual is not None:
        y = y + residual
    if relu:
        y = jnp.maximum(y, 0.0)
    return y


def ref_basic_block_apply(blk, x_nchw):
    x = jnp.transpose(x_nchw.astype(jnp.float32), (0, 2, 3, 1))
    stride = blk["stride"]
    out = _ref_conv_bn(x, blk["conv1"], stride, 1, relu=True)
    sc = _ref_conv_bn(x, blk["short"], stride, 0) if blk["is_shortcut"] else x
    out = _ref_conv_bn(out, blk["conv2"], 1, 1, relu=True, residual=sc)
    return jnp.transpose(out, (0, 3, 1, 2))


# ------------------------------------------------------------------------- main
if __name__ == "__main__":
    key = jax.random.PRNGKey(0)
    kb1, kb2, kx = jax.random.split(key, 3)

    # BasicBlock with identity shortcut, stride 1.
    blk1 = init_basic_block(kb1, 4, 4, 4, stride=1, is_shortcut=False)
    # BasicBlock with 1x1 projection shortcut, stride 2 (downsampling).
    blk2 = init_basic_block(kb2, 4, 8, 8, stride=2, is_shortcut=True)

    x = jax.random.normal(kx, (2, 4, 16, 16), jnp.float32)  # NCHW

    fwd1 = jax.jit(functools.partial(basic_block_apply, blk1))
    fwd2 = jax.jit(functools.partial(basic_block_apply, blk2))

    y1 = jax.block_until_ready(fwd1(x))
    y2 = jax.block_until_ready(fwd2(x))

    assert y1.shape == (2, 4, 16, 16), y1.shape
    assert y2.shape == (2, 8, 8, 8), y2.shape
    assert jnp.all(jnp.isfinite(y1)) and jnp.all(jnp.isfinite(y2))

    # Numerical check against a pure-JAX f32 reference (bf16-MXU tolerance).
    r1 = ref_basic_block_apply(blk1, x)
    r2 = ref_basic_block_apply(blk2, x)
    for y, r in ((y1, r1), (y2, r2)):
        rel = jnp.max(jnp.abs(y - r)) / (jnp.max(jnp.abs(r)) + 1e-6)
        assert rel < 5e-2, float(rel)

    print("KERNEL_OK")
</pallas_src>

<mosaic_0001>
module attributes {stable_mosaic.version = 11 : i64} {
  func.func @kernel(%arg0: i32, %arg1: i32, %arg2: memref<1x18x18x128xbf16, #tpu.memory_space<vmem>>, %arg3: memref<9x128x128xbf16, #tpu.memory_space<vmem>>, %arg4: memref<1x128xf32, #tpu.memory_space<vmem>>, %arg5: memref<1x256x128xbf16, #tpu.memory_space<vmem>>) attributes {dimension_semantics = [#tpu.dimension_semantics<parallel>, #tpu.dimension_semantics<parallel>], iteration_bounds = array<i64: 2, 1>, scalar_prefetch = 0 : i64, scratch_operands = 0 : i64, tpu.core_type = #tpu.core_type<tc>, window_params = [{transform_indices = @transform_0, window_bounds = array<i64: 1, 18, 18, 128>}, {transform_indices = @transform_1, window_bounds = array<i64: 9, 128, 128>}, {transform_indices = @transform_2, window_bounds = array<i64: 1, 128>}, {transform_indices = @transform_3, window_bounds = array<i64: 1, 256, 128>}]} {
    %c0 = arith.constant 0 : index
    %c0_0 = arith.constant 0 : index
    %0 = vector.load %arg4[%c0, %c0_0] : memref<1x128xf32, #tpu.memory_space<vmem>>, vector<1x128xf32>
    %1 = vector.shape_cast %0 : vector<1x128xf32> to vector<1x128xf32>
    %2 = vector.broadcast %1 : vector<1x128xf32> to vector<256x128xf32>
    %c0_1 = arith.constant 0 : index
    %c0_2 = arith.constant 0 : index
    %c0_3 = arith.constant 0 : index
    %c0_4 = arith.constant 0 : index
    %3 = vector.load %arg2[%c0_1, %c0_2, %c0_3, %c0_4] : memref<1x18x18x128xbf16, #tpu.memory_space<vmem>>, vector<1x16x16x128xbf16>
    %4 = vector.shape_cast %3 : vector<1x16x16x128xbf16> to vector<16x16x128xbf16>
    %5 = vector.shape_cast %4 : vector<16x16x128xbf16> to vector<256x128xbf16>
    %c0_5 = arith.constant 0 : index
    %c0_6 = arith.constant 0 : index
    %c0_7 = arith.constant 0 : index
    %6 = vector.load %arg3[%c0_5, %c0_6, %c0_7] : memref<9x128x128xbf16, #tpu.memory_space<vmem>>, vector<1x128x128xbf16>
    %7 = vector.shape_cast %6 : vector<1x128x128xbf16> to vector<128x128xbf16>
    %cst = arith.constant dense<0.000000e+00> : vector<256x128xf32>
    %8 = tpu.matmul %5, %7, %cst {dimension_numbers = #tpu.dot_dimension_numbers<[1], [0], [0], [1], [0, 0, 1, 1], [], []>} : vector<256x128xbf16>, vector<128x128xbf16>, vector<256x128xf32> -> vector<256x128xf32>
    %9 = arith.addf %2, %8 : vector<256x128xf32>
    %c0_8 = arith.constant 0 : index
    %c0_9 = arith.constant 0 : index
    %c1 = arith.constant 1 : index
    %c0_10 = arith.constant 0 : index
    %10 = vector.load %arg2[%c0_8, %c0_9, %c1, %c0_10] : memref<1x18x18x128xbf16, #tpu.memory_space<vmem>>, vector<1x16x16x128xbf16>
    %11 = vector.shape_cast %10 : vector<1x16x16x128xbf16> to vector<16x16x128xbf16>
    %12 = vector.shape_cast %11 : vector<16x16x128xbf16> to vector<256x128xbf16>
    %c1_11 = arith.constant 1 : index
    %c0_12 = arith.constant 0 : index
    %c0_13 = arith.constant 0 : index
    %13 = vector.load %arg3[%c1_11, %c0_12, %c0_13] : memref<9x128x128xbf16, #tpu.memory_space<vmem>>, vector<1x128x128xbf16>
    %14 = vector.shape_cast %13 : vector<1x128x128xbf16> to vector<128x128xbf16>
    %cst_14 = arith.constant dense<0.000000e+00> : vector<256x128xf32>
    %15 = tpu.matmul %12, %14, %cst_14 {dimension_numbers = #tpu.dot_dimension_numbers<[1], [0], [0], [1], [0, 0, 1, 1], [], []>} : vector<256x128xbf16>, vector<128x128xbf16>, vector<256x128xf32> -> vector<256x128xf32>
    %16 = arith.addf %9, %15 : vector<256x128xf32>
    %c0_15 = arith.constant 0 : index
    %c0_16 = arith.constant 0 : index
    %c2 = arith.constant 2 : index
    %c0_17 = arith.constant 0 : index
    %17 = vector.load %arg2[%c0_15, %c0_16, %c2, %c0_17] : memref<1x18x18x128xbf16, #tpu.memory_space<vmem>>, vector<1x16x16x128xbf16>
    %18 = vector.shape_cast %17 : vector<1x16x16x128xbf16> to vector<16x16x128xbf16>
    %19 = vector.shape_cast %18 : vector<16x16x128xbf16> to vector<256x128xbf16>
    %c2_18 = arith.constant 2 : index
    %c0_19 = arith.constant 0 : index
    %c0_20 = arith.constant 0 : index
    %20 = vector.load %arg3[%c2_18, %c0_19, %c0_20] : memref<9x128x128xbf16, #tpu.memory_space<vmem>>, vector<1x128x128xbf16>
    %21 = vector.shape_cast %20 : vector<1x128x128xbf16> to vector<128x128xbf16>
    %cst_21 = arith.constant dense<0.000000e+00> : vector<256x128xf32>
    %22 = tpu.matmul %19, %21, %cst_21 {dimension_numbers = #tpu.dot_dimension_numbers<[1], [0], [0], [1], [0, 0, 1, 1], [], []>} : vector<256x128xbf16>, vector<128x128xbf16>, vector<256x128xf32> -> vector<256x128xf32>
    %23 = arith.addf %16, %22 : vector<256x128xf32>
    %c0_22 = arith.constant 0 : index
    %c1_23 = arith.constant 1 : index
    %c0_24 = arith.constant 0 : index
    %c0_25 = arith.constant 0 : index
    %24 = vector.load %arg2[%c0_22, %c1_23, %c0_24, %c0_25] : memref<1x18x18x128xbf16, #tpu.memory_space<vmem>>, vector<1x16x16x128xbf16>
    %25 = vector.shape_cast %24 : vector<1x16x16x128xbf16> to vector<16x16x128xbf16>
    %26 = vector.shape_cast %25 : vector<16x16x128xbf16> to vector<256x128xbf16>
    %c3 = arith.constant 3 : index
    %c0_26 = arith.constant 0 : index
    %c0_27 = arith.constant 0 : index
    %27 = vector.load %arg3[%c3, %c0_26, %c0_27] : memref<9x128x128xbf16, #tpu.memory_space<vmem>>, vector<1x128x128xbf16>
    %28 = vector.shape_cast %27 : vector<1x128x128xbf16> to vector<128x128xbf16>
    %cst_28 = arith.constant dense<0.000000e+00> : vector<256x128xf32>
    %29 = tpu.matmul %26, %28, %cst_28 {dimension_numbers = #tpu.dot_dimension_numbers<[1], [0], [0], [1], [0, 0, 1, 1], [], []>} : vector<256x128xbf16>, vector<128x128xbf16>, vector<256x128xf32> -> vector<256x128xf32>
    %30 = arith.addf %23, %29 : vector<256x128xf32>
    %c0_29 = arith.constant 0 : index
    %c1_30 = arith.constant 1 : index
    %c1_31 = arith.constant 1 : index
    %c0_32 = arith.constant 0 : index
    %31 = vector.load %arg2[%c0_29, %c1_30, %c1_31, %c0_32] : memref<1x18x18x128xbf16, #tpu.memory_space<vmem>>, vector<1x16x16x128xbf16>
    %32 = vector.shape_cast %31 : vector<1x16x16x128xbf16> to vector<16x16x128xbf16>
    %33 = vector.shape_cast %32 : vector<16x16x128xbf16> to vector<256x128xbf16>
    %c4 = arith.constant 4 : index
    %c0_33 = arith.constant 0 : index
    %c0_34 = arith.constant 0 : index
    %34 = vector.load %arg3[%c4, %c0_33, %c0_34] : memref<9x128x128xbf16, #tpu.memory_space<vmem>>, vector<1x128x128xbf16>
    %35 = vector.shape_cast %34 : vector<1x128x128xbf16> to vector<128x128xbf16>
    %cst_35 = arith.constant dense<0.000000e+00> : vector<256x128xf32>
    %36 = tpu.matmul %33, %35, %cst_35 {dimension_numbers = #tpu.dot_dimension_numbers<[1], [0], [0], [1], [0, 0, 1, 1], [], []>} : vector<256x128xbf16>, vector<128x128xbf16>, vector<256x128xf32> -> vector<256x128xf32>
    %37 = arith.addf %30, %36 : vector<256x128xf32>
    %c0_36 = arith.constant 0 : index
    %c1_37 = arith.constant 1 : index
    %c2_38 = arith.constant 2 : index
    %c0_39 = arith.constant 0 : index
    %38 = vector.load %arg2[%c0_36, %c1_37, %c2_38, %c0_39] : memref<1x18x18x128xbf16, #tpu.memory_space<vmem>>, vector<1x16x16x128xbf16>
    %39 = vector.shape_cast %38 : vector<1x16x16x128xbf16> to vector<16x16x128xbf16>
    %40 = vector.shape_cast %39 : vector<16x16x128xbf16> to vector<256x128xbf16>
    %c5 = arith.constant 5 : index
    %c0_40 = arith.constant 0 : index
    %c0_41 = arith.constant 0 : index
    %41 = vector.load %arg3[%c5, %c0_40, %c0_41] : memref<9x128x128xbf16, #tpu.memory_space<vmem>>, vector<1x128x128xbf16>
    %42 = vector.shape_cast %41 : vector<1x128x128xbf16> to vector<128x128xbf16>
    %cst_42 = arith.constant dense<0.000000e+00> : vector<256x128xf32>
    %43 = tpu.matmul %40, %42, %cst_42 {dimension_numbers = #tpu.dot_dimension_numbers<[1], [0], [0], [1], [0, 0, 1, 1], [], []>} : vector<256x128xbf16>, vector<128x128xbf16>, vector<256x128xf32> -> vector<256x128xf32>
    %44 = arith.addf %37, %43 : vector<256x128xf32>
    %c0_43 = arith.constant 0 : index
    %c2_44 = arith.constant 2 : index
    %c0_45 = arith.constant 0 : index
    %c0_46 = arith.constant 0 : index
    %45 = vector.load %arg2[%c0_43, %c2_44, %c0_45, %c0_46] : memref<1x18x18x128xbf16, #tpu.memory_space<vmem>>, vector<1x16x16x128xbf16>
    %46 = vector.shape_cast %45 : vector<1x16x16x128xbf16> to vector<16x16x128xbf16>
    %47 = vector.shape_cast %46 : vector<16x16x128xbf16> to vector<256x128xbf16>
    %c6 = arith.constant 6 : index
    %c0_47 = arith.constant 0 : index
    %c0_48 = arith.constant 0 : index
    %48 = vector.load %arg3[%c6, %c0_47, %c0_48] : memref<9x128x128xbf16, #tpu.memory_space<vmem>>, vector<1x128x128xbf16>
    %49 = vector.shape_cast %48 : vector<1x128x128xbf16> to vector<128x128xbf16>
    %cst_49 = arith.constant dense<0.000000e+00> : vector<256x128xf32>
    %50 = tpu.matmul %47, %49, %cst_49 {dimension_numbers = #tpu.dot_dimension_numbers<[1], [0], [0], [1], [0, 0, 1, 1], [], []>} : vector<256x128xbf16>, vector<128x128xbf16>, vector<256x128xf32> -> vector<256x128xf32>
    %51 = arith.addf %44, %50 : vector<256x128xf32>
    %c0_50 = arith.constant 0 : index
    %c2_51 = arith.constant 2 : index
    %c1_52 = arith.constant 1 : index
    %c0_53 = arith.constant 0 : index
    %52 = vector.load %arg2[%c0_50, %c2_51, %c1_52, %c0_53] : memref<1x18x18x128xbf16, #tpu.memory_space<vmem>>, vector<1x16x16x128xbf16>
    %53 = vector.shape_cast %52 : vector<1x16x16x128xbf16> to vector<16x16x128xbf16>
    %54 = vector.shape_cast %53 : vector<16x16x128xbf16> to vector<256x128xbf16>
    %c7 = arith.constant 7 : index
    %c0_54 = arith.constant 0 : index
    %c0_55 = arith.constant 0 : index
    %55 = vector.load %arg3[%c7, %c0_54, %c0_55] : memref<9x128x128xbf16, #tpu.memory_space<vmem>>, vector<1x128x128xbf16>
    %56 = vector.shape_cast %55 : vector<1x128x128xbf16> to vector<128x128xbf16>
    %cst_56 = arith.constant dense<0.000000e+00> : vector<256x128xf32>
    %57 = tpu.matmul %54, %56, %cst_56 {dimension_numbers = #tpu.dot_dimension_numbers<[1], [0], [0], [1], [0, 0, 1, 1], [], []>} : vector<256x128xbf16>, vector<128x128xbf16>, vector<256x128xf32> -> vector<256x128xf32>
    %58 = arith.addf %51, %57 : vector<256x128xf32>
    %c0_57 = arith.constant 0 : index
    %c2_58 = arith.constant 2 : index
    %c2_59 = arith.constant 2 : index
    %c0_60 = arith.constant 0 : index
    %59 = vector.load %arg2[%c0_57, %c2_58, %c2_59, %c0_60] : memref<1x18x18x128xbf16, #tpu.memory_space<vmem>>, vector<1x16x16x128xbf16>
    %60 = vector.shape_cast %59 : vector<1x16x16x128xbf16> to vector<16x16x128xbf16>
    %61 = vector.shape_cast %60 : vector<16x16x128xbf16> to vector<256x128xbf16>
    %c8 = arith.constant 8 : index
    %c0_61 = arith.constant 0 : index
    %c0_62 = arith.constant 0 : index
    %62 = vector.load %arg3[%c8, %c0_61, %c0_62] : memref<9x128x128xbf16, #tpu.memory_space<vmem>>, vector<1x128x128xbf16>
    %63 = vector.shape_cast %62 : vector<1x128x128xbf16> to vector<128x128xbf16>
    %cst_63 = arith.constant dense<0.000000e+00> : vector<256x128xf32>
    %64 = tpu.matmul %61, %63, %cst_63 {dimension_numbers = #tpu.dot_dimension_numbers<[1], [0], [0], [1], [0, 0, 1, 1], [], []>} : vector<256x128xbf16>, vector<128x128xbf16>, vector<256x128xf32> -> vector<256x128xf32>
    %65 = arith.addf %58, %64 : vector<256x128xf32>
    %cst_64 = arith.constant 0.000000e+00 : f32
    %66 = vector.broadcast %cst_64 : f32 to vector<256x128xf32>
    %67 = arith.maximumf %65, %66 : vector<256x128xf32>
    %68 = arith.truncf %67 : vector<256x128xf32> to vector<256x128xbf16>
    %c0_65 = arith.constant 0 : index
    %c0_66 = arith.constant 0 : index
    %c0_67 = arith.constant 0 : index
    %69 = vector.load %arg5[%c0_65, %c0_66, %c0_67] : memref<1x256x128xbf16, #tpu.memory_space<vmem>>, vector<1x256x128xbf16>
    %70 = vector.shape_cast %69 : vector<1x256x128xbf16> to vector<256x128xbf16>
    %71 = vector.shape_cast %68 : vector<256x128xbf16> to vector<1x256x128xbf16>
    tpu.vector_store %arg5[%c0_65, %c0_66, %c0_67], %71 {strides = array<i32>} : memref<1x256x128xbf16, #tpu.memory_space<vmem>>, vector<1x256x128xbf16>,
    return
  }
  func.func @transform_0(%arg0: i32, %arg1: i32) -> (i32, i32, i32, i32) {
    %c0_i32 = arith.constant 0 : i32
    %c0_i32_0 = arith.constant 0 : i32
    %c0_i32_1 = arith.constant 0 : i32
    %c0_i32_2 = arith.constant 0 : i32
    return %arg0, %c0_i32, %c0_i32_0, %c0_i32_1 : i32, i32, i32, i32
  }
  func.func @transform_1(%arg0: i32, %arg1: i32) -> (i32, i32, i32) {
    %c0_i32 = arith.constant 0 : i32
    %c0_i32_0 = arith.constant 0 : i32
    %c0_i32_1 = arith.constant 0 : i32
    return %c0_i32, %c0_i32_0, %arg1 : i32, i32, i32
  }
  func.func @transform_2(%arg0: i32, %arg1: i32) -> (i32, i32) {
    %c0_i32 = arith.constant 0 : i32
    %c0_i32_0 = arith.constant 0 : i32
    return %c0_i32, %arg1 : i32, i32
  }
  func.func @transform_3(%arg0: i32, %arg1: i32) -> (i32, i32, i32) {
    %c0_i32 = arith.constant 0 : i32
    %c0_i32_0 = arith.constant 0 : i32
    return %arg0, %c0_i32, %arg1 : i32, i32, i32
  }
}

module attributes {stable_mosaic.version = 11 : i64} {
  func.func @kernel(%arg0: i32, %arg1: i32, %arg2: memref<1x18x18x128xbf16, #tpu.memory_space<vmem>>, %arg3: memref<9x128x128xbf16, #tpu.memory_space<vmem>>, %arg4: memref<1x128xf32, #tpu.memory_space<vmem>>, %arg5: memref<1x256x128xbf16, #tpu.memory_space<vmem>>, %arg6: memref<1x256x128xbf16, #tpu.memory_space<vmem>>) attributes {dimension_semantics = [#tpu.dimension_semantics<parallel>, #tpu.dimension_semantics<parallel>], iteration_bounds = array<i64: 2, 1>, scalar_prefetch = 0 : i64, scratch_operands = 0 : i64, tpu.core_type = #tpu.core_type<tc>, window_params = [{transform_indices = @transform_0, window_bounds = array<i64: 1, 18, 18, 128>}, {transform_indices = @transform_1, window_bounds = array<i64: 9, 128, 128>}, {transform_indices = @transform_2, window_bounds = array<i64: 1, 128>}, {transform_indices = @transform_3, window_bounds = array<i64: 1, 256, 128>}, {transform_indices = @transform_4, window_bounds = array<i64: 1, 256, 128>}]} {
    %c0 = arith.constant 0 : index
    %c0_0 = arith.constant 0 : index
    %0 = vector.load %arg4[%c0, %c0_0] : memref<1x128xf32, #tpu.memory_space<vmem>>, vector<1x128xf32>
    %1 = vector.shape_cast %0 : vector<1x128xf32> to vector<1x128xf32>
    %2 = vector.broadcast %1 : vector<1x128xf32> to vector<256x128xf32>
    %c0_1 = arith.constant 0 : index
    %c0_2 = arith.constant 0 : index
    %c0_3 = arith.constant 0 : index
    %3 = vector.load %arg5[%c0_1, %c0_2, %c0_3] : memref<1x256x128xbf16, #tpu.memory_space<vmem>>, vector<1x256x128xbf16>
    %4 = vector.shape_cast %3 : vector<1x256x128xbf16> to vector<256x128xbf16>
    %5 = arith.extf %4 : vector<256x128xbf16> to vector<256x128xf32>
    %6 = arith.addf %2, %5 : vector<256x128xf32>
    %c0_4 = arith.constant 0 : index
    %c0_5 = arith.constant 0 : index
    %c0_6 = arith.constant 0 : index
    %c0_7 = arith.constant 0 : index
    %7 = vector.load %arg2[%c0_4, %c0_5, %c0_6, %c0_7] : memref<1x18x18x128xbf16, #tpu.memory_space<vmem>>, vector<1x16x16x128xbf16>
    %8 = vector.shape_cast %7 : vector<1x16x16x128xbf16> to vector<16x16x128xbf16>
    %9 = vector.shape_cast %8 : vector<16x16x128xbf16> to vector<256x128xbf16>
    %c0_8 = arith.constant 0 : index
    %c0_9 = arith.constant 0 : index
    %c0_10 = arith.constant 0 : index
    %10 = vector.load %arg3[%c0_8, %c0_9, %c0_10] : memref<9x128x128xbf16, #tpu.memory_space<vmem>>, vector<1x128x128xbf16>
    %11 = vector.shape_cast %10 : vector<1x128x128xbf16> to vector<128x128xbf16>
    %cst = arith.constant dense<0.000000e+00> : vector<256x128xf32>
    %12 = tpu.matmul %9, %11, %cst {dimension_numbers = #tpu.dot_dimension_numbers<[1], [0], [0], [1], [0, 0, 1, 1], [], []>} : vector<256x128xbf16>, vector<128x128xbf16>, vector<256x128xf32> -> vector<256x128xf32>
    %13 = arith.addf %6, %12 : vector<256x128xf32>
    %c0_11 = arith.constant 0 : index
    %c0_12 = arith.constant 0 : index
    %c1 = arith.constant 1 : index
    %c0_13 = arith.constant 0 : index
    %14 = vector.load %arg2[%c0_11, %c0_12, %c1, %c0_13] : memref<1x18x18x128xbf16, #tpu.memory_space<vmem>>, vector<1x16x16x128xbf16>
    %15 = vector.shape_cast %14 : vector<1x16x16x128xbf16> to vector<16x16x128xbf16>
    %16 = vector.shape_cast %15 : vector<16x16x128xbf16> to vector<256x128xbf16>
    %c1_14 = arith.constant 1 : index
    %c0_15 = arith.constant 0 : index
    %c0_16 = arith.constant 0 : index
    %17 = vector.load %arg3[%c1_14, %c0_15, %c0_16] : memref<9x128x128xbf16, #tpu.memory_space<vmem>>, vector<1x128x128xbf16>
    %18 = vector.shape_cast %17 : vector<1x128x128xbf16> to vector<128x128xbf16>
    %cst_17 = arith.constant dense<0.000000e+00> : vector<256x128xf32>
    %19 = tpu.matmul %16, %18, %cst_17 {dimension_numbers = #tpu.dot_dimension_numbers<[1], [0], [0], [1], [0, 0, 1, 1], [], []>} : vector<256x128xbf16>, vector<128x128xbf16>, vector<256x128xf32> -> vector<256x128xf32>
    %20 = arith.addf %13, %19 : vector<256x128xf32>
    %c0_18 = arith.constant 0 : index
    %c0_19 = arith.constant 0 : index
    %c2 = arith.constant 2 : index
    %c0_20 = arith.constant 0 : index
    %21 = vector.load %arg2[%c0_18, %c0_19, %c2, %c0_20] : memref<1x18x18x128xbf16, #tpu.memory_space<vmem>>, vector<1x16x16x128xbf16>
    %22 = vector.shape_cast %21 : vector<1x16x16x128xbf16> to vector<16x16x128xbf16>
    %23 = vector.shape_cast %22 : vector<16x16x128xbf16> to vector<256x128xbf16>
    %c2_21 = arith.constant 2 : index
    %c0_22 = arith.constant 0 : index
    %c0_23 = arith.constant 0 : index
    %24 = vector.load %arg3[%c2_21, %c0_22, %c0_23] : memref<9x128x128xbf16, #tpu.memory_space<vmem>>, vector<1x128x128xbf16>
    %25 = vector.shape_cast %24 : vector<1x128x128xbf16> to vector<128x128xbf16>
    %cst_24 = arith.constant dense<0.000000e+00> : vector<256x128xf32>
    %26 = tpu.matmul %23, %25, %cst_24 {dimension_numbers = #tpu.dot_dimension_numbers<[1], [0], [0], [1], [0, 0, 1, 1], [], []>} : vector<256x128xbf16>, vector<128x128xbf16>, vector<256x128xf32> -> vector<256x128xf32>
    %27 = arith.addf %20, %26 : vector<256x128xf32>
    %c0_25 = arith.constant 0 : index
    %c1_26 = arith.constant 1 : index
    %c0_27 = arith.constant 0 : index
    %c0_28 = arith.constant 0 : index
    %28 = vector.load %arg2[%c0_25, %c1_26, %c0_27, %c0_28] : memref<1x18x18x128xbf16, #tpu.memory_space<vmem>>, vector<1x16x16x128xbf16>
    %29 = vector.shape_cast %28 : vector<1x16x16x128xbf16> to vector<16x16x128xbf16>
    %30 = vector.shape_cast %29 : vector<16x16x128xbf16> to vector<256x128xbf16>
    %c3 = arith.constant 3 : index
    %c0_29 = arith.constant 0 : index
    %c0_30 = arith.constant 0 : index
    %31 = vector.load %arg3[%c3, %c0_29, %c0_30] : memref<9x128x128xbf16, #tpu.memory_space<vmem>>, vector<1x128x128xbf16>
    %32 = vector.shape_cast %31 : vector<1x128x128xbf16> to vector<128x128xbf16>
    %cst_31 = arith.constant dense<0.000000e+00> : vector<256x128xf32>
    %33 = tpu.matmul %30, %32, %cst_31 {dimension_numbers = #tpu.dot_dimension_numbers<[1], [0], [0], [1], [0, 0, 1, 1], [], []>} : vector<256x128xbf16>, vector<128x128xbf16>, vector<256x128xf32> -> vector<256x128xf32>
    %34 = arith.addf %27, %33 : vector<256x128xf32>
    %c0_32 = arith.constant 0 : index
    %c1_33 = arith.constant 1 : index
    %c1_34 = arith.constant 1 : index
    %c0_35 = arith.constant 0 : index
    %35 = vector.load %arg2[%c0_32, %c1_33, %c1_34, %c0_35] : memref<1x18x18x128xbf16, #tpu.memory_space<vmem>>, vector<1x16x16x128xbf16>
    %36 = vector.shape_cast %35 : vector<1x16x16x128xbf16> to vector<16x16x128xbf16>
    %37 = vector.shape_cast %36 : vector<16x16x128xbf16> to vector<256x128xbf16>
    %c4 = arith.constant 4 : index
    %c0_36 = arith.constant 0 : index
    %c0_37 = arith.constant 0 : index
    %38 = vector.load %arg3[%c4, %c0_36, %c0_37] : memref<9x128x128xbf16, #tpu.memory_space<vmem>>, vector<1x128x128xbf16>
    %39 = vector.shape_cast %38 : vector<1x128x128xbf16> to vector<128x128xbf16>
    %cst_38 = arith.constant dense<0.000000e+00> : vector<256x128xf32>
    %40 = tpu.matmul %37, %39, %cst_38 {dimension_numbers = #tpu.dot_dimension_numbers<[1], [0], [0], [1], [0, 0, 1, 1], [], []>} : vector<256x128xbf16>, vector<128x128xbf16>, vector<256x128xf32> -> vector<256x128xf32>
    %41 = arith.addf %34, %40 : vector<256x128xf32>
    %c0_39 = arith.constant 0 : index
    %c1_40 = arith.constant 1 : index
    %c2_41 = arith.constant 2 : index
    %c0_42 = arith.constant 0 : index
    %42 = vector.load %arg2[%c0_39, %c1_40, %c2_41, %c0_42] : memref<1x18x18x128xbf16, #tpu.memory_space<vmem>>, vector<1x16x16x128xbf16>
    %43 = vector.shape_cast %42 : vector<1x16x16x128xbf16> to vector<16x16x128xbf16>
    %44 = vector.shape_cast %43 : vector<16x16x128xbf16> to vector<256x128xbf16>
    %c5 = arith.constant 5 : index
    %c0_43 = arith.constant 0 : index
    %c0_44 = arith.constant 0 : index
    %45 = vector.load %arg3[%c5, %c0_43, %c0_44] : memref<9x128x128xbf16, #tpu.memory_space<vmem>>, vector<1x128x128xbf16>
    %46 = vector.shape_cast %45 : vector<1x128x128xbf16> to vector<128x128xbf16>
    %cst_45 = arith.constant dense<0.000000e+00> : vector<256x128xf32>
    %47 = tpu.matmul %44, %46, %cst_45 {dimension_numbers = #tpu.dot_dimension_numbers<[1], [0], [0], [1], [0, 0, 1, 1], [], []>} : vector<256x128xbf16>, vector<128x128xbf16>, vector<256x128xf32> -> vector<256x128xf32>
    %48 = arith.addf %41, %47 : vector<256x128xf32>
    %c0_46 = arith.constant 0 : index
    %c2_47 = arith.constant 2 : index
    %c0_48 = arith.constant 0 : index
    %c0_49 = arith.constant 0 : index
    %49 = vector.load %arg2[%c0_46, %c2_47, %c0_48, %c0_49] : memref<1x18x18x128xbf16, #tpu.memory_space<vmem>>, vector<1x16x16x128xbf16>
    %50 = vector.shape_cast %49 : vector<1x16x16x128xbf16> to vector<16x16x128xbf16>
    %51 = vector.shape_cast %50 : vector<16x16x128xbf16> to vector<256x128xbf16>
    %c6 = arith.constant 6 : index
    %c0_50 = arith.constant 0 : index
    %c0_51 = arith.constant 0 : index
    %52 = vector.load %arg3[%c6, %c0_50, %c0_51] : memref<9x128x128xbf16, #tpu.memory_space<vmem>>, vector<1x128x128xbf16>
    %53 = vector.shape_cast %52 : vector<1x128x128xbf16> to vector<128x128xbf16>
    %cst_52 = arith.constant dense<0.000000e+00> : vector<256x128xf32>
    %54 = tpu.matmul %51, %53, %cst_52 {dimension_numbers = #tpu.dot_dimension_numbers<[1], [0], [0], [1], [0, 0, 1, 1], [], []>} : vector<256x128xbf16>, vector<128x128xbf16>, vector<256x128xf32> -> vector<256x128xf32>
    %55 = arith.addf %48, %54 : vector<256x128xf32>
    %c0_53 = arith.constant 0 : index
    %c2_54 = arith.constant 2 : index
    %c1_55 = arith.constant 1 : index
    %c0_56 = arith.constant 0 : index
    %56 = vector.load %arg2[%c0_53, %c2_54, %c1_55, %c0_56] : memref<1x18x18x128xbf16, #tpu.memory_space<vmem>>, vector<1x16x16x128xbf16>
    %57 = vector.shape_cast %56 : vector<1x16x16x128xbf16> to vector<16x16x128xbf16>
    %58 = vector.shape_cast %57 : vector<16x16x128xbf16> to vector<256x128xbf16>
    %c7 = arith.constant 7 : index
    %c0_57 = arith.constant 0 : index
    %c0_58 = arith.constant 0 : index
    %59 = vector.load %arg3[%c7, %c0_57, %c0_58] : memref<9x128x128xbf16, #tpu.memory_space<vmem>>, vector<1x128x128xbf16>
    %60 = vector.shape_cast %59 : vector<1x128x128xbf16> to vector<128x128xbf16>
    %cst_59 = arith.constant dense<0.000000e+00> : vector<256x128xf32>
    %61 = tpu.matmul %58, %60, %cst_59 {dimension_numbers = #tpu.dot_dimension_numbers<[1], [0], [0], [1], [0, 0, 1, 1], [], []>} : vector<256x128xbf16>, vector<128x128xbf16>, vector<256x128xf32> -> vector<256x128xf32>
    %62 = arith.addf %55, %61 : vector<256x128xf32>
    %c0_60 = arith.constant 0 : index
    %c2_61 = arith.constant 2 : index
    %c2_62 = arith.constant 2 : index
    %c0_63 = arith.constant 0 : index
    %63 = vector.load %arg2[%c0_60, %c2_61, %c2_62, %c0_63] : memref<1x18x18x128xbf16, #tpu.memory_space<vmem>>, vector<1x16x16x128xbf16>
    %64 = vector.shape_cast %63 : vector<1x16x16x128xbf16> to vector<16x16x128xbf16>
    %65 = vector.shape_cast %64 : vector<16x16x128xbf16> to vector<256x128xbf16>
    %c8 = arith.constant 8 : index
    %c0_64 = arith.constant 0 : index
    %c0_65 = arith.constant 0 : index
    %66 = vector.load %arg3[%c8, %c0_64, %c0_65] : memref<9x128x128xbf16, #tpu.memory_space<vmem>>, vector<1x128x128xbf16>
    %67 = vector.shape_cast %66 : vector<1x128x128xbf16> to vector<128x128xbf16>
    %cst_66 = arith.constant dense<0.000000e+00> : vector<256x128xf32>
    %68 = tpu.matmul %65, %67, %cst_66 {dimension_numbers = #tpu.dot_dimension_numbers<[1], [0], [0], [1], [0, 0, 1, 1], [], []>} : vector<256x128xbf16>, vector<128x128xbf16>, vector<256x128xf32> -> vector<256x128xf32>
    %69 = arith.addf %62, %68 : vector<256x128xf32>
    %cst_67 = arith.constant 0.000000e+00 : f32
    %70 = vector.broadcast %cst_67 : f32 to vector<256x128xf32>
    %71 = arith.maximumf %69, %70 : vector<256x128xf32>
    %72 = arith.truncf %71 : vector<256x128xf32> to vector<256x128xbf16>
    %c0_68 = arith.constant 0 : index
    %c0_69 = arith.constant 0 : index
    %c0_70 = arith.constant 0 : index
    %73 = vector.load %arg6[%c0_68, %c0_69, %c0_70] : memref<1x256x128xbf16, #tpu.memory_space<vmem>>, vector<1x256x128xbf16>
    %74 = vector.shape_cast %73 : vector<1x256x128xbf16> to vector<256x128xbf16>
    %75 = vector.shape_cast %72 : vector<256x128xbf16> to vector<1x256x128xbf16>
    tpu.vector_store %arg6[%c0_68, %c0_69, %c0_70], %75 {strides = array<i32>} : memref<1x256x128xbf16, #tpu.memory_space<vmem>>, vector<1x256x128xbf16>,
    return
  }
  func.func @transform_0(%arg0: i32, %arg1: i32) -> (i32, i32, i32, i32) {
    %c0_i32 = arith.constant 0 : i32
    %c0_i32_0 = arith.constant 0 : i32
    %c0_i32_1 = arith.constant 0 : i32
    %c0_i32_2 = arith.constant 0 : i32
    return %arg0, %c0_i32, %c0_i32_0, %c0_i32_1 : i32, i32, i32, i32
  }
  func.func @transform_1(%arg0: i32, %arg1: i32) -> (i32, i32, i32) {
    %c0_i32 = arith.constant 0 : i32
    %c0_i32_0 = arith.constant 0 : i32
    %c0_i32_1 = arith.constant 0 : i32
    return %c0_i32, %c0_i32_0, %arg1 : i32, i32, i32
  }
  func.func @transform_2(%arg0: i32, %arg1: i32) -> (i32, i32) {
    %c0_i32 = arith.constant 0 : i32
    %c0_i32_0 = arith.constant 0 : i32
    return %c0_i32, %arg1 : i32, i32
  }
  func.func @transform_3(%arg0: i32, %arg1: i32) -> (i32, i32, i32) {
    %c0_i32 = arith.constant 0 : i32
    %c0_i32_0 = arith.constant 0 : i32
    return %arg0, %c0_i32, %arg1 : i32, i32, i32
  }
  func.func @transform_4(%arg0: i32, %arg1: i32) -> (i32, i32, i32) {
    %c0_i32 = arith.constant 0 : i32
    %c0_i32_0 = arith.constant 0 : i32
    return %arg0, %c0_i32, %arg1 : i32, i32, i32
  }
}

</mosaic_0001>

<llo_original>
// kernel: basic_block_apply.3
$region0: #{basic_block_apply.3}
  #allocation0 [shape = 'u32[]', space=smem, size = 0x4, offset = 0x4, fixed_abs, tag = 'smem constant byte address 0x4 - core index']
  #allocation1 [shape = 'u32[144,128]{1,0:T(1,128)}', space=vmem, size = 0x12000, scoped, tag = 'internal scratch']
  %s0 = inlined_call_operand.vmem [shape: bf16[2,18,18,128], index: 0, kind: input, shape index: {}]
  %s1 = inlined_call_operand.vmem [shape: bf16[9,128,128], index: 1, kind: input, shape index: {}]
  %s2 = inlined_call_operand.vmem [shape: f32[1,128], index: 2, kind: input, shape index: {}]
  %s3 = inlined_call_operand.vmem [shape: bf16[2,256,128], index: 3, kind: input, shape index: {}]
  %s4 = inlined_call_operand.vmem [shape: bf16[2,256,128], index: 4, kind: output, shape index: {}]
  %s5 = sld [smem:[#allocation0]]
  $region49: #{basic_block_apply.3} parent=0
    _
  %s7 = ssub.s32 1, %s5
  %s8 = scalar_select 0, %s7, %s5
  loop: start=0, step=1, limit=4
  $region2: #{basic_block_apply.3} parent=0 // loop_pre_header
    _
  $region3: #{basic_block_apply.3} parent=0 // loop_header
    %s10 = sphi 0, %s14
    %p11 = scmp.ge.s32.totalorder %s10, 4
    %s17 = sphi 0, %s29
    %s18 = sphi 0, %s25
    %s19 = sphi 0, %s17
    %s20 = sphi 0, %s18
    %s21 = sphi 0, %s19
    %s22 = sphi 0, %s20
    %s32 = sphi 0, %s34
    %s35 = sphi 0, %s32
    %s36 = sphi 0, %s35
    %s52 = sphi 0, %s36
    %s58 = sphi 0, %s60
    %s61 = sphi 0, %s58
    %s62 = sphi 0, %s61
    %s78 = sphi 0, %s62
    %s84 = sphi 0, %s86
    %s87 = sphi 0, %s84
    %s88 = sphi 0, %s87
    %s104 = sphi 0, %s88
    %s112 = sphi 0, %s114
    %s115 = sphi 0, %s112
    %s116 = sphi 0, %s115
    %s132 = sphi 0, %s116
    %s140 = sphi 0, %s142
    %s143 = sphi 0, %s140
    %s144 = sphi 0, %s143
    %s160 = sphi 0, %s144
  $region4: #{basic_block_apply.3} parent=0 // loop_header_branch
    %13 = sbr.rel (%p11) target = $region8
  $region5: #{basic_block_apply.3} parent=0 // loop_body
    %s15 = ssub.s32 %s10, 1
    %s16 = ssub.s32 %s10, 2
    %s23 = sadd.s32 1, %s18
    %p24 = scmp.ge.s32.totalorder %s23, 1
    %s25 = scalar_select %p24, 0, %s23
    %s26 = sadd.s32 1, %s17
    %s27 = scalar_select %p24, %s26, %s17
    %p28 = scmp.ge.s32.totalorder %s27, 2
    %s29 = scalar_select %p28, 0, %s27
    %s30 = ssub.s32 %s17, %s29
    %p31 = scmp.eq.s32.totalorder %s30, 0
    %s33 = sadd.s32 %s32, 1
    %s34 = scalar_select %p31, %s32, %s33
    %p37 = pneg %p31
    %p38 = scmp.eq.s32.totalorder %s10, 1
    %p39 = por %p37, %p38
    %p40 = scmp.ne.s32.totalorder %s32, %s35
    %p41 = scmp.eq.s32.totalorder %s10, 0
    %p42 = por %p40, %p41
    %p43 = scmp.ne.s32.totalorder %s32, %s35
    %p44 = scmp.eq.s32.totalorder %s15, 1
    %p45 = por %p43, %p44
    %p46 = scmp.ne.s32.totalorder %s35, %s36
    %p47 = scmp.eq.s32.totalorder %s15, 0
    %p48 = por %p46, %p47
    %p49 = scmp.ne.s32.totalorder %s35, %s36
    %p50 = scmp.eq.s32.totalorder %s16, 1
    %p51 = por %p49, %p50
    %p53 = scmp.ne.s32.totalorder %s36, %s52
    %p54 = scmp.eq.s32.totalorder %s16, 0
    %p55 = por %p53, %p54
    %s56 = ssub.s32 %s18, %s25
    %p57 = scmp.eq.s32.totalorder %s56, 0
    %s59 = sadd.s32 %s58, 1
    %s60 = scalar_select %p57, %s58, %s59
    %p63 = pneg %p57
    %p64 = scmp.eq.s32.totalorder %s10, 1
    %p65 = por %p63, %p64
    %p66 = scmp.ne.s32.totalorder %s58, %s61
    %p67 = scmp.eq.s32.totalorder %s10, 0
    %p68 = por %p66, %p67
    %p69 = scmp.ne.s32.totalorder %s58, %s61
    %p70 = scmp.eq.s32.totalorder %s15, 1
    %p71 = por %p69, %p70
    %p72 = scmp.ne.s32.totalorder %s61, %s62
    %p73 = scmp.eq.s32.totalorder %s15, 0
    %p74 = por %p72, %p73
    %p75 = scmp.ne.s32.totalorder %s61, %s62
    %p76 = scmp.eq.s32.totalorder %s16, 1
    %p77 = por %p75, %p76
    %p79 = scmp.ne.s32.totalorder %s62, %s78
    %p80 = scmp.eq.s32.totalorder %s16, 0
    %p81 = por %p79, %p80
    %s82 = ssub.s32 %s18, %s25
    %p83 = scmp.eq.s32.totalorder %s82, 0
    %s85 = sadd.s32 %s84, 1
    %s86 = scalar_select %p83, %s84, %s85
    %p89 = pneg %p83
    %p90 = scmp.eq.s32.totalorder %s10, 1
    %p91 = por %p89, %p90
    %p92 = scmp.ne.s32.totalorder %s84, %s87
    %p93 = scmp.eq.s32.totalorder %s10, 0
    %p94 = por %p92, %p93
    %p95 = scmp.ne.s32.totalorder %s84, %s87
    %p96 = scmp.eq.s32.totalorder %s15, 1
    %p97 = por %p95, %p96
    %p98 = scmp.ne.s32.totalorder %s87, %s88
    %p99 = scmp.eq.s32.totalorder %s15, 0
    %p100 = por %p98, %p99
    %p101 = scmp.ne.s32.totalorder %s87, %s88
    %p102 = scmp.eq.s32.totalorder %s16, 1
    %p103 = por %p101, %p102
    %p105 = scmp.ne.s32.totalorder %s88, %s104
    %p106 = scmp.eq.s32.totalorder %s16, 0
    %p107 = por %p105, %p106
    %s108 = ssub.s32 %s17, %s29
    %s109 = ssub.s32 %s18, %s25
    %s110 = sor.u32 %s108, %s109
    %p111 = scmp.eq.s32.totalorder %s110, 0
    %s113 = sadd.s32 %s112, 1
    %s114 = scalar_select %p111, %s112, %s113
    %p117 = pneg %p111
    %p118 = scmp.eq.s32.totalorder %s10, 1
    %p119 = por %p117, %p118
    %p120 = scmp.ne.s32.totalorder %s112, %s115
    %p121 = scmp.eq.s32.totalorder %s10, 0
    %p122 = por %p120, %p121
    %p123 = scmp.ne.s32.totalorder %s112, %s115
    %p124 = scmp.eq.s32.totalorder %s15, 1
    %p125 = por %p123, %p124
    %p126 = scmp.ne.s32.totalorder %s115, %s116
    %p127 = scmp.eq.s32.totalorder %s15, 0
    %p128 = por %p126, %p127
    %p129 = scmp.ne.s32.totalorder %s115, %s116
    %p130 = scmp.eq.s32.totalorder %s16, 1
    %p131 = por %p129, %p130
    %p133 = scmp.ne.s32.totalorder %s116, %s132
    %p134 = scmp.eq.s32.totalorder %s16, 0
    %p135 = por %p133, %p134
    %s136 = ssub.s32 %s17, %s29
    %s137 = ssub.s32 %s18, %s25
    %s138 = sor.u32 %s136, %s137
    %p139 = scmp.eq.s32.totalorder %s138, 0
    %s141 = sadd.s32 %s140, 1
    %s142 = scalar_select %p139, %s140, %s141
    %p145 = pneg %p139
    %p146 = scmp.eq.s32.totalorder %s10, 1
    %p147 = por %p145, %p146
    %p148 = scmp.ne.s32.totalorder %s140, %s143
    %p149 = scmp.eq.s32.totalorder %s10, 0
    %p150 = por %p148, %p149
    %p151 = scmp.ne.s32.totalorder %s140, %s143
    %p152 = scmp.eq.s32.totalorder %s15, 1
    %p153 = por %p151, %p152
    %p154 = scmp.ne.s32.totalorder %s143, %s144
    %p155 = scmp.eq.s32.totalorder %s15, 0
    %p156 = por %p154, %p155
    %p157 = scmp.ne.s32.totalorder %s143, %s144
    %p158 = scmp.eq.s32.totalorder %s16, 1
    %p159 = por %p157, %p158
    %p161 = scmp.ne.s32.totalorder %s144, %s160
    %p162 = scmp.eq.s32.totalorder %s16, 0
    %p163 = por %p161, %p162
    %p164 = scmp.le.s32.totalorder 1, %s10
    %p165 = scmp.lt.s32.totalorder %s10, 3
    %p166 = pnand %p164, %p165
    %p167 = pneg %p166
    // Predicated region
    $region9: #{basic_block_apply.3} parent=5 // pred_check
      _
    $region10: #{basic_block_apply.3} parent=5 // pred_check_branch
      %169 = sbr.rel (%p166) target = $region12
    $region11: #{basic_block_apply.3} parent=5 // pred_region
      %s170 = ssub.s32 %s10, 1
      // Predicated region
      $region13: #{basic_block_apply.3} parent=11 // pred_check
        %p171 = pneg %p74
      $region14: #{basic_block_apply.3} parent=11 // pred_check_branch
        %173 = sbr.rel (%p171) target = $region16
      $region15: #{basic_block_apply.3} parent=11 // pred_region
        %p174 = scmp.lt.s32.totalorder %s20, 0
        %s175 = scalar_select %p174, %s20, 0
        %s176 = smul.addr %s175, 4
        %s177 = scalar_lea.vmem %s1, %s176
      $region16: #{basic_block_apply.3} parent=11 // pred_fallthru
        _
      // Predicated region
      $region17: #{basic_block_apply.3} parent=11 // pred_check
        %p178 = pneg %p100
      $region18: #{basic_block_apply.3} parent=11 // pred_check_branch
        %180 = sbr.rel (%p178) target = $region20
      $region19: #{basic_block_apply.3} parent=11 // pred_region
        %p181 = scmp.lt.s32.totalorder %s20, 0
        %s182 = scalar_select %p181, %s20, 0
        %s183 = scalar_lea.vmem %s2, %s182
      $region20: #{basic_block_apply.3} parent=11 // pred_fallthru
        _
    $region12: #{basic_block_apply.3} parent=5 // pred_fallthru
      _
    %p184 = scmp.lt.s32.totalorder %s10, 2
    // Predicated region
    $region21: #{basic_block_apply.3} parent=5 // pred_check
      %p185 = pneg %p184
    $region22: #{basic_block_apply.3} parent=5 // pred_check_branch
      %187 = sbr.rel (%p185) target = $region24
    $region23: #{basic_block_apply.3} parent=5 // pred_region
      // Predicated region
      $region25: #{basic_block_apply.3} parent=23 // pred_check
        %p188 = pneg %p42
      $region26: #{basic_block_apply.3} parent=23 // pred_check_branch
        %190 = sbr.rel (%p188) target = $region28
      $region27: #{basic_block_apply.3} parent=23 // pred_region
        %p191 = scmp.lt.s32.totalorder %s17, 1
        %s192 = scalar_select %p191, %s17, 1
        %s193 = smul.addr %s192, 54
        %s194 = smul.addr %s193, 4
        %s195 = scalar_lea.vmem %s0, %s194
      $region28: #{basic_block_apply.3} parent=23 // pred_fallthru
        _
      // Predicated region
      $region29: #{basic_block_apply.3} parent=23 // pred_check
        %p196 = pneg %p122
      $region30: #{basic_block_apply.3} parent=23 // pred_check_branch
        %198 = sbr.rel (%p196) target = $region32
      $region31: #{basic_block_apply.3} parent=23 // pred_region
        %p199 = scmp.lt.s32.totalorder %s17, 1
        %s200 = scalar_select %p199, %s17, 1
        %p201 = scmp.lt.s32.totalorder %s18, 0
        %s202 = scalar_select %p201, %s18, 0
        %s203 = smul.addr %s200, 32
        %s204 = sadd.s32 %s202, %s203
        %s205 = smul.addr %s204, 4
        %s206 = scalar_lea.vmem %s3, %s205
      $region32: #{basic_block_apply.3} parent=23 // pred_fallthru
        _
    $region24: #{basic_block_apply.3} parent=5 // pred_fallthru
      _
    %p207 = scmp.le.s32.totalorder 1, %s10
    %p208 = scmp.lt.s32.totalorder %s10, 3
    %p209 = pnand %p207, %p208
    %p210 = pneg %p209
    // Predicated region
    $region33: #{basic_block_apply.3} parent=5 // pred_check
      _
    $region34: #{basic_block_apply.3} parent=5 // pred_check_branch
      %212 = sbr.rel (%p209) target = $region36
    $region35: #{basic_block_apply.3} parent=5 // pred_region
      %s213 = ssub.s32 %s10, 1
      %p214 = scmp.lt.s32.totalorder %s19, 1
      %s215 = scalar_select %p214, %s19, 1
      %s216 = smul.addr %s215, 54
      %s217 = smul.addr %s216, 4
      %s218 = scalar_lea.vmem %s0, %s217
      %p219 = pneg %p48
      %p220 = pneg %p45
      %p221 = scmp.lt.s32.totalorder %s20, 0
      %s222 = scalar_select %p221, %s20, 0
      %s223 = smul.addr %s222, 4
      %s224 = scalar_lea.vmem %s1, %s223
      %p225 = pneg %p74
      %p226 = pneg %p71
      %p227 = scmp.lt.s32.totalorder %s20, 0
      %s228 = scalar_select %p227, %s20, 0
      %s229 = scalar_lea.vmem %s2, %s228
      %p230 = pneg %p100
      %p231 = pneg %p97
      %p232 = scmp.lt.s32.totalorder %s19, 1
      %s233 = scalar_select %p232, %s19, 1
      %p234 = scmp.lt.s32.totalorder %s20, 0
      %s235 = scalar_select %p234, %s20, 0
      %s236 = smul.addr %s233, 32
      %s237 = sadd.s32 %s235, %s236
      %s238 = smul.addr %s237, 4
      %s239 = scalar_lea.vmem %s3, %s238
      %p240 = pneg %p128
      %p241 = pneg %p125
      %p242 = pneg %p156
      %p243 = pneg %p153
      %p244 = scmp.lt.s32.totalorder %s19, 1
      %s245 = scalar_select %p244, %s19, 1
      %p246 = scmp.lt.s32.totalorder %s20, 0
      %s247 = scalar_select %p246, %s20, 0
      %s248 = smul.addr %s245, 32
      %s249 = sadd.s32 %s247, %s248
      %s250 = smul.addr %s249, 4
      %s251 = scalar_lea.vmem %s4, %s250
      %p252 = scmp.lt.s32.totalorder %s19, 1
      %s253 = scalar_select %p252, %s19, 1
      %s254 = smul.addr %s253, 54
      %s255 = smul.addr %s254, 4
      %s256 = scalar_lea.vmem %s0, %s255
      %p257 = scmp.lt.s32.totalorder %s20, 0
      %s258 = scalar_select %p257, %s20, 0
      %s259 = smul.addr %s258, 4
      %s260 = scalar_lea.vmem %s1, %s259
      %p261 = scmp.lt.s32.totalorder %s20, 0
      %s262 = scalar_select %p261, %s20, 0
      %s263 = scalar_lea.vmem %s2, %s262
      %p264 = scmp.lt.s32.totalorder %s19, 1
      %s265 = scalar_select %p264, %s19, 1
      %p266 = scmp.lt.s32.totalorder %s20, 0
      %s267 = scalar_select %p266, %s20, 0
      %s268 = smul.addr %s265, 32
      %s269 = sadd.s32 %s267, %s268
      %s270 = smul.addr %s269, 4
      %s271 = scalar_lea.vmem %s3, %s270
      %p272 = scmp.lt.s32.totalorder %s19, 1
      %s273 = scalar_select %p272, %s19, 1
      %p274 = scmp.lt.s32.totalorder %s20, 0
      %s275 = scalar_select %p274, %s20, 0
      %s276 = smul.addr %s273, 32
      %s277 = sadd.s32 %s275, %s276
      %s278 = smul.addr %s277, 4
      %s279 = scalar_lea.vmem %s4, %s278
      %v281 = vld [vmem:[%s263] sm:$0x1]
      %v283 = vlaneseq
      %v284 = vshrl.u32 %v283, 7
      %v285 = vsub.s32 0, %v284
      %v286 = vrot.slane %v281, %v285
      %v288 = vld [vmem:[%s271] sm:$0xf]
      %v289 = vld [vmem:[%s271 + $0x4] sm:$0xf]
      %v290 = vld [vmem:[%s271 + $0x8] sm:$0xf]
      %v291 = vld [vmem:[%s271 + $0xc] sm:$0xf]
      %v292 = vld [vmem:[%s271 + $0x10] sm:$0xf]
      %v293 = vld [vmem:[%s271 + $0x14] sm:$0xf]
      %v294 = vld [vmem:[%s271 + $0x18] sm:$0xf]
      %v295 = vld [vmem:[%s271 + $0x1c] sm:$0xf]
      %v296 = vld [vmem:[%s271 + $0x20] sm:$0xf]
      %v297 = vld [vmem:[%s271 + $0x24] sm:$0xf]
      %v298 = vld [vmem:[%s271 + $0x28] sm:$0xf]
      %v299 = vld [vmem:[%s271 + $0x2c] sm:$0xf]
      %v300 = vld [vmem:[%s271 + $0x30] sm:$0xf]
      %v301 = vld [vmem:[%s271 + $0x34] sm:$0xf]
      %v302 = vld [vmem:[%s271 + $0x38] sm:$0xf]
      %v303 = vld [vmem:[%s271 + $0x3c] sm:$0xf]
      %v304 = vld [vmem:[%s271 + $0x40] sm:$0xf]
      %v305 = vld [vmem:[%s271 + $0x44] sm:$0xf]
      %v306 = vld [vmem:[%s271 + $0x48] sm:$0xf]
      %v307 = vld [vmem:[%s271 + $0x4c] sm:$0xf]
      %v308 = vld [vmem:[%s271 + $0x50] sm:$0xf]
      %v309 = vld [vmem:[%s271 + $0x54] sm:$0xf]
      %v310 = vld [vmem:[%s271 + $0x58] sm:$0xf]
      %v311 = vld [vmem:[%s271 + $0x5c] sm:$0xf]
      %v312 = vld [vmem:[%s271 + $0x60] sm:$0xf]
      %v313 = vld [vmem:[%s271 + $0x64] sm:$0xf]
      %v314 = vld [vmem:[%s271 + $0x68] sm:$0xf]
      %v315 = vld [vmem:[%s271 + $0x6c] sm:$0xf]
      %v316 = vld [vmem:[%s271 + $0x70] sm:$0xf]
      %v317 = vld [vmem:[%s271 + $0x74] sm:$0xf]
      %v318 = vld [vmem:[%s271 + $0x78] sm:$0xf]
      %v319 = vld [vmem:[%s271 + $0x7c] sm:$0xf]
      %v320 = vunpack.c.l.bf16 %v288
      %v321 = vunpack.c.l.bf16 %v289
      %v322 = vunpack.c.l.bf16 %v290
      %v323 = vunpack.c.l.bf16 %v291
      %v324 = vunpack.c.l.bf16 %v292
      %v325 = vunpack.c.l.bf16 %v293
      %v326 = vunpack.c.l.bf16 %v294
      %v327 = vunpack.c.l.bf16 %v295
      %v328 = vunpack.c.l.bf16 %v296
      %v329 = vunpack.c.l.bf16 %v297
      %v330 = vunpack.c.l.bf16 %v298
      %v331 = vunpack.c.l.bf16 %v299
      %v332 = vunpack.c.l.bf16 %v300
      %v333 = vunpack.c.l.bf16 %v301
      %v334 = vunpack.c.l.bf16 %v302
      %v335 = vunpack.c.l.bf16 %v303
      %v336 = vunpack.c.l.bf16 %v304
      %v337 = vunpack.c.l.bf16 %v305
      %v338 = vunpack.c.l.bf16 %v306
      %v339 = vunpack.c.l.bf16 %v307
      %v340 = vunpack.c.l.bf16 %v308
      %v341 = vunpack.c.l.bf16 %v309
      %v342 = vunpack.c.l.bf16 %v310
      %v343 = vunpack.c.l.bf16 %v311
      %v344 = vunpack.c.l.bf16 %v312
      %v345 = vunpack.c.l.bf16 %v313
      %v346 = vunpack.c.l.bf16 %v314
      %v347 = vunpack.c.l.bf16 %v315
      %v348 = vunpack.c.l.bf16 %v316
      %v349 = vunpack.c.l.bf16 %v317
      %v350 = vunpack.c.l.bf16 %v318
      %v351 = vunpack.c.l.bf16 %v319
      %v352 = vadd.f32 %v286, %v320
      %v353 = vadd.f32 %v286, %v321
      %v354 = vadd.f32 %v286, %v322
      %v355 = vadd.f32 %v286, %v323
      %v356 = vadd.f32 %v286, %v324
      %v357 = vadd.f32 %v286, %v325
      %v358 = vadd.f32 %v286, %v326
      %v359 = vadd.f32 %v286, %v327
      %v360 = vadd.f32 %v286, %v328
      %v361 = vadd.f32 %v286, %v329
      %v362 = vadd.f32 %v286, %v330
      %v363 = vadd.f32 %v286, %v331
      %v364 = vadd.f32 %v286, %v332
      %v365 = vadd.f32 %v286, %v333
      %v366 = vadd.f32 %v286, %v334
      %v367 = vadd.f32 %v286, %v335
      %v368 = vadd.f32 %v286, %v336
      %v369 = vadd.f32 %v286, %v337
      %v370 = vadd.f32 %v286, %v338
      %v371 = vadd.f32 %v286, %v339
      %v372 = vadd.f32 %v286, %v340
      %v373 = vadd.f32 %v286, %v341
      %v374 = vadd.f32 %v286, %v342
      %v375 = vadd.f32 %v286, %v343
      %v376 = vadd.f32 %v286, %v344
      %v377 = vadd.f32 %v286, %v345
      %v378 = vadd.f32 %v286, %v346
      %v379 = vadd.f32 %v286, %v347
      %v380 = vadd.f32 %v286, %v348
      %v381 = vadd.f32 %v286, %v349
      %v382 = vadd.f32 %v286, %v350
      %v383 = vadd.f32 %v286, %v351
      %v384 = vld [vmem:[%s256] sm:$0xf]
      %v385 = vld [vmem:[%s256 + $0x4] sm:$0xf]
      %v386 = vld [vmem:[%s256 + $0xc] sm:$0xf]
      %v387 = vld [vmem:[%s256 + $0x10] sm:$0xf]
      %v388 = vld [vmem:[%s256 + $0x18] sm:$0xf]
      %v389 = vld [vmem:[%s256 + $0x1c] sm:$0xf]
      %v390 = vld [vmem:[%s256 + $0x24] sm:$0xf]
      %v391 = vld [vmem:[%s256 + $0x28] sm:$0xf]
      %v392 = vld [vmem:[%s256 + $0x30] sm:$0xf]
      %v393 = vld [vmem:[%s256 + $0x34] sm:$0xf]
      %v394 = vld [vmem:[%s256 + $0x3c] sm:$0xf]
      %v395 = vld [vmem:[%s256 + $0x40] sm:$0xf]
      %v396 = vld [vmem:[%s256 + $0x48] sm:$0xf]
      %v397 = vld [vmem:[%s256 + $0x4c] sm:$0xf]
      %v398 = vld [vmem:[%s256 + $0x54] sm:$0xf]
      %v399 = vld [vmem:[%s256 + $0x58] sm:$0xf]
      %v400 = vld [vmem:[%s256 + $0x60] sm:$0xf]
      %v401 = vld [vmem:[%s256 + $0x64] sm:$0xf]
      %v402 = vld [vmem:[%s256 + $0x6c] sm:$0xf]
      %v403 = vld [vmem:[%s256 + $0x70] sm:$0xf]
      %v404 = vld [vmem:[%s256 + $0x78] sm:$0xf]
      %v405 = vld [vmem:[%s256 + $0x7c] sm:$0xf]
      %v406 = vld [vmem:[%s256 + $0x84] sm:$0xf]
      %v407 = vld [vmem:[%s256 + $0x88] sm:$0xf]
      %v408 = vld [vmem:[%s256 + $0x90] sm:$0xf]
      %v409 = vld [vmem:[%s256 + $0x94] sm:$0xf]
      %v410 = vld [vmem:[%s256 + $0x9c] sm:$0xf]
      %v411 = vld [vmem:[%s256 + $0xa0] sm:$0xf]
      %v412 = vld [vmem:[%s256 + $0xa8] sm:$0xf]
      %v413 = vld [vmem:[%s256 + $0xac] sm:$0xf]
      %v414 = vld [vmem:[%s256 + $0xb4] sm:$0xf]
      %v415 = vld [vmem:[%s256 + $0xb8] sm:$0xf]
      %v416 = vld [vmem:[%s260] sm:$0xf]
      %v417 = vld [vmem:[%s260 + $0x4] sm:$0xf]
      %v418 = vld [vmem:[%s260 + $0x8] sm:$0xf]
      %v419 = vld [vmem:[%s260 + $0xc] sm:$0xf]
      %v420 = vld [vmem:[%s260 + $0x10] sm:$0xf]
      %v421 = vld [vmem:[%s260 + $0x14] sm:$0xf]
      %v422 = vld [vmem:[%s260 + $0x18] sm:$0xf]
      %v423 = vld [vmem:[%s260 + $0x1c] sm:$0xf]
      %v424 = vld [vmem:[%s260 + $0x20] sm:$0xf]
      %v425 = vld [vmem:[%s260 + $0x24] sm:$0xf]
      %v426 = vld [vmem:[%s260 + $0x28] sm:$0xf]
      %v427 = vld [vmem:[%s260 + $0x2c] sm:$0xf]
      %v428 = vld [vmem:[%s260 + $0x30] sm:$0xf]
      %v429 = vld [vmem:[%s260 + $0x34] sm:$0xf]
      %v430 = vld [vmem:[%s260 + $0x38] sm:$0xf]
      %v431 = vld [vmem:[%s260 + $0x3c] sm:$0xf]
      %v464 = vunpack.c.l.b16 %v384
      %v465 = vunpack.c.l.b16 %v385
      %v466 = vunpack.c.l.b16 %v386
      %v467 = vunpack.c.l.b16 %v387
      %v468 = vunpack.c.l.b16 %v388
      %v469 = vunpack.c.l.b16 %v389
      %v470 = vunpack.c.l.b16 %v390
      %v471 = vunpack.c.l.b16 %v391
      %v472 = vunpack.c.l.b16 %v392
      %v473 = vunpack.c.l.b16 %v393
      %v474 = vunpack.c.l.b16 %v394
      %v475 = vunpack.c.l.b16 %v395
      %v476 = vunpack.c.l.b16 %v396
      %v477 = vunpack.c.l.b16 %v397
      %v478 = vunpack.c.l.b16 %v398
      %v479 = vunpack.c.l.b16 %v399
      %v480 = vunpack.c.l.b16 %v400
      %v481 = vunpack.c.l.b16 %v401
      %v482 = vunpack.c.l.b16 %v402
      %v483 = vunpack.c.l.b16 %v403
      %v484 = vunpack.c.l.b16 %v404
      %v485 = vunpack.c.l.b16 %v405
      %v486 = vunpack.c.l.b16 %v406
      %v487 = vunpack.c.l.b16 %v407
      %v488 = vunpack.c.l.b16 %v408
      %v489 = vunpack.c.l.b16 %v409
      %v490 = vunpack.c.l.b16 %v410
      %v491 = vunpack.c.l.b16 %v411
      %v492 = vunpack.c.l.b16 %v412
      %v493 = vunpack.c.l.b16 %v413
      %v494 = vunpack.c.l.b16 %v414
      %v495 = vunpack.c.l.b16 %v415
      %v496 = vpack.c.b16 %v465, %v464
      %v497 = vpack.c.b16 %v467, %v466
      %v498 = vpack.c.b16 %v469, %v468
      %v499 = vpack.c.b16 %v471, %v470
      %v500 = vpack.c.b16 %v473, %v472
      %v501 = vpack.c.b16 %v475, %v474
      %v502 = vpack.c.b16 %v477, %v476
      %v503 = vpack.c.b16 %v479, %v478
      %v504 = vpack.c.b16 %v481, %v480
      %v505 = vpack.c.b16 %v483, %v482
      %v506 = vpack.c.b16 %v485, %v484
      %v507 = vpack.c.b16 %v487, %v486
      %v508 = vpack.c.b16 %v489, %v488
      %v509 = vpack.c.b16 %v491, %v490
      %v510 = vpack.c.b16 %v493, %v492
      %v511 = vpack.c.b16 %v495, %v494
      %v544 = vunpack.c.l.b16 %v416
      %v545 = vunpack.c.l.b16 %v417
      %v546 = vunpack.c.l.b16 %v418
      %v547 = vunpack.c.l.b16 %v419
      %v548 = vunpack.c.l.b16 %v420
      %v549 = vunpack.c.l.b16 %v421
      %v550 = vunpack.c.l.b16 %v422
      %v551 = vunpack.c.l.b16 %v423
      %v552 = vunpack.c.l.b16 %v424
      %v553 = vunpack.c.l.b16 %v425
      %v554 = vunpack.c.l.b16 %v426
      %v555 = vunpack.c.l.b16 %v427
      %v556 = vunpack.c.l.b16 %v428
      %v557 = vunpack.c.l.b16 %v429
      %v558 = vunpack.c.l.b16 %v430
      %v559 = vunpack.c.l.b16 %v431
      %v560 = vpack.c.b16 %v545, %v544
      %v561 = vpack.c.b16 %v547, %v546
      %v562 = vpack.c.b16 %v549, %v548
      %v563 = vpack.c.b16 %v551, %v550
      %v564 = vpack.c.b16 %v553, %v552
      %v565 = vpack.c.b16 %v555, %v554
      %v566 = vpack.c.b16 %v557, %v556
      %v567 = vpack.c.b16 %v559, %v558
      %576 = vmatprep.subr.bf16.mxu0 0
      %577 = vmatpush1.bf16.msra.mxu0 %v567
      %578 = vmatprep.subr.bf16.mxu0 0
      %579 = vmatpush1.bf16.msra.mxu0 %v566
      %580 = vmatprep.subr.bf16.mxu0 0
      %581 = vmatpush1.bf16.msra.mxu0 %v565
      %582 = vmatprep.subr.bf16.mxu0 0
      %583 = vmatpush1.bf16.msra.mxu0 %v564
      %584 = vmatprep.subr.bf16.mxu0 0
      %585 = vmatpush1.bf16.msra.mxu0 %v563
      %586 = vmatprep.subr.bf16.mxu0 0
      %587 = vmatpush1.bf16.msra.mxu0 %v562
      %588 = vmatprep.subr.bf16.mxu0 0
      %589 = vmatpush1.bf16.msra.mxu0 %v561
      %590 = vmatprep.subr.bf16.mxu0 0
      %591 = vmatpush1.bf16.msra.mxu0 %v560
      %592 = vmatprep.subr.bf16.mxu0 0
      %593 = vmatpush2.bf16.msra.mxu0 0
      %594 = vmatprep.subr.bf16.mxu0 0
      %595 = vmatpush2.bf16.msra.mxu0 0
      %596 = vmatprep.subr.bf16.mxu0 0
      %597 = vmatpush2.bf16.msra.mxu0 0
      %598 = vmatprep.subr.bf16.mxu0 0
      %599 = vmatpush2.bf16.msra.mxu0 0
      %600 = vmatprep.subr.bf16.mxu0 0
      %601 = vmatpush2.bf16.msra.mxu0 0
      %602 = vmatprep.subr.bf16.mxu0 0
      %603 = vmatpush2.bf16.msra.mxu0 0
      %604 = vmatprep.subr.bf16.mxu0 0
      %605 = vmatpush2.bf16.msra.mxu0 0
      %606 = vmatprep.subr.bf16.mxu0 0
      %607 = vmatpush2.bf16.msra.mxu0 0
      %608 = vmatprep.mubr.bf16.mxu0 0
      %609 = vmatmul.mubr.bf16.gmra.mxu0 %v496
      %v610 = vpop.f32.mrf.mxu0
      %v611 = vadd.f32 0.0, %v610
      %v612 = vpop.f32.mrf.mxu0
      %v613 = vpop.f32.mrf.mxu0
      %v614 = vadd.f32 0.0, %v613
      %v615 = vpop.f32.mrf.mxu0
      %616 = vmatprep.mubr.bf16.mxu0 0
      %617 = vmatmul.mubr.bf16.gmra.mxu0 %v497
      %v618 = vpop.f32.mrf.mxu0
      %v619 = vadd.f32 0.0, %v618
      %v620 = vpop.f32.mrf.mxu0
      %v621 = vpop.f32.mrf.mxu0
      %v622 = vadd.f32 0.0, %v621
      %v623 = vpop.f32.mrf.mxu0
      %624 = vmatprep.mubr.bf16.mxu0 0
      %625 = vmatmul.mubr.bf16.gmra.mxu0 %v498
      %v626 = vpop.f32.mrf.mxu0
      %v627 = vadd.f32 0.0, %v626
      %v628 = vpop.f32.mrf.mxu0
      %v629 = vpop.f32.mrf.mxu0
      %v630 = vadd.f32 0.0, %v629
      %v631 = vpop.f32.mrf.mxu0
      %632 = vmatprep.mubr.bf16.mxu0 0
      %633 = vmatmul.mubr.bf16.gmra.mxu0 %v499
      %v634 = vpop.f32.mrf.mxu0
      %v635 = vadd.f32 0.0, %v634
      %v636 = vpop.f32.mrf.mxu0
      %v637 = vpop.f32.mrf.mxu0
      %v638 = vadd.f32 0.0, %v637
      %v639 = vpop.f32.mrf.mxu0
      %640 = vmatprep.mubr.bf16.mxu0 0
      %641 = vmatmul.mubr.bf16.gmra.mxu0 %v500
      %v642 = vpop.f32.mrf.mxu0
      %v643 = vadd.f32 0.0, %v642
      %v644 = vpop.f32.mrf.mxu0
      %v645 = vpop.f32.mrf.mxu0
      %v646 = vadd.f32 0.0, %v645
      %v647 = vpop.f32.mrf.mxu0
      %648 = vmatprep.mubr.bf16.mxu0 0
      %649 = vmatmul.mubr.bf16.gmra.mxu0 %v501
      %v650 = vpop.f32.mrf.mxu0
      %v651 = vadd.f32 0.0, %v650
      %v652 = vpop.f32.mrf.mxu0
      %v653 = vpop.f32.mrf.mxu0
      %v654 = vadd.f32 0.0, %v653
      %v655 = vpop.f32.mrf.mxu0
      %656 = vmatprep.mubr.bf16.mxu0 0
      %657 = vmatmul.mubr.bf16.gmra.mxu0 %v502
      %v658 = vpop.f32.mrf.mxu0
      %v659 = vadd.f32 0.0, %v658
      %v660 = vpop.f32.mrf.mxu0
      %v661 = vpop.f32.mrf.mxu0
      %v662 = vadd.f32 0.0, %v661
      %v663 = vpop.f32.mrf.mxu0
      %664 = vmatprep.mubr.bf16.mxu0 0
      %665 = vmatmul.mubr.bf16.gmra.mxu0 %v503
      %v666 = vpop.f32.mrf.mxu0
      %v667 = vadd.f32 0.0, %v666
      %v668 = vpop.f32.mrf.mxu0
      %v669 = vpop.f32.mrf.mxu0
      %v670 = vadd.f32 0.0, %v669
      %v671 = vpop.f32.mrf.mxu0
      %672 = vmatprep.mubr.bf16.mxu0 0
      %673 = vmatmul.mubr.bf16.gmra.mxu0 %v504
      %v674 = vpop.f32.mrf.mxu0
      %v675 = vadd.f32 0.0, %v674
      %v676 = vpop.f32.mrf.mxu0
      %v677 = vpop.f32.mrf.mxu0
      %v678 = vadd.f32 0.0, %v677
      %v679 = vpop.f32.mrf.mxu0
      %680 = vmatprep.mubr.bf16.mxu0 0
      %681 = vmatmul.mubr.bf16.gmra.mxu0 %v505
      %v682 = vpop.f32.mrf.mxu0
      %v683 = vadd.f32 0.0, %v682
      %v684 = vpop.f32.mrf.mxu0
      %v685 = vpop.f32.mrf.mxu0
      %v686 = vadd.f32 0.0, %v685
      %v687 = vpop.f32.mrf.mxu0
      %688 = vmatprep.mubr.bf16.mxu0 0
      %689 = vmatmul.mubr.bf16.gmra.mxu0 %v506
      %v690 = vpop.f32.mrf.mxu0
      %v691 = vadd.f32 0.0, %v690
      %v692 = vpop.f32.mrf.mxu0
      %v693 = vpop.f32.mrf.mxu0
      %v694 = vadd.f32 0.0, %v693
      %v695 = vpop.f32.mrf.mxu0
      %696 = vmatprep.mubr.bf16.mxu0 0
      %697 = vmatmul.mubr.bf16.gmra.mxu0 %v507
      %v698 = vpop.f32.mrf.mxu0
      %v699 = vadd.f32 0.0, %v698
      %v700 = vpop.f32.mrf.mxu0
      %v701 = vpop.f32.mrf.mxu0
      %v702 = vadd.f32 0.0, %v701
      %v703 = vpop.f32.mrf.mxu0
      %704 = vmatprep.mubr.bf16.mxu0 0
      %705 = vmatmul.mubr.bf16.gmra.mxu0 %v508
      %v706 = vpop.f32.mrf.mxu0
      %v707 = vadd.f32 0.0, %v706
      %v708 = vpop.f32.mrf.mxu0
      %v709 = vpop.f32.mrf.mxu0
      %v710 = vadd.f32 0.0, %v709
      %v711 = vpop.f32.mrf.mxu0
      %712 = vmatprep.mubr.bf16.mxu0 0
      %713 = vmatmul.mubr.bf16.gmra.mxu0 %v509
      %v714 = vpop.f32.mrf.mxu0
      %v715 = vadd.f32 0.0, %v714
      %v716 = vpop.f32.mrf.mxu0
      %v717 = vpop.f32.mrf.mxu0
      %v718 = vadd.f32 0.0, %v717
      %v719 = vpop.f32.mrf.mxu0
      %720 = vmatprep.mubr.bf16.mxu0 0
      %721 = vmatmul.mubr.bf16.gmra.mxu0 %v510
      %v722 = vpop.f32.mrf.mxu0
      %v723 = vadd.f32 0.0, %v722
      %v724 = vpop.f32.mrf.mxu0
      %v725 = vpop.f32.mrf.mxu0
      %v726 = vadd.f32 0.0, %v725
      %v727 = vpop.f32.mrf.mxu0
      %728 = vmatprep.mubr.bf16.mxu0 0
      %729 = vmatmul.mubr.bf16.gmra.mxu0 %v511
      %v730 = vpop.f32.mrf.mxu0
      %v731 = vadd.f32 0.0, %v730
      %v732 = vpop.f32.mrf.mxu0
      %v733 = vpop.f32.mrf.mxu0
      %v734 = vadd.f32 0.0, %v733
      %v735 = vpop.f32.mrf.mxu0
      %736 = vdwg.mxu0
      %v737 = vadd.f32 %v352, %v611
      %v738 = vadd.f32 %v353, %v614
      %v739 = vadd.f32 %v354, %v619
      %v740 = vadd.f32 %v355, %v622
      %v741 = vadd.f32 %v356, %v627
      %v742 = vadd.f32 %v357, %v630
      %v743 = vadd.f32 %v358, %v635
      %v744 = vadd.f32 %v359, %v638
      %v745 = vadd.f32 %v360, %v643
      %v746 = vadd.f32 %v361, %v646
      %v747 = vadd.f32 %v362, %v651
      %v748 = vadd.f32 %v363, %v654
      %v749 = vadd.f32 %v364, %v659
      %v750 = vadd.f32 %v365, %v662
      %v751 = vadd.f32 %v366, %v667
      %v752 = vadd.f32 %v367, %v670
      %v753 = vadd.f32 %v368, %v675
      %v754 = vadd.f32 %v369, %v678
      %v755 = vadd.f32 %v370, %v683
      %v756 = vadd.f32 %v371, %v686
      %v757 = vadd.f32 %v372, %v691
      %v758 = vadd.f32 %v373, %v694
      %v759 = vadd.f32 %v374, %v699
      %v760 = vadd.f32 %v375, %v702
      %v761 = vadd.f32 %v376, %v707
      %v762 = vadd.f32 %v377, %v710
      %v763 = vadd.f32 %v378, %v715
      %v764 = vadd.f32 %v379, %v718
      %v765 = vadd.f32 %v380, %v723
      %v766 = vadd.f32 %v381, %v726
      %v767 = vadd.f32 %v382, %v731
      %v768 = vadd.f32 %v383, %v734
      %v769 = vld [vmem:[%s256] sm:$0xf]
      %v770 = vld [vmem:[%s256 + $0x4] sm:$0xf]
      %v771 = vld [vmem:[%s256 + $0x8] sm:$0x1]
      %v772 = vld [vmem:[%s256 + $0xc] sm:$0xf]
      %v773 = vld [vmem:[%s256 + $0x10] sm:$0xf]
      %v774 = vld [vmem:[%s256 + $0x14] sm:$0x1]
      %v775 = vld [vmem:[%s256 + $0x18] sm:$0xf]
      %v776 = vld [vmem:[%s256 + $0x1c] sm:$0xf]
      %v777 = vld [vmem:[%s256 + $0x20] sm:$0x1]
      %v778 = vld [vmem:[%s256 + $0x24] sm:$0xf]
      %v779 = vld [vmem:[%s256 + $0x28] sm:$0xf]
      %v780 = vld [vmem:[%s256 + $0x2c] sm:$0x1]
      %v781 = vld [vmem:[%s256 + $0x30] sm:$0xf]
      %v782 = vld [vmem:[%s256 + $0x34] sm:$0xf]
      %v783 = vld [vmem:[%s256 + $0x38] sm:$0x1]
      %v784 = vld [vmem:[%s256 + $0x3c] sm:$0xf]
      %v785 = vld [vmem:[%s256 + $0x40] sm:$0xf]
      %v786 = vld [vmem:[%s256 + $0x44] sm:$0x1]
      %v787 = vld [vmem:[%s256 + $0x48] sm:$0xf]
      %v788 = vld [vmem:[%s256 + $0x4c] sm:$0xf]
      %v789 = vld [vmem:[%s256 + $0x50] sm:$0x1]
      %v790 = vld [vmem:[%s256 + $0x54] sm:$0xf]
      %v791 = vld [vmem:[%s256 + $0x58] sm:$0xf]
      %v792 = vld [vmem:[%s256 + $0x5c] sm:$0x1]
      %v793 = vld [vmem:[%s256 + $0x60] sm:$0xf]
      %v794 = vld [vmem:[%s256 + $0x64] sm:$0xf]
      %v795 = vld [vmem:[%s256 + $0x68] sm:$0x1]
      %v796 = vld [vmem:[%s256 + $0x6c] sm:$0xf]
      %v797 = vld [vmem:[%s256 + $0x70] sm:$0xf]
      %v798 = vld [vmem:[%s256 + $0x74] sm:$0x1]
      %v799 = vld [vmem:[%s256 + $0x78] sm:$0xf]
      %v800 = vld [vmem:[%s256 + $0x7c] sm:$0xf]
      %v801 = vld [vmem:[%s256 + $0x80] sm:$0x1]
      %v802 = vld [vmem:[%s256 + $0x84] sm:$0xf]
      %v803 = vld [vmem:[%s256 + $0x88] sm:$0xf]
      %v804 = vld [vmem:[%s256 + $0x8c] sm:$0x1]
      %v805 = vld [vmem:[%s256 + $0x90] sm:$0xf]
      %v806 = vld [vmem:[%s256 + $0x94] sm:$0xf]
      %v807 = vld [vmem:[%s256 + $0x98] sm:$0x1]
      %v808 = vld [vmem:[%s256 + $0x9c] sm:$0xf]
      %v809 = vld [vmem:[%s256 + $0xa0] sm:$0xf]
      %v810 = vld [vmem:[%s256 + $0xa4] sm:$0x1]
      %v811 = vld [vmem:[%s256 + $0xa8] sm:$0xf]
      %v812 = vld [vmem:[%s256 + $0xac] sm:$0xf]
      %v813 = vld [vmem:[%s256 + $0xb0] sm:$0x1]
      %v814 = vld [vmem:[%s256 + $0xb4] sm:$0xf]
      %v815 = vld [vmem:[%s256 + $0xb8] sm:$0xf]
      %v816 = vld [vmem:[%s256 + $0xbc] sm:$0x1]
      %vm817 = vsmask.f32 3328
      %vm818 = vsmask.f32 7440
      %vm819 = vmor %vm817, %vm818
      %v821 = vshrl.u32 %v769, 16
      %v823 = vrot.slane %v821, 4
      %v824 = vshll.u32 %v769, 16
      %v826 = vrot.slane %v824, 5
      %v827 = vor.u32 %v823, %v826
      %v828 = vrot.slane %v827, 4
      %v830 = vshll.u32 %v770, 16
      %v832 = vrot.slane %v830, 5
      %v833 = vsel %vm819, %v828, %v832
      %v834 = vshrl.u32 %v770, 16
      %v836 = vrot.slane %v834, 4
      %v837 = vor.u32 %v836, %v832
      %v838 = vrot.slane %v837, 4
      %v840 = vshll.u32 %v771, 16
      %v842 = vrot.slane %v840, 5
      %v843 = vsel %vm819, %v838, %v842
      %v845 = vshrl.u32 %v772, 16
      %v847 = vrot.slane %v845, 4
      %v848 = vshll.u32 %v772, 16
      %v850 = vrot.slane %v848, 5
      %v851 = vor.u32 %v847, %v850
      %v852 = vrot.slane %v851, 4
      %v854 = vshll.u32 %v773, 16
      %v856 = vrot.slane %v854, 5
      %v857 = vsel %vm819, %v852, %v856
      %v858 = vshrl.u32 %v773, 16
      %v860 = vrot.slane %v858, 4
      %v861 = vor.u32 %v860, %v856
      %v862 = vrot.slane %v861, 4
      %v864 = vshll.u32 %v774, 16
      %v866 = vrot.slane %v864, 5
      %v867 = vsel %vm819, %v862, %v866
      %v869 = vshrl.u32 %v775, 16
      %v871 = vrot.slane %v869, 4
      %v872 = vshll.u32 %v775, 16
      %v874 = vrot.slane %v872, 5
      %v875 = vor.u32 %v871, %v874
      %v876 = vrot.slane %v875, 4
      %v878 = vshll.u32 %v776, 16
      %v880 = vrot.slane %v878, 5
      %v881 = vsel %vm819, %v876, %v880
      %v882 = vshrl.u32 %v776, 16
      %v884 = vrot.slane %v882, 4
      %v885 = vor.u32 %v884, %v880
      %v886 = vrot.slane %v885, 4
      %v888 = vshll.u32 %v777, 16
      %v890 = vrot.slane %v888, 5
      %v891 = vsel %vm819, %v886, %v890
      %v893 = vshrl.u32 %v778, 16
      %v895 = vrot.slane %v893, 4
      %v896 = vshll.u32 %v778, 16
      %v898 = vrot.slane %v896, 5
      %v899 = vor.u32 %v895, %v898
      %v900 = vrot.slane %v899, 4
      %v902 = vshll.u32 %v779, 16
      %v904 = vrot.slane %v902, 5
      %v905 = vsel %vm819, %v900, %v904
      %v906 = vshrl.u32 %v779, 16
      %v908 = vrot.slane %v906, 4
      %v909 = vor.u32 %v908, %v904
      %v910 = vrot.slane %v909, 4
      %v912 = vshll.u32 %v780, 16
      %v914 = vrot.slane %v912, 5
      %v915 = vsel %vm819, %v910, %v914
      %v917 = vshrl.u32 %v781, 16
      %v919 = vrot.slane %v917, 4
      %v920 = vshll.u32 %v781, 16
      %v922 = vrot.slane %v920, 5
      %v923 = vor.u32 %v919, %v922
      %v924 = vrot.slane %v923, 4
      %v926 = vshll.u32 %v782, 16
      %v928 = vrot.slane %v926, 5
      %v929 = vsel %vm819, %v924, %v928
      %v930 = vshrl.u32 %v782, 16
      %v932 = vrot.slane %v930, 4
      %v933 = vor.u32 %v932, %v928
      %v934 = vrot.slane %v933, 4
      %v936 = vshll.u32 %v783, 16
      %v938 = vrot.slane %v936, 5
      %v939 = vsel %vm819, %v934, %v938
      %v941 = vshrl.u32 %v784, 16
      %v943 = vrot.slane %v941, 4
      %v944 = vshll.u32 %v784, 16
      %v946 = vrot.slane %v944, 5
      %v947 = vor.u32 %v943, %v946
      %v948 = vrot.slane %v947, 4
      %v950 = vshll.u32 %v785, 16
      %v952 = vrot.slane %v950, 5
      %v953 = vsel %vm819, %v948, %v952
      %v954 = vshrl.u32 %v785, 16
      %v956 = vrot.slane %v954, 4
      %v957 = vor.u32 %v956, %v952
      %v958 = vrot.slane %v957, 4
      %v960 = vshll.u32 %v786, 16
      %v962 = vrot.slane %v960, 5
      %v963 = vsel %vm819, %v958, %v962
      %v965 = vshrl.u32 %v787, 16
      %v967 = vrot.slane %v965, 4
      %v968 = vshll.u32 %v787, 16
      %v970 = vrot.slane %v968, 5
      %v971 = vor.u32 %v967, %v970
      %v972 = vrot.slane %v971, 4
      %v974 = vshll.u32 %v788, 16
      %v976 = vrot.slane %v974, 5
      %v977 = vsel %vm819, %v972, %v976
      %v978 = vshrl.u32 %v788, 16
      %v980 = vrot.slane %v978, 4
      %v981 = vor.u32 %v980, %v976
      %v982 = vrot.slane %v981, 4
      %v984 = vshll.u32 %v789, 16
      %v986 = vrot.slane %v984, 5
      %v987 = vsel %vm819, %v982, %v986
      %v989 = vshrl.u32 %v790, 16
      %v991 = vrot.slane %v989, 4
      %v992 = vshll.u32 %v790, 16
      %v994 = vrot.slane %v992, 5
      %v995 = vor.u32 %v991, %v994
      %v996 = vrot.slane %v995, 4
      %v998 = vshll.u32 %v791, 16
      %v1000 = vrot.slane %v998, 5
      %v1001 = vsel %vm819, %v996, %v1000
      %v1002 = vshrl.u32 %v791, 16
      %v1004 = vrot.slane %v1002, 4
      %v1005 = vor.u32 %v1004, %v1000
      %v1006 = vrot.slane %v1005, 4
      %v1008 = vshll.u32 %v792, 16
      %v1010 = vrot.slane %v1008, 5
      %v1011 = vsel %vm819, %v1006, %v1010
      %v1013 = vshrl.u32 %v793, 16
      %v1015 = vrot.slane %v1013, 4
      %v1016 = vshll.u32 %v793, 16
      %v1018 = vrot.slane %v1016, 5
      %v1019 = vor.u32 %v1015, %v1018
      %v1020 = vrot.slane %v1019, 4
      %v1022 = vshll.u32 %v794, 16
      %v1024 = vrot.slane %v1022, 5
      %v1025 = vsel %vm819, %v1020, %v1024
      %v1026 = vshrl.u32 %v794, 16
      %v1028 = vrot.slane %v1026, 4
      %v1029 = vor.u32 %v1028, %v1024
      %v1030 = vrot.slane %v1029, 4
      %v1032 = vshll.u32 %v795, 16
      %v1034 = vrot.slane %v1032, 5
      %v1035 = vsel %vm819, %v1030, %v1034
      %v1037 = vshrl.u32 %v796, 16
      %v1039 = vrot.slane %v1037, 4
      %v1040 = vshll.u32 %v796, 16
      %v1042 = vrot.slane %v1040, 5
      %v1043 = vor.u32 %v1039, %v1042
      %v1044 = vrot.slane %v1043, 4
      %v1046 = vshll.u32 %v797, 16
      %v1048 = vrot.slane %v1046, 5
      %v1049 = vsel %vm819, %v1044, %v1048
      %v1050 = vshrl.u32 %v797, 16
      %v1052 = vrot.slane %v1050, 4
      %v1053 = vor.u32 %v1052, %v1048
      %v1054 = vrot.slane %v1053, 4
      %v1056 = vshll.u32 %v798, 16
      %v1058 = vrot.slane %v1056, 5
      %v1059 = vsel %vm819, %v1054, %v1058
      %v1061 = vshrl.u32 %v799, 16
      %v1063 = vrot.slane %v1061, 4
      %v1064 = vshll.u32 %v799, 16
      %v1066 = vrot.slane %v1064, 5
      %v1067 = vor.u32 %v1063, %v1066
      %v1068 = vrot.slane %v1067, 4
      %v1070 = vshll.u32 %v800, 16
      %v1072 = vrot.slane %v1070, 5
      %v1073 = vsel %vm819, %v1068, %v1072
      %v1074 = vshrl.u32 %v800, 16
      %v1076 = vrot.slane %v1074, 4
      %v1077 = vor.u32 %v1076, %v1072
      %v1078 = vrot.slane %v1077, 4
      %v1080 = vshll.u32 %v801, 16
      %v1082 = vrot.slane %v1080, 5
      %v1083 = vsel %vm819, %v1078, %v1082
      %v1085 = vshrl.u32 %v802, 16
      %v1087 = vrot.slane %v1085, 4
      %v1088 = vshll.u32 %v802, 16
      %v1090 = vrot.slane %v1088, 5
      %v1091 = vor.u32 %v1087, %v1090
      %v1092 = vrot.slane %v1091, 4
      %v1094 = vshll.u32 %v803, 16
      %v1096 = vrot.slane %v1094, 5
      %v1097 = vsel %vm819, %v1092, %v1096
      %v1098 = vshrl.u32 %v803, 16
      %v1100 = vrot.slane %v1098, 4
      %v1101 = vor.u32 %v1100, %v1096
      %v1102 = vrot.slane %v1101, 4
      %v1104 = vshll.u32 %v804, 16
      %v1106 = vrot.slane %v1104, 5
      %v1107 = vsel %vm819, %v1102, %v1106
      %v1109 = vshrl.u32 %v805, 16
      %v1111 = vrot.slane %v1109, 4
      %v1112 = vshll.u32 %v805, 16
      %v1114 = vrot.slane %v1112, 5
      %v1115 = vor.u32 %v1111, %v1114
      %v1116 = vrot.slane %v1115, 4
      %v1118 = vshll.u32 %v806, 16
      %v1120 = vrot.slane %v1118, 5
      %v1121 = vsel %vm819, %v1116, %v1120
      %v1122 = vshrl.u32 %v806, 16
      %v1124 = vrot.slane %v1122, 4
      %v1125 = vor.u32 %v1124, %v1120
      %v1126 = vrot.slane %v1125, 4
      %v1128 = vshll.u32 %v807, 16
      %v1130 = vrot.slane %v1128, 5
      %v1131 = vsel %vm819, %v1126, %v1130
      %v1133 = vshrl.u32 %v808, 16
      %v1135 = vrot.slane %v1133, 4
      %v1136 = vshll.u32 %v808, 16
      %v1138 = vrot.slane %v1136, 5
      %v1139 = vor.u32 %v1135, %v1138
      %v1140 = vrot.slane %v1139, 4
      %v1142 = vshll.u32 %v809, 16
      %v1144 = vrot.slane %v1142, 5
      %v1145 = vsel %vm819, %v1140, %v1144
      %v1146 = vshrl.u32 %v809, 16
      %v1148 = vrot.slane %v1146, 4
      %v1149 = vor.u32 %v1148, %v1144
      %v1150 = vrot.slane %v1149, 4
      %v1152 = vshll.u32 %v810, 16
      %v1154 = vrot.slane %v1152, 5
      %v1155 = vsel %vm819, %v1150, %v1154
      %v1157 = vshrl.u32 %v811, 16
      %v1159 = vrot.slane %v1157, 4
      %v1160 = vshll.u32 %v811, 16
      %v1162 = vrot.slane %v1160, 5
      %v1163 = vor.u32 %v1159, %v1162
      %v1164 = vrot.slane %v1163, 4
      %v1166 = vshll.u32 %v812, 16
      %v1168 = vrot.slane %v1166, 5
      %v1169 = vsel %vm819, %v1164, %v1168
      %v1170 = vshrl.u32 %v812, 16
      %v1172 = vrot.slane %v1170, 4
      %v1173 = vor.u32 %v1172, %v1168
      %v1174 = vrot.slane %v1173, 4
      %v1176 = vshll.u32 %v813, 16
      %v1178 = vrot.slane %v1176, 5
      %v1179 = vsel %vm819, %v1174, %v1178
      %v1181 = vshrl.u32 %v814, 16
      %v1183 = vrot.slane %v1181, 4
      %v1184 = vshll.u32 %v814, 16
      %v1186 = vrot.slane %v1184, 5
      %v1187 = vor.u32 %v1183, %v1186
      %v1188 = vrot.slane %v1187, 4
      %v1190 = vshll.u32 %v815, 16
      %v1192 = vrot.slane %v1190, 5
      %v1193 = vsel %vm819, %v1188, %v1192
      %v1194 = vshrl.u32 %v815, 16
      %v1196 = vrot.slane %v1194, 4
      %v1197 = vor.u32 %v1196, %v1192
      %v1198 = vrot.slane %v1197, 4
      %v1200 = vshll.u32 %v816, 16
      %v1202 = vrot.slane %v1200, 5
      %v1203 = vsel %vm819, %v1198, %v1202
      %s1204 = scalar_lea.vmem %s260, 64
      %v1205 = vld [vmem:[%s1204] sm:$0xf]
      %v1206 = vld [vmem:[%s1204 + $0x4] sm:$0xf]
      %v1207 = vld [vmem:[%s1204 + $0x8] sm:$0xf]
      %v1208 = vld [vmem:[%s1204 + $0xc] sm:$0xf]
      %v1209 = vld [vmem:[%s1204 + $0x10] sm:$0xf]
      %v1210 = vld [vmem:[%s1204 + $0x14] sm:$0xf]
      %v1211 = vld [vmem:[%s1204 + $0x18] sm:$0xf]
      %v1212 = vld [vmem:[%s1204 + $0x1c] sm:$0xf]
      %v1213 = vld [vmem:[%s1204 + $0x20] sm:$0xf]
      %v1214 = vld [vmem:[%s1204 + $0x24] sm:$0xf]
      %v1215 = vld [vmem:[%s1204 + $0x28] sm:$0xf]
      %v1216 = vld [vmem:[%s1204 + $0x2c] sm:$0xf]
      %v1217 = vld [vmem:[%s1204 + $0x30] sm:$0xf]
      %v1218 = vld [vmem:[%s1204 + $0x34] sm:$0xf]
      %v1219 = vld [vmem:[%s1204 + $0x38] sm:$0xf]
      %v1220 = vld [vmem:[%s1204 + $0x3c] sm:$0xf]
      %v1221 = vunpack.c.l.b16 %v833
      %v1222 = vunpack.c.l.b16 %v843
      %v1223 = vunpack.c.l.b16 %v857
      %v1224 = vunpack.c.l.b16 %v867
      %v1225 = vunpack.c.l.b16 %v881
      %v1226 = vunpack.c.l.b16 %v891
      %v1227 = vunpack.c.l.b16 %v905
      %v1228 = vunpack.c.l.b16 %v915
      %v1229 = vunpack.c.l.b16 %v929
      %v1230 = vunpack.c.l.b16 %v939
      %v1231 = vunpack.c.l.b16 %v953
      %v1232 = vunpack.c.l.b16 %v963
      %v1233 = vunpack.c.l.b16 %v977
      %v1234 = vunpack.c.l.b16 %v987
      %v1235 = vunpack.c.l.b16 %v1001
      %v1236 = vunpack.c.l.b16 %v1011
      %v1237 = vunpack.c.l.b16 %v1025
      %v1238 = vunpack.c.l.b16 %v1035
      %v1239 = vunpack.c.l.b16 %v1049
      %v1240 = vunpack.c.l.b16 %v1059
      %v1241 = vunpack.c.l.b16 %v1073
      %v1242 = vunpack.c.l.b16 %v1083
      %v1243 = vunpack.c.l.b16 %v1097
      %v1244 = vunpack.c.l.b16 %v1107
      %v1245 = vunpack.c.l.b16 %v1121
      %v1246 = vunpack.c.l.b16 %v1131
      %v1247 = vunpack.c.l.b16 %v1145
      %v1248 = vunpack.c.l.b16 %v1155
      %v1249 = vunpack.c.l.b16 %v1169
      %v1250 = vunpack.c.l.b16 %v1179
      %v1251 = vunpack.c.l.b16 %v1193
      %v1252 = vunpack.c.l.b16 %v1203
      %v1253 = vpack.c.b16 %v1222, %v1221
      %v1254 = vpack.c.b16 %v1224, %v1223
      %v1255 = vpack.c.b16 %v1226, %v1225
      %v1256 = vpack.c.b16 %v1228, %v1227
      %v1257 = vpack.c.b16 %v1230, %v1229
      %v1258 = vpack.c.b16 %v1232, %v1231
      %v1259 = vpack.c.b16 %v1234, %v1233
      %v1260 = vpack.c.b16 %v1236, %v1235
      %v1261 = vpack.c.b16 %v1238, %v1237
      %v1262 = vpack.c.b16 %v1240, %v1239
      %v1263 = vpack.c.b16 %v1242, %v1241
      %v1264 = vpack.c.b16 %v1244, %v1243
      %v1265 = vpack.c.b16 %v1246, %v1245
      %v1266 = vpack.c.b16 %v1248, %v1247
      %v1267 = vpack.c.b16 %v1250, %v1249
      %v1268 = vpack.c.b16 %v1252, %v1251
      %v1301 = vunpack.c.l.b16 %v1205
      %v1302 = vunpack.c.l.b16 %v1206
      %v1303 = vunpack.c.l.b16 %v1207
      %v1304 = vunpack.c.l.b16 %v1208
      %v1305 = vunpack.c.l.b16 %v1209
      %v1306 = vunpack.c.l.b16 %v1210
      %v1307 = vunpack.c.l.b16 %v1211
      %v1308 = vunpack.c.l.b16 %v1212
      %v1309 = vunpack.c.l.b16 %v1213
      %v1310 = vunpack.c.l.b16 %v1214
      %v1311 = vunpack.c.l.b16 %v1215
      %v1312 = vunpack.c.l.b16 %v1216
      %v1313 = vunpack.c.l.b16 %v1217
      %v1314 = vunpack.c.l.b16 %v1218
      %v1315 = vunpack.c.l.b16 %v1219
      %v1316 = vunpack.c.l.b16 %v1220
      %v1317 = vpack.c.b16 %v1302, %v1301
      %v1318 = vpack.c.b16 %v1304, %v1303
      %v1319 = vpack.c.b16 %v1306, %v1305
      %v1320 = vpack.c.b16 %v1308, %v1307
      %v1321 = vpack.c.b16 %v1310, %v1309
      %v1322 = vpack.c.b16 %v1312, %v1311
      %v1323 = vpack.c.b16 %v1314, %v1313
      %v1324 = vpack.c.b16 %v1316, %v1315
      %1333 = vmatprep.subr.bf16.mxu0 0
      %1334 = vmatpush1.bf16.msra.mxu0 %v1324
      %1335 = vmatprep.subr.bf16.mxu0 0
      %1336 = vmatpush1.bf16.msra.mxu0 %v1323
      %1337 = vmatprep.subr.bf16.mxu0 0
      %1338 = vmatpush1.bf16.msra.mxu0 %v1322
      %1339 = vmatprep.subr.bf16.mxu0 0
      %1340 = vmatpush1.bf16.msra.mxu0 %v1321
      %1341 = vmatprep.subr.bf16.mxu0 0
      %1342 = vmatpush1.bf16.msra.mxu0 %v1320
      %1343 = vmatprep.subr.bf16.mxu0 0
      %1344 = vmatpush1.bf16.msra.mxu0 %v1319
      %1345 = vmatprep.subr.bf16.mxu0 0
      %1346 = vmatpush1.bf16.msra.mxu0 %v1318
      %1347 = vmatprep.subr.bf16.mxu0 0
      %1348 = vmatpush1.bf16.msra.mxu0 %v1317
      %1349 = vmatprep.subr.bf16.mxu0 0
      %1350 = vmatpush2.bf16.msra.mxu0 0
      %1351 = vmatprep.subr.bf16.mxu0 0
      %1352 = vmatpush2.bf16.msra.mxu0 0
      %1353 = vmatprep.subr.bf16.mxu0 0
      %1354 = vmatpush2.bf16.msra.mxu0 0
      %1355 = vmatprep.subr.bf16.mxu0 0
      %1356 = vmatpush2.bf16.msra.mxu0 0
      %1357 = vmatprep.subr.bf16.mxu0 0
      %1358 = vmatpush2.bf16.msra.mxu0 0
      %1359 = vmatprep.subr.bf16.mxu0 0
      %1360 = vmatpush2.bf16.msra.mxu0 0
      %1361 = vmatprep.subr.bf16.mxu0 0
      %1362 = vmatpush2.bf16.msra.mxu0 0
      %1363 = vmatprep.subr.bf16.mxu0 0
      %1364 = vmatpush2.bf16.msra.mxu0 0
      %1365 = vmatprep.mubr.bf16.mxu0 0
      %1366 = vmatmul.mubr.bf16.gmra.mxu0 %v1253
      %v1367 = vpop.f32.mrf.mxu0
      %v1368 = vadd.f32 0.0, %v1367
      %v1369 = vpop.f32.mrf.mxu0
      %v1370 = vpop.f32.mrf.mxu0
      %v1371 = vadd.f32 0.0, %v1370
      %v1372 = vpop.f32.mrf.mxu0
      %1373 = vmatprep.mubr.bf16.mxu0 0
      %1374 = vmatmul.mubr.bf16.gmra.mxu0 %v1254
      %v1375 = vpop.f32.mrf.mxu0
      %v1376 = vadd.f32 0.0, %v1375
      %v1377 = vpop.f32.mrf.mxu0
      %v1378 = vpop.f32.mrf.mxu0
      %v1379 = vadd.f32 0.0, %v1378
      %v1380 = vpop.f32.mrf.mxu0
      %1381 = vmatprep.mubr.bf16.mxu0 0
      %1382 = vmatmul.mubr.bf16.gmra.mxu0 %v1255
      %v1383 = vpop.f32.mrf.mxu0
      %v1384 = vadd.f32 0.0, %v1383
      %v1385 = vpop.f32.mrf.mxu0
      %v1386 = vpop.f32.mrf.mxu0
      %v1387 = vadd.f32 0.0, %v1386
      %v1388 = vpop.f32.mrf.mxu0
      %1389 = vmatprep.mubr.bf16.mxu0 0
      %1390 = vmatmul.mubr.bf16.gmra.mxu0 %v1256
      %v1391 = vpop.f32.mrf.mxu0
      %v1392 = vadd.f32 0.0, %v1391
      %v1393 = vpop.f32.mrf.mxu0
      %v1394 = vpop.f32.mrf.mxu0
      %v1395 = vadd.f32 0.0, %v1394
      %v1396 = vpop.f32.mrf.mxu0
      %1397 = vmatprep.mubr.bf16.mxu0 0
      %1398 = vmatmul.mubr.bf16.gmra.mxu0 %v1257
      %v1399 = vpop.f32.mrf.mxu0
      %v1400 = vadd.f32 0.0, %v1399
      %v1401 = vpop.f32.mrf.mxu0
      %v1402 = vpop.f32.mrf.mxu0
      %v1403 = vadd.f32 0.0, %v1402
      %v1404 = vpop.f32.mrf.mxu0
      %1405 = vmatprep.mubr.bf16.mxu0 0
      %1406 = vmatmul.mubr.bf16.gmra.mxu0 %v1258
      %v1407 = vpop.f32.mrf.mxu0
      %v1408 = vadd.f32 0.0, %v1407
      %v1409 = vpop.f32.mrf.mxu0
      %v1410 = vpop.f32.mrf.mxu0
      %v1411 = vadd.f32 0.0, %v1410
      %v1412 = vpop.f32.mrf.mxu0
      %1413 = vmatprep.mubr.bf16.mxu0 0
      %1414 = vmatmul.mubr.bf16.gmra.mxu0 %v1259
      %v1415 = vpop.f32.mrf.mxu0
      %v1416 = vadd.f32 0.0, %v1415
      %v1417 = vpop.f32.mrf.mxu0
      %v1418 = vpop.f32.mrf.mxu0
      %v1419 = vadd.f32 0.0, %v1418
      %v1420 = vpop.f32.mrf.mxu0
      %1421 = vmatprep.mubr.bf16.mxu0 0
      %1422 = vmatmul.mubr.bf16.gmra.mxu0 %v1260
      %v1423 = vpop.f32.mrf.mxu0
      %v1424 = vadd.f32 0.0, %v1423
      %v1425 = vpop.f32.mrf.mxu0
      %v1426 = vpop.f32.mrf.mxu0
      %v1427 = vadd.f32 0.0, %v1426
      %v1428 = vpop.f32.mrf.mxu0
      %1429 = vmatprep.mubr.bf16.mxu0 0
      %1430 = vmatmul.mubr.bf16.gmra.mxu0 %v1261
      %v1431 = vpop.f32.mrf.mxu0
      %v1432 = vadd.f32 0.0, %v1431
      %v1433 = vpop.f32.mrf.mxu0
      %v1434 = vpop.f32.mrf.mxu0
      %v1435 = vadd.f32 0.0, %v1434
      %v1436 = vpop.f32.mrf.mxu0
      %1437 = vmatprep.mubr.bf16.mxu0 0
      %1438 = vmatmul.mubr.bf16.gmra.mxu0 %v1262
      %v1439 = vpop.f32.mrf.mxu0
      %v1440 = vadd.f32 0.0, %v1439
      %v1441 = vpop.f32.mrf.mxu0
      %v1442 = vpop.f32.mrf.mxu0
      %v1443 = vadd.f32 0.0, %v1442
      %v1444 = vpop.f32.mrf.mxu0
      %1445 = vmatprep.mubr.bf16.mxu0 0
      %1446 = vmatmul.mubr.bf16.gmra.mxu0 %v1263
      %v1447 = vpop.f32.mrf.mxu0
      %v1448 = vadd.f32 0.0, %v1447
      %v1449 = vpop.f32.mrf.mxu0
      %v1450 = vpop.f32.mrf.mxu0
      %v1451 = vadd.f32 0.0, %v1450
      %v1452 = vpop.f32.mrf.mxu0
      %1453 = vmatprep.mubr.bf16.mxu0 0
      %1454 = vmatmul.mubr.bf16.gmra.mxu0 %v1264
      %v1455 = vpop.f32.mrf.mxu0
      %v1456 = vadd.f32 0.0, %v1455
      %v1457 = vpop.f32.mrf.mxu0
      %v1458 = vpop.f32.mrf.mxu0
      %v1459 = vadd.f32 0.0, %v1458
      %v1460 = vpop.f32.mrf.mxu0
      %1461 = vmatprep.mubr.bf16.mxu0 0
      %1462 = vmatmul.mubr.bf16.gmra.mxu0 %v1265
      %v1463 = vpop.f32.mrf.mxu0
      %v1464 = vadd.f32 0.0, %v1463
      %v1465 = vpop.f32.mrf.mxu0
      %v1466 = vpop.f32.mrf.mxu0
      %v1467 = vadd.f32 0.0, %v1466
      %v1468 = vpop.f32.mrf.mxu0
      %1469 = vmatprep.mubr.bf16.mxu0 0
      %1470 = vmatmul.mubr.bf16.gmra.mxu0 %v1266
      %v1471 = vpop.f32.mrf.mxu0
      %v1472 = vadd.f32 0.0, %v1471
      %v1473 = vpop.f32.mrf.mxu0
      %v1474 = vpop.f32.mrf.mxu0
      %v1475 = vadd.f32 0.0, %v1474
      %v1476 = vpop.f32.mrf.mxu0
      %1477 = vmatprep.mubr.bf16.mxu0 0
      %1478 = vmatmul.mubr.bf16.gmra.mxu0 %v1267
      %v1479 = vpop.f32.mrf.mxu0
      %v1480 = vadd.f32 0.0, %v1479
      %v1481 = vpop.f32.mrf.mxu0
      %v1482 = vpop.f32.mrf.mxu0
      %v1483 = vadd.f32 0.0, %v1482
      %v1484 = vpop.f32.mrf.mxu0
      %1485 = vmatprep.mubr.bf16.mxu0 0
      %1486 = vmatmul.mubr.bf16.gmra.mxu0 %v1268
      %v1487 = vpop.f32.mrf.mxu0
      %v1488 = vadd.f32 0.0, %v1487
      %v1489 = vpop.f32.mrf.mxu0
      %v1490 = vpop.f32.mrf.mxu0
      %v1491 = vadd.f32 0.0, %v1490
      %v1492 = vpop.f32.mrf.mxu0
      %1493 = vdwg.mxu0
      %v1494 = vadd.f32 %v737, %v1368
      %v1495 = vadd.f32 %v738, %v1371
      %v1496 = vadd.f32 %v739, %v1376
      %v1497 = vadd.f32 %v740, %v1379
      %v1498 = vadd.f32 %v741, %v1384
      %v1499 = vadd.f32 %v742, %v1387
      %v1500 = vadd.f32 %v743, %v1392
      %v1501 = vadd.f32 %v744, %v1395
      %v1502 = vadd.f32 %v745, %v1400
      %v1503 = vadd.f32 %v746, %v1403
      %v1504 = vadd.f32 %v747, %v1408
      %v1505 = vadd.f32 %v748, %v1411
      %v1506 = vadd.f32 %v749, %v1416
      %v1507 = vadd.f32 %v750, %v1419
      %v1508 = vadd.f32 %v751, %v1424
      %v1509 = vadd.f32 %v752, %v1427
      %v1510 = vadd.f32 %v753, %v1432
      %v1511 = vadd.f32 %v754, %v1435
      %v1512 = vadd.f32 %v755, %v1440
      %v1513 = vadd.f32 %v756, %v1443
      %v1514 = vadd.f32 %v757, %v1448
      %v1515 = vadd.f32 %v758, %v1451
      %v1516 = vadd.f32 %v759, %v1456
      %v1517 = vadd.f32 %v760, %v1459
      %v1518 = vadd.f32 %v761, %v1464
      %v1519 = vadd.f32 %v762, %v1467
      %v1520 = vadd.f32 %v763, %v1472
      %v1521 = vadd.f32 %v764, %v1475
      %v1522 = vadd.f32 %v765, %v1480
      %v1523 = vadd.f32 %v766, %v1483
      %v1524 = vadd.f32 %v767, %v1488
      %v1525 = vadd.f32 %v768, %v1491
      %v1526 = vld [vmem:[%s256] sm:$0xe]
      %v1527 = vld [vmem:[%s256 + $0xc] sm:$0xe]
      %v1528 = vld [vmem:[%s256 + $0x18] sm:$0xe]
      %v1529 = vld [vmem:[%s256 + $0x24] sm:$0xe]
      %v1530 = vld [vmem:[%s256 + $0x30] sm:$0xe]
      %v1531 = vld [vmem:[%s256 + $0x3c] sm:$0xe]
      %v1532 = vld [vmem:[%s256 + $0x48] sm:$0xe]
      %v1533 = vld [vmem:[%s256 + $0x54] sm:$0xe]
      %v1534 = vld [vmem:[%s256 + $0x60] sm:$0xe]
      %v1535 = vld [vmem:[%s256 + $0x6c] sm:$0xe]
      %v1536 = vld [vmem:[%s256 + $0x78] sm:$0xe]
      %v1537 = vld [vmem:[%s256 + $0x84] sm:$0xe]
      %v1538 = vld [vmem:[%s256 + $0x90] sm:$0xe]
      %v1539 = vld [vmem:[%s256 + $0x9c] sm:$0xe]
      %v1540 = vld [vmem:[%s256 + $0xa8] sm:$0xe]
      %v1541 = vld [vmem:[%s256 + $0xb4] sm:$0xe]
      %vm1590 = vcmask 1042432
      %vm1591 = vcmask 1046532
      %vm1592 = vmor %vm1590, %vm1591
      %v1593 = vrot.slane %v1526, 5
      %v1594 = vrot.slane %v1593, 4
      %v1595 = vrot.slane %v770, 5
      %v1596 = vsel %vm1592, %v1594, %v1595
      %v1597 = vrot.slane %v1595, 4
      %v1598 = vrot.slane %v771, 5
      %v1599 = vsel %vm1592, %v1597, %v1598
      %v1600 = vrot.slane %v1527, 5
      %v1601 = vrot.slane %v1600, 4
      %v1602 = vrot.slane %v773, 5
      %v1603 = vsel %vm1592, %v1601, %v1602
      %v1604 = vrot.slane %v1602, 4
      %v1605 = vrot.slane %v774, 5
      %v1606 = vsel %vm1592, %v1604, %v1605
      %v1607 = vrot.slane %v1528, 5
      %v1608 = vrot.slane %v1607, 4
      %v1609 = vrot.slane %v776, 5
      %v1610 = vsel %vm1592, %v1608, %v1609
      %v1611 = vrot.slane %v1609, 4
      %v1612 = vrot.slane %v777, 5
      %v1613 = vsel %vm1592, %v1611, %v1612
      %v1614 = vrot.slane %v1529, 5
      %v1615 = vrot.slane %v1614, 4
      %v1616 = vrot.slane %v779, 5
      %v1617 = vsel %vm1592, %v1615, %v1616
      %v1618 = vrot.slane %v1616, 4
      %v1619 = vrot.slane %v780, 5
      %v1620 = vsel %vm1592, %v1618, %v1619
      %v1621 = vrot.slane %v1530, 5
      %v1622 = vrot.slane %v1621, 4
      %v1623 = vrot.slane %v782, 5
      %v1624 = vsel %vm1592, %v1622, %v1623
      %v1625 = vrot.slane %v1623, 4
      %v1626 = vrot.slane %v783, 5
      %v1627 = vsel %vm1592, %v1625, %v1626
      %v1628 = vrot.slane %v1531, 5
      %v1629 = vrot.slane %v1628, 4
      %v1630 = vrot.slane %v785, 5
      %v1631 = vsel %vm1592, %v1629, %v1630
      %v1632 = vrot.slane %v1630, 4
      %v1633 = vrot.slane %v786, 5
      %v1634 = vsel %vm1592, %v1632, %v1633
      %v1635 = vrot.slane %v1532, 5
      %v1636 = vrot.slane %v1635, 4
      %v1637 = vrot.slane %v788, 5
      %v1638 = vsel %vm1592, %v1636, %v1637
      %v1639 = vrot.slane %v1637, 4
      %v1640 = vrot.slane %v789, 5
      %v1641 = vsel %vm1592, %v1639, %v1640
      %v1642 = vrot.slane %v1533, 5
      %v1643 = vrot.slane %v1642, 4
      %v1644 = vrot.slane %v791, 5
      %v1645 = vsel %vm1592, %v1643, %v1644
      %v1646 = vrot.slane %v1644, 4
      %v1647 = vrot.slane %v792, 5
      %v1648 = vsel %vm1592, %v1646, %v1647
      %v1649 = vrot.slane %v1534, 5
      %v1650 = vrot.slane %v1649, 4
      %v1651 = vrot.slane %v794, 5
      %v1652 = vsel %vm1592, %v1650, %v1651
      %v1653 = vrot.slane %v1651, 4
      %v1654 = vrot.slane %v795, 5
      %v1655 = vsel %vm1592, %v1653, %v1654
      %v1656 = vrot.slane %v1535, 5
      %v1657 = vrot.slane %v1656, 4
      %v1658 = vrot.slane %v797, 5
      %v1659 = vsel %vm1592, %v1657, %v1658
      %v1660 = vrot.slane %v1658, 4
      %v1661 = vrot.slane %v798, 5
      %v1662 = vsel %vm1592, %v1660, %v1661
      %v1663 = vrot.slane %v1536, 5
      %v1664 = vrot.slane %v1663, 4
      %v1665 = vrot.slane %v800, 5
      %v1666 = vsel %vm1592, %v1664, %v1665
      %v1667 = vrot.slane %v1665, 4
      %v1668 = vrot.slane %v801, 5
      %v1669 = vsel %vm1592, %v1667, %v1668
      %v1670 = vrot.slane %v1537, 5
      %v1671 = vrot.slane %v1670, 4
      %v1672 = vrot.slane %v803, 5
      %v1673 = vsel %vm1592, %v1671, %v1672
      %v1674 = vrot.slane %v1672, 4
      %v1675 = vrot.slane %v804, 5
      %v1676 = vsel %vm1592, %v1674, %v1675
      %v1677 = vrot.slane %v1538, 5
      %v1678 = vrot.slane %v1677, 4
      %v1679 = vrot.slane %v806, 5
      %v1680 = vsel %vm1592, %v1678, %v1679
      %v1681 = vrot.slane %v1679, 4
      %v1682 = vrot.slane %v807, 5
      %v1683 = vsel %vm1592, %v1681, %v1682
      %v1684 = vrot.slane %v1539, 5
      %v1685 = vrot.slane %v1684, 4
      %v1686 = vrot.slane %v809, 5
      %v1687 = vsel %vm1592, %v1685, %v1686
      %v1688 = vrot.slane %v1686, 4
      %v1689 = vrot.slane %v810, 5
      %v1690 = vsel %vm1592, %v1688, %v1689
      %v1691 = vrot.slane %v1540, 5
      %v1692 = vrot.slane %v1691, 4
      %v1693 = vrot.slane %v812, 5
      %v1694 = vsel %vm1592, %v1692, %v1693
      %v1695 = vrot.slane %v1693, 4
      %v1696 = vrot.slane %v813, 5
      %v1697 = vsel %vm1592, %v1695, %v1696
      %v1698 = vrot.slane %v1541, 5
      %v1699 = vrot.slane %v1698, 4
      %v1700 = vrot.slane %v815, 5
      %v1701 = vsel %vm1592, %v1699, %v1700
      %v1702 = vrot.slane %v1700, 4
      %v1703 = vrot.slane %v816, 5
      %v1704 = vsel %vm1592, %v1702, %v1703
      %s1705 = scalar_lea.vmem %s260, 128
      %v1706 = vld [vmem:[%s1705] sm:$0xf]
      %v1707 = vld [vmem:[%s1705 + $0x4] sm:$0xf]
      %v1708 = vld [vmem:[%s1705 + $0x8] sm:$0xf]
      %v1709 = vld [vmem:[%s1705 + $0xc] sm:$0xf]
      %v1710 = vld [vmem:[%s1705 + $0x10] sm:$0xf]
      %v1711 = vld [vmem:[%s1705 + $0x14] sm:$0xf]
      %v1712 = vld [vmem:[%s1705 + $0x18] sm:$0xf]
      %v1713 = vld [vmem:[%s1705 + $0x1c] sm:$0xf]
      %v1714 = vld [vmem:[%s1705 + $0x20] sm:$0xf]
      %v1715 = vld [vmem:[%s1705 + $0x24] sm:$0xf]
      %v1716 = vld [vmem:[%s1705 + $0x28] sm:$0xf]
      %v1717 = vld [vmem:[%s1705 + $0x2c] sm:$0xf]
      %v1718 = vld [vmem:[%s1705 + $0x30] sm:$0xf]
      %v1719 = vld [vmem:[%s1705 + $0x34] sm:$0xf]
      %v1720 = vld [vmem:[%s1705 + $0x38] sm:$0xf]
      %v1721 = vld [vmem:[%s1705 + $0x3c] sm:$0xf]
      %v1722 = vunpack.c.l.b16 %v1596
      %v1723 = vunpack.c.l.b16 %v1599
      %v1724 = vunpack.c.l.b16 %v1603
      %v1725 = vunpack.c.l.b16 %v1606
      %v1726 = vunpack.c.l.b16 %v1610
      %v1727 = vunpack.c.l.b16 %v1613
      %v1728 = vunpack.c.l.b16 %v1617
      %v1729 = vunpack.c.l.b16 %v1620
      %v1730 = vunpack.c.l.b16 %v1624
      %v1731 = vunpack.c.l.b16 %v1627
      %v1732 = vunpack.c.l.b16 %v1631
      %v1733 = vunpack.c.l.b16 %v1634
      %v1734 = vunpack.c.l.b16 %v1638
      %v1735 = vunpack.c.l.b16 %v1641
      %v1736 = vunpack.c.l.b16 %v1645
      %v1737 = vunpack.c.l.b16 %v1648
      %v1738 = vunpack.c.l.b16 %v1652
      %v1739 = vunpack.c.l.b16 %v1655
      %v1740 = vunpack.c.l.b16 %v1659
      %v1741 = vunpack.c.l.b16 %v1662
      %v1742 = vunpack.c.l.b16 %v1666
      %v1743 = vunpack.c.l.b16 %v1669
      %v1744 = vunpack.c.l.b16 %v1673
      %v1745 = vunpack.c.l.b16 %v1676
      %v1746 = vunpack.c.l.b16 %v1680
      %v1747 = vunpack.c.l.b16 %v1683
      %v1748 = vunpack.c.l.b16 %v1687
      %v1749 = vunpack.c.l.b16 %v1690
      %v1750 = vunpack.c.l.b16 %v1694
      %v1751 = vunpack.c.l.b16 %v1697
      %v1752 = vunpack.c.l.b16 %v1701
      %v1753 = vunpack.c.l.b16 %v1704
      %v1754 = vpack.c.b16 %v1723, %v1722
      %v1755 = vpack.c.b16 %v1725, %v1724
      %v1756 = vpack.c.b16 %v1727, %v1726
      %v1757 = vpack.c.b16 %v1729, %v1728
      %v1758 = vpack.c.b16 %v1731, %v1730
      %v1759 = vpack.c.b16 %v1733, %v1732
      %v1760 = vpack.c.b16 %v1735, %v1734
      %v1761 = vpack.c.b16 %v1737, %v1736
      %v1762 = vpack.c.b16 %v1739, %v1738
      %v1763 = vpack.c.b16 %v1741, %v1740
      %v1764 = vpack.c.b16 %v1743, %v1742
      %v1765 = vpack.c.b16 %v1745, %v1744
      %v1766 = vpack.c.b16 %v1747, %v1746
      %v1767 = vpack.c.b16 %v1749, %v1748
      %v1768 = vpack.c.b16 %v1751, %v1750
      %v1769 = vpack.c.b16 %v1753, %v1752
      %v1802 = vunpack.c.l.b16 %v1706
      %v1803 = vunpack.c.l.b16 %v1707
      %v1804 = vunpack.c.l.b16 %v1708
      %v1805 = vunpack.c.l.b16 %v1709
      %v1806 = vunpack.c.l.b16 %v1710
      %v1807 = vunpack.c.l.b16 %v1711
      %v1808 = vunpack.c.l.b16 %v1712
      %v1809 = vunpack.c.l.b16 %v1713
      %v1810 = vunpack.c.l.b16 %v1714
      %v1811 = vunpack.c.l.b16 %v1715
      %v1812 = vunpack.c.l.b16 %v1716
      %v1813 = vunpack.c.l.b16 %v1717
      %v1814 = vunpack.c.l.b16 %v1718
      %v1815 = vunpack.c.l.b16 %v1719
      %v1816 = vunpack.c.l.b16 %v1720
      %v1817 = vunpack.c.l.b16 %v1721
      %v1818 = vpack.c.b16 %v1803, %v1802
      %v1819 = vpack.c.b16 %v1805, %v1804
      %v1820 = vpack.c.b16 %v1807, %v1806
      %v1821 = vpack.c.b16 %v1809, %v1808
      %v1822 = vpack.c.b16 %v1811, %v1810
      %v1823 = vpack.c.b16 %v1813, %v1812
      %v1824 = vpack.c.b16 %v1815, %v1814
      %v1825 = vpack.c.b16 %v1817, %v1816
      %1834 = vmatprep.subr.bf16.mxu0 0
      %1835 = vmatpush1.bf16.msra.mxu0 %v1825
      %1836 = vmatprep.subr.bf16.mxu0 0
      %1837 = vmatpush1.bf16.msra.mxu0 %v1824
      %1838 = vmatprep.subr.bf16.mxu0 0
      %1839 = vmatpush1.bf16.msra.mxu0 %v1823
      %1840 = vmatprep.subr.bf16.mxu0 0
      %1841 = vmatpush1.bf16.msra.mxu0 %v1822
      %1842 = vmatprep.subr.bf16.mxu0 0
      %1843 = vmatpush1.bf16.msra.mxu0 %v1821
      %1844 = vmatprep.subr.bf16.mxu0 0
      %1845 = vmatpush1.bf16.msra.mxu0 %v1820
      %1846 = vmatprep.subr.bf16.mxu0 0
      %1847 = vmatpush1.bf16.msra.mxu0 %v1819
      %1848 = vmatprep.subr.bf16.mxu0 0
      %1849 = vmatpush1.bf16.msra.mxu0 %v1818
      %1850 = vmatprep.subr.bf16.mxu0 0
      %1851 = vmatpush2.bf16.msra.mxu0 0
      %1852 = vmatprep.subr.bf16.mxu0 0
      %1853 = vmatpush2.bf16.msra.mxu0 0
      %1854 = vmatprep.subr.bf16.mxu0 0
      %1855 = vmatpush2.bf16.msra.mxu0 0
      %1856 = vmatprep.subr.bf16.mxu0 0
      %1857 = vmatpush2.bf16.msra.mxu0 0
      %1858 = vmatprep.subr.bf16.mxu0 0
      %1859 = vmatpush2.bf16.msra.mxu0 0
      %1860 = vmatprep.subr.bf16.mxu0 0
      %1861 = vmatpush2.bf16.msra.mxu0 0
      %1862 = vmatprep.subr.bf16.mxu0 0
      %1863 = vmatpush2.bf16.msra.mxu0 0
      %1864 = vmatprep.subr.bf16.mxu0 0
      %1865 = vmatpush2.bf16.msra.mxu0 0
      %1866 = vmatprep.mubr.bf16.mxu0 0
      %1867 = vmatmul.mubr.bf16.gmra.mxu0 %v1754
      %v1868 = vpop.f32.mrf.mxu0
      %v1869 = vadd.f32 0.0, %v1868
      %v1870 = vpop.f32.mrf.mxu0
      %v1871 = vpop.f32.mrf.mxu0
      %v1872 = vadd.f32 0.0, %v1871
      %v1873 = vpop.f32.mrf.mxu0
      %1874 = vmatprep.mubr.bf16.mxu0 0
      %1875 = vmatmul.mubr.bf16.gmra.mxu0 %v1755
      %v1876 = vpop.f32.mrf.mxu0
      %v1877 = vadd.f32 0.0, %v1876
      %v1878 = vpop.f32.mrf.mxu0
      %v1879 = vpop.f32.mrf.mxu0
      %v1880 = vadd.f32 0.0, %v1879
      %v1881 = vpop.f32.mrf.mxu0
      %1882 = vmatprep.mubr.bf16.mxu0 0
      %1883 = vmatmul.mubr.bf16.gmra.mxu0 %v1756
      %v1884 = vpop.f32.mrf.mxu0
      %v1885 = vadd.f32 0.0, %v1884
      %v1886 = vpop.f32.mrf.mxu0
      %v1887 = vpop.f32.mrf.mxu0
      %v1888 = vadd.f32 0.0, %v1887
      %v1889 = vpop.f32.mrf.mxu0
      %1890 = vmatprep.mubr.bf16.mxu0 0
      %1891 = vmatmul.mubr.bf16.gmra.mxu0 %v1757
      %v1892 = vpop.f32.mrf.mxu0
      %v1893 = vadd.f32 0.0, %v1892
      %v1894 = vpop.f32.mrf.mxu0
      %v1895 = vpop.f32.mrf.mxu0
      %v1896 = vadd.f32 0.0, %v1895
      %v1897 = vpop.f32.mrf.mxu0
      %1898 = vmatprep.mubr.bf16.mxu0 0
      %1899 = vmatmul.mubr.bf16.gmra.mxu0 %v1758
      %v1900 = vpop.f32.mrf.mxu0
      %v1901 = vadd.f32 0.0, %v1900
      %v1902 = vpop.f32.mrf.mxu0
      %v1903 = vpop.f32.mrf.mxu0
      %v1904 = vadd.f32 0.0, %v1903
      %v1905 = vpop.f32.mrf.mxu0
      %1906 = vmatprep.mubr.bf16.mxu0 0
      %1907 = vmatmul.mubr.bf16.gmra.mxu0 %v1759
      %v1908 = vpop.f32.mrf.mxu0
      %v1909 = vadd.f32 0.0, %v1908
      %v1910 = vpop.f32.mrf.mxu0
      %v1911 = vpop.f32.mrf.mxu0
      %v1912 = vadd.f32 0.0, %v1911
      %v1913 = vpop.f32.mrf.mxu0
      %1914 = vmatprep.mubr.bf16.mxu0 0
      %1915 = vmatmul.mubr.bf16.gmra.mxu0 %v1760
      %v1916 = vpop.f32.mrf.mxu0
      %v1917 = vadd.f32 0.0, %v1916
      %v1918 = vpop.f32.mrf.mxu0
      %v1919 = vpop.f32.mrf.mxu0
      %v1920 = vadd.f32 0.0, %v1919
      %v1921 = vpop.f32.mrf.mxu0
      %1922 = vmatprep.mubr.bf16.mxu0 0
      %1923 = vmatmul.mubr.bf16.gmra.mxu0 %v1761
      %v1924 = vpop.f32.mrf.mxu0
      %v1925 = vadd.f32 0.0, %v1924
      %v1926 = vpop.f32.mrf.mxu0
      %v1927 = vpop.f32.mrf.mxu0
      %v1928 = vadd.f32 0.0, %v1927
      %v1929 = vpop.f32.mrf.mxu0
      %1930 = vmatprep.mubr.bf16.mxu0 0
      %1931 = vmatmul.mubr.bf16.gmra.mxu0 %v1762
      %v1932 = vpop.f32.mrf.mxu0
      %v1933 = vadd.f32 0.0, %v1932
      %v1934 = vpop.f32.mrf.mxu0
      %v1935 = vpop.f32.mrf.mxu0
      %v1936 = vadd.f32 0.0, %v1935
      %v1937 = vpop.f32.mrf.mxu0
      %1938 = vmatprep.mubr.bf16.mxu0 0
      %1939 = vmatmul.mubr.bf16.gmra.mxu0 %v1763
      %v1940 = vpop.f32.mrf.mxu0
      %v1941 = vadd.f32 0.0, %v1940
      %v1942 = vpop.f32.mrf.mxu0
      %v1943 = vpop.f32.mrf.mxu0
      %v1944 = vadd.f32 0.0, %v1943
      %v1945 = vpop.f32.mrf.mxu0
      %1946 = vmatprep.mubr.bf16.mxu0 0
      %1947 = vmatmul.mubr.bf16.gmra.mxu0 %v1764
      %v1948 = vpop.f32.mrf.mxu0
      %v1949 = vadd.f32 0.0, %v1948
      %v1950 = vpop.f32.mrf.mxu0
      %v1951 = vpop.f32.mrf.mxu0
      %v1952 = vadd.f32 0.0, %v1951
      %v1953 = vpop.f32.mrf.mxu0
      %1954 = vmatprep.mubr.bf16.mxu0 0
      %1955 = vmatmul.mubr.bf16.gmra.mxu0 %v1765
      %v1956 = vpop.f32.mrf.mxu0
      %v1957 = vadd.f32 0.0, %v1956
      %v1958 = vpop.f32.mrf.mxu0
      %v1959 = vpop.f32.mrf.mxu0
      %v1960 = vadd.f32 0.0, %v1959
      %v1961 = vpop.f32.mrf.mxu0
      %1962 = vmatprep.mubr.bf16.mxu0 0
      %1963 = vmatmul.mubr.bf16.gmra.mxu0 %v1766
      %v1964 = vpop.f32.mrf.mxu0
      %v1965 = vadd.f32 0.0, %v1964
      %v1966 = vpop.f32.mrf.mxu0
      %v1967 = vpop.f32.mrf.mxu0
      %v1968 = vadd.f32 0.0, %v1967
      %v1969 = vpop.f32.mrf.mxu0
      %1970 = vmatprep.mubr.bf16.mxu0 0
      %1971 = vmatmul.mubr.bf16.gmra.mxu0 %v1767
      %v1972 = vpop.f32.mrf.mxu0
      %v1973 = vadd.f32 0.0, %v1972
      %v1974 = vpop.f32.mrf.mxu0
      %v1975 = vpop.f32.mrf.mxu0
      %v1976 = vadd.f32 0.0, %v1975
      %v1977 = vpop.f32.mrf.mxu0
      %1978 = vmatprep.mubr.bf16.mxu0 0
      %1979 = vmatmul.mubr.bf16.gmra.mxu0 %v1768
      %v1980 = vpop.f32.mrf.mxu0
      %v1981 = vadd.f32 0.0, %v1980
      %v1982 = vpop.f32.mrf.mxu0
      %v1983 = vpop.f32.mrf.mxu0
      %v1984 = vadd.f32 0.0, %v1983
      %v1985 = vpop.f32.mrf.mxu0
      %1986 = vmatprep.mubr.bf16.mxu0 0
      %1987 = vmatmul.mubr.bf16.gmra.mxu0 %v1769
      %v1988 = vpop.f32.mrf.mxu0
      %v1989 = vadd.f32 0.0, %v1988
      %v1990 = vpop.f32.mrf.mxu0
      %v1991 = vpop.f32.mrf.mxu0
      %v1992 = vadd.f32 0.0, %v1991
      %v1993 = vpop.f32.mrf.mxu0
      %1994 = vdwg.mxu0
      %v1995 = vadd.f32 %v1494, %v1869
      %v1996 = vadd.f32 %v1495, %v1872
      %v1997 = vadd.f32 %v1496, %v1877
      %v1998 = vadd.f32 %v1497, %v1880
      %v1999 = vadd.f32 %v1498, %v1885
      %v2000 = vadd.f32 %v1499, %v1888
      %v2001 = vadd.f32 %v1500, %v1893
      %v2002 = vadd.f32 %v1501, %v1896
      %v2003 = vadd.f32 %v1502, %v1901
      %v2004 = vadd.f32 %v1503, %v1904
      %v2005 = vadd.f32 %v1504, %v1909
      %v2006 = vadd.f32 %v1505, %v1912
      %v2007 = vadd.f32 %v1506, %v1917
      %v2008 = vadd.f32 %v1507, %v1920
      %v2009 = vadd.f32 %v1508, %v1925
      %v2010 = vadd.f32 %v1509, %v1928
      %v2011 = vadd.f32 %v1510, %v1933
      %v2012 = vadd.f32 %v1511, %v1936
      %v2013 = vadd.f32 %v1512, %v1941
      %v2014 = vadd.f32 %v1513, %v1944
      %v2015 = vadd.f32 %v1514, %v1949
      %v2016 = vadd.f32 %v1515, %v1952
      %v2017 = vadd.f32 %v1516, %v1957
      %v2018 = vadd.f32 %v1517, %v1960
      %v2019 = vadd.f32 %v1518, %v1965
      %v2020 = vadd.f32 %v1519, %v1968
      %v2021 = vadd.f32 %v1520, %v1973
      %v2022 = vadd.f32 %v1521, %v1976
      %v2023 = vadd.f32 %v1522, %v1981
      %v2024 = vadd.f32 %v1523, %v1984
      %v2025 = vadd.f32 %v1524, %v1989
      %v2026 = vadd.f32 %v1525, %v1992
      %s2027 = scalar_lea.vmem %s256, 12
      %v2028 = vld [vmem:[%s2027] sm:$0xf]
      %v2029 = vld [vmem:[%s2027 + $0x4] sm:$0xf]
      %v2030 = vld [vmem:[%s2027 + $0xc] sm:$0xf]
      %v2031 = vld [vmem:[%s2027 + $0x10] sm:$0xf]
      %v2032 = vld [vmem:[%s2027 + $0x18] sm:$0xf]
      %v2033 = vld [vmem:[%s2027 + $0x1c] sm:$0xf]
      %v2034 = vld [vmem:[%s2027 + $0x24] sm:$0xf]
      %v2035 = vld [vmem:[%s2027 + $0x28] sm:$0xf]
      %v2036 = vld [vmem:[%s2027 + $0x30] sm:$0xf]
      %v2037 = vld [vmem:[%s2027 + $0x34] sm:$0xf]
      %v2038 = vld [vmem:[%s2027 + $0x3c] sm:$0xf]
      %v2039 = vld [vmem:[%s2027 + $0x40] sm:$0xf]
      %v2040 = vld [vmem:[%s2027 + $0x48] sm:$0xf]
      %v2041 = vld [vmem:[%s2027 + $0x4c] sm:$0xf]
      %v2042 = vld [vmem:[%s2027 + $0x54] sm:$0xf]
      %v2043 = vld [vmem:[%s2027 + $0x58] sm:$0xf]
      %v2044 = vld [vmem:[%s2027 + $0x60] sm:$0xf]
      %v2045 = vld [vmem:[%s2027 + $0x64] sm:$0xf]
      %v2046 = vld [vmem:[%s2027 + $0x6c] sm:$0xf]
      %v2047 = vld [vmem:[%s2027 + $0x70] sm:$0xf]
      %v2048 = vld [vmem:[%s2027 + $0x78] sm:$0xf]
      %v2049 = vld [vmem:[%s2027 + $0x7c] sm:$0xf]
      %v2050 = vld [vmem:[%s2027 + $0x84] sm:$0xf]
      %v2051 = vld [vmem:[%s2027 + $0x88] sm:$0xf]
      %v2052 = vld [vmem:[%s2027 + $0x90] sm:$0xf]
      %v2053 = vld [vmem:[%s2027 + $0x94] sm:$0xf]
      %v2054 = vld [vmem:[%s2027 + $0x9c] sm:$0xf]
      %v2055 = vld [vmem:[%s2027 + $0xa0] sm:$0xf]
      %v2056 = vld [vmem:[%s2027 + $0xa8] sm:$0xf]
      %v2057 = vld [vmem:[%s2027 + $0xac] sm:$0xf]
      %v2058 = vld [vmem:[%s2027 + $0xb4] sm:$0xf]
      %v2059 = vld [vmem:[%s2027 + $0xb8] sm:$0xf]
      %s2060 = scalar_lea.vmem %s260, 192
      %v2061 = vld [vmem:[%s2060] sm:$0xf]
      %v2062 = vld [vmem:[%s2060 + $0x4] sm:$0xf]
      %v2063 = vld [vmem:[%s2060 + $0x8] sm:$0xf]
      %v2064 = vld [vmem:[%s2060 + $0xc] sm:$0xf]
      %v2065 = vld [vmem:[%s2060 + $0x10] sm:$0xf]
      %v2066 = vld [vmem:[%s2060 + $0x14] sm:$0xf]
      %v2067 = vld [vmem:[%s2060 + $0x18] sm:$0xf]
      %v2068 = vld [vmem:[%s2060 + $0x1c] sm:$0xf]
      %v2069 = vld [vmem:[%s2060 + $0x20] sm:$0xf]
      %v2070 = vld [vmem:[%s2060 + $0x24] sm:$0xf]
      %v2071 = vld [vmem:[%s2060 + $0x28] sm:$0xf]
      %v2072 = vld [vmem:[%s2060 + $0x2c] sm:$0xf]
      %v2073 = vld [vmem:[%s2060 + $0x30] sm:$0xf]
      %v2074 = vld [vmem:[%s2060 + $0x34] sm:$0xf]
      %v2075 = vld [vmem:[%s2060 + $0x38] sm:$0xf]
      %v2076 = vld [vmem:[%s2060 + $0x3c] sm:$0xf]
      %v2109 = vunpack.c.l.b16 %v2028
      %v2110 = vunpack.c.l.b16 %v2029
      %v2111 = vunpack.c.l.b16 %v2030
      %v2112 = vunpack.c.l.b16 %v2031
      %v2113 = vunpack.c.l.b16 %v2032
      %v2114 = vunpack.c.l.b16 %v2033
      %v2115 = vunpack.c.l.b16 %v2034
      %v2116 = vunpack.c.l.b16 %v2035
      %v2117 = vunpack.c.l.b16 %v2036
      %v2118 = vunpack.c.l.b16 %v2037
      %v2119 = vunpack.c.l.b16 %v2038
      %v2120 = vunpack.c.l.b16 %v2039
      %v2121 = vunpack.c.l.b16 %v2040
      %v2122 = vunpack.c.l.b16 %v2041
      %v2123 = vunpack.c.l.b16 %v2042
      %v2124 = vunpack.c.l.b16 %v2043
      %v2125 = vunpack.c.l.b16 %v2044
      %v2126 = vunpack.c.l.b16 %v2045
      %v2127 = vunpack.c.l.b16 %v2046
      %v2128 = vunpack.c.l.b16 %v2047
      %v2129 = vunpack.c.l.b16 %v2048
      %v2130 = vunpack.c.l.b16 %v2049
      %v2131 = vunpack.c.l.b16 %v2050
      %v2132 = vunpack.c.l.b16 %v2051
      %v2133 = vunpack.c.l.b16 %v2052
      %v2134 = vunpack.c.l.b16 %v2053
      %v2135 = vunpack.c.l.b16 %v2054
      %v2136 = vunpack.c.l.b16 %v2055
      %v2137 = vunpack.c.l.b16 %v2056
      %v2138 = vunpack.c.l.b16 %v2057
      %v2139 = vunpack.c.l.b16 %v2058
      %v2140 = vunpack.c.l.b16 %v2059
      %v2141 = vpack.c.b16 %v2110, %v2109
      %v2142 = vpack.c.b16 %v2112, %v2111
      %v2143 = vpack.c.b16 %v2114, %v2113
      %v2144 = vpack.c.b16 %v2116, %v2115
      %v2145 = vpack.c.b16 %v2118, %v2117
      %v2146 = vpack.c.b16 %v2120, %v2119
      %v2147 = vpack.c.b16 %v2122, %v2121
      %v2148 = vpack.c.b16 %v2124, %v2123
      %v2149 = vpack.c.b16 %v2126, %v2125
      %v2150 = vpack.c.b16 %v2128, %v2127
      %v2151 = vpack.c.b16 %v2130, %v2129
      %v2152 = vpack.c.b16 %v2132, %v2131
      %v2153 = vpack.c.b16 %v2134, %v2133
      %v2154 = vpack.c.b16 %v2136, %v2135
      %v2155 = vpack.c.b16 %v2138, %v2137
      %v2156 = vpack.c.b16 %v2140, %v2139
      %v2189 = vunpack.c.l.b16 %v2061
      %v2190 = vunpack.c.l.b16 %v2062
      %v2191 = vunpack.c.l.b16 %v2063
      %v2192 = vunpack.c.l.b16 %v2064
      %v2193 = vunpack.c.l.b16 %v2065
      %v2194 = vunpack.c.l.b16 %v2066
      %v2195 = vunpack.c.l.b16 %v2067
      %v2196 = vunpack.c.l.b16 %v2068
      %v2197 = vunpack.c.l.b16 %v2069
      %v2198 = vunpack.c.l.b16 %v2070
      %v2199 = vunpack.c.l.b16 %v2071
      %v2200 = vunpack.c.l.b16 %v2072
      %v2201 = vunpack.c.l.b16 %v2073
      %v2202 = vunpack.c.l.b16 %v2074
      %v2203 = vunpack.c.l.b16 %v2075
      %v2204 = vunpack.c.l.b16 %v2076
      %v2205 = vpack.c.b16 %v2190, %v2189
      %v2206 = vpack.c.b16 %v2192, %v2191
      %v2207 = vpack.c.b16 %v2194, %v2193
      %v2208 = vpack.c.b16 %v2196, %v2195
      %v2209 = vpack.c.b16 %v2198, %v2197
      %v2210 = vpack.c.b16 %v2200, %v2199
      %v2211 = vpack.c.b16 %v2202, %v2201
      %v2212 = vpack.c.b16 %v2204, %v2203
      %2221 = vmatprep.subr.bf16.mxu0 0
      %2222 = vmatpush1.bf16.msra.mxu0 %v2212
      %2223 = vmatprep.subr.bf16.mxu0 0
      %2224 = vmatpush1.bf16.msra.mxu0 %v2211
      %2225 = vmatprep.subr.bf16.mxu0 0
      %2226 = vmatpush1.bf16.msra.mxu0 %v2210
      %2227 = vmatprep.subr.bf16.mxu0 0
      %2228 = vmatpush1.bf16.msra.mxu0 %v2209
      %2229 = vmatprep.subr.bf16.mxu0 0
      %2230 = vmatpush1.bf16.msra.mxu0 %v2208
      %2231 = vmatprep.subr.bf16.mxu0 0
      %2232 = vmatpush1.bf16.msra.mxu0 %v2207
      %2233 = vmatprep.subr.bf16.mxu0 0
      %2234 = vmatpush1.bf16.msra.mxu0 %v2206
      %2235 = vmatprep.subr.bf16.mxu0 0
      %2236 = vmatpush1.bf16.msra.mxu0 %v2205
      %2237 = vmatprep.subr.bf16.mxu0 0
      %2238 = vmatpush2.bf16.msra.mxu0 0
      %2239 = vmatprep.subr.bf16.mxu0 0
      %2240 = vmatpush2.bf16.msra.mxu0 0
      %2241 = vmatprep.subr.bf16.mxu0 0
      %2242 = vmatpush2.bf16.msra.mxu0 0
      %2243 = vmatprep.subr.bf16.mxu0 0
      %2244 = vmatpush2.bf16.msra.mxu0 0
      %2245 = vmatprep.subr.bf16.mxu0 0
      %2246 = vmatpush2.bf16.msra.mxu0 0
      %2247 = vmatprep.subr.bf16.mxu0 0
      %2248 = vmatpush2.bf16.msra.mxu0 0
      %2249 = vmatprep.subr.bf16.mxu0 0
      %2250 = vmatpush2.bf16.msra.mxu0 0
      %2251 = vmatprep.subr.bf16.mxu0 0
      %2252 = vmatpush2.bf16.msra.mxu0 0
      %2253 = vmatprep.mubr.bf16.mxu0 0
      %2254 = vmatmul.mubr.bf16.gmra.mxu0 %v2141
      %v2255 = vpop.f32.mrf.mxu0
      %v2256 = vadd.f32 0.0, %v2255
      %v2257 = vpop.f32.mrf.mxu0
      %v2258 = vpop.f32.mrf.mxu0
      %v2259 = vadd.f32 0.0, %v2258
      %v2260 = vpop.f32.mrf.mxu0
      %2261 = vmatprep.mubr.bf16.mxu0 0
      %2262 = vmatmul.mubr.bf16.gmra.mxu0 %v2142
      %v2263 = vpop.f32.mrf.mxu0
      %v2264 = vadd.f32 0.0, %v2263
      %v2265 = vpop.f32.mrf.mxu0
      %v2266 = vpop.f32.mrf.mxu0
      %v2267 = vadd.f32 0.0, %v2266
      %v2268 = vpop.f32.mrf.mxu0
      %2269 = vmatprep.mubr.bf16.mxu0 0
      %2270 = vmatmul.mubr.bf16.gmra.mxu0 %v2143
      %v2271 = vpop.f32.mrf.mxu0
      %v2272 = vadd.f32 0.0, %v2271
      %v2273 = vpop.f32.mrf.mxu0
      %v2274 = vpop.f32.mrf.mxu0
      %v2275 = vadd.f32 0.0, %v2274
      %v2276 = vpop.f32.mrf.mxu0
      %2277 = vmatprep.mubr.bf16.mxu0 0
      %2278 = vmatmul.mubr.bf16.gmra.mxu0 %v2144
      %v2279 = vpop.f32.mrf.mxu0
      %v2280 = vadd.f32 0.0, %v2279
      %v2281 = vpop.f32.mrf.mxu0
      %v2282 = vpop.f32.mrf.mxu0
      %v2283 = vadd.f32 0.0, %v2282
      %v2284 = vpop.f32.mrf.mxu0
      %2285 = vmatprep.mubr.bf16.mxu0 0
      %2286 = vmatmul.mubr.bf16.gmra.mxu0 %v2145
      %v2287 = vpop.f32.mrf.mxu0
      %v2288 = vadd.f32 0.0, %v2287
      %v2289 = vpop.f32.mrf.mxu0
      %v2290 = vpop.f32.mrf.mxu0
      %v2291 = vadd.f32 0.0, %v2290
      %v2292 = vpop.f32.mrf.mxu0
      %2293 = vmatprep.mubr.bf16.mxu0 0
      %2294 = vmatmul.mubr.bf16.gmra.mxu0 %v2146
      %v2295 = vpop.f32.mrf.mxu0
      %v2296 = vadd.f32 0.0, %v2295
      %v2297 = vpop.f32.mrf.mxu0
      %v2298 = vpop.f32.mrf.mxu0
      %v2299 = vadd.f32 0.0, %v2298
      %v2300 = vpop.f32.mrf.mxu0
      %2301 = vmatprep.mubr.bf16.mxu0 0
      %2302 = vmatmul.mubr.bf16.gmra.mxu0 %v2147
      %v2303 = vpop.f32.mrf.mxu0
      %v2304 = vadd.f32 0.0, %v2303
      %v2305 = vpop.f32.mrf.mxu0
      %v2306 = vpop.f32.mrf.mxu0
      %v2307 = vadd.f32 0.0, %v2306
      %v2308 = vpop.f32.mrf.mxu0
      %2309 = vmatprep.mubr.bf16.mxu0 0
      %2310 = vmatmul.mubr.bf16.gmra.mxu0 %v2148
      %v2311 = vpop.f32.mrf.mxu0
      %v2312 = vadd.f32 0.0, %v2311
      %v2313 = vpop.f32.mrf.mxu0
      %v2314 = vpop.f32.mrf.mxu0
      %v2315 = vadd.f32 0.0, %v2314
      %v2316 = vpop.f32.mrf.mxu0
      %2317 = vmatprep.mubr.bf16.mxu0 0
      %2318 = vmatmul.mubr.bf16.gmra.mxu0 %v2149
      %v2319 = vpop.f32.mrf.mxu0
      %v2320 = vadd.f32 0.0, %v2319
      %v2321 = vpop.f32.mrf.mxu0
      %v2322 = vpop.f32.mrf.mxu0
      %v2323 = vadd.f32 0.0, %v2322
      %v2324 = vpop.f32.mrf.mxu0
      %2325 = vmatprep.mubr.bf16.mxu0 0
      %2326 = vmatmul.mubr.bf16.gmra.mxu0 %v2150
      %v2327 = vpop.f32.mrf.mxu0
      %v2328 = vadd.f32 0.0, %v2327
      %v2329 = vpop.f32.mrf.mxu0
      %v2330 = vpop.f32.mrf.mxu0
      %v2331 = vadd.f32 0.0, %v2330
      %v2332 = vpop.f32.mrf.mxu0
      %2333 = vmatprep.mubr.bf16.mxu0 0
      %2334 = vmatmul.mubr.bf16.gmra.mxu0 %v2151
      %v2335 = vpop.f32.mrf.mxu0
      %v2336 = vadd.f32 0.0, %v2335
      %v2337 = vpop.f32.mrf.mxu0
      %v2338 = vpop.f32.mrf.mxu0
      %v2339 = vadd.f32 0.0, %v2338
      %v2340 = vpop.f32.mrf.mxu0
      %2341 = vmatprep.mubr.bf16.mxu0 0
      %2342 = vmatmul.mubr.bf16.gmra.mxu0 %v2152
      %v2343 = vpop.f32.mrf.mxu0
      %v2344 = vadd.f32 0.0, %v2343
      %v2345 = vpop.f32.mrf.mxu0
      %v2346 = vpop.f32.mrf.mxu0
      %v2347 = vadd.f32 0.0, %v2346
      %v2348 = vpop.f32.mrf.mxu0
      %2349 = vmatprep.mubr.bf16.mxu0 0
      %2350 = vmatmul.mubr.bf16.gmra.mxu0 %v2153
      %v2351 = vpop.f32.mrf.mxu0
      %v2352 = vadd.f32 0.0, %v2351
      %v2353 = vpop.f32.mrf.mxu0
      %v2354 = vpop.f32.mrf.mxu0
      %v2355 = vadd.f32 0.0, %v2354
      %v2356 = vpop.f32.mrf.mxu0
      %2357 = vmatprep.mubr.bf16.mxu0 0
      %2358 = vmatmul.mubr.bf16.gmra.mxu0 %v2154
      %v2359 = vpop.f32.mrf.mxu0
      %v2360 = vadd.f32 0.0, %v2359
      %v2361 = vpop.f32.mrf.mxu0
      %v2362 = vpop.f32.mrf.mxu0
      %v2363 = vadd.f32 0.0, %v2362
      %v2364 = vpop.f32.mrf.mxu0
      %2365 = vmatprep.mubr.bf16.mxu0 0
      %2366 = vmatmul.mubr.bf16.gmra.mxu0 %v2155
      %v2367 = vpop.f32.mrf.mxu0
      %v2368 = vadd.f32 0.0, %v2367
      %v2369 = vpop.f32.mrf.mxu0
      %v2370 = vpop.f32.mrf.mxu0
      %v2371 = vadd.f32 0.0, %v2370
      %v2372 = vpop.f32.mrf.mxu0
      %2373 = vmatprep.mubr.bf16.mxu0 0
      %2374 = vmatmul.mubr.bf16.gmra.mxu0 %v2156
      %v2375 = vpop.f32.mrf.mxu0
      %v2376 = vadd.f32 0.0, %v2375
      %v2377 = vpop.f32.mrf.mxu0
      %v2378 = vpop.f32.mrf.mxu0
      %v2379 = vadd.f32 0.0, %v2378
      %v2380 = vpop.f32.mrf.mxu0
      %2381 = vdwg.mxu0
      %v2382 = vadd.f32 %v1995, %v2256
      %v2383 = vadd.f32 %v1996, %v2259
      %v2384 = vadd.f32 %v1997, %v2264
      %v2385 = vadd.f32 %v1998, %v2267
      %v2386 = vadd.f32 %v1999, %v2272
      %v2387 = vadd.f32 %v2000, %v2275
      %v2388 = vadd.f32 %v2001, %v2280
      %v2389 = vadd.f32 %v2002, %v2283
      %v2390 = vadd.f32 %v2003, %v2288
      %v2391 = vadd.f32 %v2004, %v2291
      %v2392 = vadd.f32 %v2005, %v2296
      %v2393 = vadd.f32 %v2006, %v2299
      %v2394 = vadd.f32 %v2007, %v2304
      %v2395 = vadd.f32 %v2008, %v2307
      %v2396 = vadd.f32 %v2009, %v2312
      %v2397 = vadd.f32 %v2010, %v2315
      %v2398 = vadd.f32 %v2011, %v2320
      %v2399 = vadd.f32 %v2012, %v2323
      %v2400 = vadd.f32 %v2013, %v2328
      %v2401 = vadd.f32 %v2014, %v2331
      %v2402 = vadd.f32 %v2015, %v2336
      %v2403 = vadd.f32 %v2016, %v2339
      %v2404 = vadd.f32 %v2017, %v2344
      %v2405 = vadd.f32 %v2018, %v2347
      %v2406 = vadd.f32 %v2019, %v2352
      %v2407 = vadd.f32 %v2020, %v2355
      %v2408 = vadd.f32 %v2021, %v2360
      %v2409 = vadd.f32 %v2022, %v2363
      %v2410 = vadd.f32 %v2023, %v2368
      %v2411 = vadd.f32 %v2024, %v2371
      %v2412 = vadd.f32 %v2025, %v2376
      %v2413 = vadd.f32 %v2026, %v2379
      %v2414 = vld [vmem:[%s2027] sm:$0xf]
      %v2415 = vld [vmem:[%s2027 + $0x4] sm:$0xf]
      %v2416 = vld [vmem:[%s2027 + $0x8] sm:$0x1]
      %v2417 = vld [vmem:[%s2027 + $0xc] sm:$0xf]
      %v2418 = vld [vmem:[%s2027 + $0x10] sm:$0xf]
      %v2419 = vld [vmem:[%s2027 + $0x14] sm:$0x1]
      %v2420 = vld [vmem:[%s2027 + $0x18] sm:$0xf]
      %v2421 = vld [vmem:[%s2027 + $0x1c] sm:$0xf]
      %v2422 = vld [vmem:[%s2027 + $0x20] sm:$0x1]
      %v2423 = vld [vmem:[%s2027 + $0x24] sm:$0xf]
      %v2424 = vld [vmem:[%s2027 + $0x28] sm:$0xf]
      %v2425 = vld [vmem:[%s2027 + $0x2c] sm:$0x1]
      %v2426 = vld [vmem:[%s2027 + $0x30] sm:$0xf]
      %v2427 = vld [vmem:[%s2027 + $0x34] sm:$0xf]
      %v2428 = vld [vmem:[%s2027 + $0x38] sm:$0x1]
      %v2429 = vld [vmem:[%s2027 + $0x3c] sm:$0xf]
      %v2430 = vld [vmem:[%s2027 + $0x40] sm:$0xf]
      %v2431 = vld [vmem:[%s2027 + $0x44] sm:$0x1]
      %v2432 = vld [vmem:[%s2027 + $0x48] sm:$0xf]
      %v2433 = vld [vmem:[%s2027 + $0x4c] sm:$0xf]
      %v2434 = vld [vmem:[%s2027 + $0x50] sm:$0x1]
      %v2435 = vld [vmem:[%s2027 + $0x54] sm:$0xf]
      %v2436 = vld [vmem:[%s2027 + $0x58] sm:$0xf]
      %v2437 = vld [vmem:[%s2027 + $0x5c] sm:$0x1]
      %v2438 = vld [vmem:[%s2027 + $0x60] sm:$0xf]
      %v2439 = vld [vmem:[%s2027 + $0x64] sm:$0xf]
      %v2440 = vld [vmem:[%s2027 + $0x68] sm:$0x1]
      %v2441 = vld [vmem:[%s2027 + $0x6c] sm:$0xf]
      %v2442 = vld [vmem:[%s2027 + $0x70] sm:$0xf]
      %v2443 = vld [vmem:[%s2027 + $0x74] sm:$0x1]
      %v2444 = vld [vmem:[%s2027 + $0x78] sm:$0xf]
      %v2445 = vld [vmem:[%s2027 + $0x7c] sm:$0xf]
      %v2446 = vld [vmem:[%s2027 + $0x80] sm:$0x1]
      %v2447 = vld [vmem:[%s2027 + $0x84] sm:$0xf]
      %v2448 = vld [vmem:[%s2027 + $0x88] sm:$0xf]
      %v2449 = vld [vmem:[%s2027 + $0x8c] sm:$0x1]
      %v2450 = vld [vmem:[%s2027 + $0x90] sm:$0xf]
      %v2451 = vld [vmem:[%s2027 + $0x94] sm:$0xf]
      %v2452 = vld [vmem:[%s2027 + $0x98] sm:$0x1]
      %v2453 = vld [vmem:[%s2027 + $0x9c] sm:$0xf]
      %v2454 = vld [vmem:[%s2027 + $0xa0] sm:$0xf]
      %v2455 = vld [vmem:[%s2027 + $0xa4] sm:$0x1]
      %v2456 = vld [vmem:[%s2027 + $0xa8] sm:$0xf]
      %v2457 = vld [vmem:[%s2027 + $0xac] sm:$0xf]
      %v2458 = vld [vmem:[%s2027 + $0xb0] sm:$0x1]
      %v2459 = vld [vmem:[%s2027 + $0xb4] sm:$0xf]
      %v2460 = vld [vmem:[%s2027 + $0xb8] sm:$0xf]
      %v2461 = vld [vmem:[%s2027 + $0xbc] sm:$0x1]
      %v2463 = vshrl.u32 %v2414, 16
      %v2465 = vrot.slane %v2463, 4
      %v2466 = vshll.u32 %v2414, 16
      %v2468 = vrot.slane %v2466, 5
      %v2469 = vor.u32 %v2465, %v2468
      %v2470 = vrot.slane %v2469, 4
      %v2472 = vshll.u32 %v2415, 16
      %v2474 = vrot.slane %v2472, 5
      %v2475 = vsel %vm819, %v2470, %v2474
      %v2476 = vshrl.u32 %v2415, 16
      %v2478 = vrot.slane %v2476, 4
      %v2479 = vor.u32 %v2478, %v2474
      %v2480 = vrot.slane %v2479, 4
      %v2482 = vshll.u32 %v2416, 16
      %v2484 = vrot.slane %v2482, 5
      %v2485 = vsel %vm819, %v2480, %v2484
      %v2487 = vshrl.u32 %v2417, 16
      %v2489 = vrot.slane %v2487, 4
      %v2490 = vshll.u32 %v2417, 16
      %v2492 = vrot.slane %v2490, 5
      %v2493 = vor.u32 %v2489, %v2492
      %v2494 = vrot.slane %v2493, 4
      %v2496 = vshll.u32 %v2418, 16
      %v2498 = vrot.slane %v2496, 5
      %v2499 = vsel %vm819, %v2494, %v2498
      %v2500 = vshrl.u32 %v2418, 16
      %v2502 = vrot.slane %v2500, 4
      %v2503 = vor.u32 %v2502, %v2498
      %v2504 = vrot.slane %v2503, 4
      %v2506 = vshll.u32 %v2419, 16
      %v2508 = vrot.slane %v2506, 5
      %v2509 = vsel %vm819, %v2504, %v2508
      %v2511 = vshrl.u32 %v2420, 16
      %v2513 = vrot.slane %v2511, 4
      %v2514 = vshll.u32 %v2420, 16
      %v2516 = vrot.slane %v2514, 5
      %v2517 = vor.u32 %v2513, %v2516
      %v2518 = vrot.slane %v2517, 4
      %v2520 = vshll.u32 %v2421, 16
      %v2522 = vrot.slane %v2520, 5
      %v2523 = vsel %vm819, %v2518, %v2522
      %v2524 = vshrl.u32 %v2421, 16
      %v2526 = vrot.slane %v2524, 4
      %v2527 = vor.u32 %v2526, %v2522
      %v2528 = vrot.slane %v2527, 4
      %v2530 = vshll.u32 %v2422, 16
      %v2532 = vrot.slane %v2530, 5
      %v2533 = vsel %vm819, %v2528, %v2532
      %v2535 = vshrl.u32 %v2423, 16
      %v2537 = vrot.slane %v2535, 4
      %v2538 = vshll.u32 %v2423, 16
      %v2540 = vrot.slane %v2538, 5
      %v2541 = vor.u32 %v2537, %v2540
      %v2542 = vrot.slane %v2541, 4
      %v2544 = vshll.u32 %v2424, 16
      %v2546 = vrot.slane %v2544, 5
      %v2547 = vsel %vm819, %v2542, %v2546
      %v2548 = vshrl.u32 %v2424, 16
      %v2550 = vrot.slane %v2548, 4
      %v2551 = vor.u32 %v2550, %v2546
      %v2552 = vrot.slane %v2551, 4
      %v2554 = vshll.u32 %v2425, 16
      %v2556 = vrot.slane %v2554, 5
      %v2557 = vsel %vm819, %v2552, %v2556
      %v2559 = vshrl.u32 %v2426, 16
      %v2561 = vrot.slane %v2559, 4
      %v2562 = vshll.u32 %v2426, 16
      %v2564 = vrot.slane %v2562, 5
      %v2565 = vor.u32 %v2561, %v2564
      %v2566 = vrot.slane %v2565, 4
      %v2568 = vshll.u32 %v2427, 16
      %v2570 = vrot.slane %v2568, 5
      %v2571 = vsel %vm819, %v2566, %v2570
      %v2572 = vshrl.u32 %v2427, 16
      %v2574 = vrot.slane %v2572, 4
      %v2575 = vor.u32 %v2574, %v2570
      %v2576 = vrot.slane %v2575, 4
      %v2578 = vshll.u32 %v2428, 16
      %v2580 = vrot.slane %v2578, 5
      %v2581 = vsel %vm819, %v2576, %v2580
      %v2583 = vshrl.u32 %v2429, 16
      %v2585 = vrot.slane %v2583, 4
      %v2586 = vshll.u32 %v2429, 16
      %v2588 = vrot.slane %v2586, 5
      %v2589 = vor.u32 %v2585, %v2588
      %v2590 = vrot.slane %v2589, 4
      %v2592 = vshll.u32 %v2430, 16
      %v2594 = vrot.slane %v2592, 5
      %v2595 = vsel %vm819, %v2590, %v2594
      %v2596 = vshrl.u32 %v2430, 16
      %v2598 = vrot.slane %v2596, 4
      %v2599 = vor.u32 %v2598, %v2594
      %v2600 = vrot.slane %v2599, 4
      %v2602 = vshll.u32 %v2431, 16
      %v2604 = vrot.slane %v2602, 5
      %v2605 = vsel %vm819, %v2600, %v2604
      %v2607 = vshrl.u32 %v2432, 16
      %v2609 = vrot.slane %v2607, 4
      %v2610 = vshll.u32 %v2432, 16
      %v2612 = vrot.slane %v2610, 5
      %v2613 = vor.u32 %v2609, %v2612
      %v2614 = vrot.slane %v2613, 4
      %v2616 = vshll.u32 %v2433, 16
      %v2618 = vrot.slane %v2616, 5
      %v2619 = vsel %vm819, %v2614, %v2618
      %v2620 = vshrl.u32 %v2433, 16
      %v2622 = vrot.slane %v2620, 4
      %v2623 = vor.u32 %v2622, %v2618
      %v2624 = vrot.slane %v2623, 4
      %v2626 = vshll.u32 %v2434, 16
      %v2628 = vrot.slane %v2626, 5
      %v2629 = vsel %vm819, %v2624, %v2628
      %v2631 = vshrl.u32 %v2435, 16
      %v2633 = vrot.slane %v2631, 4
      %v2634 = vshll.u32 %v2435, 16
      %v2636 = vrot.slane %v2634, 5
      %v2637 = vor.u32 %v2633, %v2636
      %v2638 = vrot.slane %v2637, 4
      %v2640 = vshll.u32 %v2436, 16
      %v2642 = vrot.slane %v2640, 5
      %v2643 = vsel %vm819, %v2638, %v2642
      %v2644 = vshrl.u32 %v2436, 16
      %v2646 = vrot.slane %v2644, 4
      %v2647 = vor.u32 %v2646, %v2642
      %v2648 = vrot.slane %v2647, 4
      %v2650 = vshll.u32 %v2437, 16
      %v2652 = vrot.slane %v2650, 5
      %v2653 = vsel %vm819, %v2648, %v2652
      %v2655 = vshrl.u32 %v2438, 16
      %v2657 = vrot.slane %v2655, 4
      %v2658 = vshll.u32 %v2438, 16
      %v2660 = vrot.slane %v2658, 5
      %v2661 = vor.u32 %v2657, %v2660
      %v2662 = vrot.slane %v2661, 4
      %v2664 = vshll.u32 %v2439, 16
      %v2666 = vrot.slane %v2664, 5
      %v2667 = vsel %vm819, %v2662, %v2666
      %v2668 = vshrl.u32 %v2439, 16
      %v2670 = vrot.slane %v2668, 4
      %v2671 = vor.u32 %v2670, %v2666
      %v2672 = vrot.slane %v2671, 4
      %v2674 = vshll.u32 %v2440, 16
      %v2676 = vrot.slane %v2674, 5
      %v2677 = vsel %vm819, %v2672, %v2676
      %v2679 = vshrl.u32 %v2441, 16
      %v2681 = vrot.slane %v2679, 4
      %v2682 = vshll.u32 %v2441, 16
      %v2684 = vrot.slane %v2682, 5
      %v2685 = vor.u32 %v2681, %v2684
      %v2686 = vrot.slane %v2685, 4
      %v2688 = vshll.u32 %v2442, 16
      %v2690 = vrot.slane %v2688, 5
      %v2691 = vsel %vm819, %v2686, %v2690
      %v2692 = vshrl.u32 %v2442, 16
      %v2694 = vrot.slane %v2692, 4
      %v2695 = vor.u32 %v2694, %v2690
      %v2696 = vrot.slane %v2695, 4
      %v2698 = vshll.u32 %v2443, 16
      %v2700 = vrot.slane %v2698, 5
      %v2701 = vsel %vm819, %v2696, %v2700
      %v2703 = vshrl.u32 %v2444, 16
      %v2705 = vrot.slane %v2703, 4
      %v2706 = vshll.u32 %v2444, 16
      %v2708 = vrot.slane %v2706, 5
      %v2709 = vor.u32 %v2705, %v2708
      %v2710 = vrot.slane %v2709, 4
      %v2712 = vshll.u32 %v2445, 16
      %v2714 = vrot.slane %v2712, 5
      %v2715 = vsel %vm819, %v2710, %v2714
      %v2716 = vshrl.u32 %v2445, 16
      %v2718 = vrot.slane %v2716, 4
      %v2719 = vor.u32 %v2718, %v2714
      %v2720 = vrot.slane %v2719, 4
      %v2722 = vshll.u32 %v2446, 16
      %v2724 = vrot.slane %v2722, 5
      %v2725 = vsel %vm819, %v2720, %v2724
      %v2727 = vshrl.u32 %v2447, 16
      %v2729 = vrot.slane %v2727, 4
      %v2730 = vshll.u32 %v2447, 16
      %v2732 = vrot.slane %v2730, 5
      %v2733 = vor.u32 %v2729, %v2732
      %v2734 = vrot.slane %v2733, 4
      %v2736 = vshll.u32 %v2448, 16
      %v2738 = vrot.slane %v2736, 5
      %v2739 = vsel %vm819, %v2734, %v2738
      %v2740 = vshrl.u32 %v2448, 16
      %v2742 = vrot.slane %v2740, 4
      %v2743 = vor.u32 %v2742, %v2738
      %v2744 = vrot.slane %v2743, 4
      %v2746 = vshll.u32 %v2449, 16
      %v2748 = vrot.slane %v2746, 5
      %v2749 = vsel %vm819, %v2744, %v2748
      %v2751 = vshrl.u32 %v2450, 16
      %v2753 = vrot.slane %v2751, 4
      %v2754 = vshll.u32 %v2450, 16
      %v2756 = vrot.slane %v2754, 5
      %v2757 = vor.u32 %v2753, %v2756
      %v2758 = vrot.slane %v2757, 4
      %v2760 = vshll.u32 %v2451, 16
      %v2762 = vrot.slane %v2760, 5
      %v2763 = vsel %vm819, %v2758, %v2762
      %v2764 = vshrl.u32 %v2451, 16
      %v2766 = vrot.slane %v2764, 4
      %v2767 = vor.u32 %v2766, %v2762
      %v2768 = vrot.slane %v2767, 4
      %v2770 = vshll.u32 %v2452, 16
      %v2772 = vrot.slane %v2770, 5
      %v2773 = vsel %vm819, %v2768, %v2772
      %v2775 = vshrl.u32 %v2453, 16
      %v2777 = vrot.slane %v2775, 4
      %v2778 = vshll.u32 %v2453, 16
      %v2780 = vrot.slane %v2778, 5
      %v2781 = vor.u32 %v2777, %v2780
      %v2782 = vrot.slane %v2781, 4
      %v2784 = vshll.u32 %v2454, 16
      %v2786 = vrot.slane %v2784, 5
      %v2787 = vsel %vm819, %v2782, %v2786
      %v2788 = vshrl.u32 %v2454, 16
      %v2790 = vrot.slane %v2788, 4
      %v2791 = vor.u32 %v2790, %v2786
      %v2792 = vrot.slane %v2791, 4
      %v2794 = vshll.u32 %v2455, 16
      %v2796 = vrot.slane %v2794, 5
      %v2797 = vsel %vm819, %v2792, %v2796
      %v2799 = vshrl.u32 %v2456, 16
      %v2801 = vrot.slane %v2799, 4
      %v2802 = vshll.u32 %v2456, 16
      %v2804 = vrot.slane %v2802, 5
      %v2805 = vor.u32 %v2801, %v2804
      %v2806 = vrot.slane %v2805, 4
      %v2808 = vshll.u32 %v2457, 16
      %v2810 = vrot.slane %v2808, 5
      %v2811 = vsel %vm819, %v2806, %v2810
      %v2812 = vshrl.u32 %v2457, 16
      %v2814 = vrot.slane %v2812, 4
      %v2815 = vor.u32 %v2814, %v2810
      %v2816 = vrot.slane %v2815, 4
      %v2818 = vshll.u32 %v2458, 16
      %v2820 = vrot.slane %v2818, 5
      %v2821 = vsel %vm819, %v2816, %v2820
      %v2823 = vshrl.u32 %v2459, 16
      %v2825 = vrot.slane %v2823, 4
      %v2826 = vshll.u32 %v2459, 16
      %v2828 = vrot.slane %v2826, 5
      %v2829 = vor.u32 %v2825, %v2828
      %v2830 = vrot.slane %v2829, 4
      %v2832 = vshll.u32 %v2460, 16
      %v2834 = vrot.slane %v2832, 5
      %v2835 = vsel %vm819, %v2830, %v2834
      %v2836 = vshrl.u32 %v2460, 16
      %v2838 = vrot.slane %v2836, 4
      %v2839 = vor.u32 %v2838, %v2834
      %v2840 = vrot.slane %v2839, 4
      %v2842 = vshll.u32 %v2461, 16
      %v2844 = vrot.slane %v2842, 5
      %v2845 = vsel %vm819, %v2840, %v2844
      %s2846 = scalar_lea.vmem %s260, 256
      %v2847 = vld [vmem:[%s2846] sm:$0xf]
      %v2848 = vld [vmem:[%s2846 + $0x4] sm:$0xf]
      %v2849 = vld [vmem:[%s2846 + $0x8] sm:$0xf]
      %v2850 = vld [vmem:[%s2846 + $0xc] sm:$0xf]
      %v2851 = vld [vmem:[%s2846 + $0x10] sm:$0xf]
      %v2852 = vld [vmem:[%s2846 + $0x14] sm:$0xf]
      %v2853 = vld [vmem:[%s2846 + $0x18] sm:$0xf]
      %v2854 = vld [vmem:[%s2846 + $0x1c] sm:$0xf]
      %v2855 = vld [vmem:[%s2846 + $0x20] sm:$0xf]
      %v2856 = vld [vmem:[%s2846 + $0x24] sm:$0xf]
      %v2857 = vld [vmem:[%s2846 + $0x28] sm:$0xf]
      %v2858 = vld [vmem:[%s2846 + $0x2c] sm:$0xf]
      %v2859 = vld [vmem:[%s2846 + $0x30] sm:$0xf]
      %v2860 = vld [vmem:[%s2846 + $0x34] sm:$0xf]
      %v2861 = vld [vmem:[%s2846 + $0x38] sm:$0xf]
      %v2862 = vld [vmem:[%s2846 + $0x3c] sm:$0xf]
      %v2863 = vunpack.c.l.b16 %v2475
      %v2864 = vunpack.c.l.b16 %v2485
      %v2865 = vunpack.c.l.b16 %v2499
      %v2866 = vunpack.c.l.b16 %v2509
      %v2867 = vunpack.c.l.b16 %v2523
      %v2868 = vunpack.c.l.b16 %v2533
      %v2869 = vunpack.c.l.b16 %v2547
      %v2870 = vunpack.c.l.b16 %v2557
      %v2871 = vunpack.c.l.b16 %v2571
      %v2872 = vunpack.c.l.b16 %v2581
      %v2873 = vunpack.c.l.b16 %v2595
      %v2874 = vunpack.c.l.b16 %v2605
      %v2875 = vunpack.c.l.b16 %v2619
      %v2876 = vunpack.c.l.b16 %v2629
      %v2877 = vunpack.c.l.b16 %v2643
      %v2878 = vunpack.c.l.b16 %v2653
      %v2879 = vunpack.c.l.b16 %v2667
      %v2880 = vunpack.c.l.b16 %v2677
      %v2881 = vunpack.c.l.b16 %v2691
      %v2882 = vunpack.c.l.b16 %v2701
      %v2883 = vunpack.c.l.b16 %v2715
      %v2884 = vunpack.c.l.b16 %v2725
      %v2885 = vunpack.c.l.b16 %v2739
      %v2886 = vunpack.c.l.b16 %v2749
      %v2887 = vunpack.c.l.b16 %v2763
      %v2888 = vunpack.c.l.b16 %v2773
      %v2889 = vunpack.c.l.b16 %v2787
      %v2890 = vunpack.c.l.b16 %v2797
      %v2891 = vunpack.c.l.b16 %v2811
      %v2892 = vunpack.c.l.b16 %v2821
      %v2893 = vunpack.c.l.b16 %v2835
      %v2894 = vunpack.c.l.b16 %v2845
      %v2895 = vpack.c.b16 %v2864, %v2863
      %v2896 = vpack.c.b16 %v2866, %v2865
      %v2897 = vpack.c.b16 %v2868, %v2867
      %v2898 = vpack.c.b16 %v2870, %v2869
      %v2899 = vpack.c.b16 %v2872, %v2871
      %v2900 = vpack.c.b16 %v2874, %v2873
      %v2901 = vpack.c.b16 %v2876, %v2875
      %v2902 = vpack.c.b16 %v2878, %v2877
      %v2903 = vpack.c.b16 %v2880, %v2879
      %v2904 = vpack.c.b16 %v2882, %v2881
      %v2905 = vpack.c.b16 %v2884, %v2883
      %v2906 = vpack.c.b16 %v2886, %v2885
      %v2907 = vpack.c.b16 %v2888, %v2887
      %v2908 = vpack.c.b16 %v2890, %v2889
      %v2909 = vpack.c.b16 %v2892, %v2891
      %v2910 = vpack.c.b16 %v2894, %v2893
      %v2943 = vunpack.c.l.b16 %v2847
      %v2944 = vunpack.c.l.b16 %v2848
      %v2945 = vunpack.c.l.b16 %v2849
      %v2946 = vunpack.c.l.b16 %v2850
      %v2947 = vunpack.c.l.b16 %v2851
      %v2948 = vunpack.c.l.b16 %v2852
      %v2949 = vunpack.c.l.b16 %v2853
      %v2950 = vunpack.c.l.b16 %v2854
      %v2951 = vunpack.c.l.b16 %v2855
      %v2952 = vunpack.c.l.b16 %v2856
      %v2953 = vunpack.c.l.b16 %v2857
      %v2954 = vunpack.c.l.b16 %v2858
      %v2955 = vunpack.c.l.b16 %v2859
      %v2956 = vunpack.c.l.b16 %v2860
      %v2957 = vunpack.c.l.b16 %v2861
      %v2958 = vunpack.c.l.b16 %v2862
      %v2959 = vpack.c.b16 %v2944, %v2943
      %v2960 = vpack.c.b16 %v2946, %v2945
      %v2961 = vpack.c.b16 %v2948, %v2947
      %v2962 = vpack.c.b16 %v2950, %v2949
      %v2963 = vpack.c.b16 %v2952, %v2951
      %v2964 = vpack.c.b16 %v2954, %v2953
      %v2965 = vpack.c.b16 %v2956, %v2955
      %v2966 = vpack.c.b16 %v2958, %v2957
      %2975 = vmatprep.subr.bf16.mxu0 0
      %2976 = vmatpush1.bf16.msra.mxu0 %v2966
      %2977 = vmatprep.subr.bf16.mxu0 0
      %2978 = vmatpush1.bf16.msra.mxu0 %v2965
      %2979 = vmatprep.subr.bf16.mxu0 0
      %2980 = vmatpush1.bf16.msra.mxu0 %v2964
      %2981 = vmatprep.subr.bf16.mxu0 0
      %2982 = vmatpush1.bf16.msra.mxu0 %v2963
      %2983 = vmatprep.subr.bf16.mxu0 0
      %2984 = vmatpush1.bf16.msra.mxu0 %v2962
      %2985 = vmatprep.subr.bf16.mxu0 0
      %2986 = vmatpush1.bf16.msra.mxu0 %v2961
      %2987 = vmatprep.subr.bf16.mxu0 0
      %2988 = vmatpush1.bf16.msra.mxu0 %v2960
      %2989 = vmatprep.subr.bf16.mxu0 0
      %2990 = vmatpush1.bf16.msra.mxu0 %v2959
      %2991 = vmatprep.subr.bf16.mxu0 0
      %2992 = vmatpush2.bf16.msra.mxu0 0
      %2993 = vmatprep.subr.bf16.mxu0 0
      %2994 = vmatpush2.bf16.msra.mxu0 0
      %2995 = vmatprep.subr.bf16.mxu0 0
      %2996 = vmatpush2.bf16.msra.mxu0 0
      %2997 = vmatprep.subr.bf16.mxu0 0
      %2998 = vmatpush2.bf16.msra.mxu0 0
      %2999 = vmatprep.subr.bf16.mxu0 0
      %3000 = vmatpush2.bf16.msra.mxu0 0
      %3001 = vmatprep.subr.bf16.mxu0 0
      %3002 = vmatpush2.bf16.msra.mxu0 0
      %3003 = vmatprep.subr.bf16.mxu0 0
      %3004 = vmatpush2.bf16.msra.mxu0 0
      %3005 = vmatprep.subr.bf16.mxu0 0
      %3006 = vmatpush2.bf16.msra.mxu0 0
      %3007 = vmatprep.mubr.bf16.mxu0 0
      %3008 = vmatmul.mubr.bf16.gmra.mxu0 %v2895
      %v3009 = vpop.f32.mrf.mxu0
      %v3010 = vadd.f32 0.0, %v3009
      %v3011 = vpop.f32.mrf.mxu0
      %v3012 = vpop.f32.mrf.mxu0
      %v3013 = vadd.f32 0.0, %v3012
      %v3014 = vpop.f32.mrf.mxu0
      %3015 = vmatprep.mubr.bf16.mxu0 0
      %3016 = vmatmul.mubr.bf16.gmra.mxu0 %v2896
      %v3017 = vpop.f32.mrf.mxu0
      %v3018 = vadd.f32 0.0, %v3017
      %v3019 = vpop.f32.mrf.mxu0
      %v3020 = vpop.f32.mrf.mxu0
      %v3021 = vadd.f32 0.0, %v3020
      %v3022 = vpop.f32.mrf.mxu0
      %3023 = vmatprep.mubr.bf16.mxu0 0
      %3024 = vmatmul.mubr.bf16.gmra.mxu0 %v2897
      %v3025 = vpop.f32.mrf.mxu0
      %v3026 = vadd.f32 0.0, %v3025
      %v3027 = vpop.f32.mrf.mxu0
      %v3028 = vpop.f32.mrf.mxu0
      %v3029 = vadd.f32 0.0, %v3028
      %v3030 = vpop.f32.mrf.mxu0
      %3031 = vmatprep.mubr.bf16.mxu0 0
      %3032 = vmatmul.mubr.bf16.gmra.mxu0 %v2898
      %v3033 = vpop.f32.mrf.mxu0
      %v3034 = vadd.f32 0.0, %v3033
      %v3035 = vpop.f32.mrf.mxu0
      %v3036 = vpop.f32.mrf.mxu0
      %v3037 = vadd.f32 0.0, %v3036
      %v3038 = vpop.f32.mrf.mxu0
      %3039 = vmatprep.mubr.bf16.mxu0 0
      %3040 = vmatmul.mubr.bf16.gmra.mxu0 %v2899
      %v3041 = vpop.f32.mrf.mxu0
      %v3042 = vadd.f32 0.0, %v3041
      %v3043 = vpop.f32.mrf.mxu0
      %v3044 = vpop.f32.mrf.mxu0
      %v3045 = vadd.f32 0.0, %v3044
      %v3046 = vpop.f32.mrf.mxu0
      %3047 = vmatprep.mubr.bf16.mxu0 0
      %3048 = vmatmul.mubr.bf16.gmra.mxu0 %v2900
      %v3049 = vpop.f32.mrf.mxu0
      %v3050 = vadd.f32 0.0, %v3049
      %v3051 = vpop.f32.mrf.mxu0
      %v3052 = vpop.f32.mrf.mxu0
      %v3053 = vadd.f32 0.0, %v3052
      %v3054 = vpop.f32.mrf.mxu0
      %3055 = vmatprep.mubr.bf16.mxu0 0
      %3056 = vmatmul.mubr.bf16.gmra.mxu0 %v2901
      %v3057 = vpop.f32.mrf.mxu0
      %v3058 = vadd.f32 0.0, %v3057
      %v3059 = vpop.f32.mrf.mxu0
      %v3060 = vpop.f32.mrf.mxu0
      %v3061 = vadd.f32 0.0, %v3060
      %v3062 = vpop.f32.mrf.mxu0
      %3063 = vmatprep.mubr.bf16.mxu0 0
      %3064 = vmatmul.mubr.bf16.gmra.mxu0 %v2902
      %v3065 = vpop.f32.mrf.mxu0
      %v3066 = vadd.f32 0.0, %v3065
      %v3067 = vpop.f32.mrf.mxu0
      %v3068 = vpop.f32.mrf.mxu0
      %v3069 = vadd.f32 0.0, %v3068
      %v3070 = vpop.f32.mrf.mxu0
      %3071 = vmatprep.mubr.bf16.mxu0 0
      %3072 = vmatmul.mubr.bf16.gmra.mxu0 %v2903
      %v3073 = vpop.f32.mrf.mxu0
      %v3074 = vadd.f32 0.0, %v3073
      %v3075 = vpop.f32.mrf.mxu0
      %v3076 = vpop.f32.mrf.mxu0
      %v3077 = vadd.f32 0.0, %v3076
      %v3078 = vpop.f32.mrf.mxu0
      %3079 = vmatprep.mubr.bf16.mxu0 0
      %3080 = vmatmul.mubr.bf16.gmra.mxu0 %v2904
      %v3081 = vpop.f32.mrf.mxu0
      %v3082 = vadd.f32 0.0, %v3081
      %v3083 = vpop.f32.mrf.mxu0
      %v3084 = vpop.f32.mrf.mxu0
      %v3085 = vadd.f32 0.0, %v3084
      %v3086 = vpop.f32.mrf.mxu0
      %3087 = vmatprep.mubr.bf16.mxu0 0
      %3088 = vmatmul.mubr.bf16.gmra.mxu0 %v2905
      %v3089 = vpop.f32.mrf.mxu0
      %v3090 = vadd.f32 0.0, %v3089
      %v3091 = vpop.f32.mrf.mxu0
      %v3092 = vpop.f32.mrf.mxu0
      %v3093 = vadd.f32 0.0, %v3092
      %v3094 = vpop.f32.mrf.mxu0
      %3095 = vmatprep.mubr.bf16.mxu0 0
      %3096 = vmatmul.mubr.bf16.gmra.mxu0 %v2906
      %v3097 = vpop.f32.mrf.mxu0
      %v3098 = vadd.f32 0.0, %v3097
      %v3099 = vpop.f32.mrf.mxu0
      %v3100 = vpop.f32.mrf.mxu0
      %v3101 = vadd.f32 0.0, %v3100
      %v3102 = vpop.f32.mrf.mxu0
      %3103 = vmatprep.mubr.bf16.mxu0 0
      %3104 = vmatmul.mubr.bf16.gmra.mxu0 %v2907
      %v3105 = vpop.f32.mrf.mxu0
      %v3106 = vadd.f32 0.0, %v3105
      %v3107 = vpop.f32.mrf.mxu0
      %v3108 = vpop.f32.mrf.mxu0
      %v3109 = vadd.f32 0.0, %v3108
      %v3110 = vpop.f32.mrf.mxu0
      %3111 = vmatprep.mubr.bf16.mxu0 0
      %3112 = vmatmul.mubr.bf16.gmra.mxu0 %v2908
      %v3113 = vpop.f32.mrf.mxu0
      %v3114 = vadd.f32 0.0, %v3113
      %v3115 = vpop.f32.mrf.mxu0
      %v3116 = vpop.f32.mrf.mxu0
      %v3117 = vadd.f32 0.0, %v3116
      %v3118 = vpop.f32.mrf.mxu0
      %3119 = vmatprep.mubr.bf16.mxu0 0
      %3120 = vmatmul.mubr.bf16.gmra.mxu0 %v2909
      %v3121 = vpop.f32.mrf.mxu0
      %v3122 = vadd.f32 0.0, %v3121
      %v3123 = vpop.f32.mrf.mxu0
      %v3124 = vpop.f32.mrf.mxu0
      %v3125 = vadd.f32 0.0, %v3124
      %v3126 = vpop.f32.mrf.mxu0
      %3127 = vmatprep.mubr.bf16.mxu0 0
      %3128 = vmatmul.mubr.bf16.gmra.mxu0 %v2910
      %v3129 = vpop.f32.mrf.mxu0
      %v3130 = vadd.f32 0.0, %v3129
      %v3131 = vpop.f32.mrf.mxu0
      %v3132 = vpop.f32.mrf.mxu0
      %v3133 = vadd.f32 0.0, %v3132
      %v3134 = vpop.f32.mrf.mxu0
      %3135 = vdwg.mxu0
      %v3136 = vadd.f32 %v2382, %v3010
      %v3137 = vadd.f32 %v2383, %v3013
      %v3138 = vadd.f32 %v2384, %v3018
      %v3139 = vadd.f32 %v2385, %v3021
      %v3140 = vadd.f32 %v2386, %v3026
      %v3141 = vadd.f32 %v2387, %v3029
      %v3142 = vadd.f32 %v2388, %v3034
      %v3143 = vadd.f32 %v2389, %v3037
      %v3144 = vadd.f32 %v2390, %v3042
      %v3145 = vadd.f32 %v2391, %v3045
      %v3146 = vadd.f32 %v2392, %v3050
      %v3147 = vadd.f32 %v2393, %v3053
      %v3148 = vadd.f32 %v2394, %v3058
      %v3149 = vadd.f32 %v2395, %v3061
      %v3150 = vadd.f32 %v2396, %v3066
      %v3151 = vadd.f32 %v2397, %v3069
      %v3152 = vadd.f32 %v2398, %v3074
      %v3153 = vadd.f32 %v2399, %v3077
      %v3154 = vadd.f32 %v2400, %v3082
      %v3155 = vadd.f32 %v2401, %v3085
      %v3156 = vadd.f32 %v2402, %v3090
      %v3157 = vadd.f32 %v2403, %v3093
      %v3158 = vadd.f32 %v2404, %v3098
      %v3159 = vadd.f32 %v2405, %v3101
      %v3160 = vadd.f32 %v2406, %v3106
      %v3161 = vadd.f32 %v2407, %v3109
      %v3162 = vadd.f32 %v2408, %v3114
      %v3163 = vadd.f32 %v2409, %v3117
      %v3164 = vadd.f32 %v2410, %v3122
      %v3165 = vadd.f32 %v2411, %v3125
      %v3166 = vadd.f32 %v2412, %v3130
      %v3167 = vadd.f32 %v2413, %v3133
      %v3168 = vld [vmem:[%s2027] sm:$0xe]
      %v3169 = vld [vmem:[%s2027 + $0xc] sm:$0xe]
      %v3170 = vld [vmem:[%s2027 + $0x18] sm:$0xe]
      %v3171 = vld [vmem:[%s2027 + $0x24] sm:$0xe]
      %v3172 = vld [vmem:[%s2027 + $0x30] sm:$0xe]
      %v3173 = vld [vmem:[%s2027 + $0x3c] sm:$0xe]
      %v3174 = vld [vmem:[%s2027 + $0x48] sm:$0xe]
      %v3175 = vld [vmem:[%s2027 + $0x54] sm:$0xe]
      %v3176 = vld [vmem:[%s2027 + $0x60] sm:$0xe]
      %v3177 = vld [vmem:[%s2027 + $0x6c] sm:$0xe]
      %v3178 = vld [vmem:[%s2027 + $0x78] sm:$0xe]
      %v3179 = vld [vmem:[%s2027 + $0x84] sm:$0xe]
      %v3180 = vld [vmem:[%s2027 + $0x90] sm:$0xe]
      %v3181 = vld [vmem:[%s2027 + $0x9c] sm:$0xe]
      %v3182 = vld [vmem:[%s2027 + $0xa8] sm:$0xe]
      %v3183 = vld [vmem:[%s2027 + $0xb4] sm:$0xe]
      %v3232 = vrot.slane %v3168, 5
      %v3233 = vrot.slane %v3232, 4
      %v3234 = vrot.slane %v2415, 5
      %v3235 = vsel %vm1592, %v3233, %v3234
      %v3236 = vrot.slane %v3234, 4
      %v3237 = vrot.slane %v2416, 5
      %v3238 = vsel %vm1592, %v3236, %v3237
      %v3239 = vrot.slane %v3169, 5
      %v3240 = vrot.slane %v3239, 4
      %v3241 = vrot.slane %v2418, 5
      %v3242 = vsel %vm1592, %v3240, %v3241
      %v3243 = vrot.slane %v3241, 4
      %v3244 = vrot.slane %v2419, 5
      %v3245 = vsel %vm1592, %v3243, %v3244
      %v3246 = vrot.slane %v3170, 5
      %v3247 = vrot.slane %v3246, 4
      %v3248 = vrot.slane %v2421, 5
      %v3249 = vsel %vm1592, %v3247, %v3248
      %v3250 = vrot.slane %v3248, 4
      %v3251 = vrot.slane %v2422, 5
      %v3252 = vsel %vm1592, %v3250, %v3251
      %v3253 = vrot.slane %v3171, 5
      %v3254 = vrot.slane %v3253, 4
      %v3255 = vrot.slane %v2424, 5
      %v3256 = vsel %vm1592, %v3254, %v3255
      %v3257 = vrot.slane %v3255, 4
      %v3258 = vrot.slane %v2425, 5
      %v3259 = vsel %vm1592, %v3257, %v3258
      %v3260 = vrot.slane %v3172, 5
      %v3261 = vrot.slane %v3260, 4
      %v3262 = vrot.slane %v2427, 5
      %v3263 = vsel %vm1592, %v3261, %v3262
      %v3264 = vrot.slane %v3262, 4
      %v3265 = vrot.slane %v2428, 5
      %v3266 = vsel %vm1592, %v3264, %v3265
      %v3267 = vrot.slane %v3173, 5
      %v3268 = vrot.slane %v3267, 4
      %v3269 = vrot.slane %v2430, 5
      %v3270 = vsel %vm1592, %v3268, %v3269
      %v3271 = vrot.slane %v3269, 4
      %v3272 = vrot.slane %v2431, 5
      %v3273 = vsel %vm1592, %v3271, %v3272
      %v3274 = vrot.slane %v3174, 5
      %v3275 = vrot.slane %v3274, 4
      %v3276 = vrot.slane %v2433, 5
      %v3277 = vsel %vm1592, %v3275, %v3276
      %v3278 = vrot.slane %v3276, 4
      %v3279 = vrot.slane %v2434, 5
      %v3280 = vsel %vm1592, %v3278, %v3279
      %v3281 = vrot.slane %v3175, 5
      %v3282 = vrot.slane %v3281, 4
      %v3283 = vrot.slane %v2436, 5
      %v3284 = vsel %vm1592, %v3282, %v3283
      %v3285 = vrot.slane %v3283, 4
      %v3286 = vrot.slane %v2437, 5
      %v3287 = vsel %vm1592, %v3285, %v3286
      %v3288 = vrot.slane %v3176, 5
      %v3289 = vrot.slane %v3288, 4
      %v3290 = vrot.slane %v2439, 5
      %v3291 = vsel %vm1592, %v3289, %v3290
      %v3292 = vrot.slane %v3290, 4
      %v3293 = vrot.slane %v2440, 5
      %v3294 = vsel %vm1592, %v3292, %v3293
      %v3295 = vrot.slane %v3177, 5
      %v3296 = vrot.slane %v3295, 4
      %v3297 = vrot.slane %v2442, 5
      %v3298 = vsel %vm1592, %v3296, %v3297
      %v3299 = vrot.slane %v3297, 4
      %v3300 = vrot.slane %v2443, 5
      %v3301 = vsel %vm1592, %v3299, %v3300
      %v3302 = vrot.slane %v3178, 5
      %v3303 = vrot.slane %v3302, 4
      %v3304 = vrot.slane %v2445, 5
      %v3305 = vsel %vm1592, %v3303, %v3304
      %v3306 = vrot.slane %v3304, 4
      %v3307 = vrot.slane %v2446, 5
      %v3308 = vsel %vm1592, %v3306, %v3307
      %v3309 = vrot.slane %v3179, 5
      %v3310 = vrot.slane %v3309, 4
      %v3311 = vrot.slane %v2448, 5
      %v3312 = vsel %vm1592, %v3310, %v3311
      %v3313 = vrot.slane %v3311, 4
      %v3314 = vrot.slane %v2449, 5
      %v3315 = vsel %vm1592, %v3313, %v3314
      %v3316 = vrot.slane %v3180, 5
      %v3317 = vrot.slane %v3316, 4
      %v3318 = vrot.slane %v2451, 5
      %v3319 = vsel %vm1592, %v3317, %v3318
      %v3320 = vrot.slane %v3318, 4
      %v3321 = vrot.slane %v2452, 5
      %v3322 = vsel %vm1592, %v3320, %v3321
      %v3323 = vrot.slane %v3181, 5
      %v3324 = vrot.slane %v3323, 4
      %v3325 = vrot.slane %v2454, 5
      %v3326 = vsel %vm1592, %v3324, %v3325
      %v3327 = vrot.slane %v3325, 4
      %v3328 = vrot.slane %v2455, 5
      %v3329 = vsel %vm1592, %v3327, %v3328
      %v3330 = vrot.slane %v3182, 5
      %v3331 = vrot.slane %v3330, 4
      %v3332 = vrot.slane %v2457, 5
      %v3333 = vsel %vm1592, %v3331, %v3332
      %v3334 = vrot.slane %v3332, 4
      %v3335 = vrot.slane %v2458, 5
      %v3336 = vsel %vm1592, %v3334, %v3335
      %v3337 = vrot.slane %v3183, 5
      %v3338 = vrot.slane %v3337, 4
      %v3339 = vrot.slane %v2460, 5
      %v3340 = vsel %vm1592, %v3338, %v3339
      %v3341 = vrot.slane %v3339, 4
      %v3342 = vrot.slane %v2461, 5
      %v3343 = vsel %vm1592, %v3341, %v3342
      %s3344 = scalar_lea.vmem %s260, 320
      %v3345 = vld [vmem:[%s3344] sm:$0xf]
      %v3346 = vld [vmem:[%s3344 + $0x4] sm:$0xf]
      %v3347 = vld [vmem:[%s3344 + $0x8] sm:$0xf]
      %v3348 = vld [vmem:[%s3344 + $0xc] sm:$0xf]
      %v3349 = vld [vmem:[%s3344 + $0x10] sm:$0xf]
      %v3350 = vld [vmem:[%s3344 + $0x14] sm:$0xf]
      %v3351 = vld [vmem:[%s3344 + $0x18] sm:$0xf]
      %v3352 = vld [vmem:[%s3344 + $0x1c] sm:$0xf]
      %v3353 = vld [vmem:[%s3344 + $0x20] sm:$0xf]
      %v3354 = vld [vmem:[%s3344 + $0x24] sm:$0xf]
      %v3355 = vld [vmem:[%s3344 + $0x28] sm:$0xf]
      %v3356 = vld [vmem:[%s3344 + $0x2c] sm:$0xf]
      %v3357 = vld [vmem:[%s3344 + $0x30] sm:$0xf]
      %v3358 = vld [vmem:[%s3344 + $0x34] sm:$0xf]
      %v3359 = vld [vmem:[%s3344 + $0x38] sm:$0xf]
      %v3360 = vld [vmem:[%s3344 + $0x3c] sm:$0xf]
      %v3361 = vunpack.c.l.b16 %v3235
      %v3362 = vunpack.c.l.b16 %v3238
      %v3363 = vunpack.c.l.b16 %v3242
      %v3364 = vunpack.c.l.b16 %v3245
      %v3365 = vunpack.c.l.b16 %v3249
      %v3366 = vunpack.c.l.b16 %v3252
      %v3367 = vunpack.c.l.b16 %v3256
      %v3368 = vunpack.c.l.b16 %v3259
      %v3369 = vunpack.c.l.b16 %v3263
      %v3370 = vunpack.c.l.b16 %v3266
      %v3371 = vunpack.c.l.b16 %v3270
      %v3372 = vunpack.c.l.b16 %v3273
      %v3373 = vunpack.c.l.b16 %v3277
      %v3374 = vunpack.c.l.b16 %v3280
      %v3375 = vunpack.c.l.b16 %v3284
      %v3376 = vunpack.c.l.b16 %v3287
      %v3377 = vunpack.c.l.b16 %v3291
      %v3378 = vunpack.c.l.b16 %v3294
      %v3379 = vunpack.c.l.b16 %v3298
      %v3380 = vunpack.c.l.b16 %v3301
      %v3381 = vunpack.c.l.b16 %v3305
      %v3382 = vunpack.c.l.b16 %v3308
      %v3383 = vunpack.c.l.b16 %v3312
      %v3384 = vunpack.c.l.b16 %v3315
      %v3385 = vunpack.c.l.b16 %v3319
      %v3386 = vunpack.c.l.b16 %v3322
      %v3387 = vunpack.c.l.b16 %v3326
      %v3388 = vunpack.c.l.b16 %v3329
      %v3389 = vunpack.c.l.b16 %v3333
      %v3390 = vunpack.c.l.b16 %v3336
      %v3391 = vunpack.c.l.b16 %v3340
      %v3392 = vunpack.c.l.b16 %v3343
      %v3393 = vpack.c.b16 %v3362, %v3361
      %v3394 = vpack.c.b16 %v3364, %v3363
      %v3395 = vpack.c.b16 %v3366, %v3365
      %v3396 = vpack.c.b16 %v3368, %v3367
      %v3397 = vpack.c.b16 %v3370, %v3369
      %v3398 = vpack.c.b16 %v3372, %v3371
      %v3399 = vpack.c.b16 %v3374, %v3373
      %v3400 = vpack.c.b16 %v3376, %v3375
      %v3401 = vpack.c.b16 %v3378, %v3377
      %v3402 = vpack.c.b16 %v3380, %v3379
      %v3403 = vpack.c.b16 %v3382, %v3381
      %v3404 = vpack.c.b16 %v3384, %v3383
      %v3405 = vpack.c.b16 %v3386, %v3385
      %v3406 = vpack.c.b16 %v3388, %v3387
      %v3407 = vpack.c.b16 %v3390, %v3389
      %v3408 = vpack.c.b16 %v3392, %v3391
      %v3441 = vunpack.c.l.b16 %v3345
      %v3442 = vunpack.c.l.b16 %v3346
      %v3443 = vunpack.c.l.b16 %v3347
      %v3444 = vunpack.c.l.b16 %v3348
      %v3445 = vunpack.c.l.b16 %v3349
      %v3446 = vunpack.c.l.b16 %v3350
      %v3447 = vunpack.c.l.b16 %v3351
      %v3448 = vunpack.c.l.b16 %v3352
      %v3449 = vunpack.c.l.b16 %v3353
      %v3450 = vunpack.c.l.b16 %v3354
      %v3451 = vunpack.c.l.b16 %v3355
      %v3452 = vunpack.c.l.b16 %v3356
      %v3453 = vunpack.c.l.b16 %v3357
      %v3454 = vunpack.c.l.b16 %v3358
      %v3455 = vunpack.c.l.b16 %v3359
      %v3456 = vunpack.c.l.b16 %v3360
      %v3457 = vpack.c.b16 %v3442, %v3441
      %v3458 = vpack.c.b16 %v3444, %v3443
      %v3459 = vpack.c.b16 %v3446, %v3445
      %v3460 = vpack.c.b16 %v3448, %v3447
      %v3461 = vpack.c.b16 %v3450, %v3449
      %v3462 = vpack.c.b16 %v3452, %v3451
      %v3463 = vpack.c.b16 %v3454, %v3453
      %v3464 = vpack.c.b16 %v3456, %v3455
      %3473 = vmatprep.subr.bf16.mxu0 0
      %3474 = vmatpush1.bf16.msra.mxu0 %v3464
      %3475 = vmatprep.subr.bf16.mxu0 0
      %3476 = vmatpush1.bf16.msra.mxu0 %v3463
      %3477 = vmatprep.subr.bf16.mxu0 0
      %3478 = vmatpush1.bf16.msra.mxu0 %v3462
      %3479 = vmatprep.subr.bf16.mxu0 0
      %3480 = vmatpush1.bf16.msra.mxu0 %v3461
      %3481 = vmatprep.subr.bf16.mxu0 0
      %3482 = vmatpush1.bf16.msra.mxu0 %v3460
      %3483 = vmatprep.subr.bf16.mxu0 0
      %3484 = vmatpush1.bf16.msra.mxu0 %v3459
      %3485 = vmatprep.subr.bf16.mxu0 0
      %3486 = vmatpush1.bf16.msra.mxu0 %v3458
      %3487 = vmatprep.subr.bf16.mxu0 0
      %3488 = vmatpush1.bf16.msra.mxu0 %v3457
      %3489 = vmatprep.subr.bf16.mxu0 0
      %3490 = vmatpush2.bf16.msra.mxu0 0
      %3491 = vmatprep.subr.bf16.mxu0 0
      %3492 = vmatpush2.bf16.msra.mxu0 0
      %3493 = vmatprep.subr.bf16.mxu0 0
      %3494 = vmatpush2.bf16.msra.mxu0 0
      %3495 = vmatprep.subr.bf16.mxu0 0
      %3496 = vmatpush2.bf16.msra.mxu0 0
      %3497 = vmatprep.subr.bf16.mxu0 0
      %3498 = vmatpush2.bf16.msra.mxu0 0
      %3499 = vmatprep.subr.bf16.mxu0 0
      %3500 = vmatpush2.bf16.msra.mxu0 0
      %3501 = vmatprep.subr.bf16.mxu0 0
      %3502 = vmatpush2.bf16.msra.mxu0 0
      %3503 = vmatprep.subr.bf16.mxu0 0
      %3504 = vmatpush2.bf16.msra.mxu0 0
      %3505 = vmatprep.mubr.bf16.mxu0 0
      %3506 = vmatmul.mubr.bf16.gmra.mxu0 %v3393
      %v3507 = vpop.f32.mrf.mxu0
      %v3508 = vadd.f32 0.0, %v3507
      %v3509 = vpop.f32.mrf.mxu0
      %v3510 = vpop.f32.mrf.mxu0
      %v3511 = vadd.f32 0.0, %v3510
      %v3512 = vpop.f32.mrf.mxu0
      %3513 = vmatprep.mubr.bf16.mxu0 0
      %3514 = vmatmul.mubr.bf16.gmra.mxu0 %v3394
      %v3515 = vpop.f32.mrf.mxu0
      %v3516 = vadd.f32 0.0, %v3515
      %v3517 = vpop.f32.mrf.mxu0
      %v3518 = vpop.f32.mrf.mxu0
      %v3519 = vadd.f32 0.0, %v3518
      %v3520 = vpop.f32.mrf.mxu0
      %3521 = vmatprep.mubr.bf16.mxu0 0
      %3522 = vmatmul.mubr.bf16.gmra.mxu0 %v3395
      %v3523 = vpop.f32.mrf.mxu0
      %v3524 = vadd.f32 0.0, %v3523
      %v3525 = vpop.f32.mrf.mxu0
      %v3526 = vpop.f32.mrf.mxu0
      %v3527 = vadd.f32 0.0, %v3526
      %v3528 = vpop.f32.mrf.mxu0
      %3529 = vmatprep.mubr.bf16.mxu0 0
      %3530 = vmatmul.mubr.bf16.gmra.mxu0 %v3396
      %v3531 = vpop.f32.mrf.mxu0
      %v3532 = vadd.f32 0.0, %v3531
      %v3533 = vpop.f32.mrf.mxu0
      %v3534 = vpop.f32.mrf.mxu0
      %v3535 = vadd.f32 0.0, %v3534
      %v3536 = vpop.f32.mrf.mxu0
      %3537 = vmatprep.mubr.bf16.mxu0 0
      %3538 = vmatmul.mubr.bf16.gmra.mxu0 %v3397
      %v3539 = vpop.f32.mrf.mxu0
      %v3540 = vadd.f32 0.0, %v3539
      %v3541 = vpop.f32.mrf.mxu0
      %v3542 = vpop.f32.mrf.mxu0
      %v3543 = vadd.f32 0.0, %v3542
      %v3544 = vpop.f32.mrf.mxu0
      %3545 = vmatprep.mubr.bf16.mxu0 0
      %3546 = vmatmul.mubr.bf16.gmra.mxu0 %v3398
      %v3547 = vpop.f32.mrf.mxu0
      %v3548 = vadd.f32 0.0, %v3547
      %v3549 = vpop.f32.mrf.mxu0
      %v3550 = vpop.f32.mrf.mxu0
      %v3551 = vadd.f32 0.0, %v3550
      %v3552 = vpop.f32.mrf.mxu0
      %3553 = vmatprep.mubr.bf16.mxu0 0
      %3554 = vmatmul.mubr.bf16.gmra.mxu0 %v3399
      %v3555 = vpop.f32.mrf.mxu0
      %v3556 = vadd.f32 0.0, %v3555
      %v3557 = vpop.f32.mrf.mxu0
      %v3558 = vpop.f32.mrf.mxu0
      %v3559 = vadd.f32 0.0, %v3558
      %v3560 = vpop.f32.mrf.mxu0
      %3561 = vmatprep.mubr.bf16.mxu0 0
      %3562 = vmatmul.mubr.bf16.gmra.mxu0 %v3400
      %v3563 = vpop.f32.mrf.mxu0
      %v3564 = vadd.f32 0.0, %v3563
      %v3565 = vpop.f32.mrf.mxu0
      %v3566 = vpop.f32.mrf.mxu0
      %v3567 = vadd.f32 0.0, %v3566
      %v3568 = vpop.f32.mrf.mxu0
      %3569 = vmatprep.mubr.bf16.mxu0 0
      %3570 = vmatmul.mubr.bf16.gmra.mxu0 %v3401
      %v3571 = vpop.f32.mrf.mxu0
      %v3572 = vadd.f32 0.0, %v3571
      %v3573 = vpop.f32.mrf.mxu0
      %v3574 = vpop.f32.mrf.mxu0
      %v3575 = vadd.f32 0.0, %v3574
      %v3576 = vpop.f32.mrf.mxu0
      %3577 = vmatprep.mubr.bf16.mxu0 0
      %3578 = vmatmul.mubr.bf16.gmra.mxu0 %v3402
      %v3579 = vpop.f32.mrf.mxu0
      %v3580 = vadd.f32 0.0, %v3579
      %v3581 = vpop.f32.mrf.mxu0
      %v3582 = vpop.f32.mrf.mxu0
      %v3583 = vadd.f32 0.0, %v3582
      %v3584 = vpop.f32.mrf.mxu0
      %3585 = vmatprep.mubr.bf16.mxu0 0
      %3586 = vmatmul.mubr.bf16.gmra.mxu0 %v3403
      %v3587 = vpop.f32.mrf.mxu0
      %v3588 = vadd.f32 0.0, %v3587
      %v3589 = vpop.f32.mrf.mxu0
      %v3590 = vpop.f32.mrf.mxu0
      %v3591 = vadd.f32 0.0, %v3590
      %v3592 = vpop.f32.mrf.mxu0
      %3593 = vmatprep.mubr.bf16.mxu0 0
      %3594 = vmatmul.mubr.bf16.gmra.mxu0 %v3404
      %v3595 = vpop.f32.mrf.mxu0
      %v3596 = vadd.f32 0.0, %v3595
      %v3597 = vpop.f32.mrf.mxu0
      %v3598 = vpop.f32.mrf.mxu0
      %v3599 = vadd.f32 0.0, %v3598
      %v3600 = vpop.f32.mrf.mxu0
      %3601 = vmatprep.mubr.bf16.mxu0 0
      %3602 = vmatmul.mubr.bf16.gmra.mxu0 %v3405
      %v3603 = vpop.f32.mrf.mxu0
      %v3604 = vadd.f32 0.0, %v3603
      %v3605 = vpop.f32.mrf.mxu0
      %v3606 = vpop.f32.mrf.mxu0
      %v3607 = vadd.f32 0.0, %v3606
      %v3608 = vpop.f32.mrf.mxu0
      %3609 = vmatprep.mubr.bf16.mxu0 0
      %3610 = vmatmul.mubr.bf16.gmra.mxu0 %v3406
      %v3611 = vpop.f32.mrf.mxu0
      %v3612 = vadd.f32 0.0, %v3611
      %v3613 = vpop.f32.mrf.mxu0
      %v3614 = vpop.f32.mrf.mxu0
      %v3615 = vadd.f32 0.0, %v3614
      %v3616 = vpop.f32.mrf.mxu0
      %3617 = vmatprep.mubr.bf16.mxu0 0
      %3618 = vmatmul.mubr.bf16.gmra.mxu0 %v3407
      %v3619 = vpop.f32.mrf.mxu0
      %v3620 = vadd.f32 0.0, %v3619
      %v3621 = vpop.f32.mrf.mxu0
      %v3622 = vpop.f32.mrf.mxu0
      %v3623 = vadd.f32 0.0, %v3622
      %v3624 = vpop.f32.mrf.mxu0
      %3625 = vmatprep.mubr.bf16.mxu0 0
      %3626 = vmatmul.mubr.bf16.gmra.mxu0 %v3408
      %v3627 = vpop.f32.mrf.mxu0
      %v3628 = vadd.f32 0.0, %v3627
      %v3629 = vpop.f32.mrf.mxu0
      %v3630 = vpop.f32.mrf.mxu0
      %v3631 = vadd.f32 0.0, %v3630
      %v3632 = vpop.f32.mrf.mxu0
      %3633 = vdwg.mxu0
      %v3634 = vadd.f32 %v3136, %v3508
      %v3635 = vadd.f32 %v3137, %v3511
      %v3636 = vadd.f32 %v3138, %v3516
      %v3637 = vadd.f32 %v3139, %v3519
      %v3638 = vadd.f32 %v3140, %v3524
      %v3639 = vadd.f32 %v3141, %v3527
      %v3640 = vadd.f32 %v3142, %v3532
      %v3641 = vadd.f32 %v3143, %v3535
      %v3642 = vadd.f32 %v3144, %v3540
      %v3643 = vadd.f32 %v3145, %v3543
      %v3644 = vadd.f32 %v3146, %v3548
      %v3645 = vadd.f32 %v3147, %v3551
      %v3646 = vadd.f32 %v3148, %v3556
      %v3647 = vadd.f32 %v3149, %v3559
      %v3648 = vadd.f32 %v3150, %v3564
      %v3649 = vadd.f32 %v3151, %v3567
      %v3650 = vadd.f32 %v3152, %v3572
      %v3651 = vadd.f32 %v3153, %v3575
      %v3652 = vadd.f32 %v3154, %v3580
      %v3653 = vadd.f32 %v3155, %v3583
      %v3654 = vadd.f32 %v3156, %v3588
      %v3655 = vadd.f32 %v3157, %v3591
      %v3656 = vadd.f32 %v3158, %v3596
      %v3657 = vadd.f32 %v3159, %v3599
      %v3658 = vadd.f32 %v3160, %v3604
      %v3659 = vadd.f32 %v3161, %v3607
      %v3660 = vadd.f32 %v3162, %v3612
      %v3661 = vadd.f32 %v3163, %v3615
      %v3662 = vadd.f32 %v3164, %v3620
      %v3663 = vadd.f32 %v3165, %v3623
      %v3664 = vadd.f32 %v3166, %v3628
      %v3665 = vadd.f32 %v3167, %v3631
      %s3666 = scalar_lea.vmem %s256, 24
      %v3667 = vld [vmem:[%s3666] sm:$0xf]
      %v3668 = vld [vmem:[%s3666 + $0x4] sm:$0xf]
      %v3669 = vld [vmem:[%s3666 + $0xc] sm:$0xf]
      %v3670 = vld [vmem:[%s3666 + $0x10] sm:$0xf]
      %v3671 = vld [vmem:[%s3666 + $0x18] sm:$0xf]
      %v3672 = vld [vmem:[%s3666 + $0x1c] sm:$0xf]
      %v3673 = vld [vmem:[%s3666 + $0x24] sm:$0xf]
      %v3674 = vld [vmem:[%s3666 + $0x28] sm:$0xf]
      %v3675 = vld [vmem:[%s3666 + $0x30] sm:$0xf]
      %v3676 = vld [vmem:[%s3666 + $0x34] sm:$0xf]
      %v3677 = vld [vmem:[%s3666 + $0x3c] sm:$0xf]
      %v3678 = vld [vmem:[%s3666 + $0x40] sm:$0xf]
      %v3679 = vld [vmem:[%s3666 + $0x48] sm:$0xf]
      %v3680 = vld [vmem:[%s3666 + $0x4c] sm:$0xf]
      %v3681 = vld [vmem:[%s3666 + $0x54] sm:$0xf]
      %v3682 = vld [vmem:[%s3666 + $0x58] sm:$0xf]
      %v3683 = vld [vmem:[%s3666 + $0x60] sm:$0xf]
      %v3684 = vld [vmem:[%s3666 + $0x64] sm:$0xf]
      %v3685 = vld [vmem:[%s3666 + $0x6c] sm:$0xf]
      %v3686 = vld [vmem:[%s3666 + $0x70] sm:$0xf]
      %v3687 = vld [vmem:[%s3666 + $0x78] sm:$0xf]
      %v3688 = vld [vmem:[%s3666 + $0x7c] sm:$0xf]
      %v3689 = vld [vmem:[%s3666 + $0x84] sm:$0xf]
      %v3690 = vld [vmem:[%s3666 + $0x88] sm:$0xf]
      %v3691 = vld [vmem:[%s3666 + $0x90] sm:$0xf]
      %v3692 = vld [vmem:[%s3666 + $0x94] sm:$0xf]
      %v3693 = vld [vmem:[%s3666 + $0x9c] sm:$0xf]
      %v3694 = vld [vmem:[%s3666 + $0xa0] sm:$0xf]
      %v3695 = vld [vmem:[%s3666 + $0xa8] sm:$0xf]
      %v3696 = vld [vmem:[%s3666 + $0xac] sm:$0xf]
      %v3697 = vld [vmem:[%s3666 + $0xb4] sm:$0xf]
      %v3698 = vld [vmem:[%s3666 + $0xb8] sm:$0xf]
      %s3699 = scalar_lea.vmem %s260, 384
      %v3700 = vld [vmem:[%s3699] sm:$0xf]
      %v3701 = vld [vmem:[%s3699 + $0x4] sm:$0xf]
      %v3702 = vld [vmem:[%s3699 + $0x8] sm:$0xf]
      %v3703 = vld [vmem:[%s3699 + $0xc] sm:$0xf]
      %v3704 = vld [vmem:[%s3699 + $0x10] sm:$0xf]
      %v3705 = vld [vmem:[%s3699 + $0x14] sm:$0xf]
      %v3706 = vld [vmem:[%s3699 + $0x18] sm:$0xf]
      %v3707 = vld [vmem:[%s3699 + $0x1c] sm:$0xf]
      %v3708 = vld [vmem:[%s3699 + $0x20] sm:$0xf]
      %v3709 = vld [vmem:[%s3699 + $0x24] sm:$0xf]
      %v3710 = vld [vmem:[%s3699 + $0x28] sm:$0xf]
      %v3711 = vld [vmem:[%s3699 + $0x2c] sm:$0xf]
      %v3712 = vld [vmem:[%s3699 + $0x30] sm:$0xf]
      %v3713 = vld [vmem:[%s3699 + $0x34] sm:$0xf]
      %v3714 = vld [vmem:[%s3699 + $0x38] sm:$0xf]
      %v3715 = vld [vmem:[%s3699 + $0x3c] sm:$0xf]
      %v3748 = vunpack.c.l.b16 %v3667
      %v3749 = vunpack.c.l.b16 %v3668
      %v3750 = vunpack.c.l.b16 %v3669
      %v3751 = vunpack.c.l.b16 %v3670
      %v3752 = vunpack.c.l.b16 %v3671
      %v3753 = vunpack.c.l.b16 %v3672
      %v3754 = vunpack.c.l.b16 %v3673
      %v3755 = vunpack.c.l.b16 %v3674
      %v3756 = vunpack.c.l.b16 %v3675
      %v3757 = vunpack.c.l.b16 %v3676
      %v3758 = vunpack.c.l.b16 %v3677
      %v3759 = vunpack.c.l.b16 %v3678
      %v3760 = vunpack.c.l.b16 %v3679
      %v3761 = vunpack.c.l.b16 %v3680
      %v3762 = vunpack.c.l.b16 %v3681
      %v3763 = vunpack.c.l.b16 %v3682
      %v3764 = vunpack.c.l.b16 %v3683
      %v3765 = vunpack.c.l.b16 %v3684
      %v3766 = vunpack.c.l.b16 %v3685
      %v3767 = vunpack.c.l.b16 %v3686
      %v3768 = vunpack.c.l.b16 %v3687
      %v3769 = vunpack.c.l.b16 %v3688
      %v3770 = vunpack.c.l.b16 %v3689
      %v3771 = vunpack.c.l.b16 %v3690
      %v3772 = vunpack.c.l.b16 %v3691
      %v3773 = vunpack.c.l.b16 %v3692
      %v3774 = vunpack.c.l.b16 %v3693
      %v3775 = vunpack.c.l.b16 %v3694
      %v3776 = vunpack.c.l.b16 %v3695
      %v3777 = vunpack.c.l.b16 %v3696
      %v3778 = vunpack.c.l.b16 %v3697
      %v3779 = vunpack.c.l.b16 %v3698
      %v3780 = vpack.c.b16 %v3749, %v3748
      %v3781 = vpack.c.b16 %v3751, %v3750
      %v3782 = vpack.c.b16 %v3753, %v3752
      %v3783 = vpack.c.b16 %v3755, %v3754
      %v3784 = vpack.c.b16 %v3757, %v3756
      %v3785 = vpack.c.b16 %v3759, %v3758
      %v3786 = vpack.c.b16 %v3761, %v3760
      %v3787 = vpack.c.b16 %v3763, %v3762
      %v3788 = vpack.c.b16 %v3765, %v3764
      %v3789 = vpack.c.b16 %v3767, %v3766
      %v3790 = vpack.c.b16 %v3769, %v3768
      %v3791 = vpack.c.b16 %v3771, %v3770
      %v3792 = vpack.c.b16 %v3773, %v3772
      %v3793 = vpack.c.b16 %v3775, %v3774
      %v3794 = vpack.c.b16 %v3777, %v3776
      %v3795 = vpack.c.b16 %v3779, %v3778
      %v3828 = vunpack.c.l.b16 %v3700
      %v3829 = vunpack.c.l.b16 %v3701
      %v3830 = vunpack.c.l.b16 %v3702
      %v3831 = vunpack.c.l.b16 %v3703
      %v3832 = vunpack.c.l.b16 %v3704
      %v3833 = vunpack.c.l.b16 %v3705
      %v3834 = vunpack.c.l.b16 %v3706
      %v3835 = vunpack.c.l.b16 %v3707
      %v3836 = vunpack.c.l.b16 %v3708
      %v3837 = vunpack.c.l.b16 %v3709
      %v3838 = vunpack.c.l.b16 %v3710
      %v3839 = vunpack.c.l.b16 %v3711
      %v3840 = vunpack.c.l.b16 %v3712
      %v3841 = vunpack.c.l.b16 %v3713
      %v3842 = vunpack.c.l.b16 %v3714
      %v3843 = vunpack.c.l.b16 %v3715
      %v3844 = vpack.c.b16 %v3829, %v3828
      %v3845 = vpack.c.b16 %v3831, %v3830
      %v3846 = vpack.c.b16 %v3833, %v3832
      %v3847 = vpack.c.b16 %v3835, %v3834
      %v3848 = vpack.c.b16 %v3837, %v3836
      %v3849 = vpack.c.b16 %v3839, %v3838
      %v3850 = vpack.c.b16 %v3841, %v3840
      %v3851 = vpack.c.b16 %v3843, %v3842
      %3860 = vmatprep.subr.bf16.mxu0 0
      %3861 = vmatpush1.bf16.msra.mxu0 %v3851
      %3862 = vmatprep.subr.bf16.mxu0 0
      %3863 = vmatpush1.bf16.msra.mxu0 %v3850
      %3864 = vmatprep.subr.bf16.mxu0 0
      %3865 = vmatpush1.bf16.msra.mxu0 %v3849
      %3866 = vmatprep.subr.bf16.mxu0 0
      %3867 = vmatpush1.bf16.msra.mxu0 %v3848
      %3868 = vmatprep.subr.bf16.mxu0 0
      %3869 = vmatpush1.bf16.msra.mxu0 %v3847
      %3870 = vmatprep.subr.bf16.mxu0 0
      %3871 = vmatpush1.bf16.msra.mxu0 %v3846
      %3872 = vmatprep.subr.bf16.mxu0 0
      %3873 = vmatpush1.bf16.msra.mxu0 %v3845
      %3874 = vmatprep.subr.bf16.mxu0 0
      %3875 = vmatpush1.bf16.msra.mxu0 %v3844
      %3876 = vmatprep.subr.bf16.mxu0 0
      %3877 = vmatpush2.bf16.msra.mxu0 0
      %3878 = vmatprep.subr.bf16.mxu0 0
      %3879 = vmatpush2.bf16.msra.mxu0 0
      %3880 = vmatprep.subr.bf16.mxu0 0
      %3881 = vmatpush2.bf16.msra.mxu0 0
      %3882 = vmatprep.subr.bf16.mxu0 0
      %3883 = vmatpush2.bf16.msra.mxu0 0
      %3884 = vmatprep.subr.bf16.mxu0 0
      %3885 = vmatpush2.bf16.msra.mxu0 0
      %3886 = vmatprep.subr.bf16.mxu0 0
      %3887 = vmatpush2.bf16.msra.mxu0 0
      %3888 = vmatprep.subr.bf16.mxu0 0
      %3889 = vmatpush2.bf16.msra.mxu0 0
      %3890 = vmatprep.subr.bf16.mxu0 0
      %3891 = vmatpush2.bf16.msra.mxu0 0
      %3892 = vmatprep.mubr.bf16.mxu0 0
      %3893 = vmatmul.mubr.bf16.gmra.mxu0 %v3780
      %v3894 = vpop.f32.mrf.mxu0
      %v3895 = vadd.f32 0.0, %v3894
      %v3896 = vpop.f32.mrf.mxu0
      %v3897 = vpop.f32.mrf.mxu0
      %v3898 = vadd.f32 0.0, %v3897
      %v3899 = vpop.f32.mrf.mxu0
      %3900 = vmatprep.mubr.bf16.mxu0 0
      %3901 = vmatmul.mubr.bf16.gmra.mxu0 %v3781
      %v3902 = vpop.f32.mrf.mxu0
      %v3903 = vadd.f32 0.0, %v3902
      %v3904 = vpop.f32.mrf.mxu0
      %v3905 = vpop.f32.mrf.mxu0
      %v3906 = vadd.f32 0.0, %v3905
      %v3907 = vpop.f32.mrf.mxu0
      %3908 = vmatprep.mubr.bf16.mxu0 0
      %3909 = vmatmul.mubr.bf16.gmra.mxu0 %v3782
      %v3910 = vpop.f32.mrf.mxu0
      %v3911 = vadd.f32 0.0, %v3910
      %v3912 = vpop.f32.mrf.mxu0
      %v3913 = vpop.f32.mrf.mxu0
      %v3914 = vadd.f32 0.0, %v3913
      %v3915 = vpop.f32.mrf.mxu0
      %3916 = vmatprep.mubr.bf16.mxu0 0
      %3917 = vmatmul.mubr.bf16.gmra.mxu0 %v3783
      %v3918 = vpop.f32.mrf.mxu0
      %v3919 = vadd.f32 0.0, %v3918
      %v3920 = vpop.f32.mrf.mxu0
      %v3921 = vpop.f32.mrf.mxu0
      %v3922 = vadd.f32 0.0, %v3921
      %v3923 = vpop.f32.mrf.mxu0
      %3924 = vmatprep.mubr.bf16.mxu0 0
      %3925 = vmatmul.mubr.bf16.gmra.mxu0 %v3784
      %v3926 = vpop.f32.mrf.mxu0
      %v3927 = vadd.f32 0.0, %v3926
      %v3928 = vpop.f32.mrf.mxu0
      %v3929 = vpop.f32.mrf.mxu0
      %v3930 = vadd.f32 0.0, %v3929
      %v3931 = vpop.f32.mrf.mxu0
      %3932 = vmatprep.mubr.bf16.mxu0 0
      %3933 = vmatmul.mubr.bf16.gmra.mxu0 %v3785
      %v3934 = vpop.f32.mrf.mxu0
      %v3935 = vadd.f32 0.0, %v3934
      %v3936 = vpop.f32.mrf.mxu0
      %v3937 = vpop.f32.mrf.mxu0
      %v3938 = vadd.f32 0.0, %v3937
      %v3939 = vpop.f32.mrf.mxu0
      %3940 = vmatprep.mubr.bf16.mxu0 0
      %3941 = vmatmul.mubr.bf16.gmra.mxu0 %v3786
      %v3942 = vpop.f32.mrf.mxu0
      %v3943 = vadd.f32 0.0, %v3942
      %v3944 = vpop.f32.mrf.mxu0
      %v3945 = vpop.f32.mrf.mxu0
      %v3946 = vadd.f32 0.0, %v3945
      %v3947 = vpop.f32.mrf.mxu0
      %3948 = vmatprep.mubr.bf16.mxu0 0
      %3949 = vmatmul.mubr.bf16.gmra.mxu0 %v3787
      %v3950 = vpop.f32.mrf.mxu0
      %v3951 = vadd.f32 0.0, %v3950
      %v3952 = vpop.f32.mrf.mxu0
      %v3953 = vpop.f32.mrf.mxu0
      %v3954 = vadd.f32 0.0, %v3953
      %v3955 = vpop.f32.mrf.mxu0
      %3956 = vmatprep.mubr.bf16.mxu0 0
      %3957 = vmatmul.mubr.bf16.gmra.mxu0 %v3788
      %v3958 = vpop.f32.mrf.mxu0
      %v3959 = vadd.f32 0.0, %v3958
      %v3960 = vpop.f32.mrf.mxu0
      %v3961 = vpop.f32.mrf.mxu0
      %v3962 = vadd.f32 0.0, %v3961
      %v3963 = vpop.f32.mrf.mxu0
      %3964 = vmatprep.mubr.bf16.mxu0 0
      %3965 = vmatmul.mubr.bf16.gmra.mxu0 %v3789
      %v3966 = vpop.f32.mrf.mxu0
      %v3967 = vadd.f32 0.0, %v3966
      %v3968 = vpop.f32.mrf.mxu0
      %v3969 = vpop.f32.mrf.mxu0
      %v3970 = vadd.f32 0.0, %v3969
      %v3971 = vpop.f32.mrf.mxu0
      %3972 = vmatprep.mubr.bf16.mxu0 0
      %3973 = vmatmul.mubr.bf16.gmra.mxu0 %v3790
      %v3974 = vpop.f32.mrf.mxu0
      %v3975 = vadd.f32 0.0, %v3974
      %v3976 = vpop.f32.mrf.mxu0
      %v3977 = vpop.f32.mrf.mxu0
      %v3978 = vadd.f32 0.0, %v3977
      %v3979 = vpop.f32.mrf.mxu0
      %3980 = vmatprep.mubr.bf16.mxu0 0
      %3981 = vmatmul.mubr.bf16.gmra.mxu0 %v3791
      %v3982 = vpop.f32.mrf.mxu0
      %v3983 = vadd.f32 0.0, %v3982
      %v3984 = vpop.f32.mrf.mxu0
      %v3985 = vpop.f32.mrf.mxu0
      %v3986 = vadd.f32 0.0, %v3985
      %v3987 = vpop.f32.mrf.mxu0
      %3988 = vmatprep.mubr.bf16.mxu0 0
      %3989 = vmatmul.mubr.bf16.gmra.mxu0 %v3792
      %v3990 = vpop.f32.mrf.mxu0
      %v3991 = vadd.f32 0.0, %v3990
      %v3992 = vpop.f32.mrf.mxu0
      %v3993 = vpop.f32.mrf.mxu0
      %v3994 = vadd.f32 0.0, %v3993
      %v3995 = vpop.f32.mrf.mxu0
      %3996 = vmatprep.mubr.bf16.mxu0 0
      %3997 = vmatmul.mubr.bf16.gmra.mxu0 %v3793
      %v3998 = vpop.f32.mrf.mxu0
      %v3999 = vadd.f32 0.0, %v3998
      %v4000 = vpop.f32.mrf.mxu0
      %v4001 = vpop.f32.mrf.mxu0
      %v4002 = vadd.f32 0.0, %v4001
      %v4003 = vpop.f32.mrf.mxu0
      %4004 = vmatprep.mubr.bf16.mxu0 0
      %4005 = vmatmul.mubr.bf16.gmra.mxu0 %v3794
      %v4006 = vpop.f32.mrf.mxu0
      %v4007 = vadd.f32 0.0, %v4006
      %v4008 = vpop.f32.mrf.mxu0
      %v4009 = vpop.f32.mrf.mxu0
      %v4010 = vadd.f32 0.0, %v4009
      %v4011 = vpop.f32.mrf.mxu0
      %4012 = vmatprep.mubr.bf16.mxu0 0
      %4013 = vmatmul.mubr.bf16.gmra.mxu0 %v3795
      %v4014 = vpop.f32.mrf.mxu0
      %v4015 = vadd.f32 0.0, %v4014
      %v4016 = vpop.f32.mrf.mxu0
      %v4017 = vpop.f32.mrf.mxu0
      %v4018 = vadd.f32 0.0, %v4017
      %v4019 = vpop.f32.mrf.mxu0
      %4020 = vdwg.mxu0
      %v4021 = vadd.f32 %v3634, %v3895
      %v4022 = vadd.f32 %v3635, %v3898
      %v4023 = vadd.f32 %v3636, %v3903
      %v4024 = vadd.f32 %v3637, %v3906
      %v4025 = vadd.f32 %v3638, %v3911
      %v4026 = vadd.f32 %v3639, %v3914
      %v4027 = vadd.f32 %v3640, %v3919
      %v4028 = vadd.f32 %v3641, %v3922
      %v4029 = vadd.f32 %v3642, %v3927
      %v4030 = vadd.f32 %v3643, %v3930
      %v4031 = vadd.f32 %v3644, %v3935
      %v4032 = vadd.f32 %v3645, %v3938
      %v4033 = vadd.f32 %v3646, %v3943
      %v4034 = vadd.f32 %v3647, %v3946
      %v4035 = vadd.f32 %v3648, %v3951
      %v4036 = vadd.f32 %v3649, %v3954
      %v4037 = vadd.f32 %v3650, %v3959
      %v4038 = vadd.f32 %v3651, %v3962
      %v4039 = vadd.f32 %v3652, %v3967
      %v4040 = vadd.f32 %v3653, %v3970
      %v4041 = vadd.f32 %v3654, %v3975
      %v4042 = vadd.f32 %v3655, %v3978
      %v4043 = vadd.f32 %v3656, %v3983
      %v4044 = vadd.f32 %v3657, %v3986
      %v4045 = vadd.f32 %v3658, %v3991
      %v4046 = vadd.f32 %v3659, %v3994
      %v4047 = vadd.f32 %v3660, %v3999
      %v4048 = vadd.f32 %v3661, %v4002
      %v4049 = vadd.f32 %v3662, %v4007
      %v4050 = vadd.f32 %v3663, %v4010
      %v4051 = vadd.f32 %v3664, %v4015
      %v4052 = vadd.f32 %v3665, %v4018
      %v4053 = vld [vmem:[%s3666] sm:$0xf]
      %v4054 = vld [vmem:[%s3666 + $0x4] sm:$0xf]
      %v4055 = vld [vmem:[%s3666 + $0x8] sm:$0x1]
      %v4056 = vld [vmem:[%s3666 + $0xc] sm:$0xf]
      %v4057 = vld [vmem:[%s3666 + $0x10] sm:$0xf]
      %v4058 = vld [vmem:[%s3666 + $0x14] sm:$0x1]
      %v4059 = vld [vmem:[%s3666 + $0x18] sm:$0xf]
      %v4060 = vld [vmem:[%s3666 + $0x1c] sm:$0xf]
      %v4061 = vld [vmem:[%s3666 + $0x20] sm:$0x1]
      %v4062 = vld [vmem:[%s3666 + $0x24] sm:$0xf]
      %v4063 = vld [vmem:[%s3666 + $0x28] sm:$0xf]
      %v4064 = vld [vmem:[%s3666 + $0x2c] sm:$0x1]
      %v4065 = vld [vmem:[%s3666 + $0x30] sm:$0xf]
      %v4066 = vld [vmem:[%s3666 + $0x34] sm:$0xf]
      %v4067 = vld [vmem:[%s3666 + $0x38] sm:$0x1]
      %v4068 = vld [vmem:[%s3666 + $0x3c] sm:$0xf]
      %v4069 = vld [vmem:[%s3666 + $0x40] sm:$0xf]
      %v4070 = vld [vmem:[%s3666 + $0x44] sm:$0x1]
      %v4071 = vld [vmem:[%s3666 + $0x48] sm:$0xf]
      %v4072 = vld [vmem:[%s3666 + $0x4c] sm:$0xf]
      %v4073 = vld [vmem:[%s3666 + $0x50] sm:$0x1]
      %v4074 = vld [vmem:[%s3666 + $0x54] sm:$0xf]
      %v4075 = vld [vmem:[%s3666 + $0x58] sm:$0xf]
      %v4076 = vld [vmem:[%s3666 + $0x5c] sm:$0x1]
      %v4077 = vld [vmem:[%s3666 + $0x60] sm:$0xf]
      %v4078 = vld [vmem:[%s3666 + $0x64] sm:$0xf]
      %v4079 = vld [vmem:[%s3666 + $0x68] sm:$0x1]
      %v4080 = vld [vmem:[%s3666 + $0x6c] sm:$0xf]
      %v4081 = vld [vmem:[%s3666 + $0x70] sm:$0xf]
      %v4082 = vld [vmem:[%s3666 + $0x74] sm:$0x1]
      %v4083 = vld [vmem:[%s3666 + $0x78] sm:$0xf]
      %v4084 = vld [vmem:[%s3666 + $0x7c] sm:$0xf]
      %v4085 = vld [vmem:[%s3666 + $0x80] sm:$0x1]
      %v4086 = vld [vmem:[%s3666 + $0x84] sm:$0xf]
      %v4087 = vld [vmem:[%s3666 + $0x88] sm:$0xf]
      %v4088 = vld [vmem:[%s3666 + $0x8c] sm:$0x1]
      %v4089 = vld [vmem:[%s3666 + $0x90] sm:$0xf]
      %v4090 = vld [vmem:[%s3666 + $0x94] sm:$0xf]
      %v4091 = vld [vmem:[%s3666 + $0x98] sm:$0x1]
      %v4092 = vld [vmem:[%s3666 + $0x9c] sm:$0xf]
      %v4093 = vld [vmem:[%s3666 + $0xa0] sm:$0xf]
      %v4094 = vld [vmem:[%s3666 + $0xa4] sm:$0x1]
      %v4095 = vld [vmem:[%s3666 + $0xa8] sm:$0xf]
      %v4096 = vld [vmem:[%s3666 + $0xac] sm:$0xf]
      %v4097 = vld [vmem:[%s3666 + $0xb0] sm:$0x1]
      %v4098 = vld [vmem:[%s3666 + $0xb4] sm:$0xf]
      %v4099 = vld [vmem:[%s3666 + $0xb8] sm:$0xf]
      %v4100 = vld [vmem:[%s3666 + $0xbc] sm:$0x1]
      %v4102 = vshrl.u32 %v4053, 16
      %v4104 = vrot.slane %v4102, 4
      %v4105 = vshll.u32 %v4053, 16
      %v4107 = vrot.slane %v4105, 5
      %v4108 = vor.u32 %v4104, %v4107
      %v4109 = vrot.slane %v4108, 4
      %v4111 = vshll.u32 %v4054, 16
      %v4113 = vrot.slane %v4111, 5
      %v4114 = vsel %vm819, %v4109, %v4113
      %v4115 = vshrl.u32 %v4054, 16
      %v4117 = vrot.slane %v4115, 4
      %v4118 = vor.u32 %v4117, %v4113
      %v4119 = vrot.slane %v4118, 4
      %v4121 = vshll.u32 %v4055, 16
      %v4123 = vrot.slane %v4121, 5
      %v4124 = vsel %vm819, %v4119, %v4123
      %v4126 = vshrl.u32 %v4056, 16
      %v4128 = vrot.slane %v4126, 4
      %v4129 = vshll.u32 %v4056, 16
      %v4131 = vrot.slane %v4129, 5
      %v4132 = vor.u32 %v4128, %v4131
      %v4133 = vrot.slane %v4132, 4
      %v4135 = vshll.u32 %v4057, 16
      %v4137 = vrot.slane %v4135, 5
      %v4138 = vsel %vm819, %v4133, %v4137
      %v4139 = vshrl.u32 %v4057, 16
      %v4141 = vrot.slane %v4139, 4
      %v4142 = vor.u32 %v4141, %v4137
      %v4143 = vrot.slane %v4142, 4
      %v4145 = vshll.u32 %v4058, 16
      %v4147 = vrot.slane %v4145, 5
      %v4148 = vsel %vm819, %v4143, %v4147
      %v4150 = vshrl.u32 %v4059, 16
      %v4152 = vrot.slane %v4150, 4
      %v4153 = vshll.u32 %v4059, 16
      %v4155 = vrot.slane %v4153, 5
      %v4156 = vor.u32 %v4152, %v4155
      %v4157 = vrot.slane %v4156, 4
      %v4159 = vshll.u32 %v4060, 16
      %v4161 = vrot.slane %v4159, 5
      %v4162 = vsel %vm819, %v4157, %v4161
      %v4163 = vshrl.u32 %v4060, 16
      %v4165 = vrot.slane %v4163, 4
      %v4166 = vor.u32 %v4165, %v4161
      %v4167 = vrot.slane %v4166, 4
      %v4169 = vshll.u32 %v4061, 16
      %v4171 = vrot.slane %v4169, 5
      %v4172 = vsel %vm819, %v4167, %v4171
      %v4174 = vshrl.u32 %v4062, 16
      %v4176 = vrot.slane %v4174, 4
      %v4177 = vshll.u32 %v4062, 16
      %v4179 = vrot.slane %v4177, 5
      %v4180 = vor.u32 %v4176, %v4179
      %v4181 = vrot.slane %v4180, 4
      %v4183 = vshll.u32 %v4063, 16
      %v4185 = vrot.slane %v4183, 5
      %v4186 = vsel %vm819, %v4181, %v4185
      %v4187 = vshrl.u32 %v4063, 16
      %v4189 = vrot.slane %v4187, 4
      %v4190 = vor.u32 %v4189, %v4185
      %v4191 = vrot.slane %v4190, 4
      %v4193 = vshll.u32 %v4064, 16
      %v4195 = vrot.slane %v4193, 5
      %v4196 = vsel %vm819, %v4191, %v4195
      %v4198 = vshrl.u32 %v4065, 16
      %v4200 = vrot.slane %v4198, 4
      %v4201 = vshll.u32 %v4065, 16
      %v4203 = vrot.slane %v4201, 5
      %v4204 = vor.u32 %v4200, %v4203
      %v4205 = vrot.slane %v4204, 4
      %v4207 = vshll.u32 %v4066, 16
      %v4209 = vrot.slane %v4207, 5
      %v4210 = vsel %vm819, %v4205, %v4209
      %v4211 = vshrl.u32 %v4066, 16
      %v4213 = vrot.slane %v4211, 4
      %v4214 = vor.u32 %v4213, %v4209
      %v4215 = vrot.slane %v4214, 4
      %v4217 = vshll.u32 %v4067, 16
      %v4219 = vrot.slane %v4217, 5
      %v4220 = vsel %vm819, %v4215, %v4219
      %v4222 = vshrl.u32 %v4068, 16
      %v4224 = vrot.slane %v4222, 4
      %v4225 = vshll.u32 %v4068, 16
      %v4227 = vrot.slane %v4225, 5
      %v4228 = vor.u32 %v4224, %v4227
      %v4229 = vrot.slane %v4228, 4
      %v4231 = vshll.u32 %v4069, 16
      %v4233 = vrot.slane %v4231, 5
      %v4234 = vsel %vm819, %v4229, %v4233
      %v4235 = vshrl.u32 %v4069, 16
      %v4237 = vrot.slane %v4235, 4
      %v4238 = vor.u32 %v4237, %v4233
      %v4239 = vrot.slane %v4238, 4
      %v4241 = vshll.u32 %v4070, 16
      %v4243 = vrot.slane %v4241, 5
      %v4244 = vsel %vm819, %v4239, %v4243
      %v4246 = vshrl.u32 %v4071, 16
      %v4248 = vrot.slane %v4246, 4
      %v4249 = vshll.u32 %v4071, 16
      %v4251 = vrot.slane %v4249, 5
      %v4252 = vor.u32 %v4248, %v4251
      %v4253 = vrot.slane %v4252, 4
      %v4255 = vshll.u32 %v4072, 16
      %v4257 = vrot.slane %v4255, 5
      %v4258 = vsel %vm819, %v4253, %v4257
      %v4259 = vshrl.u32 %v4072, 16
      %v4261 = vrot.slane %v4259, 4
      %v4262 = vor.u32 %v4261, %v4257
      %v4263 = vrot.slane %v4262, 4
      %v4265 = vshll.u32 %v4073, 16
      %v4267 = vrot.slane %v4265, 5
      %v4268 = vsel %vm819, %v4263, %v4267
      %v4270 = vshrl.u32 %v4074, 16
      %v4272 = vrot.slane %v4270, 4
      %v4273 = vshll.u32 %v4074, 16
      %v4275 = vrot.slane %v4273, 5
      %v4276 = vor.u32 %v4272, %v4275
      %v4277 = vrot.slane %v4276, 4
      %v4279 = vshll.u32 %v4075, 16
      %v4281 = vrot.slane %v4279, 5
      %v4282 = vsel %vm819, %v4277, %v4281
      %v4283 = vshrl.u32 %v4075, 16
      %v4285 = vrot.slane %v4283, 4
      %v4286 = vor.u32 %v4285, %v4281
      %v4287 = vrot.slane %v4286, 4
      %v4289 = vshll.u32 %v4076, 16
      %v4291 = vrot.slane %v4289, 5
      %v4292 = vsel %vm819, %v4287, %v4291
      %v4294 = vshrl.u32 %v4077, 16
      %v4296 = vrot.slane %v4294, 4
      %v4297 = vshll.u32 %v4077, 16
      %v4299 = vrot.slane %v4297, 5
      %v4300 = vor.u32 %v4296, %v4299
      %v4301 = vrot.slane %v4300, 4
      %v4303 = vshll.u32 %v4078, 16
      %v4305 = vrot.slane %v4303, 5
      %v4306 = vsel %vm819, %v4301, %v4305
      %v4307 = vshrl.u32 %v4078, 16
      %v4309 = vrot.slane %v4307, 4
      %v4310 = vor.u32 %v4309, %v4305
      %v4311 = vrot.slane %v4310, 4
      %v4313 = vshll.u32 %v4079, 16
      %v4315 = vrot.slane %v4313, 5
      %v4316 = vsel %vm819, %v4311, %v4315
      %v4318 = vshrl.u32 %v4080, 16
      %v4320 = vrot.slane %v4318, 4
      %v4321 = vshll.u32 %v4080, 16
      %v4323 = vrot.slane %v4321, 5
      %v4324 = vor.u32 %v4320, %v4323
      %v4325 = vrot.slane %v4324, 4
      %v4327 = vshll.u32 %v4081, 16
      %v4329 = vrot.slane %v4327, 5
      %v4330 = vsel %vm819, %v4325, %v4329
      %v4331 = vshrl.u32 %v4081, 16
      %v4333 = vrot.slane %v4331, 4
      %v4334 = vor.u32 %v4333, %v4329
      %v4335 = vrot.slane %v4334, 4
      %v4337 = vshll.u32 %v4082, 16
      %v4339 = vrot.slane %v4337, 5
      %v4340 = vsel %vm819, %v4335, %v4339
      %v4342 = vshrl.u32 %v4083, 16
      %v4344 = vrot.slane %v4342, 4
      %v4345 = vshll.u32 %v4083, 16
      %v4347 = vrot.slane %v4345, 5
      %v4348 = vor.u32 %v4344, %v4347
      %v4349 = vrot.slane %v4348, 4
      %v4351 = vshll.u32 %v4084, 16
      %v4353 = vrot.slane %v4351, 5
      %v4354 = vsel %vm819, %v4349, %v4353
      %v4355 = vshrl.u32 %v4084, 16
      %v4357 = vrot.slane %v4355, 4
      %v4358 = vor.u32 %v4357, %v4353
      %v4359 = vrot.slane %v4358, 4
      %v4361 = vshll.u32 %v4085, 16
      %v4363 = vrot.slane %v4361, 5
      %v4364 = vsel %vm819, %v4359, %v4363
      %v4366 = vshrl.u32 %v4086, 16
      %v4368 = vrot.slane %v4366, 4
      %v4369 = vshll.u32 %v4086, 16
      %v4371 = vrot.slane %v4369, 5
      %v4372 = vor.u32 %v4368, %v4371
      %v4373 = vrot.slane %v4372, 4
      %v4375 = vshll.u32 %v4087, 16
      %v4377 = vrot.slane %v4375, 5
      %v4378 = vsel %vm819, %v4373, %v4377
      %v4379 = vshrl.u32 %v4087, 16
      %v4381 = vrot.slane %v4379, 4
      %v4382 = vor.u32 %v4381, %v4377
      %v4383 = vrot.slane %v4382, 4
      %v4385 = vshll.u32 %v4088, 16
      %v4387 = vrot.slane %v4385, 5
      %v4388 = vsel %vm819, %v4383, %v4387
      %v4390 = vshrl.u32 %v4089, 16
      %v4392 = vrot.slane %v4390, 4
      %v4393 = vshll.u32 %v4089, 16
      %v4395 = vrot.slane %v4393, 5
      %v4396 = vor.u32 %v4392, %v4395
      %v4397 = vrot.slane %v4396, 4
      %v4399 = vshll.u32 %v4090, 16
      %v4401 = vrot.slane %v4399, 5
      %v4402 = vsel %vm819, %v4397, %v4401
      %v4403 = vshrl.u32 %v4090, 16
      %v4405 = vrot.slane %v4403, 4
      %v4406 = vor.u32 %v4405, %v4401
      %v4407 = vrot.slane %v4406, 4
      %v4409 = vshll.u32 %v4091, 16
      %v4411 = vrot.slane %v4409, 5
      %v4412 = vsel %vm819, %v4407, %v4411
      %v4414 = vshrl.u32 %v4092, 16
      %v4416 = vrot.slane %v4414, 4
      %v4417 = vshll.u32 %v4092, 16
      %v4419 = vrot.slane %v4417, 5
      %v4420 = vor.u32 %v4416, %v4419
      %v4421 = vrot.slane %v4420, 4
      %v4423 = vshll.u32 %v4093, 16
      %v4425 = vrot.slane %v4423, 5
      %v4426 = vsel %vm819, %v4421, %v4425
      %v4427 = vshrl.u32 %v4093, 16
      %v4429 = vrot.slane %v4427, 4
      %v4430 = vor.u32 %v4429, %v4425
      %v4431 = vrot.slane %v4430, 4
      %v4433 = vshll.u32 %v4094, 16
      %v4435 = vrot.slane %v4433, 5
      %v4436 = vsel %vm819, %v4431, %v4435
      %v4438 = vshrl.u32 %v4095, 16
      %v4440 = vrot.slane %v4438, 4
      %v4441 = vshll.u32 %v4095, 16
      %v4443 = vrot.slane %v4441, 5
      %v4444 = vor.u32 %v4440, %v4443
      %v4445 = vrot.slane %v4444, 4
      %v4447 = vshll.u32 %v4096, 16
      %v4449 = vrot.slane %v4447, 5
      %v4450 = vsel %vm819, %v4445, %v4449
      %v4451 = vshrl.u32 %v4096, 16
      %v4453 = vrot.slane %v4451, 4
      %v4454 = vor.u32 %v4453, %v4449
      %v4455 = vrot.slane %v4454, 4
      %v4457 = vshll.u32 %v4097, 16
      %v4459 = vrot.slane %v4457, 5
      %v4460 = vsel %vm819, %v4455, %v4459
      %v4462 = vshrl.u32 %v4098, 16
      %v4464 = vrot.slane %v4462, 4
      %v4465 = vshll.u32 %v4098, 16
      %v4467 = vrot.slane %v4465, 5
      %v4468 = vor.u32 %v4464, %v4467
      %v4469 = vrot.slane %v4468, 4
      %v4471 = vshll.u32 %v4099, 16
      %v4473 = vrot.slane %v4471, 5
      %v4474 = vsel %vm819, %v4469, %v4473
      %v4475 = vshrl.u32 %v4099, 16
      %v4477 = vrot.slane %v4475, 4
      %v4478 = vor.u32 %v4477, %v4473
      %v4479 = vrot.slane %v4478, 4
      %v4481 = vshll.u32 %v4100, 16
      %v4483 = vrot.slane %v4481, 5
      %v4484 = vsel %vm819, %v4479, %v4483
      %s4485 = scalar_lea.vmem %s260, 448
      %v4486 = vld [vmem:[%s4485] sm:$0xf]
      %v4487 = vld [vmem:[%s4485 + $0x4] sm:$0xf]
      %v4488 = vld [vmem:[%s4485 + $0x8] sm:$0xf]
      %v4489 = vld [vmem:[%s4485 + $0xc] sm:$0xf]
      %v4490 = vld [vmem:[%s4485 + $0x10] sm:$0xf]
      %v4491 = vld [vmem:[%s4485 + $0x14] sm:$0xf]
      %v4492 = vld [vmem:[%s4485 + $0x18] sm:$0xf]
      %v4493 = vld [vmem:[%s4485 + $0x1c] sm:$0xf]
      %v4494 = vld [vmem:[%s4485 + $0x20] sm:$0xf]
      %v4495 = vld [vmem:[%s4485 + $0x24] sm:$0xf]
      %v4496 = vld [vmem:[%s4485 + $0x28] sm:$0xf]
      %v4497 = vld [vmem:[%s4485 + $0x2c] sm:$0xf]
      %v4498 = vld [vmem:[%s4485 + $0x30] sm:$0xf]
      %v4499 = vld [vmem:[%s4485 + $0x34] sm:$0xf]
      %v4500 = vld [vmem:[%s4485 + $0x38] sm:$0xf]
      %v4501 = vld [vmem:[%s4485 + $0x3c] sm:$0xf]
      %v4502 = vunpack.c.l.b16 %v4114
      %v4503 = vunpack.c.l.b16 %v4124
      %v4504 = vunpack.c.l.b16 %v4138
      %v4505 = vunpack.c.l.b16 %v4148
      %v4506 = vunpack.c.l.b16 %v4162
      %v4507 = vunpack.c.l.b16 %v4172
      %v4508 = vunpack.c.l.b16 %v4186
      %v4509 = vunpack.c.l.b16 %v4196
      %v4510 = vunpack.c.l.b16 %v4210
      %v4511 = vunpack.c.l.b16 %v4220
      %v4512 = vunpack.c.l.b16 %v4234
      %v4513 = vunpack.c.l.b16 %v4244
      %v4514 = vunpack.c.l.b16 %v4258
      %v4515 = vunpack.c.l.b16 %v4268
      %v4516 = vunpack.c.l.b16 %v4282
      %v4517 = vunpack.c.l.b16 %v4292
      %v4518 = vunpack.c.l.b16 %v4306
      %v4519 = vunpack.c.l.b16 %v4316
      %v4520 = vunpack.c.l.b16 %v4330
      %v4521 = vunpack.c.l.b16 %v4340
      %v4522 = vunpack.c.l.b16 %v4354
      %v4523 = vunpack.c.l.b16 %v4364
      %v4524 = vunpack.c.l.b16 %v4378
      %v4525 = vunpack.c.l.b16 %v4388
      %v4526 = vunpack.c.l.b16 %v4402
      %v4527 = vunpack.c.l.b16 %v4412
      %v4528 = vunpack.c.l.b16 %v4426
      %v4529 = vunpack.c.l.b16 %v4436
      %v4530 = vunpack.c.l.b16 %v4450
      %v4531 = vunpack.c.l.b16 %v4460
      %v4532 = vunpack.c.l.b16 %v4474
      %v4533 = vunpack.c.l.b16 %v4484
      %v4534 = vpack.c.b16 %v4503, %v4502
      %v4535 = vpack.c.b16 %v4505, %v4504
      %v4536 = vpack.c.b16 %v4507, %v4506
      %v4537 = vpack.c.b16 %v4509, %v4508
      %v4538 = vpack.c.b16 %v4511, %v4510
      %v4539 = vpack.c.b16 %v4513, %v4512
      %v4540 = vpack.c.b16 %v4515, %v4514
      %v4541 = vpack.c.b16 %v4517, %v4516
      %v4542 = vpack.c.b16 %v4519, %v4518
      %v4543 = vpack.c.b16 %v4521, %v4520
      %v4544 = vpack.c.b16 %v4523, %v4522
      %v4545 = vpack.c.b16 %v4525, %v4524
      %v4546 = vpack.c.b16 %v4527, %v4526
      %v4547 = vpack.c.b16 %v4529, %v4528
      %v4548 = vpack.c.b16 %v4531, %v4530
      %v4549 = vpack.c.b16 %v4533, %v4532
      %v4582 = vunpack.c.l.b16 %v4486
      %v4583 = vunpack.c.l.b16 %v4487
      %v4584 = vunpack.c.l.b16 %v4488
      %v4585 = vunpack.c.l.b16 %v4489
      %v4586 = vunpack.c.l.b16 %v4490
      %v4587 = vunpack.c.l.b16 %v4491
      %v4588 = vunpack.c.l.b16 %v4492
      %v4589 = vunpack.c.l.b16 %v4493
      %v4590 = vunpack.c.l.b16 %v4494
      %v4591 = vunpack.c.l.b16 %v4495
      %v4592 = vunpack.c.l.b16 %v4496
      %v4593 = vunpack.c.l.b16 %v4497
      %v4594 = vunpack.c.l.b16 %v4498
      %v4595 = vunpack.c.l.b16 %v4499
      %v4596 = vunpack.c.l.b16 %v4500
      %v4597 = vunpack.c.l.b16 %v4501
      %v4598 = vpack.c.b16 %v4583, %v4582
      %v4599 = vpack.c.b16 %v4585, %v4584
      %v4600 = vpack.c.b16 %v4587, %v4586
      %v4601 = vpack.c.b16 %v4589, %v4588
      %v4602 = vpack.c.b16 %v4591, %v4590
      %v4603 = vpack.c.b16 %v4593, %v4592
      %v4604 = vpack.c.b16 %v4595, %v4594
      %v4605 = vpack.c.b16 %v4597, %v4596
      %4614 = vmatprep.subr.bf16.mxu0 0
      %4615 = vmatpush1.bf16.msra.mxu0 %v4605
      %4616 = vmatprep.subr.bf16.mxu0 0
      %4617 = vmatpush1.bf16.msra.mxu0 %v4604
      %4618 = vmatprep.subr.bf16.mxu0 0
      %4619 = vmatpush1.bf16.msra.mxu0 %v4603
      %4620 = vmatprep.subr.bf16.mxu0 0
      %4621 = vmatpush1.bf16.msra.mxu0 %v4602
      %4622 = vmatprep.subr.bf16.mxu0 0
      %4623 = vmatpush1.bf16.msra.mxu0 %v4601
      %4624 = vmatprep.subr.bf16.mxu0 0
      %4625 = vmatpush1.bf16.msra.mxu0 %v4600
      %4626 = vmatprep.subr.bf16.mxu0 0
      %4627 = vmatpush1.bf16.msra.mxu0 %v4599
      %4628 = vmatprep.subr.bf16.mxu0 0
      %4629 = vmatpush1.bf16.msra.mxu0 %v4598
      %4630 = vmatprep.subr.bf16.mxu0 0
      %4631 = vmatpush2.bf16.msra.mxu0 0
      %4632 = vmatprep.subr.bf16.mxu0 0
      %4633 = vmatpush2.bf16.msra.mxu0 0
      %4634 = vmatprep.subr.bf16.mxu0 0
      %4635 = vmatpush2.bf16.msra.mxu0 0
      %4636 = vmatprep.subr.bf16.mxu0 0
      %4637 = vmatpush2.bf16.msra.mxu0 0
      %4638 = vmatprep.subr.bf16.mxu0 0
      %4639 = vmatpush2.bf16.msra.mxu0 0
      %4640 = vmatprep.subr.bf16.mxu0 0
      %4641 = vmatpush2.bf16.msra.mxu0 0
      %4642 = vmatprep.subr.bf16.mxu0 0
      %4643 = vmatpush2.bf16.msra.mxu0 0
      %4644 = vmatprep.subr.bf16.mxu0 0
      %4645 = vmatpush2.bf16.msra.mxu0 0
      %4646 = vmatprep.mubr.bf16.mxu0 0
      %4647 = vmatmul.mubr.bf16.gmra.mxu0 %v4534
      %v4648 = vpop.f32.mrf.mxu0
      %v4649 = vadd.f32 0.0, %v4648
      %v4650 = vpop.f32.mrf.mxu0
      %v4651 = vpop.f32.mrf.mxu0
      %v4652 = vadd.f32 0.0, %v4651
      %v4653 = vpop.f32.mrf.mxu0
      %4654 = vmatprep.mubr.bf16.mxu0 0
      %4655 = vmatmul.mubr.bf16.gmra.mxu0 %v4535
      %v4656 = vpop.f32.mrf.mxu0
      %v4657 = vadd.f32 0.0, %v4656
      %v4658 = vpop.f32.mrf.mxu0
      %v4659 = vpop.f32.mrf.mxu0
      %v4660 = vadd.f32 0.0, %v4659
      %v4661 = vpop.f32.mrf.mxu0
      %4662 = vmatprep.mubr.bf16.mxu0 0
      %4663 = vmatmul.mubr.bf16.gmra.mxu0 %v4536
      %v4664 = vpop.f32.mrf.mxu0
      %v4665 = vadd.f32 0.0, %v4664
      %v4666 = vpop.f32.mrf.mxu0
      %v4667 = vpop.f32.mrf.mxu0
      %v4668 = vadd.f32 0.0, %v4667
      %v4669 = vpop.f32.mrf.mxu0
      %4670 = vmatprep.mubr.bf16.mxu0 0
      %4671 = vmatmul.mubr.bf16.gmra.mxu0 %v4537
      %v4672 = vpop.f32.mrf.mxu0
      %v4673 = vadd.f32 0.0, %v4672
      %v4674 = vpop.f32.mrf.mxu0
      %v4675 = vpop.f32.mrf.mxu0
      %v4676 = vadd.f32 0.0, %v4675
      %v4677 = vpop.f32.mrf.mxu0
      %4678 = vmatprep.mubr.bf16.mxu0 0
      %4679 = vmatmul.mubr.bf16.gmra.mxu0 %v4538
      %v4680 = vpop.f32.mrf.mxu0
      %v4681 = vadd.f32 0.0, %v4680
      %v4682 = vpop.f32.mrf.mxu0
      %v4683 = vpop.f32.mrf.mxu0
      %v4684 = vadd.f32 0.0, %v4683
      %v4685 = vpop.f32.mrf.mxu0
      %4686 = vmatprep.mubr.bf16.mxu0 0
      %4687 = vmatmul.mubr.bf16.gmra.mxu0 %v4539
      %v4688 = vpop.f32.mrf.mxu0
      %v4689 = vadd.f32 0.0, %v4688
      %v4690 = vpop.f32.mrf.mxu0
      %v4691 = vpop.f32.mrf.mxu0
      %v4692 = vadd.f32 0.0, %v4691
      %v4693 = vpop.f32.mrf.mxu0
      %4694 = vmatprep.mubr.bf16.mxu0 0
      %4695 = vmatmul.mubr.bf16.gmra.mxu0 %v4540
      %v4696 = vpop.f32.mrf.mxu0
      %v4697 = vadd.f32 0.0, %v4696
      %v4698 = vpop.f32.mrf.mxu0
      %v4699 = vpop.f32.mrf.mxu0
      %v4700 = vadd.f32 0.0, %v4699
      %v4701 = vpop.f32.mrf.mxu0
      %4702 = vmatprep.mubr.bf16.mxu0 0
      %4703 = vmatmul.mubr.bf16.gmra.mxu0 %v4541
      %v4704 = vpop.f32.mrf.mxu0
      %v4705 = vadd.f32 0.0, %v4704
      %v4706 = vpop.f32.mrf.mxu0
      %v4707 = vpop.f32.mrf.mxu0
      %v4708 = vadd.f32 0.0, %v4707
      %v4709 = vpop.f32.mrf.mxu0
      %4710 = vmatprep.mubr.bf16.mxu0 0
      %4711 = vmatmul.mubr.bf16.gmra.mxu0 %v4542
      %v4712 = vpop.f32.mrf.mxu0
      %v4713 = vadd.f32 0.0, %v4712
      %v4714 = vpop.f32.mrf.mxu0
      %v4715 = vpop.f32.mrf.mxu0
      %v4716 = vadd.f32 0.0, %v4715
      %v4717 = vpop.f32.mrf.mxu0
      %4718 = vmatprep.mubr.bf16.mxu0 0
      %4719 = vmatmul.mubr.bf16.gmra.mxu0 %v4543
      %v4720 = vpop.f32.mrf.mxu0
      %v4721 = vadd.f32 0.0, %v4720
      %v4722 = vpop.f32.mrf.mxu0
      %v4723 = vpop.f32.mrf.mxu0
      %v4724 = vadd.f32 0.0, %v4723
      %v4725 = vpop.f32.mrf.mxu0
      %4726 = vmatprep.mubr.bf16.mxu0 0
      %4727 = vmatmul.mubr.bf16.gmra.mxu0 %v4544
      %v4728 = vpop.f32.mrf.mxu0
      %v4729 = vadd.f32 0.0, %v4728
      %v4730 = vpop.f32.mrf.mxu0
      %v4731 = vpop.f32.mrf.mxu0
      %v4732 = vadd.f32 0.0, %v4731
      %v4733 = vpop.f32.mrf.mxu0
      %4734 = vmatprep.mubr.bf16.mxu0 0
      %4735 = vmatmul.mubr.bf16.gmra.mxu0 %v4545
      %v4736 = vpop.f32.mrf.mxu0
      %v4737 = vadd.f32 0.0, %v4736
      %v4738 = vpop.f32.mrf.mxu0
      %v4739 = vpop.f32.mrf.mxu0
      %v4740 = vadd.f32 0.0, %v4739
      %v4741 = vpop.f32.mrf.mxu0
      %4742 = vmatprep.mubr.bf16.mxu0 0
      %4743 = vmatmul.mubr.bf16.gmra.mxu0 %v4546
      %v4744 = vpop.f32.mrf.mxu0
      %v4745 = vadd.f32 0.0, %v4744
      %v4746 = vpop.f32.mrf.mxu0
      %v4747 = vpop.f32.mrf.mxu0
      %v4748 = vadd.f32 0.0, %v4747
      %v4749 = vpop.f32.mrf.mxu0
      %4750 = vmatprep.mubr.bf16.mxu0 0
      %4751 = vmatmul.mubr.bf16.gmra.mxu0 %v4547
      %v4752 = vpop.f32.mrf.mxu0
      %v4753 = vadd.f32 0.0, %v4752
      %v4754 = vpop.f32.mrf.mxu0
      %v4755 = vpop.f32.mrf.mxu0
      %v4756 = vadd.f32 0.0, %v4755
      %v4757 = vpop.f32.mrf.mxu0
      %4758 = vmatprep.mubr.bf16.mxu0 0
      %4759 = vmatmul.mubr.bf16.gmra.mxu0 %v4548
      %v4760 = vpop.f32.mrf.mxu0
      %v4761 = vadd.f32 0.0, %v4760
      %v4762 = vpop.f32.mrf.mxu0
      %v4763 = vpop.f32.mrf.mxu0
      %v4764 = vadd.f32 0.0, %v4763
      %v4765 = vpop.f32.mrf.mxu0
      %4766 = vmatprep.mubr.bf16.mxu0 0
      %4767 = vmatmul.mubr.bf16.gmra.mxu0 %v4549
      %v4768 = vpop.f32.mrf.mxu0
      %v4769 = vadd.f32 0.0, %v4768
      %v4770 = vpop.f32.mrf.mxu0
      %v4771 = vpop.f32.mrf.mxu0
      %v4772 = vadd.f32 0.0, %v4771
      %v4773 = vpop.f32.mrf.mxu0
      %4774 = vdwg.mxu0
      %v4775 = vadd.f32 %v4021, %v4649
      %v4776 = vadd.f32 %v4022, %v4652
      %v4777 = vadd.f32 %v4023, %v4657
      %v4778 = vadd.f32 %v4024, %v4660
      %v4779 = vadd.f32 %v4025, %v4665
      %v4780 = vadd.f32 %v4026, %v4668
      %v4781 = vadd.f32 %v4027, %v4673
      %v4782 = vadd.f32 %v4028, %v4676
      %v4783 = vadd.f32 %v4029, %v4681
      %v4784 = vadd.f32 %v4030, %v4684
      %v4785 = vadd.f32 %v4031, %v4689
      %v4786 = vadd.f32 %v4032, %v4692
      %v4787 = vadd.f32 %v4033, %v4697
      %v4788 = vadd.f32 %v4034, %v4700
      %v4789 = vadd.f32 %v4035, %v4705
      %v4790 = vadd.f32 %v4036, %v4708
      %v4791 = vadd.f32 %v4037, %v4713
      %v4792 = vadd.f32 %v4038, %v4716
      %v4793 = vadd.f32 %v4039, %v4721
      %v4794 = vadd.f32 %v4040, %v4724
      %v4795 = vadd.f32 %v4041, %v4729
      %v4796 = vadd.f32 %v4042, %v4732
      %v4797 = vadd.f32 %v4043, %v4737
      %v4798 = vadd.f32 %v4044, %v4740
      %v4799 = vadd.f32 %v4045, %v4745
      %v4800 = vadd.f32 %v4046, %v4748
      %v4801 = vadd.f32 %v4047, %v4753
      %v4802 = vadd.f32 %v4048, %v4756
      %v4803 = vadd.f32 %v4049, %v4761
      %v4804 = vadd.f32 %v4050, %v4764
      %v4805 = vadd.f32 %v4051, %v4769
      %v4806 = vadd.f32 %v4052, %v4772
      %v4807 = vld [vmem:[%s3666] sm:$0xe]
      %v4808 = vld [vmem:[%s3666 + $0xc] sm:$0xe]
      %v4809 = vld [vmem:[%s3666 + $0x18] sm:$0xe]
      %v4810 = vld [vmem:[%s3666 + $0x24] sm:$0xe]
      %v4811 = vld [vmem:[%s3666 + $0x30] sm:$0xe]
      %v4812 = vld [vmem:[%s3666 + $0x3c] sm:$0xe]
      %v4813 = vld [vmem:[%s3666 + $0x48] sm:$0xe]
      %v4814 = vld [vmem:[%s3666 + $0x54] sm:$0xe]
      %v4815 = vld [vmem:[%s3666 + $0x60] sm:$0xe]
      %v4816 = vld [vmem:[%s3666 + $0x6c] sm:$0xe]
      %v4817 = vld [vmem:[%s3666 + $0x78] sm:$0xe]
      %v4818 = vld [vmem:[%s3666 + $0x84] sm:$0xe]
      %v4819 = vld [vmem:[%s3666 + $0x90] sm:$0xe]
      %v4820 = vld [vmem:[%s3666 + $0x9c] sm:$0xe]
      %v4821 = vld [vmem:[%s3666 + $0xa8] sm:$0xe]
      %v4822 = vld [vmem:[%s3666 + $0xb4] sm:$0xe]
      %v4871 = vrot.slane %v4807, 5
      %v4872 = vrot.slane %v4871, 4
      %v4873 = vrot.slane %v4054, 5
      %v4874 = vsel %vm1592, %v4872, %v4873
      %v4875 = vrot.slane %v4873, 4
      %v4876 = vrot.slane %v4055, 5
      %v4877 = vsel %vm1592, %v4875, %v4876
      %v4878 = vrot.slane %v4808, 5
      %v4879 = vrot.slane %v4878, 4
      %v4880 = vrot.slane %v4057, 5
      %v4881 = vsel %vm1592, %v4879, %v4880
      %v4882 = vrot.slane %v4880, 4
      %v4883 = vrot.slane %v4058, 5
      %v4884 = vsel %vm1592, %v4882, %v4883
      %v4885 = vrot.slane %v4809, 5
      %v4886 = vrot.slane %v4885, 4
      %v4887 = vrot.slane %v4060, 5
      %v4888 = vsel %vm1592, %v4886, %v4887
      %v4889 = vrot.slane %v4887, 4
      %v4890 = vrot.slane %v4061, 5
      %v4891 = vsel %vm1592, %v4889, %v4890
      %v4892 = vrot.slane %v4810, 5
      %v4893 = vrot.slane %v4892, 4
      %v4894 = vrot.slane %v4063, 5
      %v4895 = vsel %vm1592, %v4893, %v4894
      %v4896 = vrot.slane %v4894, 4
      %v4897 = vrot.slane %v4064, 5
      %v4898 = vsel %vm1592, %v4896, %v4897
      %v4899 = vrot.slane %v4811, 5
      %v4900 = vrot.slane %v4899, 4
      %v4901 = vrot.slane %v4066, 5
      %v4902 = vsel %vm1592, %v4900, %v4901
      %v4903 = vrot.slane %v4901, 4
      %v4904 = vrot.slane %v4067, 5
      %v4905 = vsel %vm1592, %v4903, %v4904
      %v4906 = vrot.slane %v4812, 5
      %v4907 = vrot.slane %v4906, 4
      %v4908 = vrot.slane %v4069, 5
      %v4909 = vsel %vm1592, %v4907, %v4908
      %v4910 = vrot.slane %v4908, 4
      %v4911 = vrot.slane %v4070, 5
      %v4912 = vsel %vm1592, %v4910, %v4911
      %v4913 = vrot.slane %v4813, 5
      %v4914 = vrot.slane %v4913, 4
      %v4915 = vrot.slane %v4072, 5
      %v4916 = vsel %vm1592, %v4914, %v4915
      %v4917 = vrot.slane %v4915, 4
      %v4918 = vrot.slane %v4073, 5
      %v4919 = vsel %vm1592, %v4917, %v4918
      %v4920 = vrot.slane %v4814, 5
      %v4921 = vrot.slane %v4920, 4
      %v4922 = vrot.slane %v4075, 5
      %v4923 = vsel %vm1592, %v4921, %v4922
      %v4924 = vrot.slane %v4922, 4
      %v4925 = vrot.slane %v4076, 5
      %v4926 = vsel %vm1592, %v4924, %v4925
      %v4927 = vrot.slane %v4815, 5
      %v4928 = vrot.slane %v4927, 4
      %v4929 = vrot.slane %v4078, 5
      %v4930 = vsel %vm1592, %v4928, %v4929
      %v4931 = vrot.slane %v4929, 4
      %v4932 = vrot.slane %v4079, 5
      %v4933 = vsel %vm1592, %v4931, %v4932
      %v4934 = vrot.slane %v4816, 5
      %v4935 = vrot.slane %v4934, 4
      %v4936 = vrot.slane %v4081, 5
      %v4937 = vsel %vm1592, %v4935, %v4936
      %v4938 = vrot.slane %v4936, 4
      %v4939 = vrot.slane %v4082, 5
      %v4940 = vsel %vm1592, %v4938, %v4939
      %v4941 = vrot.slane %v4817, 5
      %v4942 = vrot.slane %v4941, 4
      %v4943 = vrot.slane %v4084, 5
      %v4944 = vsel %vm1592, %v4942, %v4943
      %v4945 = vrot.slane %v4943, 4
      %v4946 = vrot.slane %v4085, 5
      %v4947 = vsel %vm1592, %v4945, %v4946
      %v4948 = vrot.slane %v4818, 5
      %v4949 = vrot.slane %v4948, 4
      %v4950 = vrot.slane %v4087, 5
      %v4951 = vsel %vm1592, %v4949, %v4950
      %v4952 = vrot.slane %v4950, 4
      %v4953 = vrot.slane %v4088, 5
      %v4954 = vsel %vm1592, %v4952, %v4953
      %v4955 = vrot.slane %v4819, 5
      %v4956 = vrot.slane %v4955, 4
      %v4957 = vrot.slane %v4090, 5
      %v4958 = vsel %vm1592, %v4956, %v4957
      %v4959 = vrot.slane %v4957, 4
      %v4960 = vrot.slane %v4091, 5
      %v4961 = vsel %vm1592, %v4959, %v4960
      %v4962 = vrot.slane %v4820, 5
      %v4963 = vrot.slane %v4962, 4
      %v4964 = vrot.slane %v4093, 5
      %v4965 = vsel %vm1592, %v4963, %v4964
      %v4966 = vrot.slane %v4964, 4
      %v4967 = vrot.slane %v4094, 5
      %v4968 = vsel %vm1592, %v4966, %v4967
      %v4969 = vrot.slane %v4821, 5
      %v4970 = vrot.slane %v4969, 4
      %v4971 = vrot.slane %v4096, 5
      %v4972 = vsel %vm1592, %v4970, %v4971
      %v4973 = vrot.slane %v4971, 4
      %v4974 = vrot.slane %v4097, 5
      %v4975 = vsel %vm1592, %v4973, %v4974
      %v4976 = vrot.slane %v4822, 5
      %v4977 = vrot.slane %v4976, 4
      %v4978 = vrot.slane %v4099, 5
      %v4979 = vsel %vm1592, %v4977, %v4978
      %v4980 = vrot.slane %v4978, 4
      %v4981 = vrot.slane %v4100, 5
      %v4982 = vsel %vm1592, %v4980, %v4981
      %s4983 = scalar_lea.vmem %s260, 512
      %v4984 = vld [vmem:[%s4983] sm:$0xf]
      %v4985 = vld [vmem:[%s4983 + $0x4] sm:$0xf]
      %v4986 = vld [vmem:[%s4983 + $0x8] sm:$0xf]
      %v4987 = vld [vmem:[%s4983 + $0xc] sm:$0xf]
      %v4988 = vld [vmem:[%s4983 + $0x10] sm:$0xf]
      %v4989 = vld [vmem:[%s4983 + $0x14] sm:$0xf]
      %v4990 = vld [vmem:[%s4983 + $0x18] sm:$0xf]
      %v4991 = vld [vmem:[%s4983 + $0x1c] sm:$0xf]
      %v4992 = vld [vmem:[%s4983 + $0x20] sm:$0xf]
      %v4993 = vld [vmem:[%s4983 + $0x24] sm:$0xf]
      %v4994 = vld [vmem:[%s4983 + $0x28] sm:$0xf]
      %v4995 = vld [vmem:[%s4983 + $0x2c] sm:$0xf]
      %v4996 = vld [vmem:[%s4983 + $0x30] sm:$0xf]
      %v4997 = vld [vmem:[%s4983 + $0x34] sm:$0xf]
      %v4998 = vld [vmem:[%s4983 + $0x38] sm:$0xf]
      %v4999 = vld [vmem:[%s4983 + $0x3c] sm:$0xf]
      %v5000 = vunpack.c.l.b16 %v4874
      %v5001 = vunpack.c.l.b16 %v4877
      %v5002 = vunpack.c.l.b16 %v4881
      %v5003 = vunpack.c.l.b16 %v4884
      %v5004 = vunpack.c.l.b16 %v4888
      %v5005 = vunpack.c.l.b16 %v4891
      %v5006 = vunpack.c.l.b16 %v4895
      %v5007 = vunpack.c.l.b16 %v4898
      %v5008 = vunpack.c.l.b16 %v4902
      %v5009 = vunpack.c.l.b16 %v4905
      %v5010 = vunpack.c.l.b16 %v4909
      %v5011 = vunpack.c.l.b16 %v4912
      %v5012 = vunpack.c.l.b16 %v4916
      %v5013 = vunpack.c.l.b16 %v4919
      %v5014 = vunpack.c.l.b16 %v4923
      %v5015 = vunpack.c.l.b16 %v4926
      %v5016 = vunpack.c.l.b16 %v4930
      %v5017 = vunpack.c.l.b16 %v4933
      %v5018 = vunpack.c.l.b16 %v4937
      %v5019 = vunpack.c.l.b16 %v4940
      %v5020 = vunpack.c.l.b16 %v4944
      %v5021 = vunpack.c.l.b16 %v4947
      %v5022 = vunpack.c.l.b16 %v4951
      %v5023 = vunpack.c.l.b16 %v4954
      %v5024 = vunpack.c.l.b16 %v4958
      %v5025 = vunpack.c.l.b16 %v4961
      %v5026 = vunpack.c.l.b16 %v4965
      %v5027 = vunpack.c.l.b16 %v4968
      %v5028 = vunpack.c.l.b16 %v4972
      %v5029 = vunpack.c.l.b16 %v4975
      %v5030 = vunpack.c.l.b16 %v4979
      %v5031 = vunpack.c.l.b16 %v4982
      %v5032 = vpack.c.b16 %v5001, %v5000
      %v5033 = vpack.c.b16 %v5003, %v5002
      %v5034 = vpack.c.b16 %v5005, %v5004
      %v5035 = vpack.c.b16 %v5007, %v5006
      %v5036 = vpack.c.b16 %v5009, %v5008
      %v5037 = vpack.c.b16 %v5011, %v5010
      %v5038 = vpack.c.b16 %v5013, %v5012
      %v5039 = vpack.c.b16 %v5015, %v5014
      %v5040 = vpack.c.b16 %v5017, %v5016
      %v5041 = vpack.c.b16 %v5019, %v5018
      %v5042 = vpack.c.b16 %v5021, %v5020
      %v5043 = vpack.c.b16 %v5023, %v5022
      %v5044 = vpack.c.b16 %v5025, %v5024
      %v5045 = vpack.c.b16 %v5027, %v5026
      %v5046 = vpack.c.b16 %v5029, %v5028
      %v5047 = vpack.c.b16 %v5031, %v5030
      %v5080 = vunpack.c.l.b16 %v4984
      %v5081 = vunpack.c.l.b16 %v4985
      %v5082 = vunpack.c.l.b16 %v4986
      %v5083 = vunpack.c.l.b16 %v4987
      %v5084 = vunpack.c.l.b16 %v4988
      %v5085 = vunpack.c.l.b16 %v4989
      %v5086 = vunpack.c.l.b16 %v4990
      %v5087 = vunpack.c.l.b16 %v4991
      %v5088 = vunpack.c.l.b16 %v4992
      %v5089 = vunpack.c.l.b16 %v4993
      %v5090 = vunpack.c.l.b16 %v4994
      %v5091 = vunpack.c.l.b16 %v4995
      %v5092 = vunpack.c.l.b16 %v4996
      %v5093 = vunpack.c.l.b16 %v4997
      %v5094 = vunpack.c.l.b16 %v4998
      %v5095 = vunpack.c.l.b16 %v4999
      %v5096 = vpack.c.b16 %v5081, %v5080
      %v5097 = vpack.c.b16 %v5083, %v5082
      %v5098 = vpack.c.b16 %v5085, %v5084
      %v5099 = vpack.c.b16 %v5087, %v5086
      %v5100 = vpack.c.b16 %v5089, %v5088
      %v5101 = vpack.c.b16 %v5091, %v5090
      %v5102 = vpack.c.b16 %v5093, %v5092
      %v5103 = vpack.c.b16 %v5095, %v5094
      %5112 = vmatprep.subr.bf16.mxu0 0
      %5113 = vmatpush1.bf16.msra.mxu0 %v5103
      %5114 = vmatprep.subr.bf16.mxu0 0
      %5115 = vmatpush1.bf16.msra.mxu0 %v5102
      %5116 = vmatprep.subr.bf16.mxu0 0
      %5117 = vmatpush1.bf16.msra.mxu0 %v5101
      %5118 = vmatprep.subr.bf16.mxu0 0
      %5119 = vmatpush1.bf16.msra.mxu0 %v5100
      %5120 = vmatprep.subr.bf16.mxu0 0
      %5121 = vmatpush1.bf16.msra.mxu0 %v5099
      %5122 = vmatprep.subr.bf16.mxu0 0
      %5123 = vmatpush1.bf16.msra.mxu0 %v5098
      %5124 = vmatprep.subr.bf16.mxu0 0
      %5125 = vmatpush1.bf16.msra.mxu0 %v5097
      %5126 = vmatprep.subr.bf16.mxu0 0
      %5127 = vmatpush1.bf16.msra.mxu0 %v5096
      %5128 = vmatprep.subr.bf16.mxu0 0
      %5129 = vmatpush2.bf16.msra.mxu0 0
      %5130 = vmatprep.subr.bf16.mxu0 0
      %5131 = vmatpush2.bf16.msra.mxu0 0
      %5132 = vmatprep.subr.bf16.mxu0 0
      %5133 = vmatpush2.bf16.msra.mxu0 0
      %5134 = vmatprep.subr.bf16.mxu0 0
      %5135 = vmatpush2.bf16.msra.mxu0 0
      %5136 = vmatprep.subr.bf16.mxu0 0
      %5137 = vmatpush2.bf16.msra.mxu0 0
      %5138 = vmatprep.subr.bf16.mxu0 0
      %5139 = vmatpush2.bf16.msra.mxu0 0
      %5140 = vmatprep.subr.bf16.mxu0 0
      %5141 = vmatpush2.bf16.msra.mxu0 0
      %5142 = vmatprep.subr.bf16.mxu0 0
      %5143 = vmatpush2.bf16.msra.mxu0 0
      %5144 = vmatprep.mubr.bf16.mxu0 0
      %5145 = vmatmul.mubr.bf16.gmra.mxu0 %v5032
      %v5146 = vpop.f32.mrf.mxu0
      %v5147 = vadd.f32 0.0, %v5146
      %v5148 = vpop.f32.mrf.mxu0
      %v5149 = vpop.f32.mrf.mxu0
      %v5150 = vadd.f32 0.0, %v5149
      %v5151 = vpop.f32.mrf.mxu0
      %5152 = vmatprep.mubr.bf16.mxu0 0
      %5153 = vmatmul.mubr.bf16.gmra.mxu0 %v5033
      %v5154 = vpop.f32.mrf.mxu0
      %v5155 = vadd.f32 0.0, %v5154
      %v5156 = vpop.f32.mrf.mxu0
      %v5157 = vpop.f32.mrf.mxu0
      %v5158 = vadd.f32 0.0, %v5157
      %v5159 = vpop.f32.mrf.mxu0
      %5160 = vmatprep.mubr.bf16.mxu0 0
      %5161 = vmatmul.mubr.bf16.gmra.mxu0 %v5034
      %v5162 = vpop.f32.mrf.mxu0
      %v5163 = vadd.f32 0.0, %v5162
      %v5164 = vpop.f32.mrf.mxu0
      %v5165 = vpop.f32.mrf.mxu0
      %v5166 = vadd.f32 0.0, %v5165
      %v5167 = vpop.f32.mrf.mxu0
      %5168 = vmatprep.mubr.bf16.mxu0 0
      %5169 = vmatmul.mubr.bf16.gmra.mxu0 %v5035
      %v5170 = vpop.f32.mrf.mxu0
      %v5171 = vadd.f32 0.0, %v5170
      %v5172 = vpop.f32.mrf.mxu0
      %v5173 = vpop.f32.mrf.mxu0
      %v5174 = vadd.f32 0.0, %v5173
      %v5175 = vpop.f32.mrf.mxu0
      %5176 = vmatprep.mubr.bf16.mxu0 0
      %5177 = vmatmul.mubr.bf16.gmra.mxu0 %v5036
      %v5178 = vpop.f32.mrf.mxu0
      %v5179 = vadd.f32 0.0, %v5178
      %v5180 = vpop.f32.mrf.mxu0
      %v5181 = vpop.f32.mrf.mxu0
      %v5182 = vadd.f32 0.0, %v5181
      %v5183 = vpop.f32.mrf.mxu0
      %5184 = vmatprep.mubr.bf16.mxu0 0
      %5185 = vmatmul.mubr.bf16.gmra.mxu0 %v5037
      %v5186 = vpop.f32.mrf.mxu0
      %v5187 = vadd.f32 0.0, %v5186
      %v5188 = vpop.f32.mrf.mxu0
      %v5189 = vpop.f32.mrf.mxu0
      %v5190 = vadd.f32 0.0, %v5189
      %v5191 = vpop.f32.mrf.mxu0
      %5192 = vmatprep.mubr.bf16.mxu0 0
      %5193 = vmatmul.mubr.bf16.gmra.mxu0 %v5038
      %v5194 = vpop.f32.mrf.mxu0
      %v5195 = vadd.f32 0.0, %v5194
      %v5196 = vpop.f32.mrf.mxu0
      %v5197 = vpop.f32.mrf.mxu0
      %v5198 = vadd.f32 0.0, %v5197
      %v5199 = vpop.f32.mrf.mxu0
      %5200 = vmatprep.mubr.bf16.mxu0 0
      %5201 = vmatmul.mubr.bf16.gmra.mxu0 %v5039
      %v5202 = vpop.f32.mrf.mxu0
      %v5203 = vadd.f32 0.0, %v5202
      %v5204 = vpop.f32.mrf.mxu0
      %v5205 = vpop.f32.mrf.mxu0
      %v5206 = vadd.f32 0.0, %v5205
      %v5207 = vpop.f32.mrf.mxu0
      %5208 = vmatprep.mubr.bf16.mxu0 0
      %5209 = vmatmul.mubr.bf16.gmra.mxu0 %v5040
      %v5210 = vpop.f32.mrf.mxu0
      %v5211 = vadd.f32 0.0, %v5210
      %v5212 = vpop.f32.mrf.mxu0
      %v5213 = vpop.f32.mrf.mxu0
      %v5214 = vadd.f32 0.0, %v5213
      %v5215 = vpop.f32.mrf.mxu0
      %5216 = vmatprep.mubr.bf16.mxu0 0
      %5217 = vmatmul.mubr.bf16.gmra.mxu0 %v5041
      %v5218 = vpop.f32.mrf.mxu0
      %v5219 = vadd.f32 0.0, %v5218
      %v5220 = vpop.f32.mrf.mxu0
      %v5221 = vpop.f32.mrf.mxu0
      %v5222 = vadd.f32 0.0, %v5221
      %v5223 = vpop.f32.mrf.mxu0
      %5224 = vmatprep.mubr.bf16.mxu0 0
      %5225 = vmatmul.mubr.bf16.gmra.mxu0 %v5042
      %v5226 = vpop.f32.mrf.mxu0
      %v5227 = vadd.f32 0.0, %v5226
      %v5228 = vpop.f32.mrf.mxu0
      %v5229 = vpop.f32.mrf.mxu0
      %v5230 = vadd.f32 0.0, %v5229
      %v5231 = vpop.f32.mrf.mxu0
      %5232 = vmatprep.mubr.bf16.mxu0 0
      %5233 = vmatmul.mubr.bf16.gmra.mxu0 %v5043
      %v5234 = vpop.f32.mrf.mxu0
      %v5235 = vadd.f32 0.0, %v5234
      %v5236 = vpop.f32.mrf.mxu0
      %v5237 = vpop.f32.mrf.mxu0
      %v5238 = vadd.f32 0.0, %v5237
      %v5239 = vpop.f32.mrf.mxu0
      %5240 = vmatprep.mubr.bf16.mxu0 0
      %5241 = vmatmul.mubr.bf16.gmra.mxu0 %v5044
      %v5242 = vpop.f32.mrf.mxu0
      %v5243 = vadd.f32 0.0, %v5242
      %v5244 = vpop.f32.mrf.mxu0
      %v5245 = vpop.f32.mrf.mxu0
      %v5246 = vadd.f32 0.0, %v5245
      %v5247 = vpop.f32.mrf.mxu0
      %5248 = vmatprep.mubr.bf16.mxu0 0
      %5249 = vmatmul.mubr.bf16.gmra.mxu0 %v5045
      %v5250 = vpop.f32.mrf.mxu0
      %v5251 = vadd.f32 0.0, %v5250
      %v5252 = vpop.f32.mrf.mxu0
      %v5253 = vpop.f32.mrf.mxu0
      %v5254 = vadd.f32 0.0, %v5253
      %v5255 = vpop.f32.mrf.mxu0
      %5256 = vmatprep.mubr.bf16.mxu0 0
      %5257 = vmatmul.mubr.bf16.gmra.mxu0 %v5046
      %v5258 = vpop.f32.mrf.mxu0
      %v5259 = vadd.f32 0.0, %v5258
      %v5260 = vpop.f32.mrf.mxu0
      %v5261 = vpop.f32.mrf.mxu0
      %v5262 = vadd.f32 0.0, %v5261
      %v5263 = vpop.f32.mrf.mxu0
      %5264 = vmatprep.mubr.bf16.mxu0 0
      %5265 = vmatmul.mubr.bf16.gmra.mxu0 %v5047
      %v5266 = vpop.f32.mrf.mxu0
      %v5267 = vadd.f32 0.0, %v5266
      %v5268 = vpop.f32.mrf.mxu0
      %v5269 = vpop.f32.mrf.mxu0
      %v5270 = vadd.f32 0.0, %v5269
      %v5271 = vpop.f32.mrf.mxu0
      %5272 = vdwg.mxu0
      %v5273 = vadd.f32 %v4775, %v5147
      %v5274 = vadd.f32 %v4776, %v5150
      %v5275 = vadd.f32 %v4777, %v5155
      %v5276 = vadd.f32 %v4778, %v5158
      %v5277 = vadd.f32 %v4779, %v5163
      %v5278 = vadd.f32 %v4780, %v5166
      %v5279 = vadd.f32 %v4781, %v5171
      %v5280 = vadd.f32 %v4782, %v5174
      %v5281 = vadd.f32 %v4783, %v5179
      %v5282 = vadd.f32 %v4784, %v5182
      %v5283 = vadd.f32 %v4785, %v5187
      %v5284 = vadd.f32 %v4786, %v5190
      %v5285 = vadd.f32 %v4787, %v5195
      %v5286 = vadd.f32 %v4788, %v5198
      %v5287 = vadd.f32 %v4789, %v5203
      %v5288 = vadd.f32 %v4790, %v5206
      %v5289 = vadd.f32 %v4791, %v5211
      %v5290 = vadd.f32 %v4792, %v5214
      %v5291 = vadd.f32 %v4793, %v5219
      %v5292 = vadd.f32 %v4794, %v5222
      %v5293 = vadd.f32 %v4795, %v5227
      %v5294 = vadd.f32 %v4796, %v5230
      %v5295 = vadd.f32 %v4797, %v5235
      %v5296 = vadd.f32 %v4798, %v5238
      %v5297 = vadd.f32 %v4799, %v5243
      %v5298 = vadd.f32 %v4800, %v5246
      %v5299 = vadd.f32 %v4801, %v5251
      %v5300 = vadd.f32 %v4802, %v5254
      %v5301 = vadd.f32 %v4803, %v5259
      %v5302 = vadd.f32 %v4804, %v5262
      %v5303 = vadd.f32 %v4805, %v5267
      %v5304 = vadd.f32 %v4806, %v5270
      %v5305 = vmax.f32 %v5273, 0.0
      %v5306 = vmax.f32 %v5274, 0.0
      %v5307 = vmax.f32 %v5275, 0.0
      %v5308 = vmax.f32 %v5276, 0.0
      %v5309 = vmax.f32 %v5277, 0.0
      %v5310 = vmax.f32 %v5278, 0.0
      %v5311 = vmax.f32 %v5279, 0.0
      %v5312 = vmax.f32 %v5280, 0.0
      %v5313 = vmax.f32 %v5281, 0.0
      %v5314 = vmax.f32 %v5282, 0.0
      %v5315 = vmax.f32 %v5283, 0.0
      %v5316 = vmax.f32 %v5284, 0.0
      %v5317 = vmax.f32 %v5285, 0.0
      %v5318 = vmax.f32 %v5286, 0.0
      %v5319 = vmax.f32 %v5287, 0.0
      %v5320 = vmax.f32 %v5288, 0.0
      %v5321 = vmax.f32 %v5289, 0.0
      %v5322 = vmax.f32 %v5290, 0.0
      %v5323 = vmax.f32 %v5291, 0.0
      %v5324 = vmax.f32 %v5292, 0.0
      %v5325 = vmax.f32 %v5293, 0.0
      %v5326 = vmax.f32 %v5294, 0.0
      %v5327 = vmax.f32 %v5295, 0.0
      %v5328 = vmax.f32 %v5296, 0.0
      %v5329 = vmax.f32 %v5297, 0.0
      %v5330 = vmax.f32 %v5298, 0.0
      %v5331 = vmax.f32 %v5299, 0.0
      %v5332 = vmax.f32 %v5300, 0.0
      %v5333 = vmax.f32 %v5301, 0.0
      %v5334 = vmax.f32 %v5302, 0.0
      %v5335 = vmax.f32 %v5303, 0.0
      %v5336 = vmax.f32 %v5304, 0.0
      %v5337 = vpack.c.bf16 %v5306, %v5305
      %v5338 = vpack.c.bf16 %v5308, %v5307
      %v5339 = vpack.c.bf16 %v5310, %v5309
      %v5340 = vpack.c.bf16 %v5312, %v5311
      %v5341 = vpack.c.bf16 %v5314, %v5313
      %v5342 = vpack.c.bf16 %v5316, %v5315
      %v5343 = vpack.c.bf16 %v5318, %v5317
      %v5344 = vpack.c.bf16 %v5320, %v5319
      %v5345 = vpack.c.bf16 %v5322, %v5321
      %v5346 = vpack.c.bf16 %v5324, %v5323
      %v5347 = vpack.c.bf16 %v5326, %v5325
      %v5348 = vpack.c.bf16 %v5328, %v5327
      %v5349 = vpack.c.bf16 %v5330, %v5329
      %v5350 = vpack.c.bf16 %v5332, %v5331
      %v5351 = vpack.c.bf16 %v5334, %v5333
      %v5352 = vpack.c.bf16 %v5336, %v5335
      %v5369 = vunpack.c.l.b16 %v5337
      %v5370 = vunpack.c.h.b16 %v5337
      %v5371 = vunpack.c.l.b16 %v5338
      %v5372 = vunpack.c.h.b16 %v5338
      %v5373 = vunpack.c.l.b16 %v5339
      %v5374 = vunpack.c.h.b16 %v5339
      %v5375 = vunpack.c.l.b16 %v5340
      %v5376 = vunpack.c.h.b16 %v5340
      %v5377 = vunpack.c.l.b16 %v5341
      %v5378 = vunpack.c.h.b16 %v5341
      %v5379 = vunpack.c.l.b16 %v5342
      %v5380 = vunpack.c.h.b16 %v5342
      %v5381 = vunpack.c.l.b16 %v5343
      %v5382 = vunpack.c.h.b16 %v5343
      %v5383 = vunpack.c.l.b16 %v5344
      %v5384 = vunpack.c.h.b16 %v5344
      %v5385 = vunpack.c.l.b16 %v5345
      %v5386 = vunpack.c.h.b16 %v5345
      %v5387 = vunpack.c.l.b16 %v5346
      %v5388 = vunpack.c.h.b16 %v5346
      %v5389 = vunpack.c.l.b16 %v5347
      %v5390 = vunpack.c.h.b16 %v5347
      %v5391 = vunpack.c.l.b16 %v5348
      %v5392 = vunpack.c.h.b16 %v5348
      %v5393 = vunpack.c.l.b16 %v5349
      %v5394 = vunpack.c.h.b16 %v5349
      %v5395 = vunpack.c.l.b16 %v5350
      %v5396 = vunpack.c.h.b16 %v5350
      %v5397 = vunpack.c.l.b16 %v5351
      %v5398 = vunpack.c.h.b16 %v5351
      %v5399 = vunpack.c.l.b16 %v5352
      %v5400 = vunpack.c.h.b16 %v5352
      %v5401 = vpack.c.b16 %v5369, %v5369
      %v5402 = vpack.c.b16 %v5370, %v5370
      %v5403 = vpack.c.b16 %v5371, %v5371
      %v5404 = vpack.c.b16 %v5372, %v5372
      %v5405 = vpack.c.b16 %v5373, %v5373
      %v5406 = vpack.c.b16 %v5374, %v5374
      %v5407 = vpack.c.b16 %v5375, %v5375
      %v5408 = vpack.c.b16 %v5376, %v5376
      %v5409 = vpack.c.b16 %v5377, %v5377
      %v5410 = vpack.c.b16 %v5378, %v5378
      %v5411 = vpack.c.b16 %v5379, %v5379
      %v5412 = vpack.c.b16 %v5380, %v5380
      %v5413 = vpack.c.b16 %v5381, %v5381
      %v5414 = vpack.c.b16 %v5382, %v5382
      %v5415 = vpack.c.b16 %v5383, %v5383
      %v5416 = vpack.c.b16 %v5384, %v5384
      %v5417 = vpack.c.b16 %v5385, %v5385
      %v5418 = vpack.c.b16 %v5386, %v5386
      %v5419 = vpack.c.b16 %v5387, %v5387
      %v5420 = vpack.c.b16 %v5388, %v5388
      %v5421 = vpack.c.b16 %v5389, %v5389
      %v5422 = vpack.c.b16 %v5390, %v5390
      %v5423 = vpack.c.b16 %v5391, %v5391
      %v5424 = vpack.c.b16 %v5392, %v5392
      %v5425 = vpack.c.b16 %v5393, %v5393
      %v5426 = vpack.c.b16 %v5394, %v5394
      %v5427 = vpack.c.b16 %v5395, %v5395
      %v5428 = vpack.c.b16 %v5396, %v5396
      %v5429 = vpack.c.b16 %v5397, %v5397
      %v5430 = vpack.c.b16 %v5398, %v5398
      %v5431 = vpack.c.b16 %v5399, %v5399
      %v5432 = vpack.c.b16 %v5400, %v5400
      %5465 = vst [vmem:[%s279] sm:$0xf] %v5401
      %5466 = vst [vmem:[%s279 + $0x4] sm:$0xf] %v5402
      %5467 = vst [vmem:[%s279 + $0x8] sm:$0xf] %v5403
      %5468 = vst [vmem:[%s279 + $0xc] sm:$0xf] %v5404
      %5469 = vst [vmem:[%s279 + $0x10] sm:$0xf] %v5405
      %5470 = vst [vmem:[%s279 + $0x14] sm:$0xf] %v5406
      %5471 = vst [vmem:[%s279 + $0x18] sm:$0xf] %v5407
      %5472 = vst [vmem:[%s279 + $0x1c] sm:$0xf] %v5408
      %5473 = vst [vmem:[%s279 + $0x20] sm:$0xf] %v5409
      %5474 = vst [vmem:[%s279 + $0x24] sm:$0xf] %v5410
      %5475 = vst [vmem:[%s279 + $0x28] sm:$0xf] %v5411
      %5476 = vst [vmem:[%s279 + $0x2c] sm:$0xf] %v5412
      %5477 = vst [vmem:[%s279 + $0x30] sm:$0xf] %v5413
      %5478 = vst [vmem:[%s279 + $0x34] sm:$0xf] %v5414
      %5479 = vst [vmem:[%s279 + $0x38] sm:$0xf] %v5415
      %5480 = vst [vmem:[%s279 + $0x3c] sm:$0xf] %v5416
      %5481 = vst [vmem:[%s279 + $0x40] sm:$0xf] %v5417
      %5482 = vst [vmem:[%s279 + $0x44] sm:$0xf] %v5418
      %5483 = vst [vmem:[%s279 + $0x48] sm:$0xf] %v5419
      %5484 = vst [vmem:[%s279 + $0x4c] sm:$0xf] %v5420
      %5485 = vst [vmem:[%s279 + $0x50] sm:$0xf] %v5421
      %5486 = vst [vmem:[%s279 + $0x54] sm:$0xf] %v5422
      %5487 = vst [vmem:[%s279 + $0x58] sm:$0xf] %v5423
      %5488 = vst [vmem:[%s279 + $0x5c] sm:$0xf] %v5424
      %5489 = vst [vmem:[%s279 + $0x60] sm:$0xf] %v5425
      %5490 = vst [vmem:[%s279 + $0x64] sm:$0xf] %v5426
      %5491 = vst [vmem:[%s279 + $0x68] sm:$0xf] %v5427
      %5492 = vst [vmem:[%s279 + $0x6c] sm:$0xf] %v5428
      %5493 = vst [vmem:[%s279 + $0x70] sm:$0xf] %v5429
      %5494 = vst [vmem:[%s279 + $0x74] sm:$0xf] %v5430
      %5495 = vst [vmem:[%s279 + $0x78] sm:$0xf] %v5431
      %5496 = vst [vmem:[%s279 + $0x7c] sm:$0xf] %v5432
      %p5497 = scmp.lt.s32.totalorder %s19, 1
      %s5498 = scalar_select %p5497, %s19, 1
      %p5499 = scmp.lt.s32.totalorder %s20, 0
      %s5500 = scalar_select %p5499, %s20, 0
      %s5501 = smul.addr %s5498, 32
      %s5502 = sadd.s32 %s5500, %s5501
      %s5503 = smul.addr %s5502, 4
      %s5504 = scalar_lea.vmem %s4, %s5503
      // Predicated region
      $region37: #{basic_block_apply.3} parent=35 // pred_check
        %p5505 = pneg %p153
      $region38: #{basic_block_apply.3} parent=35 // pred_check_branch
        %5507 = sbr.rel (%p5505) target = $region40
      $region39: #{basic_block_apply.3} parent=35 // pred_region
        _
      $region40: #{basic_block_apply.3} parent=35 // pred_fallthru
        _
    $region36: #{basic_block_apply.3} parent=5 // pred_fallthru
      _
    %p5508 = scmp.le.s32.totalorder 2, %s10
    // Predicated region
    $region41: #{basic_block_apply.3} parent=5 // pred_check
      %p5509 = pneg %p5508
    $region42: #{basic_block_apply.3} parent=5 // pred_check_branch
      %5511 = sbr.rel (%p5509) target = $region44
    $region43: #{basic_block_apply.3} parent=5 // pred_region
      %s5512 = ssub.s32 %s10, 2
      // Predicated region
      $region45: #{basic_block_apply.3} parent=43 // pred_check
        %p5513 = pneg %p159
      $region46: #{basic_block_apply.3} parent=43 // pred_check_branch
        %5515 = sbr.rel (%p5513) target = $region48
      $region47: #{basic_block_apply.3} parent=43 // pred_region
        %p5516 = scmp.lt.s32.totalorder %s21, 1
        %s5517 = scalar_select %p5516, %s21, 1
        %p5518 = scmp.lt.s32.totalorder %s22, 0
        %s5519 = scalar_select %p5518, %s22, 0
        %s5520 = smul.addr %s5517, 32
        %s5521 = sadd.s32 %s5519, %s5520
        %s5522 = smul.addr %s5521, 4
        %s5523 = scalar_lea.vmem %s4, %s5522
      $region48: #{basic_block_apply.3} parent=43 // pred_fallthru
        _
    $region44: #{basic_block_apply.3} parent=5 // pred_fallthru
      _
  $region6: #{basic_block_apply.3} parent=0 // loop_footer
    %s14 = sadd.s32 1, %s10
  $region7: #{basic_block_apply.3} parent=0 // loop_footer_branch
    %9 = sbr.rel target = $region3
  $region8: #{basic_block_apply.3} parent=0 // loop_exit
    _

// kernel: basic_block_apply.2
$region0: #{basic_block_apply.2}
  #allocation0 [shape = 'u32[]', space=smem, size = 0x4, offset = 0x4, fixed_abs, tag = 'smem constant byte address 0x4 - core index']
  #allocation1 [shape = 'u32[144,128]{1,0:T(1,128)}', space=vmem, size = 0x12000, scoped, tag = 'internal scratch']
  %s0 = inlined_call_operand.vmem [shape: bf16[2,18,18,128], index: 0, kind: input, shape index: {}]
  %s1 = inlined_call_operand.vmem [shape: bf16[9,128,128], index: 1, kind: input, shape index: {}]
  %s2 = inlined_call_operand.vmem [shape: f32[1,128], index: 2, kind: input, shape index: {}]
  %s3 = inlined_call_operand.vmem [shape: bf16[2,256,128], index: 3, kind: output, shape index: {}]
  %s4 = sld [smem:[#allocation0]]
  $region45: #{basic_block_apply.2} parent=0
    _
  %s6 = ssub.s32 1, %s4
  %s7 = scalar_select 0, %s6, %s4
  loop: start=0, step=1, limit=4
  $region2: #{basic_block_apply.2} parent=0 // loop_pre_header
    _
  $region3: #{basic_block_apply.2} parent=0 // loop_header
    %s9 = sphi 0, %s13
    %p10 = scmp.ge.s32.totalorder %s9, 4
    %s16 = sphi 0, %s28
    %s17 = sphi 0, %s24
    %s18 = sphi 0, %s16
    %s19 = sphi 0, %s17
    %s20 = sphi 0, %s18
    %s21 = sphi 0, %s19
    %s31 = sphi 0, %s33
    %s34 = sphi 0, %s31
    %s35 = sphi 0, %s34
    %s51 = sphi 0, %s35
    %s57 = sphi 0, %s59
    %s60 = sphi 0, %s57
    %s61 = sphi 0, %s60
    %s77 = sphi 0, %s61
    %s83 = sphi 0, %s85
    %s86 = sphi 0, %s83
    %s87 = sphi 0, %s86
    %s103 = sphi 0, %s87
    %s111 = sphi 0, %s113
    %s114 = sphi 0, %s111
    %s115 = sphi 0, %s114
    %s131 = sphi 0, %s115
  $region4: #{basic_block_apply.2} parent=0 // loop_header_branch
    %12 = sbr.rel (%p10) target = $region8
  $region5: #{basic_block_apply.2} parent=0 // loop_body
    %s14 = ssub.s32 %s9, 1
    %s15 = ssub.s32 %s9, 2
    %s22 = sadd.s32 1, %s17
    %p23 = scmp.ge.s32.totalorder %s22, 1
    %s24 = scalar_select %p23, 0, %s22
    %s25 = sadd.s32 1, %s16
    %s26 = scalar_select %p23, %s25, %s16
    %p27 = scmp.ge.s32.totalorder %s26, 2
    %s28 = scalar_select %p27, 0, %s26
    %s29 = ssub.s32 %s16, %s28
    %p30 = scmp.eq.s32.totalorder %s29, 0
    %s32 = sadd.s32 %s31, 1
    %s33 = scalar_select %p30, %s31, %s32
    %p36 = pneg %p30
    %p37 = scmp.eq.s32.totalorder %s9, 1
    %p38 = por %p36, %p37
    %p39 = scmp.ne.s32.totalorder %s31, %s34
    %p40 = scmp.eq.s32.totalorder %s9, 0
    %p41 = por %p39, %p40
    %p42 = scmp.ne.s32.totalorder %s31, %s34
    %p43 = scmp.eq.s32.totalorder %s14, 1
    %p44 = por %p42, %p43
    %p45 = scmp.ne.s32.totalorder %s34, %s35
    %p46 = scmp.eq.s32.totalorder %s14, 0
    %p47 = por %p45, %p46
    %p48 = scmp.ne.s32.totalorder %s34, %s35
    %p49 = scmp.eq.s32.totalorder %s15, 1
    %p50 = por %p48, %p49
    %p52 = scmp.ne.s32.totalorder %s35, %s51
    %p53 = scmp.eq.s32.totalorder %s15, 0
    %p54 = por %p52, %p53
    %s55 = ssub.s32 %s17, %s24
    %p56 = scmp.eq.s32.totalorder %s55, 0
    %s58 = sadd.s32 %s57, 1
    %s59 = scalar_select %p56, %s57, %s58
    %p62 = pneg %p56
    %p63 = scmp.eq.s32.totalorder %s9, 1
    %p64 = por %p62, %p63
    %p65 = scmp.ne.s32.totalorder %s57, %s60
    %p66 = scmp.eq.s32.totalorder %s9, 0
    %p67 = por %p65, %p66
    %p68 = scmp.ne.s32.totalorder %s57, %s60
    %p69 = scmp.eq.s32.totalorder %s14, 1
    %p70 = por %p68, %p69
    %p71 = scmp.ne.s32.totalorder %s60, %s61
    %p72 = scmp.eq.s32.totalorder %s14, 0
    %p73 = por %p71, %p72
    %p74 = scmp.ne.s32.totalorder %s60, %s61
    %p75 = scmp.eq.s32.totalorder %s15, 1
    %p76 = por %p74, %p75
    %p78 = scmp.ne.s32.totalorder %s61, %s77
    %p79 = scmp.eq.s32.totalorder %s15, 0
    %p80 = por %p78, %p79
    %s81 = ssub.s32 %s17, %s24
    %p82 = scmp.eq.s32.totalorder %s81, 0
    %s84 = sadd.s32 %s83, 1
    %s85 = scalar_select %p82, %s83, %s84
    %p88 = pneg %p82
    %p89 = scmp.eq.s32.totalorder %s9, 1
    %p90 = por %p88, %p89
    %p91 = scmp.ne.s32.totalorder %s83, %s86
    %p92 = scmp.eq.s32.totalorder %s9, 0
    %p93 = por %p91, %p92
    %p94 = scmp.ne.s32.totalorder %s83, %s86
    %p95 = scmp.eq.s32.totalorder %s14, 1
    %p96 = por %p94, %p95
    %p97 = scmp.ne.s32.totalorder %s86, %s87
    %p98 = scmp.eq.s32.totalorder %s14, 0
    %p99 = por %p97, %p98
    %p100 = scmp.ne.s32.totalorder %s86, %s87
    %p101 = scmp.eq.s32.totalorder %s15, 1
    %p102 = por %p100, %p101
    %p104 = scmp.ne.s32.totalorder %s87, %s103
    %p105 = scmp.eq.s32.totalorder %s15, 0
    %p106 = por %p104, %p105
    %s107 = ssub.s32 %s16, %s28
    %s108 = ssub.s32 %s17, %s24
    %s109 = sor.u32 %s107, %s108
    %p110 = scmp.eq.s32.totalorder %s109, 0
    %s112 = sadd.s32 %s111, 1
    %s113 = scalar_select %p110, %s111, %s112
    %p116 = pneg %p110
    %p117 = scmp.eq.s32.totalorder %s9, 1
    %p118 = por %p116, %p117
    %p119 = scmp.ne.s32.totalorder %s111, %s114
    %p120 = scmp.eq.s32.totalorder %s9, 0
    %p121 = por %p119, %p120
    %p122 = scmp.ne.s32.totalorder %s111, %s114
    %p123 = scmp.eq.s32.totalorder %s14, 1
    %p124 = por %p122, %p123
    %p125 = scmp.ne.s32.totalorder %s114, %s115
    %p126 = scmp.eq.s32.totalorder %s14, 0
    %p127 = por %p125, %p126
    %p128 = scmp.ne.s32.totalorder %s114, %s115
    %p129 = scmp.eq.s32.totalorder %s15, 1
    %p130 = por %p128, %p129
    %p132 = scmp.ne.s32.totalorder %s115, %s131
    %p133 = scmp.eq.s32.totalorder %s15, 0
    %p134 = por %p132, %p133
    %p135 = scmp.le.s32.totalorder 1, %s9
    %p136 = scmp.lt.s32.totalorder %s9, 3
    %p137 = pnand %p135, %p136
    %p138 = pneg %p137
    // Predicated region
    $region9: #{basic_block_apply.2} parent=5 // pred_check
      _
    $region10: #{basic_block_apply.2} parent=5 // pred_check_branch
      %140 = sbr.rel (%p137) target = $region12
    $region11: #{basic_block_apply.2} parent=5 // pred_region
      %s141 = ssub.s32 %s9, 1
      // Predicated region
      $region13: #{basic_block_apply.2} parent=11 // pred_check
        %p142 = pneg %p73
      $region14: #{basic_block_apply.2} parent=11 // pred_check_branch
        %144 = sbr.rel (%p142) target = $region16
      $region15: #{basic_block_apply.2} parent=11 // pred_region
        %p145 = scmp.lt.s32.totalorder %s19, 0
        %s146 = scalar_select %p145, %s19, 0
        %s147 = smul.addr %s146, 4
        %s148 = scalar_lea.vmem %s1, %s147
      $region16: #{basic_block_apply.2} parent=11 // pred_fallthru
        _
      // Predicated region
      $region17: #{basic_block_apply.2} parent=11 // pred_check
        %p149 = pneg %p99
      $region18: #{basic_block_apply.2} parent=11 // pred_check_branch
        %151 = sbr.rel (%p149) target = $region20
      $region19: #{basic_block_apply.2} parent=11 // pred_region
        %p152 = scmp.lt.s32.totalorder %s19, 0
        %s153 = scalar_select %p152, %s19, 0
        %s154 = scalar_lea.vmem %s2, %s153
      $region20: #{basic_block_apply.2} parent=11 // pred_fallthru
        _
    $region12: #{basic_block_apply.2} parent=5 // pred_fallthru
      _
    %p155 = scmp.lt.s32.totalorder %s9, 2
    // Predicated region
    $region21: #{basic_block_apply.2} parent=5 // pred_check
      %p156 = pneg %p155
    $region22: #{basic_block_apply.2} parent=5 // pred_check_branch
      %158 = sbr.rel (%p156) target = $region24
    $region23: #{basic_block_apply.2} parent=5 // pred_region
      // Predicated region
      $region25: #{basic_block_apply.2} parent=23 // pred_check
        %p159 = pneg %p41
      $region26: #{basic_block_apply.2} parent=23 // pred_check_branch
        %161 = sbr.rel (%p159) target = $region28
      $region27: #{basic_block_apply.2} parent=23 // pred_region
        %p162 = scmp.lt.s32.totalorder %s16, 1
        %s163 = scalar_select %p162, %s16, 1
        %s164 = smul.addr %s163, 54
        %s165 = smul.addr %s164, 4
        %s166 = scalar_lea.vmem %s0, %s165
      $region28: #{basic_block_apply.2} parent=23 // pred_fallthru
        _
    $region24: #{basic_block_apply.2} parent=5 // pred_fallthru
      _
    %p167 = scmp.le.s32.totalorder 1, %s9
    %p168 = scmp.lt.s32.totalorder %s9, 3
    %p169 = pnand %p167, %p168
    %p170 = pneg %p169
    // Predicated region
    $region29: #{basic_block_apply.2} parent=5 // pred_check
      _
    $region30: #{basic_block_apply.2} parent=5 // pred_check_branch
      %172 = sbr.rel (%p169) target = $region32
    $region31: #{basic_block_apply.2} parent=5 // pred_region
      %s173 = ssub.s32 %s9, 1
      %p174 = scmp.lt.s32.totalorder %s18, 1
      %s175 = scalar_select %p174, %s18, 1
      %s176 = smul.addr %s175, 54
      %s177 = smul.addr %s176, 4
      %s178 = scalar_lea.vmem %s0, %s177
      %p179 = pneg %p47
      %p180 = pneg %p44
      %p181 = scmp.lt.s32.totalorder %s19, 0
      %s182 = scalar_select %p181, %s19, 0
      %s183 = smul.addr %s182, 4
      %s184 = scalar_lea.vmem %s1, %s183
      %p185 = pneg %p73
      %p186 = pneg %p70
      %p187 = scmp.lt.s32.totalorder %s19, 0
      %s188 = scalar_select %p187, %s19, 0
      %s189 = scalar_lea.vmem %s2, %s188
      %p190 = pneg %p99
      %p191 = pneg %p96
      %p192 = pneg %p127
      %p193 = pneg %p124
      %p194 = scmp.lt.s32.totalorder %s18, 1
      %s195 = scalar_select %p194, %s18, 1
      %p196 = scmp.lt.s32.totalorder %s19, 0
      %s197 = scalar_select %p196, %s19, 0
      %s198 = smul.addr %s195, 32
      %s199 = sadd.s32 %s197, %s198
      %s200 = smul.addr %s199, 4
      %s201 = scalar_lea.vmem %s3, %s200
      %p202 = scmp.lt.s32.totalorder %s18, 1
      %s203 = scalar_select %p202, %s18, 1
      %s204 = smul.addr %s203, 54
      %s205 = smul.addr %s204, 4
      %s206 = scalar_lea.vmem %s0, %s205
      %p207 = scmp.lt.s32.totalorder %s19, 0
      %s208 = scalar_select %p207, %s19, 0
      %s209 = smul.addr %s208, 4
      %s210 = scalar_lea.vmem %s1, %s209
      %p211 = scmp.lt.s32.totalorder %s19, 0
      %s212 = scalar_select %p211, %s19, 0
      %s213 = scalar_lea.vmem %s2, %s212
      %p214 = scmp.lt.s32.totalorder %s18, 1
      %s215 = scalar_select %p214, %s18, 1
      %p216 = scmp.lt.s32.totalorder %s19, 0
      %s217 = scalar_select %p216, %s19, 0
      %s218 = smul.addr %s215, 32
      %s219 = sadd.s32 %s217, %s218
      %s220 = smul.addr %s219, 4
      %s221 = scalar_lea.vmem %s3, %s220
      %v223 = vld [vmem:[%s213] sm:$0x1]
      %v225 = vlaneseq
      %v226 = vshrl.u32 %v225, 7
      %v227 = vsub.s32 0, %v226
      %v228 = vrot.slane %v223, %v227
      %v230 = vld [vmem:[%s206] sm:$0xf]
      %v231 = vld [vmem:[%s206 + $0x4] sm:$0xf]
      %v232 = vld [vmem:[%s206 + $0xc] sm:$0xf]
      %v233 = vld [vmem:[%s206 + $0x10] sm:$0xf]
      %v234 = vld [vmem:[%s206 + $0x18] sm:$0xf]
      %v235 = vld [vmem:[%s206 + $0x1c] sm:$0xf]
      %v236 = vld [vmem:[%s206 + $0x24] sm:$0xf]
      %v237 = vld [vmem:[%s206 + $0x28] sm:$0xf]
      %v238 = vld [vmem:[%s206 + $0x30] sm:$0xf]
      %v239 = vld [vmem:[%s206 + $0x34] sm:$0xf]
      %v240 = vld [vmem:[%s206 + $0x3c] sm:$0xf]
      %v241 = vld [vmem:[%s206 + $0x40] sm:$0xf]
      %v242 = vld [vmem:[%s206 + $0x48] sm:$0xf]
      %v243 = vld [vmem:[%s206 + $0x4c] sm:$0xf]
      %v244 = vld [vmem:[%s206 + $0x54] sm:$0xf]
      %v245 = vld [vmem:[%s206 + $0x58] sm:$0xf]
      %v246 = vld [vmem:[%s206 + $0x60] sm:$0xf]
      %v247 = vld [vmem:[%s206 + $0x64] sm:$0xf]
      %v248 = vld [vmem:[%s206 + $0x6c] sm:$0xf]
      %v249 = vld [vmem:[%s206 + $0x70] sm:$0xf]
      %v250 = vld [vmem:[%s206 + $0x78] sm:$0xf]
      %v251 = vld [vmem:[%s206 + $0x7c] sm:$0xf]
      %v252 = vld [vmem:[%s206 + $0x84] sm:$0xf]
      %v253 = vld [vmem:[%s206 + $0x88] sm:$0xf]
      %v254 = vld [vmem:[%s206 + $0x90] sm:$0xf]
      %v255 = vld [vmem:[%s206 + $0x94] sm:$0xf]
      %v256 = vld [vmem:[%s206 + $0x9c] sm:$0xf]
      %v257 = vld [vmem:[%s206 + $0xa0] sm:$0xf]
      %v258 = vld [vmem:[%s206 + $0xa8] sm:$0xf]
      %v259 = vld [vmem:[%s206 + $0xac] sm:$0xf]
      %v260 = vld [vmem:[%s206 + $0xb4] sm:$0xf]
      %v261 = vld [vmem:[%s206 + $0xb8] sm:$0xf]
      %v262 = vld [vmem:[%s210] sm:$0xf]
      %v263 = vld [vmem:[%s210 + $0x4] sm:$0xf]
      %v264 = vld [vmem:[%s210 + $0x8] sm:$0xf]
      %v265 = vld [vmem:[%s210 + $0xc] sm:$0xf]
      %v266 = vld [vmem:[%s210 + $0x10] sm:$0xf]
      %v267 = vld [vmem:[%s210 + $0x14] sm:$0xf]
      %v268 = vld [vmem:[%s210 + $0x18] sm:$0xf]
      %v269 = vld [vmem:[%s210 + $0x1c] sm:$0xf]
      %v270 = vld [vmem:[%s210 + $0x20] sm:$0xf]
      %v271 = vld [vmem:[%s210 + $0x24] sm:$0xf]
      %v272 = vld [vmem:[%s210 + $0x28] sm:$0xf]
      %v273 = vld [vmem:[%s210 + $0x2c] sm:$0xf]
      %v274 = vld [vmem:[%s210 + $0x30] sm:$0xf]
      %v275 = vld [vmem:[%s210 + $0x34] sm:$0xf]
      %v276 = vld [vmem:[%s210 + $0x38] sm:$0xf]
      %v277 = vld [vmem:[%s210 + $0x3c] sm:$0xf]
      %v310 = vunpack.c.l.b16 %v230
      %v311 = vunpack.c.l.b16 %v231
      %v312 = vunpack.c.l.b16 %v232
      %v313 = vunpack.c.l.b16 %v233
      %v314 = vunpack.c.l.b16 %v234
      %v315 = vunpack.c.l.b16 %v235
      %v316 = vunpack.c.l.b16 %v236
      %v317 = vunpack.c.l.b16 %v237
      %v318 = vunpack.c.l.b16 %v238
      %v319 = vunpack.c.l.b16 %v239
      %v320 = vunpack.c.l.b16 %v240
      %v321 = vunpack.c.l.b16 %v241
      %v322 = vunpack.c.l.b16 %v242
      %v323 = vunpack.c.l.b16 %v243
      %v324 = vunpack.c.l.b16 %v244
      %v325 = vunpack.c.l.b16 %v245
      %v326 = vunpack.c.l.b16 %v246
      %v327 = vunpack.c.l.b16 %v247
      %v328 = vunpack.c.l.b16 %v248
      %v329 = vunpack.c.l.b16 %v249
      %v330 = vunpack.c.l.b16 %v250
      %v331 = vunpack.c.l.b16 %v251
      %v332 = vunpack.c.l.b16 %v252
      %v333 = vunpack.c.l.b16 %v253
      %v334 = vunpack.c.l.b16 %v254
      %v335 = vunpack.c.l.b16 %v255
      %v336 = vunpack.c.l.b16 %v256
      %v337 = vunpack.c.l.b16 %v257
      %v338 = vunpack.c.l.b16 %v258
      %v339 = vunpack.c.l.b16 %v259
      %v340 = vunpack.c.l.b16 %v260
      %v341 = vunpack.c.l.b16 %v261
      %v342 = vpack.c.b16 %v311, %v310
      %v343 = vpack.c.b16 %v313, %v312
      %v344 = vpack.c.b16 %v315, %v314
      %v345 = vpack.c.b16 %v317, %v316
      %v346 = vpack.c.b16 %v319, %v318
      %v347 = vpack.c.b16 %v321, %v320
      %v348 = vpack.c.b16 %v323, %v322
      %v349 = vpack.c.b16 %v325, %v324
      %v350 = vpack.c.b16 %v327, %v326
      %v351 = vpack.c.b16 %v329, %v328
      %v352 = vpack.c.b16 %v331, %v330
      %v353 = vpack.c.b16 %v333, %v332
      %v354 = vpack.c.b16 %v335, %v334
      %v355 = vpack.c.b16 %v337, %v336
      %v356 = vpack.c.b16 %v339, %v338
      %v357 = vpack.c.b16 %v341, %v340
      %v390 = vunpack.c.l.b16 %v262
      %v391 = vunpack.c.l.b16 %v263
      %v392 = vunpack.c.l.b16 %v264
      %v393 = vunpack.c.l.b16 %v265
      %v394 = vunpack.c.l.b16 %v266
      %v395 = vunpack.c.l.b16 %v267
      %v396 = vunpack.c.l.b16 %v268
      %v397 = vunpack.c.l.b16 %v269
      %v398 = vunpack.c.l.b16 %v270
      %v399 = vunpack.c.l.b16 %v271
      %v400 = vunpack.c.l.b16 %v272
      %v401 = vunpack.c.l.b16 %v273
      %v402 = vunpack.c.l.b16 %v274
      %v403 = vunpack.c.l.b16 %v275
      %v404 = vunpack.c.l.b16 %v276
      %v405 = vunpack.c.l.b16 %v277
      %v406 = vpack.c.b16 %v391, %v390
      %v407 = vpack.c.b16 %v393, %v392
      %v408 = vpack.c.b16 %v395, %v394
      %v409 = vpack.c.b16 %v397, %v396
      %v410 = vpack.c.b16 %v399, %v398
      %v411 = vpack.c.b16 %v401, %v400
      %v412 = vpack.c.b16 %v403, %v402
      %v413 = vpack.c.b16 %v405, %v404
      %422 = vmatprep.subr.bf16.mxu0 0
      %423 = vmatpush1.bf16.msra.mxu0 %v413
      %424 = vmatprep.subr.bf16.mxu0 0
      %425 = vmatpush1.bf16.msra.mxu0 %v412
      %426 = vmatprep.subr.bf16.mxu0 0
      %427 = vmatpush1.bf16.msra.mxu0 %v411
      %428 = vmatprep.subr.bf16.mxu0 0
      %429 = vmatpush1.bf16.msra.mxu0 %v410
      %430 = vmatprep.subr.bf16.mxu0 0
      %431 = vmatpush1.bf16.msra.mxu0 %v409
      %432 = vmatprep.subr.bf16.mxu0 0
      %433 = vmatpush1.bf16.msra.mxu0 %v408
      %434 = vmatprep.subr.bf16.mxu0 0
      %435 = vmatpush1.bf16.msra.mxu0 %v407
      %436 = vmatprep.subr.bf16.mxu0 0
      %437 = vmatpush1.bf16.msra.mxu0 %v406
      %438 = vmatprep.subr.bf16.mxu0 0
      %439 = vmatpush2.bf16.msra.mxu0 0
      %440 = vmatprep.subr.bf16.mxu0 0
      %441 = vmatpush2.bf16.msra.mxu0 0
      %442 = vmatprep.subr.bf16.mxu0 0
      %443 = vmatpush2.bf16.msra.mxu0 0
      %444 = vmatprep.subr.bf16.mxu0 0
      %445 = vmatpush2.bf16.msra.mxu0 0
      %446 = vmatprep.subr.bf16.mxu0 0
      %447 = vmatpush2.bf16.msra.mxu0 0
      %448 = vmatprep.subr.bf16.mxu0 0
      %449 = vmatpush2.bf16.msra.mxu0 0
      %450 = vmatprep.subr.bf16.mxu0 0
      %451 = vmatpush2.bf16.msra.mxu0 0
      %452 = vmatprep.subr.bf16.mxu0 0
      %453 = vmatpush2.bf16.msra.mxu0 0
      %454 = vmatprep.mubr.bf16.mxu0 0
      %455 = vmatmul.mubr.bf16.gmra.mxu0 %v342
      %v456 = vpop.f32.mrf.mxu0
      %v457 = vadd.f32 0.0, %v456
      %v458 = vpop.f32.mrf.mxu0
      %v459 = vpop.f32.mrf.mxu0
      %v460 = vadd.f32 0.0, %v459
      %v461 = vpop.f32.mrf.mxu0
      %462 = vmatprep.mubr.bf16.mxu0 0
      %463 = vmatmul.mubr.bf16.gmra.mxu0 %v343
      %v464 = vpop.f32.mrf.mxu0
      %v465 = vadd.f32 0.0, %v464
      %v466 = vpop.f32.mrf.mxu0
      %v467 = vpop.f32.mrf.mxu0
      %v468 = vadd.f32 0.0, %v467
      %v469 = vpop.f32.mrf.mxu0
      %470 = vmatprep.mubr.bf16.mxu0 0
      %471 = vmatmul.mubr.bf16.gmra.mxu0 %v344
      %v472 = vpop.f32.mrf.mxu0
      %v473 = vadd.f32 0.0, %v472
      %v474 = vpop.f32.mrf.mxu0
      %v475 = vpop.f32.mrf.mxu0
      %v476 = vadd.f32 0.0, %v475
      %v477 = vpop.f32.mrf.mxu0
      %478 = vmatprep.mubr.bf16.mxu0 0
      %479 = vmatmul.mubr.bf16.gmra.mxu0 %v345
      %v480 = vpop.f32.mrf.mxu0
      %v481 = vadd.f32 0.0, %v480
      %v482 = vpop.f32.mrf.mxu0
      %v483 = vpop.f32.mrf.mxu0
      %v484 = vadd.f32 0.0, %v483
      %v485 = vpop.f32.mrf.mxu0
      %486 = vmatprep.mubr.bf16.mxu0 0
      %487 = vmatmul.mubr.bf16.gmra.mxu0 %v346
      %v488 = vpop.f32.mrf.mxu0
      %v489 = vadd.f32 0.0, %v488
      %v490 = vpop.f32.mrf.mxu0
      %v491 = vpop.f32.mrf.mxu0
      %v492 = vadd.f32 0.0, %v491
      %v493 = vpop.f32.mrf.mxu0
      %494 = vmatprep.mubr.bf16.mxu0 0
      %495 = vmatmul.mubr.bf16.gmra.mxu0 %v347
      %v496 = vpop.f32.mrf.mxu0
      %v497 = vadd.f32 0.0, %v496
      %v498 = vpop.f32.mrf.mxu0
      %v499 = vpop.f32.mrf.mxu0
      %v500 = vadd.f32 0.0, %v499
      %v501 = vpop.f32.mrf.mxu0
      %502 = vmatprep.mubr.bf16.mxu0 0
      %503 = vmatmul.mubr.bf16.gmra.mxu0 %v348
      %v504 = vpop.f32.mrf.mxu0
      %v505 = vadd.f32 0.0, %v504
      %v506 = vpop.f32.mrf.mxu0
      %v507 = vpop.f32.mrf.mxu0
      %v508 = vadd.f32 0.0, %v507
      %v509 = vpop.f32.mrf.mxu0
      %510 = vmatprep.mubr.bf16.mxu0 0
      %511 = vmatmul.mubr.bf16.gmra.mxu0 %v349
      %v512 = vpop.f32.mrf.mxu0
      %v513 = vadd.f32 0.0, %v512
      %v514 = vpop.f32.mrf.mxu0
      %v515 = vpop.f32.mrf.mxu0
      %v516 = vadd.f32 0.0, %v515
      %v517 = vpop.f32.mrf.mxu0
      %518 = vmatprep.mubr.bf16.mxu0 0
      %519 = vmatmul.mubr.bf16.gmra.mxu0 %v350
      %v520 = vpop.f32.mrf.mxu0
      %v521 = vadd.f32 0.0, %v520
      %v522 = vpop.f32.mrf.mxu0
      %v523 = vpop.f32.mrf.mxu0
      %v524 = vadd.f32 0.0, %v523
      %v525 = vpop.f32.mrf.mxu0
      %526 = vmatprep.mubr.bf16.mxu0 0
      %527 = vmatmul.mubr.bf16.gmra.mxu0 %v351
      %v528 = vpop.f32.mrf.mxu0
      %v529 = vadd.f32 0.0, %v528
      %v530 = vpop.f32.mrf.mxu0
      %v531 = vpop.f32.mrf.mxu0
      %v532 = vadd.f32 0.0, %v531
      %v533 = vpop.f32.mrf.mxu0
      %534 = vmatprep.mubr.bf16.mxu0 0
      %535 = vmatmul.mubr.bf16.gmra.mxu0 %v352
      %v536 = vpop.f32.mrf.mxu0
      %v537 = vadd.f32 0.0, %v536
      %v538 = vpop.f32.mrf.mxu0
      %v539 = vpop.f32.mrf.mxu0
      %v540 = vadd.f32 0.0, %v539
      %v541 = vpop.f32.mrf.mxu0
      %542 = vmatprep.mubr.bf16.mxu0 0
      %543 = vmatmul.mubr.bf16.gmra.mxu0 %v353
      %v544 = vpop.f32.mrf.mxu0
      %v545 = vadd.f32 0.0, %v544
      %v546 = vpop.f32.mrf.mxu0
      %v547 = vpop.f32.mrf.mxu0
      %v548 = vadd.f32 0.0, %v547
      %v549 = vpop.f32.mrf.mxu0
      %550 = vmatprep.mubr.bf16.mxu0 0
      %551 = vmatmul.mubr.bf16.gmra.mxu0 %v354
      %v552 = vpop.f32.mrf.mxu0
      %v553 = vadd.f32 0.0, %v552
      %v554 = vpop.f32.mrf.mxu0
      %v555 = vpop.f32.mrf.mxu0
      %v556 = vadd.f32 0.0, %v555
      %v557 = vpop.f32.mrf.mxu0
      %558 = vmatprep.mubr.bf16.mxu0 0
      %559 = vmatmul.mubr.bf16.gmra.mxu0 %v355
      %v560 = vpop.f32.mrf.mxu0
      %v561 = vadd.f32 0.0, %v560
      %v562 = vpop.f32.mrf.mxu0
      %v563 = vpop.f32.mrf.mxu0
      %v564 = vadd.f32 0.0, %v563
      %v565 = vpop.f32.mrf.mxu0
      %566 = vmatprep.mubr.bf16.mxu0 0
      %567 = vmatmul.mubr.bf16.gmra.mxu0 %v356
      %v568 = vpop.f32.mrf.mxu0
      %v569 = vadd.f32 0.0, %v568
      %v570 = vpop.f32.mrf.mxu0
      %v571 = vpop.f32.mrf.mxu0
      %v572 = vadd.f32 0.0, %v571
      %v573 = vpop.f32.mrf.mxu0
      %574 = vmatprep.mubr.bf16.mxu0 0
      %575 = vmatmul.mubr.bf16.gmra.mxu0 %v357
      %v576 = vpop.f32.mrf.mxu0
      %v577 = vadd.f32 0.0, %v576
      %v578 = vpop.f32.mrf.mxu0
      %v579 = vpop.f32.mrf.mxu0
      %v580 = vadd.f32 0.0, %v579
      %v581 = vpop.f32.mrf.mxu0
      %582 = vdwg.mxu0
      %v583 = vadd.f32 %v228, %v457
      %v584 = vadd.f32 %v228, %v460
      %v585 = vadd.f32 %v228, %v465
      %v586 = vadd.f32 %v228, %v468
      %v587 = vadd.f32 %v228, %v473
      %v588 = vadd.f32 %v228, %v476
      %v589 = vadd.f32 %v228, %v481
      %v590 = vadd.f32 %v228, %v484
      %v591 = vadd.f32 %v228, %v489
      %v592 = vadd.f32 %v228, %v492
      %v593 = vadd.f32 %v228, %v497
      %v594 = vadd.f32 %v228, %v500
      %v595 = vadd.f32 %v228, %v505
      %v596 = vadd.f32 %v228, %v508
      %v597 = vadd.f32 %v228, %v513
      %v598 = vadd.f32 %v228, %v516
      %v599 = vadd.f32 %v228, %v521
      %v600 = vadd.f32 %v228, %v524
      %v601 = vadd.f32 %v228, %v529
      %v602 = vadd.f32 %v228, %v532
      %v603 = vadd.f32 %v228, %v537
      %v604 = vadd.f32 %v228, %v540
      %v605 = vadd.f32 %v228, %v545
      %v606 = vadd.f32 %v228, %v548
      %v607 = vadd.f32 %v228, %v553
      %v608 = vadd.f32 %v228, %v556
      %v609 = vadd.f32 %v228, %v561
      %v610 = vadd.f32 %v228, %v564
      %v611 = vadd.f32 %v228, %v569
      %v612 = vadd.f32 %v228, %v572
      %v613 = vadd.f32 %v228, %v577
      %v614 = vadd.f32 %v228, %v580
      %v615 = vld [vmem:[%s206] sm:$0xf]
      %v616 = vld [vmem:[%s206 + $0x4] sm:$0xf]
      %v617 = vld [vmem:[%s206 + $0x8] sm:$0x1]
      %v618 = vld [vmem:[%s206 + $0xc] sm:$0xf]
      %v619 = vld [vmem:[%s206 + $0x10] sm:$0xf]
      %v620 = vld [vmem:[%s206 + $0x14] sm:$0x1]
      %v621 = vld [vmem:[%s206 + $0x18] sm:$0xf]
      %v622 = vld [vmem:[%s206 + $0x1c] sm:$0xf]
      %v623 = vld [vmem:[%s206 + $0x20] sm:$0x1]
      %v624 = vld [vmem:[%s206 + $0x24] sm:$0xf]
      %v625 = vld [vmem:[%s206 + $0x28] sm:$0xf]
      %v626 = vld [vmem:[%s206 + $0x2c] sm:$0x1]
      %v627 = vld [vmem:[%s206 + $0x30] sm:$0xf]
      %v628 = vld [vmem:[%s206 + $0x34] sm:$0xf]
      %v629 = vld [vmem:[%s206 + $0x38] sm:$0x1]
      %v630 = vld [vmem:[%s206 + $0x3c] sm:$0xf]
      %v631 = vld [vmem:[%s206 + $0x40] sm:$0xf]
      %v632 = vld [vmem:[%s206 + $0x44] sm:$0x1]
      %v633 = vld [vmem:[%s206 + $0x48] sm:$0xf]
      %v634 = vld [vmem:[%s206 + $0x4c] sm:$0xf]
      %v635 = vld [vmem:[%s206 + $0x50] sm:$0x1]
      %v636 = vld [vmem:[%s206 + $0x54] sm:$0xf]
      %v637 = vld [vmem:[%s206 + $0x58] sm:$0xf]
      %v638 = vld [vmem:[%s206 + $0x5c] sm:$0x1]
      %v639 = vld [vmem:[%s206 + $0x60] sm:$0xf]
      %v640 = vld [vmem:[%s206 + $0x64] sm:$0xf]
      %v641 = vld [vmem:[%s206 + $0x68] sm:$0x1]
      %v642 = vld [vmem:[%s206 + $0x6c] sm:$0xf]
      %v643 = vld [vmem:[%s206 + $0x70] sm:$0xf]
      %v644 = vld [vmem:[%s206 + $0x74] sm:$0x1]
      %v645 = vld [vmem:[%s206 + $0x78] sm:$0xf]
      %v646 = vld [vmem:[%s206 + $0x7c] sm:$0xf]
      %v647 = vld [vmem:[%s206 + $0x80] sm:$0x1]
      %v648 = vld [vmem:[%s206 + $0x84] sm:$0xf]
      %v649 = vld [vmem:[%s206 + $0x88] sm:$0xf]
      %v650 = vld [vmem:[%s206 + $0x8c] sm:$0x1]
      %v651 = vld [vmem:[%s206 + $0x90] sm:$0xf]
      %v652 = vld [vmem:[%s206 + $0x94] sm:$0xf]
      %v653 = vld [vmem:[%s206 + $0x98] sm:$0x1]
      %v654 = vld [vmem:[%s206 + $0x9c] sm:$0xf]
      %v655 = vld [vmem:[%s206 + $0xa0] sm:$0xf]
      %v656 = vld [vmem:[%s206 + $0xa4] sm:$0x1]
      %v657 = vld [vmem:[%s206 + $0xa8] sm:$0xf]
      %v658 = vld [vmem:[%s206 + $0xac] sm:$0xf]
      %v659 = vld [vmem:[%s206 + $0xb0] sm:$0x1]
      %v660 = vld [vmem:[%s206 + $0xb4] sm:$0xf]
      %v661 = vld [vmem:[%s206 + $0xb8] sm:$0xf]
      %v662 = vld [vmem:[%s206 + $0xbc] sm:$0x1]
      %vm663 = vsmask.f32 3328
      %vm664 = vsmask.f32 7440
      %vm665 = vmor %vm663, %vm664
      %v667 = vshrl.u32 %v615, 16
      %v669 = vrot.slane %v667, 4
      %v670 = vshll.u32 %v615, 16
      %v672 = vrot.slane %v670, 5
      %v673 = vor.u32 %v669, %v672
      %v674 = vrot.slane %v673, 4
      %v676 = vshll.u32 %v616, 16
      %v678 = vrot.slane %v676, 5
      %v679 = vsel %vm665, %v674, %v678
      %v680 = vshrl.u32 %v616, 16
      %v682 = vrot.slane %v680, 4
      %v683 = vor.u32 %v682, %v678
      %v684 = vrot.slane %v683, 4
      %v686 = vshll.u32 %v617, 16
      %v688 = vrot.slane %v686, 5
      %v689 = vsel %vm665, %v684, %v688
      %v691 = vshrl.u32 %v618, 16
      %v693 = vrot.slane %v691, 4
      %v694 = vshll.u32 %v618, 16
      %v696 = vrot.slane %v694, 5
      %v697 = vor.u32 %v693, %v696
      %v698 = vrot.slane %v697, 4
      %v700 = vshll.u32 %v619, 16
      %v702 = vrot.slane %v700, 5
      %v703 = vsel %vm665, %v698, %v702
      %v704 = vshrl.u32 %v619, 16
      %v706 = vrot.slane %v704, 4
      %v707 = vor.u32 %v706, %v702
      %v708 = vrot.slane %v707, 4
      %v710 = vshll.u32 %v620, 16
      %v712 = vrot.slane %v710, 5
      %v713 = vsel %vm665, %v708, %v712
      %v715 = vshrl.u32 %v621, 16
      %v717 = vrot.slane %v715, 4
      %v718 = vshll.u32 %v621, 16
      %v720 = vrot.slane %v718, 5
      %v721 = vor.u32 %v717, %v720
      %v722 = vrot.slane %v721, 4
      %v724 = vshll.u32 %v622, 16
      %v726 = vrot.slane %v724, 5
      %v727 = vsel %vm665, %v722, %v726
      %v728 = vshrl.u32 %v622, 16
      %v730 = vrot.slane %v728, 4
      %v731 = vor.u32 %v730, %v726
      %v732 = vrot.slane %v731, 4
      %v734 = vshll.u32 %v623, 16
      %v736 = vrot.slane %v734, 5
      %v737 = vsel %vm665, %v732, %v736
      %v739 = vshrl.u32 %v624, 16
      %v741 = vrot.slane %v739, 4
      %v742 = vshll.u32 %v624, 16
      %v744 = vrot.slane %v742, 5
      %v745 = vor.u32 %v741, %v744
      %v746 = vrot.slane %v745, 4
      %v748 = vshll.u32 %v625, 16
      %v750 = vrot.slane %v748, 5
      %v751 = vsel %vm665, %v746, %v750
      %v752 = vshrl.u32 %v625, 16
      %v754 = vrot.slane %v752, 4
      %v755 = vor.u32 %v754, %v750
      %v756 = vrot.slane %v755, 4
      %v758 = vshll.u32 %v626, 16
      %v760 = vrot.slane %v758, 5
      %v761 = vsel %vm665, %v756, %v760
      %v763 = vshrl.u32 %v627, 16
      %v765 = vrot.slane %v763, 4
      %v766 = vshll.u32 %v627, 16
      %v768 = vrot.slane %v766, 5
      %v769 = vor.u32 %v765, %v768
      %v770 = vrot.slane %v769, 4
      %v772 = vshll.u32 %v628, 16
      %v774 = vrot.slane %v772, 5
      %v775 = vsel %vm665, %v770, %v774
      %v776 = vshrl.u32 %v628, 16
      %v778 = vrot.slane %v776, 4
      %v779 = vor.u32 %v778, %v774
      %v780 = vrot.slane %v779, 4
      %v782 = vshll.u32 %v629, 16
      %v784 = vrot.slane %v782, 5
      %v785 = vsel %vm665, %v780, %v784
      %v787 = vshrl.u32 %v630, 16
      %v789 = vrot.slane %v787, 4
      %v790 = vshll.u32 %v630, 16
      %v792 = vrot.slane %v790, 5
      %v793 = vor.u32 %v789, %v792
      %v794 = vrot.slane %v793, 4
      %v796 = vshll.u32 %v631, 16
      %v798 = vrot.slane %v796, 5
      %v799 = vsel %vm665, %v794, %v798
      %v800 = vshrl.u32 %v631, 16
      %v802 = vrot.slane %v800, 4
      %v803 = vor.u32 %v802, %v798
      %v804 = vrot.slane %v803, 4
      %v806 = vshll.u32 %v632, 16
      %v808 = vrot.slane %v806, 5
      %v809 = vsel %vm665, %v804, %v808
      %v811 = vshrl.u32 %v633, 16
      %v813 = vrot.slane %v811, 4
      %v814 = vshll.u32 %v633, 16
      %v816 = vrot.slane %v814, 5
      %v817 = vor.u32 %v813, %v816
      %v818 = vrot.slane %v817, 4
      %v820 = vshll.u32 %v634, 16
      %v822 = vrot.slane %v820, 5
      %v823 = vsel %vm665, %v818, %v822
      %v824 = vshrl.u32 %v634, 16
      %v826 = vrot.slane %v824, 4
      %v827 = vor.u32 %v826, %v822
      %v828 = vrot.slane %v827, 4
      %v830 = vshll.u32 %v635, 16
      %v832 = vrot.slane %v830, 5
      %v833 = vsel %vm665, %v828, %v832
      %v835 = vshrl.u32 %v636, 16
      %v837 = vrot.slane %v835, 4
      %v838 = vshll.u32 %v636, 16
      %v840 = vrot.slane %v838, 5
      %v841 = vor.u32 %v837, %v840
      %v842 = vrot.slane %v841, 4
      %v844 = vshll.u32 %v637, 16
      %v846 = vrot.slane %v844, 5
      %v847 = vsel %vm665, %v842, %v846
      %v848 = vshrl.u32 %v637, 16
      %v850 = vrot.slane %v848, 4
      %v851 = vor.u32 %v850, %v846
      %v852 = vrot.slane %v851, 4
      %v854 = vshll.u32 %v638, 16
      %v856 = vrot.slane %v854, 5
      %v857 = vsel %vm665, %v852, %v856
      %v859 = vshrl.u32 %v639, 16
      %v861 = vrot.slane %v859, 4
      %v862 = vshll.u32 %v639, 16
      %v864 = vrot.slane %v862, 5
      %v865 = vor.u32 %v861, %v864
      %v866 = vrot.slane %v865, 4
      %v868 = vshll.u32 %v640, 16
      %v870 = vrot.slane %v868, 5
      %v871 = vsel %vm665, %v866, %v870
      %v872 = vshrl.u32 %v640, 16
      %v874 = vrot.slane %v872, 4
      %v875 = vor.u32 %v874, %v870
      %v876 = vrot.slane %v875, 4
      %v878 = vshll.u32 %v641, 16
      %v880 = vrot.slane %v878, 5
      %v881 = vsel %vm665, %v876, %v880
      %v883 = vshrl.u32 %v642, 16
      %v885 = vrot.slane %v883, 4
      %v886 = vshll.u32 %v642, 16
      %v888 = vrot.slane %v886, 5
      %v889 = vor.u32 %v885, %v888
      %v890 = vrot.slane %v889, 4
      %v892 = vshll.u32 %v643, 16
      %v894 = vrot.slane %v892, 5
      %v895 = vsel %vm665, %v890, %v894
      %v896 = vshrl.u32 %v643, 16
      %v898 = vrot.slane %v896, 4
      %v899 = vor.u32 %v898, %v894
      %v900 = vrot.slane %v899, 4
      %v902 = vshll.u32 %v644, 16
      %v904 = vrot.slane %v902, 5
      %v905 = vsel %vm665, %v900, %v904
      %v907 = vshrl.u32 %v645, 16
      %v909 = vrot.slane %v907, 4
      %v910 = vshll.u32 %v645, 16
      %v912 = vrot.slane %v910, 5
      %v913 = vor.u32 %v909, %v912
      %v914 = vrot.slane %v913, 4
      %v916 = vshll.u32 %v646, 16
      %v918 = vrot.slane %v916, 5
      %v919 = vsel %vm665, %v914, %v918
      %v920 = vshrl.u32 %v646, 16
      %v922 = vrot.slane %v920, 4
      %v923 = vor.u32 %v922, %v918
      %v924 = vrot.slane %v923, 4
      %v926 = vshll.u32 %v647, 16
      %v928 = vrot.slane %v926, 5
      %v929 = vsel %vm665, %v924, %v928
      %v931 = vshrl.u32 %v648, 16
      %v933 = vrot.slane %v931, 4
      %v934 = vshll.u32 %v648, 16
      %v936 = vrot.slane %v934, 5
      %v937 = vor.u32 %v933, %v936
      %v938 = vrot.slane %v937, 4
      %v940 = vshll.u32 %v649, 16
      %v942 = vrot.slane %v940, 5
      %v943 = vsel %vm665, %v938, %v942
      %v944 = vshrl.u32 %v649, 16
      %v946 = vrot.slane %v944, 4
      %v947 = vor.u32 %v946, %v942
      %v948 = vrot.slane %v947, 4
      %v950 = vshll.u32 %v650, 16
      %v952 = vrot.slane %v950, 5
      %v953 = vsel %vm665, %v948, %v952
      %v955 = vshrl.u32 %v651, 16
      %v957 = vrot.slane %v955, 4
      %v958 = vshll.u32 %v651, 16
      %v960 = vrot.slane %v958, 5
      %v961 = vor.u32 %v957, %v960
      %v962 = vrot.slane %v961, 4
      %v964 = vshll.u32 %v652, 16
      %v966 = vrot.slane %v964, 5
      %v967 = vsel %vm665, %v962, %v966
      %v968 = vshrl.u32 %v652, 16
      %v970 = vrot.slane %v968, 4
      %v971 = vor.u32 %v970, %v966
      %v972 = vrot.slane %v971, 4
      %v974 = vshll.u32 %v653, 16
      %v976 = vrot.slane %v974, 5
      %v977 = vsel %vm665, %v972, %v976
      %v979 = vshrl.u32 %v654, 16
      %v981 = vrot.slane %v979, 4
      %v982 = vshll.u32 %v654, 16
      %v984 = vrot.slane %v982, 5
      %v985 = vor.u32 %v981, %v984
      %v986 = vrot.slane %v985, 4
      %v988 = vshll.u32 %v655, 16
      %v990 = vrot.slane %v988, 5
      %v991 = vsel %vm665, %v986, %v990
      %v992 = vshrl.u32 %v655, 16
      %v994 = vrot.slane %v992, 4
      %v995 = vor.u32 %v994, %v990
      %v996 = vrot.slane %v995, 4
      %v998 = vshll.u32 %v656, 16
      %v1000 = vrot.slane %v998, 5
      %v1001 = vsel %vm665, %v996, %v1000
      %v1003 = vshrl.u32 %v657, 16
      %v1005 = vrot.slane %v1003, 4
      %v1006 = vshll.u32 %v657, 16
      %v1008 = vrot.slane %v1006, 5
      %v1009 = vor.u32 %v1005, %v1008
      %v1010 = vrot.slane %v1009, 4
      %v1012 = vshll.u32 %v658, 16
      %v1014 = vrot.slane %v1012, 5
      %v1015 = vsel %vm665, %v1010, %v1014
      %v1016 = vshrl.u32 %v658, 16
      %v1018 = vrot.slane %v1016, 4
      %v1019 = vor.u32 %v1018, %v1014
      %v1020 = vrot.slane %v1019, 4
      %v1022 = vshll.u32 %v659, 16
      %v1024 = vrot.slane %v1022, 5
      %v1025 = vsel %vm665, %v1020, %v1024
      %v1027 = vshrl.u32 %v660, 16
      %v1029 = vrot.slane %v1027, 4
      %v1030 = vshll.u32 %v660, 16
      %v1032 = vrot.slane %v1030, 5
      %v1033 = vor.u32 %v1029, %v1032
      %v1034 = vrot.slane %v1033, 4
      %v1036 = vshll.u32 %v661, 16
      %v1038 = vrot.slane %v1036, 5
      %v1039 = vsel %vm665, %v1034, %v1038
      %v1040 = vshrl.u32 %v661, 16
      %v1042 = vrot.slane %v1040, 4
      %v1043 = vor.u32 %v1042, %v1038
      %v1044 = vrot.slane %v1043, 4
      %v1046 = vshll.u32 %v662, 16
      %v1048 = vrot.slane %v1046, 5
      %v1049 = vsel %vm665, %v1044, %v1048
      %s1050 = scalar_lea.vmem %s210, 64
      %v1051 = vld [vmem:[%s1050] sm:$0xf]
      %v1052 = vld [vmem:[%s1050 + $0x4] sm:$0xf]
      %v1053 = vld [vmem:[%s1050 + $0x8] sm:$0xf]
      %v1054 = vld [vmem:[%s1050 + $0xc] sm:$0xf]
      %v1055 = vld [vmem:[%s1050 + $0x10] sm:$0xf]
      %v1056 = vld [vmem:[%s1050 + $0x14] sm:$0xf]
      %v1057 = vld [vmem:[%s1050 + $0x18] sm:$0xf]
      %v1058 = vld [vmem:[%s1050 + $0x1c] sm:$0xf]
      %v1059 = vld [vmem:[%s1050 + $0x20] sm:$0xf]
      %v1060 = vld [vmem:[%s1050 + $0x24] sm:$0xf]
      %v1061 = vld [vmem:[%s1050 + $0x28] sm:$0xf]
      %v1062 = vld [vmem:[%s1050 + $0x2c] sm:$0xf]
      %v1063 = vld [vmem:[%s1050 + $0x30] sm:$0xf]
      %v1064 = vld [vmem:[%s1050 + $0x34] sm:$0xf]
      %v1065 = vld [vmem:[%s1050 + $0x38] sm:$0xf]
      %v1066 = vld [vmem:[%s1050 + $0x3c] sm:$0xf]
      %v1067 = vunpack.c.l.b16 %v679
      %v1068 = vunpack.c.l.b16 %v689
      %v1069 = vunpack.c.l.b16 %v703
      %v1070 = vunpack.c.l.b16 %v713
      %v1071 = vunpack.c.l.b16 %v727
      %v1072 = vunpack.c.l.b16 %v737
      %v1073 = vunpack.c.l.b16 %v751
      %v1074 = vunpack.c.l.b16 %v761
      %v1075 = vunpack.c.l.b16 %v775
      %v1076 = vunpack.c.l.b16 %v785
      %v1077 = vunpack.c.l.b16 %v799
      %v1078 = vunpack.c.l.b16 %v809
      %v1079 = vunpack.c.l.b16 %v823
      %v1080 = vunpack.c.l.b16 %v833
      %v1081 = vunpack.c.l.b16 %v847
      %v1082 = vunpack.c.l.b16 %v857
      %v1083 = vunpack.c.l.b16 %v871
      %v1084 = vunpack.c.l.b16 %v881
      %v1085 = vunpack.c.l.b16 %v895
      %v1086 = vunpack.c.l.b16 %v905
      %v1087 = vunpack.c.l.b16 %v919
      %v1088 = vunpack.c.l.b16 %v929
      %v1089 = vunpack.c.l.b16 %v943
      %v1090 = vunpack.c.l.b16 %v953
      %v1091 = vunpack.c.l.b16 %v967
      %v1092 = vunpack.c.l.b16 %v977
      %v1093 = vunpack.c.l.b16 %v991
      %v1094 = vunpack.c.l.b16 %v1001
      %v1095 = vunpack.c.l.b16 %v1015
      %v1096 = vunpack.c.l.b16 %v1025
      %v1097 = vunpack.c.l.b16 %v1039
      %v1098 = vunpack.c.l.b16 %v1049
      %v1099 = vpack.c.b16 %v1068, %v1067
      %v1100 = vpack.c.b16 %v1070, %v1069
      %v1101 = vpack.c.b16 %v1072, %v1071
      %v1102 = vpack.c.b16 %v1074, %v1073
      %v1103 = vpack.c.b16 %v1076, %v1075
      %v1104 = vpack.c.b16 %v1078, %v1077
      %v1105 = vpack.c.b16 %v1080, %v1079
      %v1106 = vpack.c.b16 %v1082, %v1081
      %v1107 = vpack.c.b16 %v1084, %v1083
      %v1108 = vpack.c.b16 %v1086, %v1085
      %v1109 = vpack.c.b16 %v1088, %v1087
      %v1110 = vpack.c.b16 %v1090, %v1089
      %v1111 = vpack.c.b16 %v1092, %v1091
      %v1112 = vpack.c.b16 %v1094, %v1093
      %v1113 = vpack.c.b16 %v1096, %v1095
      %v1114 = vpack.c.b16 %v1098, %v1097
      %v1147 = vunpack.c.l.b16 %v1051
      %v1148 = vunpack.c.l.b16 %v1052
      %v1149 = vunpack.c.l.b16 %v1053
      %v1150 = vunpack.c.l.b16 %v1054
      %v1151 = vunpack.c.l.b16 %v1055
      %v1152 = vunpack.c.l.b16 %v1056
      %v1153 = vunpack.c.l.b16 %v1057
      %v1154 = vunpack.c.l.b16 %v1058
      %v1155 = vunpack.c.l.b16 %v1059
      %v1156 = vunpack.c.l.b16 %v1060
      %v1157 = vunpack.c.l.b16 %v1061
      %v1158 = vunpack.c.l.b16 %v1062
      %v1159 = vunpack.c.l.b16 %v1063
      %v1160 = vunpack.c.l.b16 %v1064
      %v1161 = vunpack.c.l.b16 %v1065
      %v1162 = vunpack.c.l.b16 %v1066
      %v1163 = vpack.c.b16 %v1148, %v1147
      %v1164 = vpack.c.b16 %v1150, %v1149
      %v1165 = vpack.c.b16 %v1152, %v1151
      %v1166 = vpack.c.b16 %v1154, %v1153
      %v1167 = vpack.c.b16 %v1156, %v1155
      %v1168 = vpack.c.b16 %v1158, %v1157
      %v1169 = vpack.c.b16 %v1160, %v1159
      %v1170 = vpack.c.b16 %v1162, %v1161
      %1179 = vmatprep.subr.bf16.mxu0 0
      %1180 = vmatpush1.bf16.msra.mxu0 %v1170
      %1181 = vmatprep.subr.bf16.mxu0 0
      %1182 = vmatpush1.bf16.msra.mxu0 %v1169
      %1183 = vmatprep.subr.bf16.mxu0 0
      %1184 = vmatpush1.bf16.msra.mxu0 %v1168
      %1185 = vmatprep.subr.bf16.mxu0 0
      %1186 = vmatpush1.bf16.msra.mxu0 %v1167
      %1187 = vmatprep.subr.bf16.mxu0 0
      %1188 = vmatpush1.bf16.msra.mxu0 %v1166
      %1189 = vmatprep.subr.bf16.mxu0 0
      %1190 = vmatpush1.bf16.msra.mxu0 %v1165
      %1191 = vmatprep.subr.bf16.mxu0 0
      %1192 = vmatpush1.bf16.msra.mxu0 %v1164
      %1193 = vmatprep.subr.bf16.mxu0 0
      %1194 = vmatpush1.bf16.msra.mxu0 %v1163
      %1195 = vmatprep.subr.bf16.mxu0 0
      %1196 = vmatpush2.bf16.msra.mxu0 0
      %1197 = vmatprep.subr.bf16.mxu0 0
      %1198 = vmatpush2.bf16.msra.mxu0 0
      %1199 = vmatprep.subr.bf16.mxu0 0
      %1200 = vmatpush2.bf16.msra.mxu0 0
      %1201 = vmatprep.subr.bf16.mxu0 0
      %1202 = vmatpush2.bf16.msra.mxu0 0
      %1203 = vmatprep.subr.bf16.mxu0 0
      %1204 = vmatpush2.bf16.msra.mxu0 0
      %1205 = vmatprep.subr.bf16.mxu0 0
      %1206 = vmatpush2.bf16.msra.mxu0 0
      %1207 = vmatprep.subr.bf16.mxu0 0
      %1208 = vmatpush2.bf16.msra.mxu0 0
      %1209 = vmatprep.subr.bf16.mxu0 0
      %1210 = vmatpush2.bf16.msra.mxu0 0
      %1211 = vmatprep.mubr.bf16.mxu0 0
      %1212 = vmatmul.mubr.bf16.gmra.mxu0 %v1099
      %v1213 = vpop.f32.mrf.mxu0
      %v1214 = vadd.f32 0.0, %v1213
      %v1215 = vpop.f32.mrf.mxu0
      %v1216 = vpop.f32.mrf.mxu0
      %v1217 = vadd.f32 0.0, %v1216
      %v1218 = vpop.f32.mrf.mxu0
      %1219 = vmatprep.mubr.bf16.mxu0 0
      %1220 = vmatmul.mubr.bf16.gmra.mxu0 %v1100
      %v1221 = vpop.f32.mrf.mxu0
      %v1222 = vadd.f32 0.0, %v1221
      %v1223 = vpop.f32.mrf.mxu0
      %v1224 = vpop.f32.mrf.mxu0
      %v1225 = vadd.f32 0.0, %v1224
      %v1226 = vpop.f32.mrf.mxu0
      %1227 = vmatprep.mubr.bf16.mxu0 0
      %1228 = vmatmul.mubr.bf16.gmra.mxu0 %v1101
      %v1229 = vpop.f32.mrf.mxu0
      %v1230 = vadd.f32 0.0, %v1229
      %v1231 = vpop.f32.mrf.mxu0
      %v1232 = vpop.f32.mrf.mxu0
      %v1233 = vadd.f32 0.0, %v1232
      %v1234 = vpop.f32.mrf.mxu0
      %1235 = vmatprep.mubr.bf16.mxu0 0
      %1236 = vmatmul.mubr.bf16.gmra.mxu0 %v1102
      %v1237 = vpop.f32.mrf.mxu0
      %v1238 = vadd.f32 0.0, %v1237
      %v1239 = vpop.f32.mrf.mxu0
      %v1240 = vpop.f32.mrf.mxu0
      %v1241 = vadd.f32 0.0, %v1240
      %v1242 = vpop.f32.mrf.mxu0
      %1243 = vmatprep.mubr.bf16.mxu0 0
      %1244 = vmatmul.mubr.bf16.gmra.mxu0 %v1103
      %v1245 = vpop.f32.mrf.mxu0
      %v1246 = vadd.f32 0.0, %v1245
      %v1247 = vpop.f32.mrf.mxu0
      %v1248 = vpop.f32.mrf.mxu0
      %v1249 = vadd.f32 0.0, %v1248
      %v1250 = vpop.f32.mrf.mxu0
      %1251 = vmatprep.mubr.bf16.mxu0 0
      %1252 = vmatmul.mubr.bf16.gmra.mxu0 %v1104
      %v1253 = vpop.f32.mrf.mxu0
      %v1254 = vadd.f32 0.0, %v1253
      %v1255 = vpop.f32.mrf.mxu0
      %v1256 = vpop.f32.mrf.mxu0
      %v1257 = vadd.f32 0.0, %v1256
      %v1258 = vpop.f32.mrf.mxu0
      %1259 = vmatprep.mubr.bf16.mxu0 0
      %1260 = vmatmul.mubr.bf16.gmra.mxu0 %v1105
      %v1261 = vpop.f32.mrf.mxu0
      %v1262 = vadd.f32 0.0, %v1261
      %v1263 = vpop.f32.mrf.mxu0
      %v1264 = vpop.f32.mrf.mxu0
      %v1265 = vadd.f32 0.0, %v1264
      %v1266 = vpop.f32.mrf.mxu0
      %1267 = vmatprep.mubr.bf16.mxu0 0
      %1268 = vmatmul.mubr.bf16.gmra.mxu0 %v1106
      %v1269 = vpop.f32.mrf.mxu0
      %v1270 = vadd.f32 0.0, %v1269
      %v1271 = vpop.f32.mrf.mxu0
      %v1272 = vpop.f32.mrf.mxu0
      %v1273 = vadd.f32 0.0, %v1272
      %v1274 = vpop.f32.mrf.mxu0
      %1275 = vmatprep.mubr.bf16.mxu0 0
      %1276 = vmatmul.mubr.bf16.gmra.mxu0 %v1107
      %v1277 = vpop.f32.mrf.mxu0
      %v1278 = vadd.f32 0.0, %v1277
      %v1279 = vpop.f32.mrf.mxu0
      %v1280 = vpop.f32.mrf.mxu0
      %v1281 = vadd.f32 0.0, %v1280
      %v1282 = vpop.f32.mrf.mxu0
      %1283 = vmatprep.mubr.bf16.mxu0 0
      %1284 = vmatmul.mubr.bf16.gmra.mxu0 %v1108
      %v1285 = vpop.f32.mrf.mxu0
      %v1286 = vadd.f32 0.0, %v1285
      %v1287 = vpop.f32.mrf.mxu0
      %v1288 = vpop.f32.mrf.mxu0
      %v1289 = vadd.f32 0.0, %v1288
      %v1290 = vpop.f32.mrf.mxu0
      %1291 = vmatprep.mubr.bf16.mxu0 0
      %1292 = vmatmul.mubr.bf16.gmra.mxu0 %v1109
      %v1293 = vpop.f32.mrf.mxu0
      %v1294 = vadd.f32 0.0, %v1293
      %v1295 = vpop.f32.mrf.mxu0
      %v1296 = vpop.f32.mrf.mxu0
      %v1297 = vadd.f32 0.0, %v1296
      %v1298 = vpop.f32.mrf.mxu0
      %1299 = vmatprep.mubr.bf16.mxu0 0
      %1300 = vmatmul.mubr.bf16.gmra.mxu0 %v1110
      %v1301 = vpop.f32.mrf.mxu0
      %v1302 = vadd.f32 0.0, %v1301
      %v1303 = vpop.f32.mrf.mxu0
      %v1304 = vpop.f32.mrf.mxu0
      %v1305 = vadd.f32 0.0, %v1304
      %v1306 = vpop.f32.mrf.mxu0
      %1307 = vmatprep.mubr.bf16.mxu0 0
      %1308 = vmatmul.mubr.bf16.gmra.mxu0 %v1111
      %v1309 = vpop.f32.mrf.mxu0
      %v1310 = vadd.f32 0.0, %v1309
      %v1311 = vpop.f32.mrf.mxu0
      %v1312 = vpop.f32.mrf.mxu0
      %v1313 = vadd.f32 0.0, %v1312
      %v1314 = vpop.f32.mrf.mxu0
      %1315 = vmatprep.mubr.bf16.mxu0 0
      %1316 = vmatmul.mubr.bf16.gmra.mxu0 %v1112
      %v1317 = vpop.f32.mrf.mxu0
      %v1318 = vadd.f32 0.0, %v1317
      %v1319 = vpop.f32.mrf.mxu0
      %v1320 = vpop.f32.mrf.mxu0
      %v1321 = vadd.f32 0.0, %v1320
      %v1322 = vpop.f32.mrf.mxu0
      %1323 = vmatprep.mubr.bf16.mxu0 0
      %1324 = vmatmul.mubr.bf16.gmra.mxu0 %v1113
      %v1325 = vpop.f32.mrf.mxu0
      %v1326 = vadd.f32 0.0, %v1325
      %v1327 = vpop.f32.mrf.mxu0
      %v1328 = vpop.f32.mrf.mxu0
      %v1329 = vadd.f32 0.0, %v1328
      %v1330 = vpop.f32.mrf.mxu0
      %1331 = vmatprep.mubr.bf16.mxu0 0
      %1332 = vmatmul.mubr.bf16.gmra.mxu0 %v1114
      %v1333 = vpop.f32.mrf.mxu0
      %v1334 = vadd.f32 0.0, %v1333
      %v1335 = vpop.f32.mrf.mxu0
      %v1336 = vpop.f32.mrf.mxu0
      %v1337 = vadd.f32 0.0, %v1336
      %v1338 = vpop.f32.mrf.mxu0
      %1339 = vdwg.mxu0
      %v1340 = vadd.f32 %v583, %v1214
      %v1341 = vadd.f32 %v584, %v1217
      %v1342 = vadd.f32 %v585, %v1222
      %v1343 = vadd.f32 %v586, %v1225
      %v1344 = vadd.f32 %v587, %v1230
      %v1345 = vadd.f32 %v588, %v1233
      %v1346 = vadd.f32 %v589, %v1238
      %v1347 = vadd.f32 %v590, %v1241
      %v1348 = vadd.f32 %v591, %v1246
      %v1349 = vadd.f32 %v592, %v1249
      %v1350 = vadd.f32 %v593, %v1254
      %v1351 = vadd.f32 %v594, %v1257
      %v1352 = vadd.f32 %v595, %v1262
      %v1353 = vadd.f32 %v596, %v1265
      %v1354 = vadd.f32 %v597, %v1270
      %v1355 = vadd.f32 %v598, %v1273
      %v1356 = vadd.f32 %v599, %v1278
      %v1357 = vadd.f32 %v600, %v1281
      %v1358 = vadd.f32 %v601, %v1286
      %v1359 = vadd.f32 %v602, %v1289
      %v1360 = vadd.f32 %v603, %v1294
      %v1361 = vadd.f32 %v604, %v1297
      %v1362 = vadd.f32 %v605, %v1302
      %v1363 = vadd.f32 %v606, %v1305
      %v1364 = vadd.f32 %v607, %v1310
      %v1365 = vadd.f32 %v608, %v1313
      %v1366 = vadd.f32 %v609, %v1318
      %v1367 = vadd.f32 %v610, %v1321
      %v1368 = vadd.f32 %v611, %v1326
      %v1369 = vadd.f32 %v612, %v1329
      %v1370 = vadd.f32 %v613, %v1334
      %v1371 = vadd.f32 %v614, %v1337
      %v1372 = vld [vmem:[%s206] sm:$0xe]
      %v1373 = vld [vmem:[%s206 + $0xc] sm:$0xe]
      %v1374 = vld [vmem:[%s206 + $0x18] sm:$0xe]
      %v1375 = vld [vmem:[%s206 + $0x24] sm:$0xe]
      %v1376 = vld [vmem:[%s206 + $0x30] sm:$0xe]
      %v1377 = vld [vmem:[%s206 + $0x3c] sm:$0xe]
      %v1378 = vld [vmem:[%s206 + $0x48] sm:$0xe]
      %v1379 = vld [vmem:[%s206 + $0x54] sm:$0xe]
      %v1380 = vld [vmem:[%s206 + $0x60] sm:$0xe]
      %v1381 = vld [vmem:[%s206 + $0x6c] sm:$0xe]
      %v1382 = vld [vmem:[%s206 + $0x78] sm:$0xe]
      %v1383 = vld [vmem:[%s206 + $0x84] sm:$0xe]
      %v1384 = vld [vmem:[%s206 + $0x90] sm:$0xe]
      %v1385 = vld [vmem:[%s206 + $0x9c] sm:$0xe]
      %v1386 = vld [vmem:[%s206 + $0xa8] sm:$0xe]
      %v1387 = vld [vmem:[%s206 + $0xb4] sm:$0xe]
      %vm1436 = vcmask 1042432
      %vm1437 = vcmask 1046532
      %vm1438 = vmor %vm1436, %vm1437
      %v1439 = vrot.slane %v1372, 5
      %v1440 = vrot.slane %v1439, 4
      %v1441 = vrot.slane %v616, 5
      %v1442 = vsel %vm1438, %v1440, %v1441
      %v1443 = vrot.slane %v1441, 4
      %v1444 = vrot.slane %v617, 5
      %v1445 = vsel %vm1438, %v1443, %v1444
      %v1446 = vrot.slane %v1373, 5
      %v1447 = vrot.slane %v1446, 4
      %v1448 = vrot.slane %v619, 5
      %v1449 = vsel %vm1438, %v1447, %v1448
      %v1450 = vrot.slane %v1448, 4
      %v1451 = vrot.slane %v620, 5
      %v1452 = vsel %vm1438, %v1450, %v1451
      %v1453 = vrot.slane %v1374, 5
      %v1454 = vrot.slane %v1453, 4
      %v1455 = vrot.slane %v622, 5
      %v1456 = vsel %vm1438, %v1454, %v1455
      %v1457 = vrot.slane %v1455, 4
      %v1458 = vrot.slane %v623, 5
      %v1459 = vsel %vm1438, %v1457, %v1458
      %v1460 = vrot.slane %v1375, 5
      %v1461 = vrot.slane %v1460, 4
      %v1462 = vrot.slane %v625, 5
      %v1463 = vsel %vm1438, %v1461, %v1462
      %v1464 = vrot.slane %v1462, 4
      %v1465 = vrot.slane %v626, 5
      %v1466 = vsel %vm1438, %v1464, %v1465
      %v1467 = vrot.slane %v1376, 5
      %v1468 = vrot.slane %v1467, 4
      %v1469 = vrot.slane %v628, 5
      %v1470 = vsel %vm1438, %v1468, %v1469
      %v1471 = vrot.slane %v1469, 4
      %v1472 = vrot.slane %v629, 5
      %v1473 = vsel %vm1438, %v1471, %v1472
      %v1474 = vrot.slane %v1377, 5
      %v1475 = vrot.slane %v1474, 4
      %v1476 = vrot.slane %v631, 5
      %v1477 = vsel %vm1438, %v1475, %v1476
      %v1478 = vrot.slane %v1476, 4
      %v1479 = vrot.slane %v632, 5
      %v1480 = vsel %vm1438, %v1478, %v1479
      %v1481 = vrot.slane %v1378, 5
      %v1482 = vrot.slane %v1481, 4
      %v1483 = vrot.slane %v634, 5
      %v1484 = vsel %vm1438, %v1482, %v1483
      %v1485 = vrot.slane %v1483, 4
      %v1486 = vrot.slane %v635, 5
      %v1487 = vsel %vm1438, %v1485, %v1486
      %v1488 = vrot.slane %v1379, 5
      %v1489 = vrot.slane %v1488, 4
      %v1490 = vrot.slane %v637, 5
      %v1491 = vsel %vm1438, %v1489, %v1490
      %v1492 = vrot.slane %v1490, 4
      %v1493 = vrot.slane %v638, 5
      %v1494 = vsel %vm1438, %v1492, %v1493
      %v1495 = vrot.slane %v1380, 5
      %v1496 = vrot.slane %v1495, 4
      %v1497 = vrot.slane %v640, 5
      %v1498 = vsel %vm1438, %v1496, %v1497
      %v1499 = vrot.slane %v1497, 4
      %v1500 = vrot.slane %v641, 5
      %v1501 = vsel %vm1438, %v1499, %v1500
      %v1502 = vrot.slane %v1381, 5
      %v1503 = vrot.slane %v1502, 4
      %v1504 = vrot.slane %v643, 5
      %v1505 = vsel %vm1438, %v1503, %v1504
      %v1506 = vrot.slane %v1504, 4
      %v1507 = vrot.slane %v644, 5
      %v1508 = vsel %vm1438, %v1506, %v1507
      %v1509 = vrot.slane %v1382, 5
      %v1510 = vrot.slane %v1509, 4
      %v1511 = vrot.slane %v646, 5
      %v1512 = vsel %vm1438, %v1510, %v1511
      %v1513 = vrot.slane %v1511, 4
      %v1514 = vrot.slane %v647, 5
      %v1515 = vsel %vm1438, %v1513, %v1514
      %v1516 = vrot.slane %v1383, 5
      %v1517 = vrot.slane %v1516, 4
      %v1518 = vrot.slane %v649, 5
      %v1519 = vsel %vm1438, %v1517, %v1518
      %v1520 = vrot.slane %v1518, 4
      %v1521 = vrot.slane %v650, 5
      %v1522 = vsel %vm1438, %v1520, %v1521
      %v1523 = vrot.slane %v1384, 5
      %v1524 = vrot.slane %v1523, 4
      %v1525 = vrot.slane %v652, 5
      %v1526 = vsel %vm1438, %v1524, %v1525
      %v1527 = vrot.slane %v1525, 4
      %v1528 = vrot.slane %v653, 5
      %v1529 = vsel %vm1438, %v1527, %v1528
      %v1530 = vrot.slane %v1385, 5
      %v1531 = vrot.slane %v1530, 4
      %v1532 = vrot.slane %v655, 5
      %v1533 = vsel %vm1438, %v1531, %v1532
      %v1534 = vrot.slane %v1532, 4
      %v1535 = vrot.slane %v656, 5
      %v1536 = vsel %vm1438, %v1534, %v1535
      %v1537 = vrot.slane %v1386, 5
      %v1538 = vrot.slane %v1537, 4
      %v1539 = vrot.slane %v658, 5
      %v1540 = vsel %vm1438, %v1538, %v1539
      %v1541 = vrot.slane %v1539, 4
      %v1542 = vrot.slane %v659, 5
      %v1543 = vsel %vm1438, %v1541, %v1542
      %v1544 = vrot.slane %v1387, 5
      %v1545 = vrot.slane %v1544, 4
      %v1546 = vrot.slane %v661, 5
      %v1547 = vsel %vm1438, %v1545, %v1546
      %v1548 = vrot.slane %v1546, 4
      %v1549 = vrot.slane %v662, 5
      %v1550 = vsel %vm1438, %v1548, %v1549
      %s1551 = scalar_lea.vmem %s210, 128
      %v1552 = vld [vmem:[%s1551] sm:$0xf]
      %v1553 = vld [vmem:[%s1551 + $0x4] sm:$0xf]
      %v1554 = vld [vmem:[%s1551 + $0x8] sm:$0xf]
      %v1555 = vld [vmem:[%s1551 + $0xc] sm:$0xf]
      %v1556 = vld [vmem:[%s1551 + $0x10] sm:$0xf]
      %v1557 = vld [vmem:[%s1551 + $0x14] sm:$0xf]
      %v1558 = vld [vmem:[%s1551 + $0x18] sm:$0xf]
      %v1559 = vld [vmem:[%s1551 + $0x1c] sm:$0xf]
      %v1560 = vld [vmem:[%s1551 + $0x20] sm:$0xf]
      %v1561 = vld [vmem:[%s1551 + $0x24] sm:$0xf]
      %v1562 = vld [vmem:[%s1551 + $0x28] sm:$0xf]
      %v1563 = vld [vmem:[%s1551 + $0x2c] sm:$0xf]
      %v1564 = vld [vmem:[%s1551 + $0x30] sm:$0xf]
      %v1565 = vld [vmem:[%s1551 + $0x34] sm:$0xf]
      %v1566 = vld [vmem:[%s1551 + $0x38] sm:$0xf]
      %v1567 = vld [vmem:[%s1551 + $0x3c] sm:$0xf]
      %v1568 = vunpack.c.l.b16 %v1442
      %v1569 = vunpack.c.l.b16 %v1445
      %v1570 = vunpack.c.l.b16 %v1449
      %v1571 = vunpack.c.l.b16 %v1452
      %v1572 = vunpack.c.l.b16 %v1456
      %v1573 = vunpack.c.l.b16 %v1459
      %v1574 = vunpack.c.l.b16 %v1463
      %v1575 = vunpack.c.l.b16 %v1466
      %v1576 = vunpack.c.l.b16 %v1470
      %v1577 = vunpack.c.l.b16 %v1473
      %v1578 = vunpack.c.l.b16 %v1477
      %v1579 = vunpack.c.l.b16 %v1480
      %v1580 = vunpack.c.l.b16 %v1484
      %v1581 = vunpack.c.l.b16 %v1487
      %v1582 = vunpack.c.l.b16 %v1491
      %v1583 = vunpack.c.l.b16 %v1494
      %v1584 = vunpack.c.l.b16 %v1498
      %v1585 = vunpack.c.l.b16 %v1501
      %v1586 = vunpack.c.l.b16 %v1505
      %v1587 = vunpack.c.l.b16 %v1508
      %v1588 = vunpack.c.l.b16 %v1512
      %v1589 = vunpack.c.l.b16 %v1515
      %v1590 = vunpack.c.l.b16 %v1519
      %v1591 = vunpack.c.l.b16 %v1522
      %v1592 = vunpack.c.l.b16 %v1526
      %v1593 = vunpack.c.l.b16 %v1529
      %v1594 = vunpack.c.l.b16 %v1533
      %v1595 = vunpack.c.l.b16 %v1536
      %v1596 = vunpack.c.l.b16 %v1540
      %v1597 = vunpack.c.l.b16 %v1543
      %v1598 = vunpack.c.l.b16 %v1547
      %v1599 = vunpack.c.l.b16 %v1550
      %v1600 = vpack.c.b16 %v1569, %v1568
      %v1601 = vpack.c.b16 %v1571, %v1570
      %v1602 = vpack.c.b16 %v1573, %v1572
      %v1603 = vpack.c.b16 %v1575, %v1574
      %v1604 = vpack.c.b16 %v1577, %v1576
      %v1605 = vpack.c.b16 %v1579, %v1578
      %v1606 = vpack.c.b16 %v1581, %v1580
      %v1607 = vpack.c.b16 %v1583, %v1582
      %v1608 = vpack.c.b16 %v1585, %v1584
      %v1609 = vpack.c.b16 %v1587, %v1586
      %v1610 = vpack.c.b16 %v1589, %v1588
      %v1611 = vpack.c.b16 %v1591, %v1590
      %v1612 = vpack.c.b16 %v1593, %v1592
      %v1613 = vpack.c.b16 %v1595, %v1594
      %v1614 = vpack.c.b16 %v1597, %v1596
      %v1615 = vpack.c.b16 %v1599, %v1598
      %v1648 = vunpack.c.l.b16 %v1552
      %v1649 = vunpack.c.l.b16 %v1553
      %v1650 = vunpack.c.l.b16 %v1554
      %v1651 = vunpack.c.l.b16 %v1555
      %v1652 = vunpack.c.l.b16 %v1556
      %v1653 = vunpack.c.l.b16 %v1557
      %v1654 = vunpack.c.l.b16 %v1558
      %v1655 = vunpack.c.l.b16 %v1559
      %v1656 = vunpack.c.l.b16 %v1560
      %v1657 = vunpack.c.l.b16 %v1561
      %v1658 = vunpack.c.l.b16 %v1562
      %v1659 = vunpack.c.l.b16 %v1563
      %v1660 = vunpack.c.l.b16 %v1564
      %v1661 = vunpack.c.l.b16 %v1565
      %v1662 = vunpack.c.l.b16 %v1566
      %v1663 = vunpack.c.l.b16 %v1567
      %v1664 = vpack.c.b16 %v1649, %v1648
      %v1665 = vpack.c.b16 %v1651, %v1650
      %v1666 = vpack.c.b16 %v1653, %v1652
      %v1667 = vpack.c.b16 %v1655, %v1654
      %v1668 = vpack.c.b16 %v1657, %v1656
      %v1669 = vpack.c.b16 %v1659, %v1658
      %v1670 = vpack.c.b16 %v1661, %v1660
      %v1671 = vpack.c.b16 %v1663, %v1662
      %1680 = vmatprep.subr.bf16.mxu0 0
      %1681 = vmatpush1.bf16.msra.mxu0 %v1671
      %1682 = vmatprep.subr.bf16.mxu0 0
      %1683 = vmatpush1.bf16.msra.mxu0 %v1670
      %1684 = vmatprep.subr.bf16.mxu0 0
      %1685 = vmatpush1.bf16.msra.mxu0 %v1669
      %1686 = vmatprep.subr.bf16.mxu0 0
      %1687 = vmatpush1.bf16.msra.mxu0 %v1668
      %1688 = vmatprep.subr.bf16.mxu0 0
      %1689 = vmatpush1.bf16.msra.mxu0 %v1667
      %1690 = vmatprep.subr.bf16.mxu0 0
      %1691 = vmatpush1.bf16.msra.mxu0 %v1666
      %1692 = vmatprep.subr.bf16.mxu0 0
      %1693 = vmatpush1.bf16.msra.mxu0 %v1665
      %1694 = vmatprep.subr.bf16.mxu0 0
      %1695 = vmatpush1.bf16.msra.mxu0 %v1664
      %1696 = vmatprep.subr.bf16.mxu0 0
      %1697 = vmatpush2.bf16.msra.mxu0 0
      %1698 = vmatprep.subr.bf16.mxu0 0
      %1699 = vmatpush2.bf16.msra.mxu0 0
      %1700 = vmatprep.subr.bf16.mxu0 0
      %1701 = vmatpush2.bf16.msra.mxu0 0
      %1702 = vmatprep.subr.bf16.mxu0 0
      %1703 = vmatpush2.bf16.msra.mxu0 0
      %1704 = vmatprep.subr.bf16.mxu0 0
      %1705 = vmatpush2.bf16.msra.mxu0 0
      %1706 = vmatprep.subr.bf16.mxu0 0
      %1707 = vmatpush2.bf16.msra.mxu0 0
      %1708 = vmatprep.subr.bf16.mxu0 0
      %1709 = vmatpush2.bf16.msra.mxu0 0
      %1710 = vmatprep.subr.bf16.mxu0 0
      %1711 = vmatpush2.bf16.msra.mxu0 0
      %1712 = vmatprep.mubr.bf16.mxu0 0
      %1713 = vmatmul.mubr.bf16.gmra.mxu0 %v1600
      %v1714 = vpop.f32.mrf.mxu0
      %v1715 = vadd.f32 0.0, %v1714
      %v1716 = vpop.f32.mrf.mxu0
      %v1717 = vpop.f32.mrf.mxu0
      %v1718 = vadd.f32 0.0, %v1717
      %v1719 = vpop.f32.mrf.mxu0
      %1720 = vmatprep.mubr.bf16.mxu0 0
      %1721 = vmatmul.mubr.bf16.gmra.mxu0 %v1601
      %v1722 = vpop.f32.mrf.mxu0
      %v1723 = vadd.f32 0.0, %v1722
      %v1724 = vpop.f32.mrf.mxu0
      %v1725 = vpop.f32.mrf.mxu0
      %v1726 = vadd.f32 0.0, %v1725
      %v1727 = vpop.f32.mrf.mxu0
      %1728 = vmatprep.mubr.bf16.mxu0 0
      %1729 = vmatmul.mubr.bf16.gmra.mxu0 %v1602
      %v1730 = vpop.f32.mrf.mxu0
      %v1731 = vadd.f32 0.0, %v1730
      %v1732 = vpop.f32.mrf.mxu0
      %v1733 = vpop.f32.mrf.mxu0
      %v1734 = vadd.f32 0.0, %v1733
      %v1735 = vpop.f32.mrf.mxu0
      %1736 = vmatprep.mubr.bf16.mxu0 0
      %1737 = vmatmul.mubr.bf16.gmra.mxu0 %v1603
      %v1738 = vpop.f32.mrf.mxu0
      %v1739 = vadd.f32 0.0, %v1738
      %v1740 = vpop.f32.mrf.mxu0
      %v1741 = vpop.f32.mrf.mxu0
      %v1742 = vadd.f32 0.0, %v1741
      %v1743 = vpop.f32.mrf.mxu0
      %1744 = vmatprep.mubr.bf16.mxu0 0
      %1745 = vmatmul.mubr.bf16.gmra.mxu0 %v1604
      %v1746 = vpop.f32.mrf.mxu0
      %v1747 = vadd.f32 0.0, %v1746
      %v1748 = vpop.f32.mrf.mxu0
      %v1749 = vpop.f32.mrf.mxu0
      %v1750 = vadd.f32 0.0, %v1749
      %v1751 = vpop.f32.mrf.mxu0
      %1752 = vmatprep.mubr.bf16.mxu0 0
      %1753 = vmatmul.mubr.bf16.gmra.mxu0 %v1605
      %v1754 = vpop.f32.mrf.mxu0
      %v1755 = vadd.f32 0.0, %v1754
      %v1756 = vpop.f32.mrf.mxu0
      %v1757 = vpop.f32.mrf.mxu0
      %v1758 = vadd.f32 0.0, %v1757
      %v1759 = vpop.f32.mrf.mxu0
      %1760 = vmatprep.mubr.bf16.mxu0 0
      %1761 = vmatmul.mubr.bf16.gmra.mxu0 %v1606
      %v1762 = vpop.f32.mrf.mxu0
      %v1763 = vadd.f32 0.0, %v1762
      %v1764 = vpop.f32.mrf.mxu0
      %v1765 = vpop.f32.mrf.mxu0
      %v1766 = vadd.f32 0.0, %v1765
      %v1767 = vpop.f32.mrf.mxu0
      %1768 = vmatprep.mubr.bf16.mxu0 0
      %1769 = vmatmul.mubr.bf16.gmra.mxu0 %v1607
      %v1770 = vpop.f32.mrf.mxu0
      %v1771 = vadd.f32 0.0, %v1770
      %v1772 = vpop.f32.mrf.mxu0
      %v1773 = vpop.f32.mrf.mxu0
      %v1774 = vadd.f32 0.0, %v1773
      %v1775 = vpop.f32.mrf.mxu0
      %1776 = vmatprep.mubr.bf16.mxu0 0
      %1777 = vmatmul.mubr.bf16.gmra.mxu0 %v1608
      %v1778 = vpop.f32.mrf.mxu0
      %v1779 = vadd.f32 0.0, %v1778
      %v1780 = vpop.f32.mrf.mxu0
      %v1781 = vpop.f32.mrf.mxu0
      %v1782 = vadd.f32 0.0, %v1781
      %v1783 = vpop.f32.mrf.mxu0
      %1784 = vmatprep.mubr.bf16.mxu0 0
      %1785 = vmatmul.mubr.bf16.gmra.mxu0 %v1609
      %v1786 = vpop.f32.mrf.mxu0
      %v1787 = vadd.f32 0.0, %v1786
      %v1788 = vpop.f32.mrf.mxu0
      %v1789 = vpop.f32.mrf.mxu0
      %v1790 = vadd.f32 0.0, %v1789
      %v1791 = vpop.f32.mrf.mxu0
      %1792 = vmatprep.mubr.bf16.mxu0 0
      %1793 = vmatmul.mubr.bf16.gmra.mxu0 %v1610
      %v1794 = vpop.f32.mrf.mxu0
      %v1795 = vadd.f32 0.0, %v1794
      %v1796 = vpop.f32.mrf.mxu0
      %v1797 = vpop.f32.mrf.mxu0
      %v1798 = vadd.f32 0.0, %v1797
      %v1799 = vpop.f32.mrf.mxu0
      %1800 = vmatprep.mubr.bf16.mxu0 0
      %1801 = vmatmul.mubr.bf16.gmra.mxu0 %v1611
      %v1802 = vpop.f32.mrf.mxu0
      %v1803 = vadd.f32 0.0, %v1802
      %v1804 = vpop.f32.mrf.mxu0
      %v1805 = vpop.f32.mrf.mxu0
      %v1806 = vadd.f32 0.0, %v1805
      %v1807 = vpop.f32.mrf.mxu0
      %1808 = vmatprep.mubr.bf16.mxu0 0
      %1809 = vmatmul.mubr.bf16.gmra.mxu0 %v1612
      %v1810 = vpop.f32.mrf.mxu0
      %v1811 = vadd.f32 0.0, %v1810
      %v1812 = vpop.f32.mrf.mxu0
      %v1813 = vpop.f32.mrf.mxu0
      %v1814 = vadd.f32 0.0, %v1813
      %v1815 = vpop.f32.mrf.mxu0
      %1816 = vmatprep.mubr.bf16.mxu0 0
      %1817 = vmatmul.mubr.bf16.gmra.mxu0 %v1613
      %v1818 = vpop.f32.mrf.mxu0
      %v1819 = vadd.f32 0.0, %v1818
      %v1820 = vpop.f32.mrf.mxu0
      %v1821 = vpop.f32.mrf.mxu0
      %v1822 = vadd.f32 0.0, %v1821
      %v1823 = vpop.f32.mrf.mxu0
      %1824 = vmatprep.mubr.bf16.mxu0 0
      %1825 = vmatmul.mubr.bf16.gmra.mxu0 %v1614
      %v1826 = vpop.f32.mrf.mxu0
      %v1827 = vadd.f32 0.0, %v1826
      %v1828 = vpop.f32.mrf.mxu0
      %v1829 = vpop.f32.mrf.mxu0
      %v1830 = vadd.f32 0.0, %v1829
      %v1831 = vpop.f32.mrf.mxu0
      %1832 = vmatprep.mubr.bf16.mxu0 0
      %1833 = vmatmul.mubr.bf16.gmra.mxu0 %v1615
      %v1834 = vpop.f32.mrf.mxu0
      %v1835 = vadd.f32 0.0, %v1834
      %v1836 = vpop.f32.mrf.mxu0
      %v1837 = vpop.f32.mrf.mxu0
      %v1838 = vadd.f32 0.0, %v1837
      %v1839 = vpop.f32.mrf.mxu0
      %1840 = vdwg.mxu0
      %v1841 = vadd.f32 %v1340, %v1715
      %v1842 = vadd.f32 %v1341, %v1718
      %v1843 = vadd.f32 %v1342, %v1723
      %v1844 = vadd.f32 %v1343, %v1726
      %v1845 = vadd.f32 %v1344, %v1731
      %v1846 = vadd.f32 %v1345, %v1734
      %v1847 = vadd.f32 %v1346, %v1739
      %v1848 = vadd.f32 %v1347, %v1742
      %v1849 = vadd.f32 %v1348, %v1747
      %v1850 = vadd.f32 %v1349, %v1750
      %v1851 = vadd.f32 %v1350, %v1755
      %v1852 = vadd.f32 %v1351, %v1758
      %v1853 = vadd.f32 %v1352, %v1763
      %v1854 = vadd.f32 %v1353, %v1766
      %v1855 = vadd.f32 %v1354, %v1771
      %v1856 = vadd.f32 %v1355, %v1774
      %v1857 = vadd.f32 %v1356, %v1779
      %v1858 = vadd.f32 %v1357, %v1782
      %v1859 = vadd.f32 %v1358, %v1787
      %v1860 = vadd.f32 %v1359, %v1790
      %v1861 = vadd.f32 %v1360, %v1795
      %v1862 = vadd.f32 %v1361, %v1798
      %v1863 = vadd.f32 %v1362, %v1803
      %v1864 = vadd.f32 %v1363, %v1806
      %v1865 = vadd.f32 %v1364, %v1811
      %v1866 = vadd.f32 %v1365, %v1814
      %v1867 = vadd.f32 %v1366, %v1819
      %v1868 = vadd.f32 %v1367, %v1822
      %v1869 = vadd.f32 %v1368, %v1827
      %v1870 = vadd.f32 %v1369, %v1830
      %v1871 = vadd.f32 %v1370, %v1835
      %v1872 = vadd.f32 %v1371, %v1838
      %s1873 = scalar_lea.vmem %s206, 12
      %v1874 = vld [vmem:[%s1873] sm:$0xf]
      %v1875 = vld [vmem:[%s1873 + $0x4] sm:$0xf]
      %v1876 = vld [vmem:[%s1873 + $0xc] sm:$0xf]
      %v1877 = vld [vmem:[%s1873 + $0x10] sm:$0xf]
      %v1878 = vld [vmem:[%s1873 + $0x18] sm:$0xf]
      %v1879 = vld [vmem:[%s1873 + $0x1c] sm:$0xf]
      %v1880 = vld [vmem:[%s1873 + $0x24] sm:$0xf]
      %v1881 = vld [vmem:[%s1873 + $0x28] sm:$0xf]
      %v1882 = vld [vmem:[%s1873 + $0x30] sm:$0xf]
      %v1883 = vld [vmem:[%s1873 + $0x34] sm:$0xf]
      %v1884 = vld [vmem:[%s1873 + $0x3c] sm:$0xf]
      %v1885 = vld [vmem:[%s1873 + $0x40] sm:$0xf]
      %v1886 = vld [vmem:[%s1873 + $0x48] sm:$0xf]
      %v1887 = vld [vmem:[%s1873 + $0x4c] sm:$0xf]
      %v1888 = vld [vmem:[%s1873 + $0x54] sm:$0xf]
      %v1889 = vld [vmem:[%s1873 + $0x58] sm:$0xf]
      %v1890 = vld [vmem:[%s1873 + $0x60] sm:$0xf]
      %v1891 = vld [vmem:[%s1873 + $0x64] sm:$0xf]
      %v1892 = vld [vmem:[%s1873 + $0x6c] sm:$0xf]
      %v1893 = vld [vmem:[%s1873 + $0x70] sm:$0xf]
      %v1894 = vld [vmem:[%s1873 + $0x78] sm:$0xf]
      %v1895 = vld [vmem:[%s1873 + $0x7c] sm:$0xf]
      %v1896 = vld [vmem:[%s1873 + $0x84] sm:$0xf]
      %v1897 = vld [vmem:[%s1873 + $0x88] sm:$0xf]
      %v1898 = vld [vmem:[%s1873 + $0x90] sm:$0xf]
      %v1899 = vld [vmem:[%s1873 + $0x94] sm:$0xf]
      %v1900 = vld [vmem:[%s1873 + $0x9c] sm:$0xf]
      %v1901 = vld [vmem:[%s1873 + $0xa0] sm:$0xf]
      %v1902 = vld [vmem:[%s1873 + $0xa8] sm:$0xf]
      %v1903 = vld [vmem:[%s1873 + $0xac] sm:$0xf]
      %v1904 = vld [vmem:[%s1873 + $0xb4] sm:$0xf]
      %v1905 = vld [vmem:[%s1873 + $0xb8] sm:$0xf]
      %s1906 = scalar_lea.vmem %s210, 192
      %v1907 = vld [vmem:[%s1906] sm:$0xf]
      %v1908 = vld [vmem:[%s1906 + $0x4] sm:$0xf]
      %v1909 = vld [vmem:[%s1906 + $0x8] sm:$0xf]
      %v1910 = vld [vmem:[%s1906 + $0xc] sm:$0xf]
      %v1911 = vld [vmem:[%s1906 + $0x10] sm:$0xf]
      %v1912 = vld [vmem:[%s1906 + $0x14] sm:$0xf]
      %v1913 = vld [vmem:[%s1906 + $0x18] sm:$0xf]
      %v1914 = vld [vmem:[%s1906 + $0x1c] sm:$0xf]
      %v1915 = vld [vmem:[%s1906 + $0x20] sm:$0xf]
      %v1916 = vld [vmem:[%s1906 + $0x24] sm:$0xf]
      %v1917 = vld [vmem:[%s1906 + $0x28] sm:$0xf]
      %v1918 = vld [vmem:[%s1906 + $0x2c] sm:$0xf]
      %v1919 = vld [vmem:[%s1906 + $0x30] sm:$0xf]
      %v1920 = vld [vmem:[%s1906 + $0x34] sm:$0xf]
      %v1921 = vld [vmem:[%s1906 + $0x38] sm:$0xf]
      %v1922 = vld [vmem:[%s1906 + $0x3c] sm:$0xf]
      %v1955 = vunpack.c.l.b16 %v1874
      %v1956 = vunpack.c.l.b16 %v1875
      %v1957 = vunpack.c.l.b16 %v1876
      %v1958 = vunpack.c.l.b16 %v1877
      %v1959 = vunpack.c.l.b16 %v1878
      %v1960 = vunpack.c.l.b16 %v1879
      %v1961 = vunpack.c.l.b16 %v1880
      %v1962 = vunpack.c.l.b16 %v1881
      %v1963 = vunpack.c.l.b16 %v1882
      %v1964 = vunpack.c.l.b16 %v1883
      %v1965 = vunpack.c.l.b16 %v1884
      %v1966 = vunpack.c.l.b16 %v1885
      %v1967 = vunpack.c.l.b16 %v1886
      %v1968 = vunpack.c.l.b16 %v1887
      %v1969 = vunpack.c.l.b16 %v1888
      %v1970 = vunpack.c.l.b16 %v1889
      %v1971 = vunpack.c.l.b16 %v1890
      %v1972 = vunpack.c.l.b16 %v1891
      %v1973 = vunpack.c.l.b16 %v1892
      %v1974 = vunpack.c.l.b16 %v1893
      %v1975 = vunpack.c.l.b16 %v1894
      %v1976 = vunpack.c.l.b16 %v1895
      %v1977 = vunpack.c.l.b16 %v1896
      %v1978 = vunpack.c.l.b16 %v1897
      %v1979 = vunpack.c.l.b16 %v1898
      %v1980 = vunpack.c.l.b16 %v1899
      %v1981 = vunpack.c.l.b16 %v1900
      %v1982 = vunpack.c.l.b16 %v1901
      %v1983 = vunpack.c.l.b16 %v1902
      %v1984 = vunpack.c.l.b16 %v1903
      %v1985 = vunpack.c.l.b16 %v1904
      %v1986 = vunpack.c.l.b16 %v1905
      %v1987 = vpack.c.b16 %v1956, %v1955
      %v1988 = vpack.c.b16 %v1958, %v1957
      %v1989 = vpack.c.b16 %v1960, %v1959
      %v1990 = vpack.c.b16 %v1962, %v1961
      %v1991 = vpack.c.b16 %v1964, %v1963
      %v1992 = vpack.c.b16 %v1966, %v1965
      %v1993 = vpack.c.b16 %v1968, %v1967
      %v1994 = vpack.c.b16 %v1970, %v1969
      %v1995 = vpack.c.b16 %v1972, %v1971
      %v1996 = vpack.c.b16 %v1974, %v1973
      %v1997 = vpack.c.b16 %v1976, %v1975
      %v1998 = vpack.c.b16 %v1978, %v1977
      %v1999 = vpack.c.b16 %v1980, %v1979
      %v2000 = vpack.c.b16 %v1982, %v1981
      %v2001 = vpack.c.b16 %v1984, %v1983
      %v2002 = vpack.c.b16 %v1986, %v1985
      %v2035 = vunpack.c.l.b16 %v1907
      %v2036 = vunpack.c.l.b16 %v1908
      %v2037 = vunpack.c.l.b16 %v1909
      %v2038 = vunpack.c.l.b16 %v1910
      %v2039 = vunpack.c.l.b16 %v1911
      %v2040 = vunpack.c.l.b16 %v1912
      %v2041 = vunpack.c.l.b16 %v1913
      %v2042 = vunpack.c.l.b16 %v1914
      %v2043 = vunpack.c.l.b16 %v1915
      %v2044 = vunpack.c.l.b16 %v1916
      %v2045 = vunpack.c.l.b16 %v1917
      %v2046 = vunpack.c.l.b16 %v1918
      %v2047 = vunpack.c.l.b16 %v1919
      %v2048 = vunpack.c.l.b16 %v1920
      %v2049 = vunpack.c.l.b16 %v1921
      %v2050 = vunpack.c.l.b16 %v1922
      %v2051 = vpack.c.b16 %v2036, %v2035
      %v2052 = vpack.c.b16 %v2038, %v2037
      %v2053 = vpack.c.b16 %v2040, %v2039
      %v2054 = vpack.c.b16 %v2042, %v2041
      %v2055 = vpack.c.b16 %v2044, %v2043
      %v2056 = vpack.c.b16 %v2046, %v2045
      %v2057 = vpack.c.b16 %v2048, %v2047
      %v2058 = vpack.c.b16 %v2050, %v2049
      %2067 = vmatprep.subr.bf16.mxu0 0
      %2068 = vmatpush1.bf16.msra.mxu0 %v2058
      %2069 = vmatprep.subr.bf16.mxu0 0
      %2070 = vmatpush1.bf16.msra.mxu0 %v2057
      %2071 = vmatprep.subr.bf16.mxu0 0
      %2072 = vmatpush1.bf16.msra.mxu0 %v2056
      %2073 = vmatprep.subr.bf16.mxu0 0
      %2074 = vmatpush1.bf16.msra.mxu0 %v2055
      %2075 = vmatprep.subr.bf16.mxu0 0
      %2076 = vmatpush1.bf16.msra.mxu0 %v2054
      %2077 = vmatprep.subr.bf16.mxu0 0
      %2078 = vmatpush1.bf16.msra.mxu0 %v2053
      %2079 = vmatprep.subr.bf16.mxu0 0
      %2080 = vmatpush1.bf16.msra.mxu0 %v2052
      %2081 = vmatprep.subr.bf16.mxu0 0
      %2082 = vmatpush1.bf16.msra.mxu0 %v2051
      %2083 = vmatprep.subr.bf16.mxu0 0
      %2084 = vmatpush2.bf16.msra.mxu0 0
      %2085 = vmatprep.subr.bf16.mxu0 0
      %2086 = vmatpush2.bf16.msra.mxu0 0
      %2087 = vmatprep.subr.bf16.mxu0 0
      %2088 = vmatpush2.bf16.msra.mxu0 0
      %2089 = vmatprep.subr.bf16.mxu0 0
      %2090 = vmatpush2.bf16.msra.mxu0 0
      %2091 = vmatprep.subr.bf16.mxu0 0
      %2092 = vmatpush2.bf16.msra.mxu0 0
      %2093 = vmatprep.subr.bf16.mxu0 0
      %2094 = vmatpush2.bf16.msra.mxu0 0
      %2095 = vmatprep.subr.bf16.mxu0 0
      %2096 = vmatpush2.bf16.msra.mxu0 0
      %2097 = vmatprep.subr.bf16.mxu0 0
      %2098 = vmatpush2.bf16.msra.mxu0 0
      %2099 = vmatprep.mubr.bf16.mxu0 0
      %2100 = vmatmul.mubr.bf16.gmra.mxu0 %v1987
      %v2101 = vpop.f32.mrf.mxu0
      %v2102 = vadd.f32 0.0, %v2101
      %v2103 = vpop.f32.mrf.mxu0
      %v2104 = vpop.f32.mrf.mxu0
      %v2105 = vadd.f32 0.0, %v2104
      %v2106 = vpop.f32.mrf.mxu0
      %2107 = vmatprep.mubr.bf16.mxu0 0
      %2108 = vmatmul.mubr.bf16.gmra.mxu0 %v1988
      %v2109 = vpop.f32.mrf.mxu0
      %v2110 = vadd.f32 0.0, %v2109
      %v2111 = vpop.f32.mrf.mxu0
      %v2112 = vpop.f32.mrf.mxu0
      %v2113 = vadd.f32 0.0, %v2112
      %v2114 = vpop.f32.mrf.mxu0
      %2115 = vmatprep.mubr.bf16.mxu0 0
      %2116 = vmatmul.mubr.bf16.gmra.mxu0 %v1989
      %v2117 = vpop.f32.mrf.mxu0
      %v2118 = vadd.f32 0.0, %v2117
      %v2119 = vpop.f32.mrf.mxu0
      %v2120 = vpop.f32.mrf.mxu0
      %v2121 = vadd.f32 0.0, %v2120
      %v2122 = vpop.f32.mrf.mxu0
      %2123 = vmatprep.mubr.bf16.mxu0 0
      %2124 = vmatmul.mubr.bf16.gmra.mxu0 %v1990
      %v2125 = vpop.f32.mrf.mxu0
      %v2126 = vadd.f32 0.0, %v2125
      %v2127 = vpop.f32.mrf.mxu0
      %v2128 = vpop.f32.mrf.mxu0
      %v2129 = vadd.f32 0.0, %v2128
      %v2130 = vpop.f32.mrf.mxu0
      %2131 = vmatprep.mubr.bf16.mxu0 0
      %2132 = vmatmul.mubr.bf16.gmra.mxu0 %v1991
      %v2133 = vpop.f32.mrf.mxu0
      %v2134 = vadd.f32 0.0, %v2133
      %v2135 = vpop.f32.mrf.mxu0
      %v2136 = vpop.f32.mrf.mxu0
      %v2137 = vadd.f32 0.0, %v2136
      %v2138 = vpop.f32.mrf.mxu0
      %2139 = vmatprep.mubr.bf16.mxu0 0
      %2140 = vmatmul.mubr.bf16.gmra.mxu0 %v1992
      %v2141 = vpop.f32.mrf.mxu0
      %v2142 = vadd.f32 0.0, %v2141
      %v2143 = vpop.f32.mrf.mxu0
      %v2144 = vpop.f32.mrf.mxu0
      %v2145 = vadd.f32 0.0, %v2144
      %v2146 = vpop.f32.mrf.mxu0
      %2147 = vmatprep.mubr.bf16.mxu0 0
      %2148 = vmatmul.mubr.bf16.gmra.mxu0 %v1993
      %v2149 = vpop.f32.mrf.mxu0
      %v2150 = vadd.f32 0.0, %v2149
      %v2151 = vpop.f32.mrf.mxu0
      %v2152 = vpop.f32.mrf.mxu0
      %v2153 = vadd.f32 0.0, %v2152
      %v2154 = vpop.f32.mrf.mxu0
      %2155 = vmatprep.mubr.bf16.mxu0 0
      %2156 = vmatmul.mubr.bf16.gmra.mxu0 %v1994
      %v2157 = vpop.f32.mrf.mxu0
      %v2158 = vadd.f32 0.0, %v2157
      %v2159 = vpop.f32.mrf.mxu0
      %v2160 = vpop.f32.mrf.mxu0
      %v2161 = vadd.f32 0.0, %v2160
      %v2162 = vpop.f32.mrf.mxu0
      %2163 = vmatprep.mubr.bf16.mxu0 0
      %2164 = vmatmul.mubr.bf16.gmra.mxu0 %v1995
      %v2165 = vpop.f32.mrf.mxu0
      %v2166 = vadd.f32 0.0, %v2165
      %v2167 = vpop.f32.mrf.mxu0
      %v2168 = vpop.f32.mrf.mxu0
      %v2169 = vadd.f32 0.0, %v2168
      %v2170 = vpop.f32.mrf.mxu0
      %2171 = vmatprep.mubr.bf16.mxu0 0
      %2172 = vmatmul.mubr.bf16.gmra.mxu0 %v1996
      %v2173 = vpop.f32.mrf.mxu0
      %v2174 = vadd.f32 0.0, %v2173
      %v2175 = vpop.f32.mrf.mxu0
      %v2176 = vpop.f32.mrf.mxu0
      %v2177 = vadd.f32 0.0, %v2176
      %v2178 = vpop.f32.mrf.mxu0
      %2179 = vmatprep.mubr.bf16.mxu0 0
      %2180 = vmatmul.mubr.bf16.gmra.mxu0 %v1997
      %v2181 = vpop.f32.mrf.mxu0
      %v2182 = vadd.f32 0.0, %v2181
      %v2183 = vpop.f32.mrf.mxu0
      %v2184 = vpop.f32.mrf.mxu0
      %v2185 = vadd.f32 0.0, %v2184
      %v2186 = vpop.f32.mrf.mxu0
      %2187 = vmatprep.mubr.bf16.mxu0 0
      %2188 = vmatmul.mubr.bf16.gmra.mxu0 %v1998
      %v2189 = vpop.f32.mrf.mxu0
      %v2190 = vadd.f32 0.0, %v2189
      %v2191 = vpop.f32.mrf.mxu0
      %v2192 = vpop.f32.mrf.mxu0
      %v2193 = vadd.f32 0.0, %v2192
      %v2194 = vpop.f32.mrf.mxu0
      %2195 = vmatprep.mubr.bf16.mxu0 0
      %2196 = vmatmul.mubr.bf16.gmra.mxu0 %v1999
      %v2197 = vpop.f32.mrf.mxu0
      %v2198 = vadd.f32 0.0, %v2197
      %v2199 = vpop.f32.mrf.mxu0
      %v2200 = vpop.f32.mrf.mxu0
      %v2201 = vadd.f32 0.0, %v2200
      %v2202 = vpop.f32.mrf.mxu0
      %2203 = vmatprep.mubr.bf16.mxu0 0
      %2204 = vmatmul.mubr.bf16.gmra.mxu0 %v2000
      %v2205 = vpop.f32.mrf.mxu0
      %v2206 = vadd.f32 0.0, %v2205
      %v2207 = vpop.f32.mrf.mxu0
      %v2208 = vpop.f32.mrf.mxu0
      %v2209 = vadd.f32 0.0, %v2208
      %v2210 = vpop.f32.mrf.mxu0
      %2211 = vmatprep.mubr.bf16.mxu0 0
      %2212 = vmatmul.mubr.bf16.gmra.mxu0 %v2001
      %v2213 = vpop.f32.mrf.mxu0
      %v2214 = vadd.f32 0.0, %v2213
      %v2215 = vpop.f32.mrf.mxu0
      %v2216 = vpop.f32.mrf.mxu0
      %v2217 = vadd.f32 0.0, %v2216
      %v2218 = vpop.f32.mrf.mxu0
      %2219 = vmatprep.mubr.bf16.mxu0 0
      %2220 = vmatmul.mubr.bf16.gmra.mxu0 %v2002
      %v2221 = vpop.f32.mrf.mxu0
      %v2222 = vadd.f32 0.0, %v2221
      %v2223 = vpop.f32.mrf.mxu0
      %v2224 = vpop.f32.mrf.mxu0
      %v2225 = vadd.f32 0.0, %v2224
      %v2226 = vpop.f32.mrf.mxu0
      %2227 = vdwg.mxu0
      %v2228 = vadd.f32 %v1841, %v2102
      %v2229 = vadd.f32 %v1842, %v2105
      %v2230 = vadd.f32 %v1843, %v2110
      %v2231 = vadd.f32 %v1844, %v2113
      %v2232 = vadd.f32 %v1845, %v2118
      %v2233 = vadd.f32 %v1846, %v2121
      %v2234 = vadd.f32 %v1847, %v2126
      %v2235 = vadd.f32 %v1848, %v2129
      %v2236 = vadd.f32 %v1849, %v2134
      %v2237 = vadd.f32 %v1850, %v2137
      %v2238 = vadd.f32 %v1851, %v2142
      %v2239 = vadd.f32 %v1852, %v2145
      %v2240 = vadd.f32 %v1853, %v2150
      %v2241 = vadd.f32 %v1854, %v2153
      %v2242 = vadd.f32 %v1855, %v2158
      %v2243 = vadd.f32 %v1856, %v2161
      %v2244 = vadd.f32 %v1857, %v2166
      %v2245 = vadd.f32 %v1858, %v2169
      %v2246 = vadd.f32 %v1859, %v2174
      %v2247 = vadd.f32 %v1860, %v2177
      %v2248 = vadd.f32 %v1861, %v2182
      %v2249 = vadd.f32 %v1862, %v2185
      %v2250 = vadd.f32 %v1863, %v2190
      %v2251 = vadd.f32 %v1864, %v2193
      %v2252 = vadd.f32 %v1865, %v2198
      %v2253 = vadd.f32 %v1866, %v2201
      %v2254 = vadd.f32 %v1867, %v2206
      %v2255 = vadd.f32 %v1868, %v2209
      %v2256 = vadd.f32 %v1869, %v2214
      %v2257 = vadd.f32 %v1870, %v2217
      %v2258 = vadd.f32 %v1871, %v2222
      %v2259 = vadd.f32 %v1872, %v2225
      %v2260 = vld [vmem:[%s1873] sm:$0xf]
      %v2261 = vld [vmem:[%s1873 + $0x4] sm:$0xf]
      %v2262 = vld [vmem:[%s1873 + $0x8] sm:$0x1]
      %v2263 = vld [vmem:[%s1873 + $0xc] sm:$0xf]
      %v2264 = vld [vmem:[%s1873 + $0x10] sm:$0xf]
      %v2265 = vld [vmem:[%s1873 + $0x14] sm:$0x1]
      %v2266 = vld [vmem:[%s1873 + $0x18] sm:$0xf]
      %v2267 = vld [vmem:[%s1873 + $0x1c] sm:$0xf]
      %v2268 = vld [vmem:[%s1873 + $0x20] sm:$0x1]
      %v2269 = vld [vmem:[%s1873 + $0x24] sm:$0xf]
      %v2270 = vld [vmem:[%s1873 + $0x28] sm:$0xf]
      %v2271 = vld [vmem:[%s1873 + $0x2c] sm:$0x1]
      %v2272 = vld [vmem:[%s1873 + $0x30] sm:$0xf]
      %v2273 = vld [vmem:[%s1873 + $0x34] sm:$0xf]
      %v2274 = vld [vmem:[%s1873 + $0x38] sm:$0x1]
      %v2275 = vld [vmem:[%s1873 + $0x3c] sm:$0xf]
      %v2276 = vld [vmem:[%s1873 + $0x40] sm:$0xf]
      %v2277 = vld [vmem:[%s1873 + $0x44] sm:$0x1]
      %v2278 = vld [vmem:[%s1873 + $0x48] sm:$0xf]
      %v2279 = vld [vmem:[%s1873 + $0x4c] sm:$0xf]
      %v2280 = vld [vmem:[%s1873 + $0x50] sm:$0x1]
      %v2281 = vld [vmem:[%s1873 + $0x54] sm:$0xf]
      %v2282 = vld [vmem:[%s1873 + $0x58] sm:$0xf]
      %v2283 = vld [vmem:[%s1873 + $0x5c] sm:$0x1]
      %v2284 = vld [vmem:[%s1873 + $0x60] sm:$0xf]
      %v2285 = vld [vmem:[%s1873 + $0x64] sm:$0xf]
      %v2286 = vld [vmem:[%s1873 + $0x68] sm:$0x1]
      %v2287 = vld [vmem:[%s1873 + $0x6c] sm:$0xf]
      %v2288 = vld [vmem:[%s1873 + $0x70] sm:$0xf]
      %v2289 = vld [vmem:[%s1873 + $0x74] sm:$0x1]
      %v2290 = vld [vmem:[%s1873 + $0x78] sm:$0xf]
      %v2291 = vld [vmem:[%s1873 + $0x7c] sm:$0xf]
      %v2292 = vld [vmem:[%s1873 + $0x80] sm:$0x1]
      %v2293 = vld [vmem:[%s1873 + $0x84] sm:$0xf]
      %v2294 = vld [vmem:[%s1873 + $0x88] sm:$0xf]
      %v2295 = vld [vmem:[%s1873 + $0x8c] sm:$0x1]
      %v2296 = vld [vmem:[%s1873 + $0x90] sm:$0xf]
      %v2297 = vld [vmem:[%s1873 + $0x94] sm:$0xf]
      %v2298 = vld [vmem:[%s1873 + $0x98] sm:$0x1]
      %v2299 = vld [vmem:[%s1873 + $0x9c] sm:$0xf]
      %v2300 = vld [vmem:[%s1873 + $0xa0] sm:$0xf]
      %v2301 = vld [vmem:[%s1873 + $0xa4] sm:$0x1]
      %v2302 = vld [vmem:[%s1873 + $0xa8] sm:$0xf]
      %v2303 = vld [vmem:[%s1873 + $0xac] sm:$0xf]
      %v2304 = vld [vmem:[%s1873 + $0xb0] sm:$0x1]
      %v2305 = vld [vmem:[%s1873 + $0xb4] sm:$0xf]
      %v2306 = vld [vmem:[%s1873 + $0xb8] sm:$0xf]
      %v2307 = vld [vmem:[%s1873 + $0xbc] sm:$0x1]
      %v2309 = vshrl.u32 %v2260, 16
      %v2311 = vrot.slane %v2309, 4
      %v2312 = vshll.u32 %v2260, 16
      %v2314 = vrot.slane %v2312, 5
      %v2315 = vor.u32 %v2311, %v2314
      %v2316 = vrot.slane %v2315, 4
      %v2318 = vshll.u32 %v2261, 16
      %v2320 = vrot.slane %v2318, 5
      %v2321 = vsel %vm665, %v2316, %v2320
      %v2322 = vshrl.u32 %v2261, 16
      %v2324 = vrot.slane %v2322, 4
      %v2325 = vor.u32 %v2324, %v2320
      %v2326 = vrot.slane %v2325, 4
      %v2328 = vshll.u32 %v2262, 16
      %v2330 = vrot.slane %v2328, 5
      %v2331 = vsel %vm665, %v2326, %v2330
      %v2333 = vshrl.u32 %v2263, 16
      %v2335 = vrot.slane %v2333, 4
      %v2336 = vshll.u32 %v2263, 16
      %v2338 = vrot.slane %v2336, 5
      %v2339 = vor.u32 %v2335, %v2338
      %v2340 = vrot.slane %v2339, 4
      %v2342 = vshll.u32 %v2264, 16
      %v2344 = vrot.slane %v2342, 5
      %v2345 = vsel %vm665, %v2340, %v2344
      %v2346 = vshrl.u32 %v2264, 16
      %v2348 = vrot.slane %v2346, 4
      %v2349 = vor.u32 %v2348, %v2344
      %v2350 = vrot.slane %v2349, 4
      %v2352 = vshll.u32 %v2265, 16
      %v2354 = vrot.slane %v2352, 5
      %v2355 = vsel %vm665, %v2350, %v2354
      %v2357 = vshrl.u32 %v2266, 16
      %v2359 = vrot.slane %v2357, 4
      %v2360 = vshll.u32 %v2266, 16
      %v2362 = vrot.slane %v2360, 5
      %v2363 = vor.u32 %v2359, %v2362
      %v2364 = vrot.slane %v2363, 4
      %v2366 = vshll.u32 %v2267, 16
      %v2368 = vrot.slane %v2366, 5
      %v2369 = vsel %vm665, %v2364, %v2368
      %v2370 = vshrl.u32 %v2267, 16
      %v2372 = vrot.slane %v2370, 4
      %v2373 = vor.u32 %v2372, %v2368
      %v2374 = vrot.slane %v2373, 4
      %v2376 = vshll.u32 %v2268, 16
      %v2378 = vrot.slane %v2376, 5
      %v2379 = vsel %vm665, %v2374, %v2378
      %v2381 = vshrl.u32 %v2269, 16
      %v2383 = vrot.slane %v2381, 4
      %v2384 = vshll.u32 %v2269, 16
      %v2386 = vrot.slane %v2384, 5
      %v2387 = vor.u32 %v2383, %v2386
      %v2388 = vrot.slane %v2387, 4
      %v2390 = vshll.u32 %v2270, 16
      %v2392 = vrot.slane %v2390, 5
      %v2393 = vsel %vm665, %v2388, %v2392
      %v2394 = vshrl.u32 %v2270, 16
      %v2396 = vrot.slane %v2394, 4
      %v2397 = vor.u32 %v2396, %v2392
      %v2398 = vrot.slane %v2397, 4
      %v2400 = vshll.u32 %v2271, 16
      %v2402 = vrot.slane %v2400, 5
      %v2403 = vsel %vm665, %v2398, %v2402
      %v2405 = vshrl.u32 %v2272, 16
      %v2407 = vrot.slane %v2405, 4
      %v2408 = vshll.u32 %v2272, 16
      %v2410 = vrot.slane %v2408, 5
      %v2411 = vor.u32 %v2407, %v2410
      %v2412 = vrot.slane %v2411, 4
      %v2414 = vshll.u32 %v2273, 16
      %v2416 = vrot.slane %v2414, 5
      %v2417 = vsel %vm665, %v2412, %v2416
      %v2418 = vshrl.u32 %v2273, 16
      %v2420 = vrot.slane %v2418, 4
      %v2421 = vor.u32 %v2420, %v2416
      %v2422 = vrot.slane %v2421, 4
      %v2424 = vshll.u32 %v2274, 16
      %v2426 = vrot.slane %v2424, 5
      %v2427 = vsel %vm665, %v2422, %v2426
      %v2429 = vshrl.u32 %v2275, 16
      %v2431 = vrot.slane %v2429, 4
      %v2432 = vshll.u32 %v2275, 16
      %v2434 = vrot.slane %v2432, 5
      %v2435 = vor.u32 %v2431, %v2434
      %v2436 = vrot.slane %v2435, 4
      %v2438 = vshll.u32 %v2276, 16
      %v2440 = vrot.slane %v2438, 5
      %v2441 = vsel %vm665, %v2436, %v2440
      %v2442 = vshrl.u32 %v2276, 16
      %v2444 = vrot.slane %v2442, 4
      %v2445 = vor.u32 %v2444, %v2440
      %v2446 = vrot.slane %v2445, 4
      %v2448 = vshll.u32 %v2277, 16
      %v2450 = vrot.slane %v2448, 5
      %v2451 = vsel %vm665, %v2446, %v2450
      %v2453 = vshrl.u32 %v2278, 16
      %v2455 = vrot.slane %v2453, 4
      %v2456 = vshll.u32 %v2278, 16
      %v2458 = vrot.slane %v2456, 5
      %v2459 = vor.u32 %v2455, %v2458
      %v2460 = vrot.slane %v2459, 4
      %v2462 = vshll.u32 %v2279, 16
      %v2464 = vrot.slane %v2462, 5
      %v2465 = vsel %vm665, %v2460, %v2464
      %v2466 = vshrl.u32 %v2279, 16
      %v2468 = vrot.slane %v2466, 4
      %v2469 = vor.u32 %v2468, %v2464
      %v2470 = vrot.slane %v2469, 4
      %v2472 = vshll.u32 %v2280, 16
      %v2474 = vrot.slane %v2472, 5
      %v2475 = vsel %vm665, %v2470, %v2474
      %v2477 = vshrl.u32 %v2281, 16
      %v2479 = vrot.slane %v2477, 4
      %v2480 = vshll.u32 %v2281, 16
      %v2482 = vrot.slane %v2480, 5
      %v2483 = vor.u32 %v2479, %v2482
      %v2484 = vrot.slane %v2483, 4
      %v2486 = vshll.u32 %v2282, 16
      %v2488 = vrot.slane %v2486, 5
      %v2489 = vsel %vm665, %v2484, %v2488
      %v2490 = vshrl.u32 %v2282, 16
      %v2492 = vrot.slane %v2490, 4
      %v2493 = vor.u32 %v2492, %v2488
      %v2494 = vrot.slane %v2493, 4
      %v2496 = vshll.u32 %v2283, 16
      %v2498 = vrot.slane %v2496, 5
      %v2499 = vsel %vm665, %v2494, %v2498
      %v2501 = vshrl.u32 %v2284, 16
      %v2503 = vrot.slane %v2501, 4
      %v2504 = vshll.u32 %v2284, 16
      %v2506 = vrot.slane %v2504, 5
      %v2507 = vor.u32 %v2503, %v2506
      %v2508 = vrot.slane %v2507, 4
      %v2510 = vshll.u32 %v2285, 16
      %v2512 = vrot.slane %v2510, 5
      %v2513 = vsel %vm665, %v2508, %v2512
      %v2514 = vshrl.u32 %v2285, 16
      %v2516 = vrot.slane %v2514, 4
      %v2517 = vor.u32 %v2516, %v2512
      %v2518 = vrot.slane %v2517, 4
      %v2520 = vshll.u32 %v2286, 16
      %v2522 = vrot.slane %v2520, 5
      %v2523 = vsel %vm665, %v2518, %v2522
      %v2525 = vshrl.u32 %v2287, 16
      %v2527 = vrot.slane %v2525, 4
      %v2528 = vshll.u32 %v2287, 16
      %v2530 = vrot.slane %v2528, 5
      %v2531 = vor.u32 %v2527, %v2530
      %v2532 = vrot.slane %v2531, 4
      %v2534 = vshll.u32 %v2288, 16
      %v2536 = vrot.slane %v2534, 5
      %v2537 = vsel %vm665, %v2532, %v2536
      %v2538 = vshrl.u32 %v2288, 16
      %v2540 = vrot.slane %v2538, 4
      %v2541 = vor.u32 %v2540, %v2536
      %v2542 = vrot.slane %v2541, 4
      %v2544 = vshll.u32 %v2289, 16
      %v2546 = vrot.slane %v2544, 5
      %v2547 = vsel %vm665, %v2542, %v2546
      %v2549 = vshrl.u32 %v2290, 16
      %v2551 = vrot.slane %v2549, 4
      %v2552 = vshll.u32 %v2290, 16
      %v2554 = vrot.slane %v2552, 5
      %v2555 = vor.u32 %v2551, %v2554
      %v2556 = vrot.slane %v2555, 4
      %v2558 = vshll.u32 %v2291, 16
      %v2560 = vrot.slane %v2558, 5
      %v2561 = vsel %vm665, %v2556, %v2560
      %v2562 = vshrl.u32 %v2291, 16
      %v2564 = vrot.slane %v2562, 4
      %v2565 = vor.u32 %v2564, %v2560
      %v2566 = vrot.slane %v2565, 4
      %v2568 = vshll.u32 %v2292, 16
      %v2570 = vrot.slane %v2568, 5
      %v2571 = vsel %vm665, %v2566, %v2570
      %v2573 = vshrl.u32 %v2293, 16
      %v2575 = vrot.slane %v2573, 4
      %v2576 = vshll.u32 %v2293, 16
      %v2578 = vrot.slane %v2576, 5
      %v2579 = vor.u32 %v2575, %v2578
      %v2580 = vrot.slane %v2579, 4
      %v2582 = vshll.u32 %v2294, 16
      %v2584 = vrot.slane %v2582, 5
      %v2585 = vsel %vm665, %v2580, %v2584
      %v2586 = vshrl.u32 %v2294, 16
      %v2588 = vrot.slane %v2586, 4
      %v2589 = vor.u32 %v2588, %v2584
      %v2590 = vrot.slane %v2589, 4
      %v2592 = vshll.u32 %v2295, 16
      %v2594 = vrot.slane %v2592, 5
      %v2595 = vsel %vm665, %v2590, %v2594
      %v2597 = vshrl.u32 %v2296, 16
      %v2599 = vrot.slane %v2597, 4
      %v2600 = vshll.u32 %v2296, 16
      %v2602 = vrot.slane %v2600, 5
      %v2603 = vor.u32 %v2599, %v2602
      %v2604 = vrot.slane %v2603, 4
      %v2606 = vshll.u32 %v2297, 16
      %v2608 = vrot.slane %v2606, 5
      %v2609 = vsel %vm665, %v2604, %v2608
      %v2610 = vshrl.u32 %v2297, 16
      %v2612 = vrot.slane %v2610, 4
      %v2613 = vor.u32 %v2612, %v2608
      %v2614 = vrot.slane %v2613, 4
      %v2616 = vshll.u32 %v2298, 16
      %v2618 = vrot.slane %v2616, 5
      %v2619 = vsel %vm665, %v2614, %v2618
      %v2621 = vshrl.u32 %v2299, 16
      %v2623 = vrot.slane %v2621, 4
      %v2624 = vshll.u32 %v2299, 16
      %v2626 = vrot.slane %v2624, 5
      %v2627 = vor.u32 %v2623, %v2626
      %v2628 = vrot.slane %v2627, 4
      %v2630 = vshll.u32 %v2300, 16
      %v2632 = vrot.slane %v2630, 5
      %v2633 = vsel %vm665, %v2628, %v2632
      %v2634 = vshrl.u32 %v2300, 16
      %v2636 = vrot.slane %v2634, 4
      %v2637 = vor.u32 %v2636, %v2632
      %v2638 = vrot.slane %v2637, 4
      %v2640 = vshll.u32 %v2301, 16
      %v2642 = vrot.slane %v2640, 5
      %v2643 = vsel %vm665, %v2638, %v2642
      %v2645 = vshrl.u32 %v2302, 16
      %v2647 = vrot.slane %v2645, 4
      %v2648 = vshll.u32 %v2302, 16
      %v2650 = vrot.slane %v2648, 5
      %v2651 = vor.u32 %v2647, %v2650
      %v2652 = vrot.slane %v2651, 4
      %v2654 = vshll.u32 %v2303, 16
      %v2656 = vrot.slane %v2654, 5
      %v2657 = vsel %vm665, %v2652, %v2656
      %v2658 = vshrl.u32 %v2303, 16
      %v2660 = vrot.slane %v2658, 4
      %v2661 = vor.u32 %v2660, %v2656
      %v2662 = vrot.slane %v2661, 4
      %v2664 = vshll.u32 %v2304, 16
      %v2666 = vrot.slane %v2664, 5
      %v2667 = vsel %vm665, %v2662, %v2666
      %v2669 = vshrl.u32 %v2305, 16
      %v2671 = vrot.slane %v2669, 4
      %v2672 = vshll.u32 %v2305, 16
      %v2674 = vrot.slane %v2672, 5
      %v2675 = vor.u32 %v2671, %v2674
      %v2676 = vrot.slane %v2675, 4
      %v2678 = vshll.u32 %v2306, 16
      %v2680 = vrot.slane %v2678, 5
      %v2681 = vsel %vm665, %v2676, %v2680
      %v2682 = vshrl.u32 %v2306, 16
      %v2684 = vrot.slane %v2682, 4
      %v2685 = vor.u32 %v2684, %v2680
      %v2686 = vrot.slane %v2685, 4
      %v2688 = vshll.u32 %v2307, 16
      %v2690 = vrot.slane %v2688, 5
      %v2691 = vsel %vm665, %v2686, %v2690
      %s2692 = scalar_lea.vmem %s210, 256
      %v2693 = vld [vmem:[%s2692] sm:$0xf]
      %v2694 = vld [vmem:[%s2692 + $0x4] sm:$0xf]
      %v2695 = vld [vmem:[%s2692 + $0x8] sm:$0xf]
      %v2696 = vld [vmem:[%s2692 + $0xc] sm:$0xf]
      %v2697 = vld [vmem:[%s2692 + $0x10] sm:$0xf]
      %v2698 = vld [vmem:[%s2692 + $0x14] sm:$0xf]
      %v2699 = vld [vmem:[%s2692 + $0x18] sm:$0xf]
      %v2700 = vld [vmem:[%s2692 + $0x1c] sm:$0xf]
      %v2701 = vld [vmem:[%s2692 + $0x20] sm:$0xf]
      %v2702 = vld [vmem:[%s2692 + $0x24] sm:$0xf]
      %v2703 = vld [vmem:[%s2692 + $0x28] sm:$0xf]
      %v2704 = vld [vmem:[%s2692 + $0x2c] sm:$0xf]
      %v2705 = vld [vmem:[%s2692 + $0x30] sm:$0xf]
      %v2706 = vld [vmem:[%s2692 + $0x34] sm:$0xf]
      %v2707 = vld [vmem:[%s2692 + $0x38] sm:$0xf]
      %v2708 = vld [vmem:[%s2692 + $0x3c] sm:$0xf]
      %v2709 = vunpack.c.l.b16 %v2321
      %v2710 = vunpack.c.l.b16 %v2331
      %v2711 = vunpack.c.l.b16 %v2345
      %v2712 = vunpack.c.l.b16 %v2355
      %v2713 = vunpack.c.l.b16 %v2369
      %v2714 = vunpack.c.l.b16 %v2379
      %v2715 = vunpack.c.l.b16 %v2393
      %v2716 = vunpack.c.l.b16 %v2403
      %v2717 = vunpack.c.l.b16 %v2417
      %v2718 = vunpack.c.l.b16 %v2427
      %v2719 = vunpack.c.l.b16 %v2441
      %v2720 = vunpack.c.l.b16 %v2451
      %v2721 = vunpack.c.l.b16 %v2465
      %v2722 = vunpack.c.l.b16 %v2475
      %v2723 = vunpack.c.l.b16 %v2489
      %v2724 = vunpack.c.l.b16 %v2499
      %v2725 = vunpack.c.l.b16 %v2513
      %v2726 = vunpack.c.l.b16 %v2523
      %v2727 = vunpack.c.l.b16 %v2537
      %v2728 = vunpack.c.l.b16 %v2547
      %v2729 = vunpack.c.l.b16 %v2561
      %v2730 = vunpack.c.l.b16 %v2571
      %v2731 = vunpack.c.l.b16 %v2585
      %v2732 = vunpack.c.l.b16 %v2595
      %v2733 = vunpack.c.l.b16 %v2609
      %v2734 = vunpack.c.l.b16 %v2619
      %v2735 = vunpack.c.l.b16 %v2633
      %v2736 = vunpack.c.l.b16 %v2643
      %v2737 = vunpack.c.l.b16 %v2657
      %v2738 = vunpack.c.l.b16 %v2667
      %v2739 = vunpack.c.l.b16 %v2681
      %v2740 = vunpack.c.l.b16 %v2691
      %v2741 = vpack.c.b16 %v2710, %v2709
      %v2742 = vpack.c.b16 %v2712, %v2711
      %v2743 = vpack.c.b16 %v2714, %v2713
      %v2744 = vpack.c.b16 %v2716, %v2715
      %v2745 = vpack.c.b16 %v2718, %v2717
      %v2746 = vpack.c.b16 %v2720, %v2719
      %v2747 = vpack.c.b16 %v2722, %v2721
      %v2748 = vpack.c.b16 %v2724, %v2723
      %v2749 = vpack.c.b16 %v2726, %v2725
      %v2750 = vpack.c.b16 %v2728, %v2727
      %v2751 = vpack.c.b16 %v2730, %v2729
      %v2752 = vpack.c.b16 %v2732, %v2731
      %v2753 = vpack.c.b16 %v2734, %v2733
      %v2754 = vpack.c.b16 %v2736, %v2735
      %v2755 = vpack.c.b16 %v2738, %v2737
      %v2756 = vpack.c.b16 %v2740, %v2739
      %v2789 = vunpack.c.l.b16 %v2693
      %v2790 = vunpack.c.l.b16 %v2694
      %v2791 = vunpack.c.l.b16 %v2695
      %v2792 = vunpack.c.l.b16 %v2696
      %v2793 = vunpack.c.l.b16 %v2697
      %v2794 = vunpack.c.l.b16 %v2698
      %v2795 = vunpack.c.l.b16 %v2699
      %v2796 = vunpack.c.l.b16 %v2700
      %v2797 = vunpack.c.l.b16 %v2701
      %v2798 = vunpack.c.l.b16 %v2702
      %v2799 = vunpack.c.l.b16 %v2703
      %v2800 = vunpack.c.l.b16 %v2704
      %v2801 = vunpack.c.l.b16 %v2705
      %v2802 = vunpack.c.l.b16 %v2706
      %v2803 = vunpack.c.l.b16 %v2707
      %v2804 = vunpack.c.l.b16 %v2708
      %v2805 = vpack.c.b16 %v2790, %v2789
      %v2806 = vpack.c.b16 %v2792, %v2791
      %v2807 = vpack.c.b16 %v2794, %v2793
      %v2808 = vpack.c.b16 %v2796, %v2795
      %v2809 = vpack.c.b16 %v2798, %v2797
      %v2810 = vpack.c.b16 %v2800, %v2799
      %v2811 = vpack.c.b16 %v2802, %v2801
      %v2812 = vpack.c.b16 %v2804, %v2803
      %2821 = vmatprep.subr.bf16.mxu0 0
      %2822 = vmatpush1.bf16.msra.mxu0 %v2812
      %2823 = vmatprep.subr.bf16.mxu0 0
      %2824 = vmatpush1.bf16.msra.mxu0 %v2811
      %2825 = vmatprep.subr.bf16.mxu0 0
      %2826 = vmatpush1.bf16.msra.mxu0 %v2810
      %2827 = vmatprep.subr.bf16.mxu0 0
      %2828 = vmatpush1.bf16.msra.mxu0 %v2809
      %2829 = vmatprep.subr.bf16.mxu0 0
      %2830 = vmatpush1.bf16.msra.mxu0 %v2808
      %2831 = vmatprep.subr.bf16.mxu0 0
      %2832 = vmatpush1.bf16.msra.mxu0 %v2807
      %2833 = vmatprep.subr.bf16.mxu0 0
      %2834 = vmatpush1.bf16.msra.mxu0 %v2806
      %2835 = vmatprep.subr.bf16.mxu0 0
      %2836 = vmatpush1.bf16.msra.mxu0 %v2805
      %2837 = vmatprep.subr.bf16.mxu0 0
      %2838 = vmatpush2.bf16.msra.mxu0 0
      %2839 = vmatprep.subr.bf16.mxu0 0
      %2840 = vmatpush2.bf16.msra.mxu0 0
      %2841 = vmatprep.subr.bf16.mxu0 0
      %2842 = vmatpush2.bf16.msra.mxu0 0
      %2843 = vmatprep.subr.bf16.mxu0 0
      %2844 = vmatpush2.bf16.msra.mxu0 0
      %2845 = vmatprep.subr.bf16.mxu0 0
      %2846 = vmatpush2.bf16.msra.mxu0 0
      %2847 = vmatprep.subr.bf16.mxu0 0
      %2848 = vmatpush2.bf16.msra.mxu0 0
      %2849 = vmatprep.subr.bf16.mxu0 0
      %2850 = vmatpush2.bf16.msra.mxu0 0
      %2851 = vmatprep.subr.bf16.mxu0 0
      %2852 = vmatpush2.bf16.msra.mxu0 0
      %2853 = vmatprep.mubr.bf16.mxu0 0
      %2854 = vmatmul.mubr.bf16.gmra.mxu0 %v2741
      %v2855 = vpop.f32.mrf.mxu0
      %v2856 = vadd.f32 0.0, %v2855
      %v2857 = vpop.f32.mrf.mxu0
      %v2858 = vpop.f32.mrf.mxu0
      %v2859 = vadd.f32 0.0, %v2858
      %v2860 = vpop.f32.mrf.mxu0
      %2861 = vmatprep.mubr.bf16.mxu0 0
      %2862 = vmatmul.mubr.bf16.gmra.mxu0 %v2742
      %v2863 = vpop.f32.mrf.mxu0
      %v2864 = vadd.f32 0.0, %v2863
      %v2865 = vpop.f32.mrf.mxu0
      %v2866 = vpop.f32.mrf.mxu0
      %v2867 = vadd.f32 0.0, %v2866
      %v2868 = vpop.f32.mrf.mxu0
      %2869 = vmatprep.mubr.bf16.mxu0 0
      %2870 = vmatmul.mubr.bf16.gmra.mxu0 %v2743
      %v2871 = vpop.f32.mrf.mxu0
      %v2872 = vadd.f32 0.0, %v2871
      %v2873 = vpop.f32.mrf.mxu0
      %v2874 = vpop.f32.mrf.mxu0
      %v2875 = vadd.f32 0.0, %v2874
      %v2876 = vpop.f32.mrf.mxu0
      %2877 = vmatprep.mubr.bf16.mxu0 0
      %2878 = vmatmul.mubr.bf16.gmra.mxu0 %v2744
      %v2879 = vpop.f32.mrf.mxu0
      %v2880 = vadd.f32 0.0, %v2879
      %v2881 = vpop.f32.mrf.mxu0
      %v2882 = vpop.f32.mrf.mxu0
      %v2883 = vadd.f32 0.0, %v2882
      %v2884 = vpop.f32.mrf.mxu0
      %2885 = vmatprep.mubr.bf16.mxu0 0
      %2886 = vmatmul.mubr.bf16.gmra.mxu0 %v2745
      %v2887 = vpop.f32.mrf.mxu0
      %v2888 = vadd.f32 0.0, %v2887
      %v2889 = vpop.f32.mrf.mxu0
      %v2890 = vpop.f32.mrf.mxu0
      %v2891 = vadd.f32 0.0, %v2890
      %v2892 = vpop.f32.mrf.mxu0
      %2893 = vmatprep.mubr.bf16.mxu0 0
      %2894 = vmatmul.mubr.bf16.gmra.mxu0 %v2746
      %v2895 = vpop.f32.mrf.mxu0
      %v2896 = vadd.f32 0.0, %v2895
      %v2897 = vpop.f32.mrf.mxu0
      %v2898 = vpop.f32.mrf.mxu0
      %v2899 = vadd.f32 0.0, %v2898
      %v2900 = vpop.f32.mrf.mxu0
      %2901 = vmatprep.mubr.bf16.mxu0 0
      %2902 = vmatmul.mubr.bf16.gmra.mxu0 %v2747
      %v2903 = vpop.f32.mrf.mxu0
      %v2904 = vadd.f32 0.0, %v2903
      %v2905 = vpop.f32.mrf.mxu0
      %v2906 = vpop.f32.mrf.mxu0
      %v2907 = vadd.f32 0.0, %v2906
      %v2908 = vpop.f32.mrf.mxu0
      %2909 = vmatprep.mubr.bf16.mxu0 0
      %2910 = vmatmul.mubr.bf16.gmra.mxu0 %v2748
      %v2911 = vpop.f32.mrf.mxu0
      %v2912 = vadd.f32 0.0, %v2911
      %v2913 = vpop.f32.mrf.mxu0
      %v2914 = vpop.f32.mrf.mxu0
      %v2915 = vadd.f32 0.0, %v2914
      %v2916 = vpop.f32.mrf.mxu0
      %2917 = vmatprep.mubr.bf16.mxu0 0
      %2918 = vmatmul.mubr.bf16.gmra.mxu0 %v2749
      %v2919 = vpop.f32.mrf.mxu0
      %v2920 = vadd.f32 0.0, %v2919
      %v2921 = vpop.f32.mrf.mxu0
      %v2922 = vpop.f32.mrf.mxu0
      %v2923 = vadd.f32 0.0, %v2922
      %v2924 = vpop.f32.mrf.mxu0
      %2925 = vmatprep.mubr.bf16.mxu0 0
      %2926 = vmatmul.mubr.bf16.gmra.mxu0 %v2750
      %v2927 = vpop.f32.mrf.mxu0
      %v2928 = vadd.f32 0.0, %v2927
      %v2929 = vpop.f32.mrf.mxu0
      %v2930 = vpop.f32.mrf.mxu0
      %v2931 = vadd.f32 0.0, %v2930
      %v2932 = vpop.f32.mrf.mxu0
      %2933 = vmatprep.mubr.bf16.mxu0 0
      %2934 = vmatmul.mubr.bf16.gmra.mxu0 %v2751
      %v2935 = vpop.f32.mrf.mxu0
      %v2936 = vadd.f32 0.0, %v2935
      %v2937 = vpop.f32.mrf.mxu0
      %v2938 = vpop.f32.mrf.mxu0
      %v2939 = vadd.f32 0.0, %v2938
      %v2940 = vpop.f32.mrf.mxu0
      %2941 = vmatprep.mubr.bf16.mxu0 0
      %2942 = vmatmul.mubr.bf16.gmra.mxu0 %v2752
      %v2943 = vpop.f32.mrf.mxu0
      %v2944 = vadd.f32 0.0, %v2943
      %v2945 = vpop.f32.mrf.mxu0
      %v2946 = vpop.f32.mrf.mxu0
      %v2947 = vadd.f32 0.0, %v2946
      %v2948 = vpop.f32.mrf.mxu0
      %2949 = vmatprep.mubr.bf16.mxu0 0
      %2950 = vmatmul.mubr.bf16.gmra.mxu0 %v2753
      %v2951 = vpop.f32.mrf.mxu0
      %v2952 = vadd.f32 0.0, %v2951
      %v2953 = vpop.f32.mrf.mxu0
      %v2954 = vpop.f32.mrf.mxu0
      %v2955 = vadd.f32 0.0, %v2954
      %v2956 = vpop.f32.mrf.mxu0
      %2957 = vmatprep.mubr.bf16.mxu0 0
      %2958 = vmatmul.mubr.bf16.gmra.mxu0 %v2754
      %v2959 = vpop.f32.mrf.mxu0
      %v2960 = vadd.f32 0.0, %v2959
      %v2961 = vpop.f32.mrf.mxu0
      %v2962 = vpop.f32.mrf.mxu0
      %v2963 = vadd.f32 0.0, %v2962
      %v2964 = vpop.f32.mrf.mxu0
      %2965 = vmatprep.mubr.bf16.mxu0 0
      %2966 = vmatmul.mubr.bf16.gmra.mxu0 %v2755
      %v2967 = vpop.f32.mrf.mxu0
      %v2968 = vadd.f32 0.0, %v2967
      %v2969 = vpop.f32.mrf.mxu0
      %v2970 = vpop.f32.mrf.mxu0
      %v2971 = vadd.f32 0.0, %v2970
      %v2972 = vpop.f32.mrf.mxu0
      %2973 = vmatprep.mubr.bf16.mxu0 0
      %2974 = vmatmul.mubr.bf16.gmra.mxu0 %v2756
      %v2975 = vpop.f32.mrf.mxu0
      %v2976 = vadd.f32 0.0, %v2975
      %v2977 = vpop.f32.mrf.mxu0
      %v2978 = vpop.f32.mrf.mxu0
      %v2979 = vadd.f32 0.0, %v2978
      %v2980 = vpop.f32.mrf.mxu0
      %2981 = vdwg.mxu0
      %v2982 = vadd.f32 %v2228, %v2856
      %v2983 = vadd.f32 %v2229, %v2859
      %v2984 = vadd.f32 %v2230, %v2864
      %v2985 = vadd.f32 %v2231, %v2867
      %v2986 = vadd.f32 %v2232, %v2872
      %v2987 = vadd.f32 %v2233, %v2875
      %v2988 = vadd.f32 %v2234, %v2880
      %v2989 = vadd.f32 %v2235, %v2883
      %v2990 = vadd.f32 %v2236, %v2888
      %v2991 = vadd.f32 %v2237, %v2891
      %v2992 = vadd.f32 %v2238, %v2896
      %v2993 = vadd.f32 %v2239, %v2899
      %v2994 = vadd.f32 %v2240, %v2904
      %v2995 = vadd.f32 %v2241, %v2907
      %v2996 = vadd.f32 %v2242, %v2912
      %v2997 = vadd.f32 %v2243, %v2915
      %v2998 = vadd.f32 %v2244, %v2920
      %v2999 = vadd.f32 %v2245, %v2923
      %v3000 = vadd.f32 %v2246, %v2928
      %v3001 = vadd.f32 %v2247, %v2931
      %v3002 = vadd.f32 %v2248, %v2936
      %v3003 = vadd.f32 %v2249, %v2939
      %v3004 = vadd.f32 %v2250, %v2944
      %v3005 = vadd.f32 %v2251, %v2947
      %v3006 = vadd.f32 %v2252, %v2952
      %v3007 = vadd.f32 %v2253, %v2955
      %v3008 = vadd.f32 %v2254, %v2960
      %v3009 = vadd.f32 %v2255, %v2963
      %v3010 = vadd.f32 %v2256, %v2968
      %v3011 = vadd.f32 %v2257, %v2971
      %v3012 = vadd.f32 %v2258, %v2976
      %v3013 = vadd.f32 %v2259, %v2979
      %v3014 = vld [vmem:[%s1873] sm:$0xe]
      %v3015 = vld [vmem:[%s1873 + $0xc] sm:$0xe]
      %v3016 = vld [vmem:[%s1873 + $0x18] sm:$0xe]
      %v3017 = vld [vmem:[%s1873 + $0x24] sm:$0xe]
      %v3018 = vld [vmem:[%s1873 + $0x30] sm:$0xe]
      %v3019 = vld [vmem:[%s1873 + $0x3c] sm:$0xe]
      %v3020 = vld [vmem:[%s1873 + $0x48] sm:$0xe]
      %v3021 = vld [vmem:[%s1873 + $0x54] sm:$0xe]
      %v3022 = vld [vmem:[%s1873 + $0x60] sm:$0xe]
      %v3023 = vld [vmem:[%s1873 + $0x6c] sm:$0xe]
      %v3024 = vld [vmem:[%s1873 + $0x78] sm:$0xe]
      %v3025 = vld [vmem:[%s1873 + $0x84] sm:$0xe]
      %v3026 = vld [vmem:[%s1873 + $0x90] sm:$0xe]
      %v3027 = vld [vmem:[%s1873 + $0x9c] sm:$0xe]
      %v3028 = vld [vmem:[%s1873 + $0xa8] sm:$0xe]
      %v3029 = vld [vmem:[%s1873 + $0xb4] sm:$0xe]
      %v3078 = vrot.slane %v3014, 5
      %v3079 = vrot.slane %v3078, 4
      %v3080 = vrot.slane %v2261, 5
      %v3081 = vsel %vm1438, %v3079, %v3080
      %v3082 = vrot.slane %v3080, 4
      %v3083 = vrot.slane %v2262, 5
      %v3084 = vsel %vm1438, %v3082, %v3083
      %v3085 = vrot.slane %v3015, 5
      %v3086 = vrot.slane %v3085, 4
      %v3087 = vrot.slane %v2264, 5
      %v3088 = vsel %vm1438, %v3086, %v3087
      %v3089 = vrot.slane %v3087, 4
      %v3090 = vrot.slane %v2265, 5
      %v3091 = vsel %vm1438, %v3089, %v3090
      %v3092 = vrot.slane %v3016, 5
      %v3093 = vrot.slane %v3092, 4
      %v3094 = vrot.slane %v2267, 5
      %v3095 = vsel %vm1438, %v3093, %v3094
      %v3096 = vrot.slane %v3094, 4
      %v3097 = vrot.slane %v2268, 5
      %v3098 = vsel %vm1438, %v3096, %v3097
      %v3099 = vrot.slane %v3017, 5
      %v3100 = vrot.slane %v3099, 4
      %v3101 = vrot.slane %v2270, 5
      %v3102 = vsel %vm1438, %v3100, %v3101
      %v3103 = vrot.slane %v3101, 4
      %v3104 = vrot.slane %v2271, 5
      %v3105 = vsel %vm1438, %v3103, %v3104
      %v3106 = vrot.slane %v3018, 5
      %v3107 = vrot.slane %v3106, 4
      %v3108 = vrot.slane %v2273, 5
      %v3109 = vsel %vm1438, %v3107, %v3108
      %v3110 = vrot.slane %v3108, 4
      %v3111 = vrot.slane %v2274, 5
      %v3112 = vsel %vm1438, %v3110, %v3111
      %v3113 = vrot.slane %v3019, 5
      %v3114 = vrot.slane %v3113, 4
      %v3115 = vrot.slane %v2276, 5
      %v3116 = vsel %vm1438, %v3114, %v3115
      %v3117 = vrot.slane %v3115, 4
      %v3118 = vrot.slane %v2277, 5
      %v3119 = vsel %vm1438, %v3117, %v3118
      %v3120 = vrot.slane %v3020, 5
      %v3121 = vrot.slane %v3120, 4
      %v3122 = vrot.slane %v2279, 5
      %v3123 = vsel %vm1438, %v3121, %v3122
      %v3124 = vrot.slane %v3122, 4
      %v3125 = vrot.slane %v2280, 5
      %v3126 = vsel %vm1438, %v3124, %v3125
      %v3127 = vrot.slane %v3021, 5
      %v3128 = vrot.slane %v3127, 4
      %v3129 = vrot.slane %v2282, 5
      %v3130 = vsel %vm1438, %v3128, %v3129
      %v3131 = vrot.slane %v3129, 4
      %v3132 = vrot.slane %v2283, 5
      %v3133 = vsel %vm1438, %v3131, %v3132
      %v3134 = vrot.slane %v3022, 5
      %v3135 = vrot.slane %v3134, 4
      %v3136 = vrot.slane %v2285, 5
      %v3137 = vsel %vm1438, %v3135, %v3136
      %v3138 = vrot.slane %v3136, 4
      %v3139 = vrot.slane %v2286, 5
      %v3140 = vsel %vm1438, %v3138, %v3139
      %v3141 = vrot.slane %v3023, 5
      %v3142 = vrot.slane %v3141, 4
      %v3143 = vrot.slane %v2288, 5
      %v3144 = vsel %vm1438, %v3142, %v3143
      %v3145 = vrot.slane %v3143, 4
      %v3146 = vrot.slane %v2289, 5
      %v3147 = vsel %vm1438, %v3145, %v3146
      %v3148 = vrot.slane %v3024, 5
      %v3149 = vrot.slane %v3148, 4
      %v3150 = vrot.slane %v2291, 5
      %v3151 = vsel %vm1438, %v3149, %v3150
      %v3152 = vrot.slane %v3150, 4
      %v3153 = vrot.slane %v2292, 5
      %v3154 = vsel %vm1438, %v3152, %v3153
      %v3155 = vrot.slane %v3025, 5
      %v3156 = vrot.slane %v3155, 4
      %v3157 = vrot.slane %v2294, 5
      %v3158 = vsel %vm1438, %v3156, %v3157
      %v3159 = vrot.slane %v3157, 4
      %v3160 = vrot.slane %v2295, 5
      %v3161 = vsel %vm1438, %v3159, %v3160
      %v3162 = vrot.slane %v3026, 5
      %v3163 = vrot.slane %v3162, 4
      %v3164 = vrot.slane %v2297, 5
      %v3165 = vsel %vm1438, %v3163, %v3164
      %v3166 = vrot.slane %v3164, 4
      %v3167 = vrot.slane %v2298, 5
      %v3168 = vsel %vm1438, %v3166, %v3167
      %v3169 = vrot.slane %v3027, 5
      %v3170 = vrot.slane %v3169, 4
      %v3171 = vrot.slane %v2300, 5
      %v3172 = vsel %vm1438, %v3170, %v3171
      %v3173 = vrot.slane %v3171, 4
      %v3174 = vrot.slane %v2301, 5
      %v3175 = vsel %vm1438, %v3173, %v3174
      %v3176 = vrot.slane %v3028, 5
      %v3177 = vrot.slane %v3176, 4
      %v3178 = vrot.slane %v2303, 5
      %v3179 = vsel %vm1438, %v3177, %v3178
      %v3180 = vrot.slane %v3178, 4
      %v3181 = vrot.slane %v2304, 5
      %v3182 = vsel %vm1438, %v3180, %v3181
      %v3183 = vrot.slane %v3029, 5
      %v3184 = vrot.slane %v3183, 4
      %v3185 = vrot.slane %v2306, 5
      %v3186 = vsel %vm1438, %v3184, %v3185
      %v3187 = vrot.slane %v3185, 4
      %v3188 = vrot.slane %v2307, 5
      %v3189 = vsel %vm1438, %v3187, %v3188
      %s3190 = scalar_lea.vmem %s210, 320
      %v3191 = vld [vmem:[%s3190] sm:$0xf]
      %v3192 = vld [vmem:[%s3190 + $0x4] sm:$0xf]
      %v3193 = vld [vmem:[%s3190 + $0x8] sm:$0xf]
      %v3194 = vld [vmem:[%s3190 + $0xc] sm:$0xf]
      %v3195 = vld [vmem:[%s3190 + $0x10] sm:$0xf]
      %v3196 = vld [vmem:[%s3190 + $0x14] sm:$0xf]
      %v3197 = vld [vmem:[%s3190 + $0x18] sm:$0xf]
      %v3198 = vld [vmem:[%s3190 + $0x1c] sm:$0xf]
      %v3199 = vld [vmem:[%s3190 + $0x20] sm:$0xf]
      %v3200 = vld [vmem:[%s3190 + $0x24] sm:$0xf]
      %v3201 = vld [vmem:[%s3190 + $0x28] sm:$0xf]
      %v3202 = vld [vmem:[%s3190 + $0x2c] sm:$0xf]
      %v3203 = vld [vmem:[%s3190 + $0x30] sm:$0xf]
      %v3204 = vld [vmem:[%s3190 + $0x34] sm:$0xf]
      %v3205 = vld [vmem:[%s3190 + $0x38] sm:$0xf]
      %v3206 = vld [vmem:[%s3190 + $0x3c] sm:$0xf]
      %v3207 = vunpack.c.l.b16 %v3081
      %v3208 = vunpack.c.l.b16 %v3084
      %v3209 = vunpack.c.l.b16 %v3088
      %v3210 = vunpack.c.l.b16 %v3091
      %v3211 = vunpack.c.l.b16 %v3095
      %v3212 = vunpack.c.l.b16 %v3098
      %v3213 = vunpack.c.l.b16 %v3102
      %v3214 = vunpack.c.l.b16 %v3105
      %v3215 = vunpack.c.l.b16 %v3109
      %v3216 = vunpack.c.l.b16 %v3112
      %v3217 = vunpack.c.l.b16 %v3116
      %v3218 = vunpack.c.l.b16 %v3119
      %v3219 = vunpack.c.l.b16 %v3123
      %v3220 = vunpack.c.l.b16 %v3126
      %v3221 = vunpack.c.l.b16 %v3130
      %v3222 = vunpack.c.l.b16 %v3133
      %v3223 = vunpack.c.l.b16 %v3137
      %v3224 = vunpack.c.l.b16 %v3140
      %v3225 = vunpack.c.l.b16 %v3144
      %v3226 = vunpack.c.l.b16 %v3147
      %v3227 = vunpack.c.l.b16 %v3151
      %v3228 = vunpack.c.l.b16 %v3154
      %v3229 = vunpack.c.l.b16 %v3158
      %v3230 = vunpack.c.l.b16 %v3161
      %v3231 = vunpack.c.l.b16 %v3165
      %v3232 = vunpack.c.l.b16 %v3168
      %v3233 = vunpack.c.l.b16 %v3172
      %v3234 = vunpack.c.l.b16 %v3175
      %v3235 = vunpack.c.l.b16 %v3179
      %v3236 = vunpack.c.l.b16 %v3182
      %v3237 = vunpack.c.l.b16 %v3186
      %v3238 = vunpack.c.l.b16 %v3189
      %v3239 = vpack.c.b16 %v3208, %v3207
      %v3240 = vpack.c.b16 %v3210, %v3209
      %v3241 = vpack.c.b16 %v3212, %v3211
      %v3242 = vpack.c.b16 %v3214, %v3213
      %v3243 = vpack.c.b16 %v3216, %v3215
      %v3244 = vpack.c.b16 %v3218, %v3217
      %v3245 = vpack.c.b16 %v3220, %v3219
      %v3246 = vpack.c.b16 %v3222, %v3221
      %v3247 = vpack.c.b16 %v3224, %v3223
      %v3248 = vpack.c.b16 %v3226, %v3225
      %v3249 = vpack.c.b16 %v3228, %v3227
      %v3250 = vpack.c.b16 %v3230, %v3229
      %v3251 = vpack.c.b16 %v3232, %v3231
      %v3252 = vpack.c.b16 %v3234, %v3233
      %v3253 = vpack.c.b16 %v3236, %v3235
      %v3254 = vpack.c.b16 %v3238, %v3237
      %v3287 = vunpack.c.l.b16 %v3191
      %v3288 = vunpack.c.l.b16 %v3192
      %v3289 = vunpack.c.l.b16 %v3193
      %v3290 = vunpack.c.l.b16 %v3194
      %v3291 = vunpack.c.l.b16 %v3195
      %v3292 = vunpack.c.l.b16 %v3196
      %v3293 = vunpack.c.l.b16 %v3197
      %v3294 = vunpack.c.l.b16 %v3198
      %v3295 = vunpack.c.l.b16 %v3199
      %v3296 = vunpack.c.l.b16 %v3200
      %v3297 = vunpack.c.l.b16 %v3201
      %v3298 = vunpack.c.l.b16 %v3202
      %v3299 = vunpack.c.l.b16 %v3203
      %v3300 = vunpack.c.l.b16 %v3204
      %v3301 = vunpack.c.l.b16 %v3205
      %v3302 = vunpack.c.l.b16 %v3206
      %v3303 = vpack.c.b16 %v3288, %v3287
      %v3304 = vpack.c.b16 %v3290, %v3289
      %v3305 = vpack.c.b16 %v3292, %v3291
      %v3306 = vpack.c.b16 %v3294, %v3293
      %v3307 = vpack.c.b16 %v3296, %v3295
      %v3308 = vpack.c.b16 %v3298, %v3297
      %v3309 = vpack.c.b16 %v3300, %v3299
      %v3310 = vpack.c.b16 %v3302, %v3301
      %3319 = vmatprep.subr.bf16.mxu0 0
      %3320 = vmatpush1.bf16.msra.mxu0 %v3310
      %3321 = vmatprep.subr.bf16.mxu0 0
      %3322 = vmatpush1.bf16.msra.mxu0 %v3309
      %3323 = vmatprep.subr.bf16.mxu0 0
      %3324 = vmatpush1.bf16.msra.mxu0 %v3308
      %3325 = vmatprep.subr.bf16.mxu0 0
      %3326 = vmatpush1.bf16.msra.mxu0 %v3307
      %3327 = vmatprep.subr.bf16.mxu0 0
      %3328 = vmatpush1.bf16.msra.mxu0 %v3306
      %3329 = vmatprep.subr.bf16.mxu0 0
      %3330 = vmatpush1.bf16.msra.mxu0 %v3305
      %3331 = vmatprep.subr.bf16.mxu0 0
      %3332 = vmatpush1.bf16.msra.mxu0 %v3304
      %3333 = vmatprep.subr.bf16.mxu0 0
      %3334 = vmatpush1.bf16.msra.mxu0 %v3303
      %3335 = vmatprep.subr.bf16.mxu0 0
      %3336 = vmatpush2.bf16.msra.mxu0 0
      %3337 = vmatprep.subr.bf16.mxu0 0
      %3338 = vmatpush2.bf16.msra.mxu0 0
      %3339 = vmatprep.subr.bf16.mxu0 0
      %3340 = vmatpush2.bf16.msra.mxu0 0
      %3341 = vmatprep.subr.bf16.mxu0 0
      %3342 = vmatpush2.bf16.msra.mxu0 0
      %3343 = vmatprep.subr.bf16.mxu0 0
      %3344 = vmatpush2.bf16.msra.mxu0 0
      %3345 = vmatprep.subr.bf16.mxu0 0
      %3346 = vmatpush2.bf16.msra.mxu0 0
      %3347 = vmatprep.subr.bf16.mxu0 0
      %3348 = vmatpush2.bf16.msra.mxu0 0
      %3349 = vmatprep.subr.bf16.mxu0 0
      %3350 = vmatpush2.bf16.msra.mxu0 0
      %3351 = vmatprep.mubr.bf16.mxu0 0
      %3352 = vmatmul.mubr.bf16.gmra.mxu0 %v3239
      %v3353 = vpop.f32.mrf.mxu0
      %v3354 = vadd.f32 0.0, %v3353
      %v3355 = vpop.f32.mrf.mxu0
      %v3356 = vpop.f32.mrf.mxu0
      %v3357 = vadd.f32 0.0, %v3356
      %v3358 = vpop.f32.mrf.mxu0
      %3359 = vmatprep.mubr.bf16.mxu0 0
      %3360 = vmatmul.mubr.bf16.gmra.mxu0 %v3240
      %v3361 = vpop.f32.mrf.mxu0
      %v3362 = vadd.f32 0.0, %v3361
      %v3363 = vpop.f32.mrf.mxu0
      %v3364 = vpop.f32.mrf.mxu0
      %v3365 = vadd.f32 0.0, %v3364
      %v3366 = vpop.f32.mrf.mxu0
      %3367 = vmatprep.mubr.bf16.mxu0 0
      %3368 = vmatmul.mubr.bf16.gmra.mxu0 %v3241
      %v3369 = vpop.f32.mrf.mxu0
      %v3370 = vadd.f32 0.0, %v3369
      %v3371 = vpop.f32.mrf.mxu0
      %v3372 = vpop.f32.mrf.mxu0
      %v3373 = vadd.f32 0.0, %v3372
      %v3374 = vpop.f32.mrf.mxu0
      %3375 = vmatprep.mubr.bf16.mxu0 0
      %3376 = vmatmul.mubr.bf16.gmra.mxu0 %v3242
      %v3377 = vpop.f32.mrf.mxu0
      %v3378 = vadd.f32 0.0, %v3377
      %v3379 = vpop.f32.mrf.mxu0
      %v3380 = vpop.f32.mrf.mxu0
      %v3381 = vadd.f32 0.0, %v3380
      %v3382 = vpop.f32.mrf.mxu0
      %3383 = vmatprep.mubr.bf16.mxu0 0
      %3384 = vmatmul.mubr.bf16.gmra.mxu0 %v3243
      %v3385 = vpop.f32.mrf.mxu0
      %v3386 = vadd.f32 0.0, %v3385
      %v3387 = vpop.f32.mrf.mxu0
      %v3388 = vpop.f32.mrf.mxu0
      %v3389 = vadd.f32 0.0, %v3388
      %v3390 = vpop.f32.mrf.mxu0
      %3391 = vmatprep.mubr.bf16.mxu0 0
      %3392 = vmatmul.mubr.bf16.gmra.mxu0 %v3244
      %v3393 = vpop.f32.mrf.mxu0
      %v3394 = vadd.f32 0.0, %v3393
      %v3395 = vpop.f32.mrf.mxu0
      %v3396 = vpop.f32.mrf.mxu0
      %v3397 = vadd.f32 0.0, %v3396
      %v3398 = vpop.f32.mrf.mxu0
      %3399 = vmatprep.mubr.bf16.mxu0 0
      %3400 = vmatmul.mubr.bf16.gmra.mxu0 %v3245
      %v3401 = vpop.f32.mrf.mxu0
      %v3402 = vadd.f32 0.0, %v3401
      %v3403 = vpop.f32.mrf.mxu0
      %v3404 = vpop.f32.mrf.mxu0
      %v3405 = vadd.f32 0.0, %v3404
      %v3406 = vpop.f32.mrf.mxu0
      %3407 = vmatprep.mubr.bf16.mxu0 0
      %3408 = vmatmul.mubr.bf16.gmra.mxu0 %v3246
      %v3409 = vpop.f32.mrf.mxu0
      %v3410 = vadd.f32 0.0, %v3409
      %v3411 = vpop.f32.mrf.mxu0
      %v3412 = vpop.f32.mrf.mxu0
      %v3413 = vadd.f32 0.0, %v3412
      %v3414 = vpop.f32.mrf.mxu0
      %3415 = vmatprep.mubr.bf16.mxu0 0
      %3416 = vmatmul.mubr.bf16.gmra.mxu0 %v3247
      %v3417 = vpop.f32.mrf.mxu0
      %v3418 = vadd.f32 0.0, %v3417
      %v3419 = vpop.f32.mrf.mxu0
      %v3420 = vpop.f32.mrf.mxu0
      %v3421 = vadd.f32 0.0, %v3420
      %v3422 = vpop.f32.mrf.mxu0
      %3423 = vmatprep.mubr.bf16.mxu0 0
      %3424 = vmatmul.mubr.bf16.gmra.mxu0 %v3248
      %v3425 = vpop.f32.mrf.mxu0
      %v3426 = vadd.f32 0.0, %v3425
      %v3427 = vpop.f32.mrf.mxu0
      %v3428 = vpop.f32.mrf.mxu0
      %v3429 = vadd.f32 0.0, %v3428
      %v3430 = vpop.f32.mrf.mxu0
      %3431 = vmatprep.mubr.bf16.mxu0 0
      %3432 = vmatmul.mubr.bf16.gmra.mxu0 %v3249
      %v3433 = vpop.f32.mrf.mxu0
      %v3434 = vadd.f32 0.0, %v3433
      %v3435 = vpop.f32.mrf.mxu0
      %v3436 = vpop.f32.mrf.mxu0
      %v3437 = vadd.f32 0.0, %v3436
      %v3438 = vpop.f32.mrf.mxu0
      %3439 = vmatprep.mubr.bf16.mxu0 0
      %3440 = vmatmul.mubr.bf16.gmra.mxu0 %v3250
      %v3441 = vpop.f32.mrf.mxu0
      %v3442 = vadd.f32 0.0, %v3441
      %v3443 = vpop.f32.mrf.mxu0
      %v3444 = vpop.f32.mrf.mxu0
      %v3445 = vadd.f32 0.0, %v3444
      %v3446 = vpop.f32.mrf.mxu0
      %3447 = vmatprep.mubr.bf16.mxu0 0
      %3448 = vmatmul.mubr.bf16.gmra.mxu0 %v3251
      %v3449 = vpop.f32.mrf.mxu0
      %v3450 = vadd.f32 0.0, %v3449
      %v3451 = vpop.f32.mrf.mxu0
      %v3452 = vpop.f32.mrf.mxu0
      %v3453 = vadd.f32 0.0, %v3452
      %v3454 = vpop.f32.mrf.mxu0
      %3455 = vmatprep.mubr.bf16.mxu0 0
      %3456 = vmatmul.mubr.bf16.gmra.mxu0 %v3252
      %v3457 = vpop.f32.mrf.mxu0
      %v3458 = vadd.f32 0.0, %v3457
      %v3459 = vpop.f32.mrf.mxu0
      %v3460 = vpop.f32.mrf.mxu0
      %v3461 = vadd.f32 0.0, %v3460
      %v3462 = vpop.f32.mrf.mxu0
      %3463 = vmatprep.mubr.bf16.mxu0 0
      %3464 = vmatmul.mubr.bf16.gmra.mxu0 %v3253
      %v3465 = vpop.f32.mrf.mxu0
      %v3466 = vadd.f32 0.0, %v3465
      %v3467 = vpop.f32.mrf.mxu0
      %v3468 = vpop.f32.mrf.mxu0
      %v3469 = vadd.f32 0.0, %v3468
      %v3470 = vpop.f32.mrf.mxu0
      %3471 = vmatprep.mubr.bf16.mxu0 0
      %3472 = vmatmul.mubr.bf16.gmra.mxu0 %v3254
      %v3473 = vpop.f32.mrf.mxu0
      %v3474 = vadd.f32 0.0, %v3473
      %v3475 = vpop.f32.mrf.mxu0
      %v3476 = vpop.f32.mrf.mxu0
      %v3477 = vadd.f32 0.0, %v3476
      %v3478 = vpop.f32.mrf.mxu0
      %3479 = vdwg.mxu0
      %v3480 = vadd.f32 %v2982, %v3354
      %v3481 = vadd.f32 %v2983, %v3357
      %v3482 = vadd.f32 %v2984, %v3362
      %v3483 = vadd.f32 %v2985, %v3365
      %v3484 = vadd.f32 %v2986, %v3370
      %v3485 = vadd.f32 %v2987, %v3373
      %v3486 = vadd.f32 %v2988, %v3378
      %v3487 = vadd.f32 %v2989, %v3381
      %v3488 = vadd.f32 %v2990, %v3386
      %v3489 = vadd.f32 %v2991, %v3389
      %v3490 = vadd.f32 %v2992, %v3394
      %v3491 = vadd.f32 %v2993, %v3397
      %v3492 = vadd.f32 %v2994, %v3402
      %v3493 = vadd.f32 %v2995, %v3405
      %v3494 = vadd.f32 %v2996, %v3410
      %v3495 = vadd.f32 %v2997, %v3413
      %v3496 = vadd.f32 %v2998, %v3418
      %v3497 = vadd.f32 %v2999, %v3421
      %v3498 = vadd.f32 %v3000, %v3426
      %v3499 = vadd.f32 %v3001, %v3429
      %v3500 = vadd.f32 %v3002, %v3434
      %v3501 = vadd.f32 %v3003, %v3437
      %v3502 = vadd.f32 %v3004, %v3442
      %v3503 = vadd.f32 %v3005, %v3445
      %v3504 = vadd.f32 %v3006, %v3450
      %v3505 = vadd.f32 %v3007, %v3453
      %v3506 = vadd.f32 %v3008, %v3458
      %v3507 = vadd.f32 %v3009, %v3461
      %v3508 = vadd.f32 %v3010, %v3466
      %v3509 = vadd.f32 %v3011, %v3469
      %v3510 = vadd.f32 %v3012, %v3474
      %v3511 = vadd.f32 %v3013, %v3477
      %s3512 = scalar_lea.vmem %s206, 24
      %v3513 = vld [vmem:[%s3512] sm:$0xf]
      %v3514 = vld [vmem:[%s3512 + $0x4] sm:$0xf]
      %v3515 = vld [vmem:[%s3512 + $0xc] sm:$0xf]
      %v3516 = vld [vmem:[%s3512 + $0x10] sm:$0xf]
      %v3517 = vld [vmem:[%s3512 + $0x18] sm:$0xf]
      %v3518 = vld [vmem:[%s3512 + $0x1c] sm:$0xf]
      %v3519 = vld [vmem:[%s3512 + $0x24] sm:$0xf]
      %v3520 = vld [vmem:[%s3512 + $0x28] sm:$0xf]
      %v3521 = vld [vmem:[%s3512 + $0x30] sm:$0xf]
      %v3522 = vld [vmem:[%s3512 + $0x34] sm:$0xf]
      %v3523 = vld [vmem:[%s3512 + $0x3c] sm:$0xf]
      %v3524 = vld [vmem:[%s3512 + $0x40] sm:$0xf]
      %v3525 = vld [vmem:[%s3512 + $0x48] sm:$0xf]
      %v3526 = vld [vmem:[%s3512 + $0x4c] sm:$0xf]
      %v3527 = vld [vmem:[%s3512 + $0x54] sm:$0xf]
      %v3528 = vld [vmem:[%s3512 + $0x58] sm:$0xf]
      %v3529 = vld [vmem:[%s3512 + $0x60] sm:$0xf]
      %v3530 = vld [vmem:[%s3512 + $0x64] sm:$0xf]
      %v3531 = vld [vmem:[%s3512 + $0x6c] sm:$0xf]
      %v3532 = vld [vmem:[%s3512 + $0x70] sm:$0xf]
      %v3533 = vld [vmem:[%s3512 + $0x78] sm:$0xf]
      %v3534 = vld [vmem:[%s3512 + $0x7c] sm:$0xf]
      %v3535 = vld [vmem:[%s3512 + $0x84] sm:$0xf]
      %v3536 = vld [vmem:[%s3512 + $0x88] sm:$0xf]
      %v3537 = vld [vmem:[%s3512 + $0x90] sm:$0xf]
      %v3538 = vld [vmem:[%s3512 + $0x94] sm:$0xf]
      %v3539 = vld [vmem:[%s3512 + $0x9c] sm:$0xf]
      %v3540 = vld [vmem:[%s3512 + $0xa0] sm:$0xf]
      %v3541 = vld [vmem:[%s3512 + $0xa8] sm:$0xf]
      %v3542 = vld [vmem:[%s3512 + $0xac] sm:$0xf]
      %v3543 = vld [vmem:[%s3512 + $0xb4] sm:$0xf]
      %v3544 = vld [vmem:[%s3512 + $0xb8] sm:$0xf]
      %s3545 = scalar_lea.vmem %s210, 384
      %v3546 = vld [vmem:[%s3545] sm:$0xf]
      %v3547 = vld [vmem:[%s3545 + $0x4] sm:$0xf]
      %v3548 = vld [vmem:[%s3545 + $0x8] sm:$0xf]
      %v3549 = vld [vmem:[%s3545 + $0xc] sm:$0xf]
      %v3550 = vld [vmem:[%s3545 + $0x10] sm:$0xf]
      %v3551 = vld [vmem:[%s3545 + $0x14] sm:$0xf]
      %v3552 = vld [vmem:[%s3545 + $0x18] sm:$0xf]
      %v3553 = vld [vmem:[%s3545 + $0x1c] sm:$0xf]
      %v3554 = vld [vmem:[%s3545 + $0x20] sm:$0xf]
      %v3555 = vld [vmem:[%s3545 + $0x24] sm:$0xf]
      %v3556 = vld [vmem:[%s3545 + $0x28] sm:$0xf]
      %v3557 = vld [vmem:[%s3545 + $0x2c] sm:$0xf]
      %v3558 = vld [vmem:[%s3545 + $0x30] sm:$0xf]
      %v3559 = vld [vmem:[%s3545 + $0x34] sm:$0xf]
      %v3560 = vld [vmem:[%s3545 + $0x38] sm:$0xf]
      %v3561 = vld [vmem:[%s3545 + $0x3c] sm:$0xf]
      %v3594 = vunpack.c.l.b16 %v3513
      %v3595 = vunpack.c.l.b16 %v3514
      %v3596 = vunpack.c.l.b16 %v3515
      %v3597 = vunpack.c.l.b16 %v3516
      %v3598 = vunpack.c.l.b16 %v3517
      %v3599 = vunpack.c.l.b16 %v3518
      %v3600 = vunpack.c.l.b16 %v3519
      %v3601 = vunpack.c.l.b16 %v3520
      %v3602 = vunpack.c.l.b16 %v3521
      %v3603 = vunpack.c.l.b16 %v3522
      %v3604 = vunpack.c.l.b16 %v3523
      %v3605 = vunpack.c.l.b16 %v3524
      %v3606 = vunpack.c.l.b16 %v3525
      %v3607 = vunpack.c.l.b16 %v3526
      %v3608 = vunpack.c.l.b16 %v3527
      %v3609 = vunpack.c.l.b16 %v3528
      %v3610 = vunpack.c.l.b16 %v3529
      %v3611 = vunpack.c.l.b16 %v3530
      %v3612 = vunpack.c.l.b16 %v3531
      %v3613 = vunpack.c.l.b16 %v3532
      %v3614 = vunpack.c.l.b16 %v3533
      %v3615 = vunpack.c.l.b16 %v3534
      %v3616 = vunpack.c.l.b16 %v3535
      %v3617 = vunpack.c.l.b16 %v3536
      %v3618 = vunpack.c.l.b16 %v3537
      %v3619 = vunpack.c.l.b16 %v3538
      %v3620 = vunpack.c.l.b16 %v3539
      %v3621 = vunpack.c.l.b16 %v3540
      %v3622 = vunpack.c.l.b16 %v3541
      %v3623 = vunpack.c.l.b16 %v3542
      %v3624 = vunpack.c.l.b16 %v3543
      %v3625 = vunpack.c.l.b16 %v3544
      %v3626 = vpack.c.b16 %v3595, %v3594
      %v3627 = vpack.c.b16 %v3597, %v3596
      %v3628 = vpack.c.b16 %v3599, %v3598
      %v3629 = vpack.c.b16 %v3601, %v3600
      %v3630 = vpack.c.b16 %v3603, %v3602
      %v3631 = vpack.c.b16 %v3605, %v3604
      %v3632 = vpack.c.b16 %v3607, %v3606
      %v3633 = vpack.c.b16 %v3609, %v3608
      %v3634 = vpack.c.b16 %v3611, %v3610
      %v3635 = vpack.c.b16 %v3613, %v3612
      %v3636 = vpack.c.b16 %v3615, %v3614
      %v3637 = vpack.c.b16 %v3617, %v3616
      %v3638 = vpack.c.b16 %v3619, %v3618
      %v3639 = vpack.c.b16 %v3621, %v3620
      %v3640 = vpack.c.b16 %v3623, %v3622
      %v3641 = vpack.c.b16 %v3625, %v3624
      %v3674 = vunpack.c.l.b16 %v3546
      %v3675 = vunpack.c.l.b16 %v3547
      %v3676 = vunpack.c.l.b16 %v3548
      %v3677 = vunpack.c.l.b16 %v3549
      %v3678 = vunpack.c.l.b16 %v3550
      %v3679 = vunpack.c.l.b16 %v3551
      %v3680 = vunpack.c.l.b16 %v3552
      %v3681 = vunpack.c.l.b16 %v3553
      %v3682 = vunpack.c.l.b16 %v3554
      %v3683 = vunpack.c.l.b16 %v3555
      %v3684 = vunpack.c.l.b16 %v3556
      %v3685 = vunpack.c.l.b16 %v3557
      %v3686 = vunpack.c.l.b16 %v3558
      %v3687 = vunpack.c.l.b16 %v3559
      %v3688 = vunpack.c.l.b16 %v3560
      %v3689 = vunpack.c.l.b16 %v3561
      %v3690 = vpack.c.b16 %v3675, %v3674
      %v3691 = vpack.c.b16 %v3677, %v3676
      %v3692 = vpack.c.b16 %v3679, %v3678
      %v3693 = vpack.c.b16 %v3681, %v3680
      %v3694 = vpack.c.b16 %v3683, %v3682
      %v3695 = vpack.c.b16 %v3685, %v3684
      %v3696 = vpack.c.b16 %v3687, %v3686
      %v3697 = vpack.c.b16 %v3689, %v3688
      %3706 = vmatprep.subr.bf16.mxu0 0
      %3707 = vmatpush1.bf16.msra.mxu0 %v3697
      %3708 = vmatprep.subr.bf16.mxu0 0
      %3709 = vmatpush1.bf16.msra.mxu0 %v3696
      %3710 = vmatprep.subr.bf16.mxu0 0
      %3711 = vmatpush1.bf16.msra.mxu0 %v3695
      %3712 = vmatprep.subr.bf16.mxu0 0
      %3713 = vmatpush1.bf16.msra.mxu0 %v3694
      %3714 = vmatprep.subr.bf16.mxu0 0
      %3715 = vmatpush1.bf16.msra.mxu0 %v3693
      %3716 = vmatprep.subr.bf16.mxu0 0
      %3717 = vmatpush1.bf16.msra.mxu0 %v3692
      %3718 = vmatprep.subr.bf16.mxu0 0
      %3719 = vmatpush1.bf16.msra.mxu0 %v3691
      %3720 = vmatprep.subr.bf16.mxu0 0
      %3721 = vmatpush1.bf16.msra.mxu0 %v3690
      %3722 = vmatprep.subr.bf16.mxu0 0
      %3723 = vmatpush2.bf16.msra.mxu0 0
      %3724 = vmatprep.subr.bf16.mxu0 0
      %3725 = vmatpush2.bf16.msra.mxu0 0
      %3726 = vmatprep.subr.bf16.mxu0 0
      %3727 = vmatpush2.bf16.msra.mxu0 0
      %3728 = vmatprep.subr.bf16.mxu0 0
      %3729 = vmatpush2.bf16.msra.mxu0 0
      %3730 = vmatprep.subr.bf16.mxu0 0
      %3731 = vmatpush2.bf16.msra.mxu0 0
      %3732 = vmatprep.subr.bf16.mxu0 0
      %3733 = vmatpush2.bf16.msra.mxu0 0
      %3734 = vmatprep.subr.bf16.mxu0 0
      %3735 = vmatpush2.bf16.msra.mxu0 0
      %3736 = vmatprep.subr.bf16.mxu0 0
      %3737 = vmatpush2.bf16.msra.mxu0 0
      %3738 = vmatprep.mubr.bf16.mxu0 0
      %3739 = vmatmul.mubr.bf16.gmra.mxu0 %v3626
      %v3740 = vpop.f32.mrf.mxu0
      %v3741 = vadd.f32 0.0, %v3740
      %v3742 = vpop.f32.mrf.mxu0
      %v3743 = vpop.f32.mrf.mxu0
      %v3744 = vadd.f32 0.0, %v3743
      %v3745 = vpop.f32.mrf.mxu0
      %3746 = vmatprep.mubr.bf16.mxu0 0
      %3747 = vmatmul.mubr.bf16.gmra.mxu0 %v3627
      %v3748 = vpop.f32.mrf.mxu0
      %v3749 = vadd.f32 0.0, %v3748
      %v3750 = vpop.f32.mrf.mxu0
      %v3751 = vpop.f32.mrf.mxu0
      %v3752 = vadd.f32 0.0, %v3751
      %v3753 = vpop.f32.mrf.mxu0
      %3754 = vmatprep.mubr.bf16.mxu0 0
      %3755 = vmatmul.mubr.bf16.gmra.mxu0 %v3628
      %v3756 = vpop.f32.mrf.mxu0
      %v3757 = vadd.f32 0.0, %v3756
      %v3758 = vpop.f32.mrf.mxu0
      %v3759 = vpop.f32.mrf.mxu0
      %v3760 = vadd.f32 0.0, %v3759
      %v3761 = vpop.f32.mrf.mxu0
      %3762 = vmatprep.mubr.bf16.mxu0 0
      %3763 = vmatmul.mubr.bf16.gmra.mxu0 %v3629
      %v3764 = vpop.f32.mrf.mxu0
      %v3765 = vadd.f32 0.0, %v3764
      %v3766 = vpop.f32.mrf.mxu0
      %v3767 = vpop.f32.mrf.mxu0
      %v3768 = vadd.f32 0.0, %v3767
      %v3769 = vpop.f32.mrf.mxu0
      %3770 = vmatprep.mubr.bf16.mxu0 0
      %3771 = vmatmul.mubr.bf16.gmra.mxu0 %v3630
      %v3772 = vpop.f32.mrf.mxu0
      %v3773 = vadd.f32 0.0, %v3772
      %v3774 = vpop.f32.mrf.mxu0
      %v3775 = vpop.f32.mrf.mxu0
      %v3776 = vadd.f32 0.0, %v3775
      %v3777 = vpop.f32.mrf.mxu0
      %3778 = vmatprep.mubr.bf16.mxu0 0
      %3779 = vmatmul.mubr.bf16.gmra.mxu0 %v3631
      %v3780 = vpop.f32.mrf.mxu0
      %v3781 = vadd.f32 0.0, %v3780
      %v3782 = vpop.f32.mrf.mxu0
      %v3783 = vpop.f32.mrf.mxu0
      %v3784 = vadd.f32 0.0, %v3783
      %v3785 = vpop.f32.mrf.mxu0
      %3786 = vmatprep.mubr.bf16.mxu0 0
      %3787 = vmatmul.mubr.bf16.gmra.mxu0 %v3632
      %v3788 = vpop.f32.mrf.mxu0
      %v3789 = vadd.f32 0.0, %v3788
      %v3790 = vpop.f32.mrf.mxu0
      %v3791 = vpop.f32.mrf.mxu0
      %v3792 = vadd.f32 0.0, %v3791
      %v3793 = vpop.f32.mrf.mxu0
      %3794 = vmatprep.mubr.bf16.mxu0 0
      %3795 = vmatmul.mubr.bf16.gmra.mxu0 %v3633
      %v3796 = vpop.f32.mrf.mxu0
      %v3797 = vadd.f32 0.0, %v3796
      %v3798 = vpop.f32.mrf.mxu0
      %v3799 = vpop.f32.mrf.mxu0
      %v3800 = vadd.f32 0.0, %v3799
      %v3801 = vpop.f32.mrf.mxu0
      %3802 = vmatprep.mubr.bf16.mxu0 0
      %3803 = vmatmul.mubr.bf16.gmra.mxu0 %v3634
      %v3804 = vpop.f32.mrf.mxu0
      %v3805 = vadd.f32 0.0, %v3804
      %v3806 = vpop.f32.mrf.mxu0
      %v3807 = vpop.f32.mrf.mxu0
      %v3808 = vadd.f32 0.0, %v3807
      %v3809 = vpop.f32.mrf.mxu0
      %3810 = vmatprep.mubr.bf16.mxu0 0
      %3811 = vmatmul.mubr.bf16.gmra.mxu0 %v3635
      %v3812 = vpop.f32.mrf.mxu0
      %v3813 = vadd.f32 0.0, %v3812
      %v3814 = vpop.f32.mrf.mxu0
      %v3815 = vpop.f32.mrf.mxu0
      %v3816 = vadd.f32 0.0, %v3815
      %v3817 = vpop.f32.mrf.mxu0
      %3818 = vmatprep.mubr.bf16.mxu0 0
      %3819 = vmatmul.mubr.bf16.gmra.mxu0 %v3636
      %v3820 = vpop.f32.mrf.mxu0
      %v3821 = vadd.f32 0.0, %v3820
      %v3822 = vpop.f32.mrf.mxu0
      %v3823 = vpop.f32.mrf.mxu0
      %v3824 = vadd.f32 0.0, %v3823
      %v3825 = vpop.f32.mrf.mxu0
      %3826 = vmatprep.mubr.bf16.mxu0 0
      %3827 = vmatmul.mubr.bf16.gmra.mxu0 %v3637
      %v3828 = vpop.f32.mrf.mxu0
      %v3829 = vadd.f32 0.0, %v3828
      %v3830 = vpop.f32.mrf.mxu0
      %v3831 = vpop.f32.mrf.mxu0
      %v3832 = vadd.f32 0.0, %v3831
      %v3833 = vpop.f32.mrf.mxu0
      %3834 = vmatprep.mubr.bf16.mxu0 0
      %3835 = vmatmul.mubr.bf16.gmra.mxu0 %v3638
      %v3836 = vpop.f32.mrf.mxu0
      %v3837 = vadd.f32 0.0, %v3836
      %v3838 = vpop.f32.mrf.mxu0
      %v3839 = vpop.f32.mrf.mxu0
      %v3840 = vadd.f32 0.0, %v3839
      %v3841 = vpop.f32.mrf.mxu0
      %3842 = vmatprep.mubr.bf16.mxu0 0
      %3843 = vmatmul.mubr.bf16.gmra.mxu0 %v3639
      %v3844 = vpop.f32.mrf.mxu0
      %v3845 = vadd.f32 0.0, %v3844
      %v3846 = vpop.f32.mrf.mxu0
      %v3847 = vpop.f32.mrf.mxu0
      %v3848 = vadd.f32 0.0, %v3847
      %v3849 = vpop.f32.mrf.mxu0
      %3850 = vmatprep.mubr.bf16.mxu0 0
      %3851 = vmatmul.mubr.bf16.gmra.mxu0 %v3640
      %v3852 = vpop.f32.mrf.mxu0
      %v3853 = vadd.f32 0.0, %v3852
      %v3854 = vpop.f32.mrf.mxu0
      %v3855 = vpop.f32.mrf.mxu0
      %v3856 = vadd.f32 0.0, %v3855
      %v3857 = vpop.f32.mrf.mxu0
      %3858 = vmatprep.mubr.bf16.mxu0 0
      %3859 = vmatmul.mubr.bf16.gmra.mxu0 %v3641
      %v3860 = vpop.f32.mrf.mxu0
      %v3861 = vadd.f32 0.0, %v3860
      %v3862 = vpop.f32.mrf.mxu0
      %v3863 = vpop.f32.mrf.mxu0
      %v3864 = vadd.f32 0.0, %v3863
      %v3865 = vpop.f32.mrf.mxu0
      %3866 = vdwg.mxu0
      %v3867 = vadd.f32 %v3480, %v3741
      %v3868 = vadd.f32 %v3481, %v3744
      %v3869 = vadd.f32 %v3482, %v3749
      %v3870 = vadd.f32 %v3483, %v3752
      %v3871 = vadd.f32 %v3484, %v3757
      %v3872 = vadd.f32 %v3485, %v3760
      %v3873 = vadd.f32 %v3486, %v3765
      %v3874 = vadd.f32 %v3487, %v3768
      %v3875 = vadd.f32 %v3488, %v3773
      %v3876 = vadd.f32 %v3489, %v3776
      %v3877 = vadd.f32 %v3490, %v3781
      %v3878 = vadd.f32 %v3491, %v3784
      %v3879 = vadd.f32 %v3492, %v3789
      %v3880 = vadd.f32 %v3493, %v3792
      %v3881 = vadd.f32 %v3494, %v3797
      %v3882 = vadd.f32 %v3495, %v3800
      %v3883 = vadd.f32 %v3496, %v3805
      %v3884 = vadd.f32 %v3497, %v3808
      %v3885 = vadd.f32 %v3498, %v3813
      %v3886 = vadd.f32 %v3499, %v3816
      %v3887 = vadd.f32 %v3500, %v3821
      %v3888 = vadd.f32 %v3501, %v3824
      %v3889 = vadd.f32 %v3502, %v3829
      %v3890 = vadd.f32 %v3503, %v3832
      %v3891 = vadd.f32 %v3504, %v3837
      %v3892 = vadd.f32 %v3505, %v3840
      %v3893 = vadd.f32 %v3506, %v3845
      %v3894 = vadd.f32 %v3507, %v3848
      %v3895 = vadd.f32 %v3508, %v3853
      %v3896 = vadd.f32 %v3509, %v3856
      %v3897 = vadd.f32 %v3510, %v3861
      %v3898 = vadd.f32 %v3511, %v3864
      %v3899 = vld [vmem:[%s3512] sm:$0xf]
      %v3900 = vld [vmem:[%s3512 + $0x4] sm:$0xf]
      %v3901 = vld [vmem:[%s3512 + $0x8] sm:$0x1]
      %v3902 = vld [vmem:[%s3512 + $0xc] sm:$0xf]
      %v3903 = vld [vmem:[%s3512 + $0x10] sm:$0xf]
      %v3904 = vld [vmem:[%s3512 + $0x14] sm:$0x1]
      %v3905 = vld [vmem:[%s3512 + $0x18] sm:$0xf]
      %v3906 = vld [vmem:[%s3512 + $0x1c] sm:$0xf]
      %v3907 = vld [vmem:[%s3512 + $0x20] sm:$0x1]
      %v3908 = vld [vmem:[%s3512 + $0x24] sm:$0xf]
      %v3909 = vld [vmem:[%s3512 + $0x28] sm:$0xf]
      %v3910 = vld [vmem:[%s3512 + $0x2c] sm:$0x1]
      %v3911 = vld [vmem:[%s3512 + $0x30] sm:$0xf]
      %v3912 = vld [vmem:[%s3512 + $0x34] sm:$0xf]
      %v3913 = vld [vmem:[%s3512 + $0x38] sm:$0x1]
      %v3914 = vld [vmem:[%s3512 + $0x3c] sm:$0xf]
      %v3915 = vld [vmem:[%s3512 + $0x40] sm:$0xf]
      %v3916 = vld [vmem:[%s3512 + $0x44] sm:$0x1]
      %v3917 = vld [vmem:[%s3512 + $0x48] sm:$0xf]
      %v3918 = vld [vmem:[%s3512 + $0x4c] sm:$0xf]
      %v3919 = vld [vmem:[%s3512 + $0x50] sm:$0x1]
      %v3920 = vld [vmem:[%s3512 + $0x54] sm:$0xf]
      %v3921 = vld [vmem:[%s3512 + $0x58] sm:$0xf]
      %v3922 = vld [vmem:[%s3512 + $0x5c] sm:$0x1]
      %v3923 = vld [vmem:[%s3512 + $0x60] sm:$0xf]
      %v3924 = vld [vmem:[%s3512 + $0x64] sm:$0xf]
      %v3925 = vld [vmem:[%s3512 + $0x68] sm:$0x1]
      %v3926 = vld [vmem:[%s3512 + $0x6c] sm:$0xf]
      %v3927 = vld [vmem:[%s3512 + $0x70] sm:$0xf]
      %v3928 = vld [vmem:[%s3512 + $0x74] sm:$0x1]
      %v3929 = vld [vmem:[%s3512 + $0x78] sm:$0xf]
      %v3930 = vld [vmem:[%s3512 + $0x7c] sm:$0xf]
      %v3931 = vld [vmem:[%s3512 + $0x80] sm:$0x1]
      %v3932 = vld [vmem:[%s3512 + $0x84] sm:$0xf]
      %v3933 = vld [vmem:[%s3512 + $0x88] sm:$0xf]
      %v3934 = vld [vmem:[%s3512 + $0x8c] sm:$0x1]
      %v3935 = vld [vmem:[%s3512 + $0x90] sm:$0xf]
      %v3936 = vld [vmem:[%s3512 + $0x94] sm:$0xf]
      %v3937 = vld [vmem:[%s3512 + $0x98] sm:$0x1]
      %v3938 = vld [vmem:[%s3512 + $0x9c] sm:$0xf]
      %v3939 = vld [vmem:[%s3512 + $0xa0] sm:$0xf]
      %v3940 = vld [vmem:[%s3512 + $0xa4] sm:$0x1]
      %v3941 = vld [vmem:[%s3512 + $0xa8] sm:$0xf]
      %v3942 = vld [vmem:[%s3512 + $0xac] sm:$0xf]
      %v3943 = vld [vmem:[%s3512 + $0xb0] sm:$0x1]
      %v3944 = vld [vmem:[%s3512 + $0xb4] sm:$0xf]
      %v3945 = vld [vmem:[%s3512 + $0xb8] sm:$0xf]
      %v3946 = vld [vmem:[%s3512 + $0xbc] sm:$0x1]
      %v3948 = vshrl.u32 %v3899, 16
      %v3950 = vrot.slane %v3948, 4
      %v3951 = vshll.u32 %v3899, 16
      %v3953 = vrot.slane %v3951, 5
      %v3954 = vor.u32 %v3950, %v3953
      %v3955 = vrot.slane %v3954, 4
      %v3957 = vshll.u32 %v3900, 16
      %v3959 = vrot.slane %v3957, 5
      %v3960 = vsel %vm665, %v3955, %v3959
      %v3961 = vshrl.u32 %v3900, 16
      %v3963 = vrot.slane %v3961, 4
      %v3964 = vor.u32 %v3963, %v3959
      %v3965 = vrot.slane %v3964, 4
      %v3967 = vshll.u32 %v3901, 16
      %v3969 = vrot.slane %v3967, 5
      %v3970 = vsel %vm665, %v3965, %v3969
      %v3972 = vshrl.u32 %v3902, 16
      %v3974 = vrot.slane %v3972, 4
      %v3975 = vshll.u32 %v3902, 16
      %v3977 = vrot.slane %v3975, 5
      %v3978 = vor.u32 %v3974, %v3977
      %v3979 = vrot.slane %v3978, 4
      %v3981 = vshll.u32 %v3903, 16
      %v3983 = vrot.slane %v3981, 5
      %v3984 = vsel %vm665, %v3979, %v3983
      %v3985 = vshrl.u32 %v3903, 16
      %v3987 = vrot.slane %v3985, 4
      %v3988 = vor.u32 %v3987, %v3983
      %v3989 = vrot.slane %v3988, 4
      %v3991 = vshll.u32 %v3904, 16
      %v3993 = vrot.slane %v3991, 5
      %v3994 = vsel %vm665, %v3989, %v3993
      %v3996 = vshrl.u32 %v3905, 16
      %v3998 = vrot.slane %v3996, 4
      %v3999 = vshll.u32 %v3905, 16
      %v4001 = vrot.slane %v3999, 5
      %v4002 = vor.u32 %v3998, %v4001
      %v4003 = vrot.slane %v4002, 4
      %v4005 = vshll.u32 %v3906, 16
      %v4007 = vrot.slane %v4005, 5
      %v4008 = vsel %vm665, %v4003, %v4007
      %v4009 = vshrl.u32 %v3906, 16
      %v4011 = vrot.slane %v4009, 4
      %v4012 = vor.u32 %v4011, %v4007
      %v4013 = vrot.slane %v4012, 4
      %v4015 = vshll.u32 %v3907, 16
      %v4017 = vrot.slane %v4015, 5
      %v4018 = vsel %vm665, %v4013, %v4017
      %v4020 = vshrl.u32 %v3908, 16
      %v4022 = vrot.slane %v4020, 4
      %v4023 = vshll.u32 %v3908, 16
      %v4025 = vrot.slane %v4023, 5
      %v4026 = vor.u32 %v4022, %v4025
      %v4027 = vrot.slane %v4026, 4
      %v4029 = vshll.u32 %v3909, 16
      %v4031 = vrot.slane %v4029, 5
      %v4032 = vsel %vm665, %v4027, %v4031
      %v4033 = vshrl.u32 %v3909, 16
      %v4035 = vrot.slane %v4033, 4
      %v4036 = vor.u32 %v4035, %v4031
      %v4037 = vrot.slane %v4036, 4
      %v4039 = vshll.u32 %v3910, 16
      %v4041 = vrot.slane %v4039, 5
      %v4042 = vsel %vm665, %v4037, %v4041
      %v4044 = vshrl.u32 %v3911, 16
      %v4046 = vrot.slane %v4044, 4
      %v4047 = vshll.u32 %v3911, 16
      %v4049 = vrot.slane %v4047, 5
      %v4050 = vor.u32 %v4046, %v4049
      %v4051 = vrot.slane %v4050, 4
      %v4053 = vshll.u32 %v3912, 16
      %v4055 = vrot.slane %v4053, 5
      %v4056 = vsel %vm665, %v4051, %v4055
      %v4057 = vshrl.u32 %v3912, 16
      %v4059 = vrot.slane %v4057, 4
      %v4060 = vor.u32 %v4059, %v4055
      %v4061 = vrot.slane %v4060, 4
      %v4063 = vshll.u32 %v3913, 16
      %v4065 = vrot.slane %v4063, 5
      %v4066 = vsel %vm665, %v4061, %v4065
      %v4068 = vshrl.u32 %v3914, 16
      %v4070 = vrot.slane %v4068, 4
      %v4071 = vshll.u32 %v3914, 16
      %v4073 = vrot.slane %v4071, 5
      %v4074 = vor.u32 %v4070, %v4073
      %v4075 = vrot.slane %v4074, 4
      %v4077 = vshll.u32 %v3915, 16
      %v4079 = vrot.slane %v4077, 5
      %v4080 = vsel %vm665, %v4075, %v4079
      %v4081 = vshrl.u32 %v3915, 16
      %v4083 = vrot.slane %v4081, 4
      %v4084 = vor.u32 %v4083, %v4079
      %v4085 = vrot.slane %v4084, 4
      %v4087 = vshll.u32 %v3916, 16
      %v4089 = vrot.slane %v4087, 5
      %v4090 = vsel %vm665, %v4085, %v4089
      %v4092 = vshrl.u32 %v3917, 16
      %v4094 = vrot.slane %v4092, 4
      %v4095 = vshll.u32 %v3917, 16
      %v4097 = vrot.slane %v4095, 5
      %v4098 = vor.u32 %v4094, %v4097
      %v4099 = vrot.slane %v4098, 4
      %v4101 = vshll.u32 %v3918, 16
      %v4103 = vrot.slane %v4101, 5
      %v4104 = vsel %vm665, %v4099, %v4103
      %v4105 = vshrl.u32 %v3918, 16
      %v4107 = vrot.slane %v4105, 4
      %v4108 = vor.u32 %v4107, %v4103
      %v4109 = vrot.slane %v4108, 4
      %v4111 = vshll.u32 %v3919, 16
      %v4113 = vrot.slane %v4111, 5
      %v4114 = vsel %vm665, %v4109, %v4113
      %v4116 = vshrl.u32 %v3920, 16
      %v4118 = vrot.slane %v4116, 4
      %v4119 = vshll.u32 %v3920, 16
      %v4121 = vrot.slane %v4119, 5
      %v4122 = vor.u32 %v4118, %v4121
      %v4123 = vrot.slane %v4122, 4
      %v4125 = vshll.u32 %v3921, 16
      %v4127 = vrot.slane %v4125, 5
      %v4128 = vsel %vm665, %v4123, %v4127
      %v4129 = vshrl.u32 %v3921, 16
      %v4131 = vrot.slane %v4129, 4
      %v4132 = vor.u32 %v4131, %v4127
      %v4133 = vrot.slane %v4132, 4
      %v4135 = vshll.u32 %v3922, 16
      %v4137 = vrot.slane %v4135, 5
      %v4138 = vsel %vm665, %v4133, %v4137
      %v4140 = vshrl.u32 %v3923, 16
      %v4142 = vrot.slane %v4140, 4
      %v4143 = vshll.u32 %v3923, 16
      %v4145 = vrot.slane %v4143, 5
      %v4146 = vor.u32 %v4142, %v4145
      %v4147 = vrot.slane %v4146, 4
      %v4149 = vshll.u32 %v3924, 16
      %v4151 = vrot.slane %v4149, 5
      %v4152 = vsel %vm665, %v4147, %v4151
      %v4153 = vshrl.u32 %v3924, 16
      %v4155 = vrot.slane %v4153, 4
      %v4156 = vor.u32 %v4155, %v4151
      %v4157 = vrot.slane %v4156, 4
      %v4159 = vshll.u32 %v3925, 16
      %v4161 = vrot.slane %v4159, 5
      %v4162 = vsel %vm665, %v4157, %v4161
      %v4164 = vshrl.u32 %v3926, 16
      %v4166 = vrot.slane %v4164, 4
      %v4167 = vshll.u32 %v3926, 16
      %v4169 = vrot.slane %v4167, 5
      %v4170 = vor.u32 %v4166, %v4169
      %v4171 = vrot.slane %v4170, 4
      %v4173 = vshll.u32 %v3927, 16
      %v4175 = vrot.slane %v4173, 5
      %v4176 = vsel %vm665, %v4171, %v4175
      %v4177 = vshrl.u32 %v3927, 16
      %v4179 = vrot.slane %v4177, 4
      %v4180 = vor.u32 %v4179, %v4175
      %v4181 = vrot.slane %v4180, 4
      %v4183 = vshll.u32 %v3928, 16
      %v4185 = vrot.slane %v4183, 5
      %v4186 = vsel %vm665, %v4181, %v4185
      %v4188 = vshrl.u32 %v3929, 16
      %v4190 = vrot.slane %v4188, 4
      %v4191 = vshll.u32 %v3929, 16
      %v4193 = vrot.slane %v4191, 5
      %v4194 = vor.u32 %v4190, %v4193
      %v4195 = vrot.slane %v4194, 4
      %v4197 = vshll.u32 %v3930, 16
      %v4199 = vrot.slane %v4197, 5
      %v4200 = vsel %vm665, %v4195, %v4199
      %v4201 = vshrl.u32 %v3930, 16
      %v4203 = vrot.slane %v4201, 4
      %v4204 = vor.u32 %v4203, %v4199
      %v4205 = vrot.slane %v4204, 4
      %v4207 = vshll.u32 %v3931, 16
      %v4209 = vrot.slane %v4207, 5
      %v4210 = vsel %vm665, %v4205, %v4209
      %v4212 = vshrl.u32 %v3932, 16
      %v4214 = vrot.slane %v4212, 4
      %v4215 = vshll.u32 %v3932, 16
      %v4217 = vrot.slane %v4215, 5
      %v4218 = vor.u32 %v4214, %v4217
      %v4219 = vrot.slane %v4218, 4
      %v4221 = vshll.u32 %v3933, 16
      %v4223 = vrot.slane %v4221, 5
      %v4224 = vsel %vm665, %v4219, %v4223
      %v4225 = vshrl.u32 %v3933, 16
      %v4227 = vrot.slane %v4225, 4
      %v4228 = vor.u32 %v4227, %v4223
      %v4229 = vrot.slane %v4228, 4
      %v4231 = vshll.u32 %v3934, 16
      %v4233 = vrot.slane %v4231, 5
      %v4234 = vsel %vm665, %v4229, %v4233
      %v4236 = vshrl.u32 %v3935, 16
      %v4238 = vrot.slane %v4236, 4
      %v4239 = vshll.u32 %v3935, 16
      %v4241 = vrot.slane %v4239, 5
      %v4242 = vor.u32 %v4238, %v4241
      %v4243 = vrot.slane %v4242, 4
      %v4245 = vshll.u32 %v3936, 16
      %v4247 = vrot.slane %v4245, 5
      %v4248 = vsel %vm665, %v4243, %v4247
      %v4249 = vshrl.u32 %v3936, 16
      %v4251 = vrot.slane %v4249, 4
      %v4252 = vor.u32 %v4251, %v4247
      %v4253 = vrot.slane %v4252, 4
      %v4255 = vshll.u32 %v3937, 16
      %v4257 = vrot.slane %v4255, 5
      %v4258 = vsel %vm665, %v4253, %v4257
      %v4260 = vshrl.u32 %v3938, 16
      %v4262 = vrot.slane %v4260, 4
      %v4263 = vshll.u32 %v3938, 16
      %v4265 = vrot.slane %v4263, 5
      %v4266 = vor.u32 %v4262, %v4265
      %v4267 = vrot.slane %v4266, 4
      %v4269 = vshll.u32 %v3939, 16
      %v4271 = vrot.slane %v4269, 5
      %v4272 = vsel %vm665, %v4267, %v4271
      %v4273 = vshrl.u32 %v3939, 16
      %v4275 = vrot.slane %v4273, 4
      %v4276 = vor.u32 %v4275, %v4271
      %v4277 = vrot.slane %v4276, 4
      %v4279 = vshll.u32 %v3940, 16
      %v4281 = vrot.slane %v4279, 5
      %v4282 = vsel %vm665, %v4277, %v4281
      %v4284 = vshrl.u32 %v3941, 16
      %v4286 = vrot.slane %v4284, 4
      %v4287 = vshll.u32 %v3941, 16
      %v4289 = vrot.slane %v4287, 5
      %v4290 = vor.u32 %v4286, %v4289
      %v4291 = vrot.slane %v4290, 4
      %v4293 = vshll.u32 %v3942, 16
      %v4295 = vrot.slane %v4293, 5
      %v4296 = vsel %vm665, %v4291, %v4295
      %v4297 = vshrl.u32 %v3942, 16
      %v4299 = vrot.slane %v4297, 4
      %v4300 = vor.u32 %v4299, %v4295
      %v4301 = vrot.slane %v4300, 4
      %v4303 = vshll.u32 %v3943, 16
      %v4305 = vrot.slane %v4303, 5
      %v4306 = vsel %vm665, %v4301, %v4305
      %v4308 = vshrl.u32 %v3944, 16
      %v4310 = vrot.slane %v4308, 4
      %v4311 = vshll.u32 %v3944, 16
      %v4313 = vrot.slane %v4311, 5
      %v4314 = vor.u32 %v4310, %v4313
      %v4315 = vrot.slane %v4314, 4
      %v4317 = vshll.u32 %v3945, 16
      %v4319 = vrot.slane %v4317, 5
      %v4320 = vsel %vm665, %v4315, %v4319
      %v4321 = vshrl.u32 %v3945, 16
      %v4323 = vrot.slane %v4321, 4
      %v4324 = vor.u32 %v4323, %v4319
      %v4325 = vrot.slane %v4324, 4
      %v4327 = vshll.u32 %v3946, 16
      %v4329 = vrot.slane %v4327, 5
      %v4330 = vsel %vm665, %v4325, %v4329
      %s4331 = scalar_lea.vmem %s210, 448
      %v4332 = vld [vmem:[%s4331] sm:$0xf]
      %v4333 = vld [vmem:[%s4331 + $0x4] sm:$0xf]
      %v4334 = vld [vmem:[%s4331 + $0x8] sm:$0xf]
      %v4335 = vld [vmem:[%s4331 + $0xc] sm:$0xf]
      %v4336 = vld [vmem:[%s4331 + $0x10] sm:$0xf]
      %v4337 = vld [vmem:[%s4331 + $0x14] sm:$0xf]
      %v4338 = vld [vmem:[%s4331 + $0x18] sm:$0xf]
      %v4339 = vld [vmem:[%s4331 + $0x1c] sm:$0xf]
      %v4340 = vld [vmem:[%s4331 + $0x20] sm:$0xf]
      %v4341 = vld [vmem:[%s4331 + $0x24] sm:$0xf]
      %v4342 = vld [vmem:[%s4331 + $0x28] sm:$0xf]
      %v4343 = vld [vmem:[%s4331 + $0x2c] sm:$0xf]
      %v4344 = vld [vmem:[%s4331 + $0x30] sm:$0xf]
      %v4345 = vld [vmem:[%s4331 + $0x34] sm:$0xf]
      %v4346 = vld [vmem:[%s4331 + $0x38] sm:$0xf]
      %v4347 = vld [vmem:[%s4331 + $0x3c] sm:$0xf]
      %v4348 = vunpack.c.l.b16 %v3960
      %v4349 = vunpack.c.l.b16 %v3970
      %v4350 = vunpack.c.l.b16 %v3984
      %v4351 = vunpack.c.l.b16 %v3994
      %v4352 = vunpack.c.l.b16 %v4008
      %v4353 = vunpack.c.l.b16 %v4018
      %v4354 = vunpack.c.l.b16 %v4032
      %v4355 = vunpack.c.l.b16 %v4042
      %v4356 = vunpack.c.l.b16 %v4056
      %v4357 = vunpack.c.l.b16 %v4066
      %v4358 = vunpack.c.l.b16 %v4080
      %v4359 = vunpack.c.l.b16 %v4090
      %v4360 = vunpack.c.l.b16 %v4104
      %v4361 = vunpack.c.l.b16 %v4114
      %v4362 = vunpack.c.l.b16 %v4128
      %v4363 = vunpack.c.l.b16 %v4138
      %v4364 = vunpack.c.l.b16 %v4152
      %v4365 = vunpack.c.l.b16 %v4162
      %v4366 = vunpack.c.l.b16 %v4176
      %v4367 = vunpack.c.l.b16 %v4186
      %v4368 = vunpack.c.l.b16 %v4200
      %v4369 = vunpack.c.l.b16 %v4210
      %v4370 = vunpack.c.l.b16 %v4224
      %v4371 = vunpack.c.l.b16 %v4234
      %v4372 = vunpack.c.l.b16 %v4248
      %v4373 = vunpack.c.l.b16 %v4258
      %v4374 = vunpack.c.l.b16 %v4272
      %v4375 = vunpack.c.l.b16 %v4282
      %v4376 = vunpack.c.l.b16 %v4296
      %v4377 = vunpack.c.l.b16 %v4306
      %v4378 = vunpack.c.l.b16 %v4320
      %v4379 = vunpack.c.l.b16 %v4330
      %v4380 = vpack.c.b16 %v4349, %v4348
      %v4381 = vpack.c.b16 %v4351, %v4350
      %v4382 = vpack.c.b16 %v4353, %v4352
      %v4383 = vpack.c.b16 %v4355, %v4354
      %v4384 = vpack.c.b16 %v4357, %v4356
      %v4385 = vpack.c.b16 %v4359, %v4358
      %v4386 = vpack.c.b16 %v4361, %v4360
      %v4387 = vpack.c.b16 %v4363, %v4362
      %v4388 = vpack.c.b16 %v4365, %v4364
      %v4389 = vpack.c.b16 %v4367, %v4366
      %v4390 = vpack.c.b16 %v4369, %v4368
      %v4391 = vpack.c.b16 %v4371, %v4370
      %v4392 = vpack.c.b16 %v4373, %v4372
      %v4393 = vpack.c.b16 %v4375, %v4374
      %v4394 = vpack.c.b16 %v4377, %v4376
      %v4395 = vpack.c.b16 %v4379, %v4378
      %v4428 = vunpack.c.l.b16 %v4332
      %v4429 = vunpack.c.l.b16 %v4333
      %v4430 = vunpack.c.l.b16 %v4334
      %v4431 = vunpack.c.l.b16 %v4335
      %v4432 = vunpack.c.l.b16 %v4336
      %v4433 = vunpack.c.l.b16 %v4337
      %v4434 = vunpack.c.l.b16 %v4338
      %v4435 = vunpack.c.l.b16 %v4339
      %v4436 = vunpack.c.l.b16 %v4340
      %v4437 = vunpack.c.l.b16 %v4341
      %v4438 = vunpack.c.l.b16 %v4342
      %v4439 = vunpack.c.l.b16 %v4343
      %v4440 = vunpack.c.l.b16 %v4344
      %v4441 = vunpack.c.l.b16 %v4345
      %v4442 = vunpack.c.l.b16 %v4346
      %v4443 = vunpack.c.l.b16 %v4347
      %v4444 = vpack.c.b16 %v4429, %v4428
      %v4445 = vpack.c.b16 %v4431, %v4430
      %v4446 = vpack.c.b16 %v4433, %v4432
      %v4447 = vpack.c.b16 %v4435, %v4434
      %v4448 = vpack.c.b16 %v4437, %v4436
      %v4449 = vpack.c.b16 %v4439, %v4438
      %v4450 = vpack.c.b16 %v4441, %v4440
      %v4451 = vpack.c.b16 %v4443, %v4442
      %4460 = vmatprep.subr.bf16.mxu0 0
      %4461 = vmatpush1.bf16.msra.mxu0 %v4451
      %4462 = vmatprep.subr.bf16.mxu0 0
      %4463 = vmatpush1.bf16.msra.mxu0 %v4450
      %4464 = vmatprep.subr.bf16.mxu0 0
      %4465 = vmatpush1.bf16.msra.mxu0 %v4449
      %4466 = vmatprep.subr.bf16.mxu0 0
      %4467 = vmatpush1.bf16.msra.mxu0 %v4448
      %4468 = vmatprep.subr.bf16.mxu0 0
      %4469 = vmatpush1.bf16.msra.mxu0 %v4447
      %4470 = vmatprep.subr.bf16.mxu0 0
      %4471 = vmatpush1.bf16.msra.mxu0 %v4446
      %4472 = vmatprep.subr.bf16.mxu0 0
      %4473 = vmatpush1.bf16.msra.mxu0 %v4445
      %4474 = vmatprep.subr.bf16.mxu0 0
      %4475 = vmatpush1.bf16.msra.mxu0 %v4444
      %4476 = vmatprep.subr.bf16.mxu0 0
      %4477 = vmatpush2.bf16.msra.mxu0 0
      %4478 = vmatprep.subr.bf16.mxu0 0
      %4479 = vmatpush2.bf16.msra.mxu0 0
      %4480 = vmatprep.subr.bf16.mxu0 0
      %4481 = vmatpush2.bf16.msra.mxu0 0
      %4482 = vmatprep.subr.bf16.mxu0 0
      %4483 = vmatpush2.bf16.msra.mxu0 0
      %4484 = vmatprep.subr.bf16.mxu0 0
      %4485 = vmatpush2.bf16.msra.mxu0 0
      %4486 = vmatprep.subr.bf16.mxu0 0
      %4487 = vmatpush2.bf16.msra.mxu0 0
      %4488 = vmatprep.subr.bf16.mxu0 0
      %4489 = vmatpush2.bf16.msra.mxu0 0
      %4490 = vmatprep.subr.bf16.mxu0 0
      %4491 = vmatpush2.bf16.msra.mxu0 0
      %4492 = vmatprep.mubr.bf16.mxu0 0
      %4493 = vmatmul.mubr.bf16.gmra.mxu0 %v4380
      %v4494 = vpop.f32.mrf.mxu0
      %v4495 = vadd.f32 0.0, %v4494
      %v4496 = vpop.f32.mrf.mxu0
      %v4497 = vpop.f32.mrf.mxu0
      %v4498 = vadd.f32 0.0, %v4497
      %v4499 = vpop.f32.mrf.mxu0
      %4500 = vmatprep.mubr.bf16.mxu0 0
      %4501 = vmatmul.mubr.bf16.gmra.mxu0 %v4381
      %v4502 = vpop.f32.mrf.mxu0
      %v4503 = vadd.f32 0.0, %v4502
      %v4504 = vpop.f32.mrf.mxu0
      %v4505 = vpop.f32.mrf.mxu0
      %v4506 = vadd.f32 0.0, %v4505
      %v4507 = vpop.f32.mrf.mxu0
      %4508 = vmatprep.mubr.bf16.mxu0 0
      %4509 = vmatmul.mubr.bf16.gmra.mxu0 %v4382
      %v4510 = vpop.f32.mrf.mxu0
      %v4511 = vadd.f32 0.0, %v4510
      %v4512 = vpop.f32.mrf.mxu0
      %v4513 = vpop.f32.mrf.mxu0
      %v4514 = vadd.f32 0.0, %v4513
      %v4515 = vpop.f32.mrf.mxu0
      %4516 = vmatprep.mubr.bf16.mxu0 0
      %4517 = vmatmul.mubr.bf16.gmra.mxu0 %v4383
      %v4518 = vpop.f32.mrf.mxu0
      %v4519 = vadd.f32 0.0, %v4518
      %v4520 = vpop.f32.mrf.mxu0
      %v4521 = vpop.f32.mrf.mxu0
      %v4522 = vadd.f32 0.0, %v4521
      %v4523 = vpop.f32.mrf.mxu0
      %4524 = vmatprep.mubr.bf16.mxu0 0
      %4525 = vmatmul.mubr.bf16.gmra.mxu0 %v4384
      %v4526 = vpop.f32.mrf.mxu0
      %v4527 = vadd.f32 0.0, %v4526
      %v4528 = vpop.f32.mrf.mxu0
      %v4529 = vpop.f32.mrf.mxu0
      %v4530 = vadd.f32 0.0, %v4529
      %v4531 = vpop.f32.mrf.mxu0
      %4532 = vmatprep.mubr.bf16.mxu0 0
      %4533 = vmatmul.mubr.bf16.gmra.mxu0 %v4385
      %v4534 = vpop.f32.mrf.mxu0
      %v4535 = vadd.f32 0.0, %v4534
      %v4536 = vpop.f32.mrf.mxu0
      %v4537 = vpop.f32.mrf.mxu0
      %v4538 = vadd.f32 0.0, %v4537
      %v4539 = vpop.f32.mrf.mxu0
      %4540 = vmatprep.mubr.bf16.mxu0 0
      %4541 = vmatmul.mubr.bf16.gmra.mxu0 %v4386
      %v4542 = vpop.f32.mrf.mxu0
      %v4543 = vadd.f32 0.0, %v4542
      %v4544 = vpop.f32.mrf.mxu0
      %v4545 = vpop.f32.mrf.mxu0
      %v4546 = vadd.f32 0.0, %v4545
      %v4547 = vpop.f32.mrf.mxu0
      %4548 = vmatprep.mubr.bf16.mxu0 0
      %4549 = vmatmul.mubr.bf16.gmra.mxu0 %v4387
      %v4550 = vpop.f32.mrf.mxu0
      %v4551 = vadd.f32 0.0, %v4550
      %v4552 = vpop.f32.mrf.mxu0
      %v4553 = vpop.f32.mrf.mxu0
      %v4554 = vadd.f32 0.0, %v4553
      %v4555 = vpop.f32.mrf.mxu0
      %4556 = vmatprep.mubr.bf16.mxu0 0
      %4557 = vmatmul.mubr.bf16.gmra.mxu0 %v4388
      %v4558 = vpop.f32.mrf.mxu0
      %v4559 = vadd.f32 0.0, %v4558
      %v4560 = vpop.f32.mrf.mxu0
      %v4561 = vpop.f32.mrf.mxu0
      %v4562 = vadd.f32 0.0, %v4561
      %v4563 = vpop.f32.mrf.mxu0
      %4564 = vmatprep.mubr.bf16.mxu0 0
      %4565 = vmatmul.mubr.bf16.gmra.mxu0 %v4389
      %v4566 = vpop.f32.mrf.mxu0
      %v4567 = vadd.f32 0.0, %v4566
      %v4568 = vpop.f32.mrf.mxu0
      %v4569 = vpop.f32.mrf.mxu0
      %v4570 = vadd.f32 0.0, %v4569
      %v4571 = vpop.f32.mrf.mxu0
      %4572 = vmatprep.mubr.bf16.mxu0 0
      %4573 = vmatmul.mubr.bf16.gmra.mxu0 %v4390
      %v4574 = vpop.f32.mrf.mxu0
      %v4575 = vadd.f32 0.0, %v4574
      %v4576 = vpop.f32.mrf.mxu0
      %v4577 = vpop.f32.mrf.mxu0
      %v4578 = vadd.f32 0.0, %v4577
      %v4579 = vpop.f32.mrf.mxu0
      %4580 = vmatprep.mubr.bf16.mxu0 0
      %4581 = vmatmul.mubr.bf16.gmra.mxu0 %v4391
      %v4582 = vpop.f32.mrf.mxu0
      %v4583 = vadd.f32 0.0, %v4582
      %v4584 = vpop.f32.mrf.mxu0
      %v4585 = vpop.f32.mrf.mxu0
      %v4586 = vadd.f32 0.0, %v4585
      %v4587 = vpop.f32.mrf.mxu0
      %4588 = vmatprep.mubr.bf16.mxu0 0
      %4589 = vmatmul.mubr.bf16.gmra.mxu0 %v4392
      %v4590 = vpop.f32.mrf.mxu0
      %v4591 = vadd.f32 0.0, %v4590
      %v4592 = vpop.f32.mrf.mxu0
      %v4593 = vpop.f32.mrf.mxu0
      %v4594 = vadd.f32 0.0, %v4593
      %v4595 = vpop.f32.mrf.mxu0
      %4596 = vmatprep.mubr.bf16.mxu0 0
      %4597 = vmatmul.mubr.bf16.gmra.mxu0 %v4393
      %v4598 = vpop.f32.mrf.mxu0
      %v4599 = vadd.f32 0.0, %v4598
      %v4600 = vpop.f32.mrf.mxu0
      %v4601 = vpop.f32.mrf.mxu0
      %v4602 = vadd.f32 0.0, %v4601
      %v4603 = vpop.f32.mrf.mxu0
      %4604 = vmatprep.mubr.bf16.mxu0 0
      %4605 = vmatmul.mubr.bf16.gmra.mxu0 %v4394
      %v4606 = vpop.f32.mrf.mxu0
      %v4607 = vadd.f32 0.0, %v4606
      %v4608 = vpop.f32.mrf.mxu0
      %v4609 = vpop.f32.mrf.mxu0
      %v4610 = vadd.f32 0.0, %v4609
      %v4611 = vpop.f32.mrf.mxu0
      %4612 = vmatprep.mubr.bf16.mxu0 0
      %4613 = vmatmul.mubr.bf16.gmra.mxu0 %v4395
      %v4614 = vpop.f32.mrf.mxu0
      %v4615 = vadd.f32 0.0, %v4614
      %v4616 = vpop.f32.mrf.mxu0
      %v4617 = vpop.f32.mrf.mxu0
      %v4618 = vadd.f32 0.0, %v4617
      %v4619 = vpop.f32.mrf.mxu0
      %4620 = vdwg.mxu0
      %v4621 = vadd.f32 %v3867, %v4495
      %v4622 = vadd.f32 %v3868, %v4498
      %v4623 = vadd.f32 %v3869, %v4503
      %v4624 = vadd.f32 %v3870, %v4506
      %v4625 = vadd.f32 %v3871, %v4511
      %v4626 = vadd.f32 %v3872, %v4514
      %v4627 = vadd.f32 %v3873, %v4519
      %v4628 = vadd.f32 %v3874, %v4522
      %v4629 = vadd.f32 %v3875, %v4527
      %v4630 = vadd.f32 %v3876, %v4530
      %v4631 = vadd.f32 %v3877, %v4535
      %v4632 = vadd.f32 %v3878, %v4538
      %v4633 = vadd.f32 %v3879, %v4543
      %v4634 = vadd.f32 %v3880, %v4546
      %v4635 = vadd.f32 %v3881, %v4551
      %v4636 = vadd.f32 %v3882, %v4554
      %v4637 = vadd.f32 %v3883, %v4559
      %v4638 = vadd.f32 %v3884, %v4562
      %v4639 = vadd.f32 %v3885, %v4567
      %v4640 = vadd.f32 %v3886, %v4570
      %v4641 = vadd.f32 %v3887, %v4575
      %v4642 = vadd.f32 %v3888, %v4578
      %v4643 = vadd.f32 %v3889, %v4583
      %v4644 = vadd.f32 %v3890, %v4586
      %v4645 = vadd.f32 %v3891, %v4591
      %v4646 = vadd.f32 %v3892, %v4594
      %v4647 = vadd.f32 %v3893, %v4599
      %v4648 = vadd.f32 %v3894, %v4602
      %v4649 = vadd.f32 %v3895, %v4607
      %v4650 = vadd.f32 %v3896, %v4610
      %v4651 = vadd.f32 %v3897, %v4615
      %v4652 = vadd.f32 %v3898, %v4618
      %v4653 = vld [vmem:[%s3512] sm:$0xe]
      %v4654 = vld [vmem:[%s3512 + $0xc] sm:$0xe]
      %v4655 = vld [vmem:[%s3512 + $0x18] sm:$0xe]
      %v4656 = vld [vmem:[%s3512 + $0x24] sm:$0xe]
      %v4657 = vld [vmem:[%s3512 + $0x30] sm:$0xe]
      %v4658 = vld [vmem:[%s3512 + $0x3c] sm:$0xe]
      %v4659 = vld [vmem:[%s3512 + $0x48] sm:$0xe]
      %v4660 = vld [vmem:[%s3512 + $0x54] sm:$0xe]
      %v4661 = vld [vmem:[%s3512 + $0x60] sm:$0xe]
      %v4662 = vld [vmem:[%s3512 + $0x6c] sm:$0xe]
      %v4663 = vld [vmem:[%s3512 + $0x78] sm:$0xe]
      %v4664 = vld [vmem:[%s3512 + $0x84] sm:$0xe]
      %v4665 = vld [vmem:[%s3512 + $0x90] sm:$0xe]
      %v4666 = vld [vmem:[%s3512 + $0x9c] sm:$0xe]
      %v4667 = vld [vmem:[%s3512 + $0xa8] sm:$0xe]
      %v4668 = vld [vmem:[%s3512 + $0xb4] sm:$0xe]
      %v4717 = vrot.slane %v4653, 5
      %v4718 = vrot.slane %v4717, 4
      %v4719 = vrot.slane %v3900, 5
      %v4720 = vsel %vm1438, %v4718, %v4719
      %v4721 = vrot.slane %v4719, 4
      %v4722 = vrot.slane %v3901, 5
      %v4723 = vsel %vm1438, %v4721, %v4722
      %v4724 = vrot.slane %v4654, 5
      %v4725 = vrot.slane %v4724, 4
      %v4726 = vrot.slane %v3903, 5
      %v4727 = vsel %vm1438, %v4725, %v4726
      %v4728 = vrot.slane %v4726, 4
      %v4729 = vrot.slane %v3904, 5
      %v4730 = vsel %vm1438, %v4728, %v4729
      %v4731 = vrot.slane %v4655, 5
      %v4732 = vrot.slane %v4731, 4
      %v4733 = vrot.slane %v3906, 5
      %v4734 = vsel %vm1438, %v4732, %v4733
      %v4735 = vrot.slane %v4733, 4
      %v4736 = vrot.slane %v3907, 5
      %v4737 = vsel %vm1438, %v4735, %v4736
      %v4738 = vrot.slane %v4656, 5
      %v4739 = vrot.slane %v4738, 4
      %v4740 = vrot.slane %v3909, 5
      %v4741 = vsel %vm1438, %v4739, %v4740
      %v4742 = vrot.slane %v4740, 4
      %v4743 = vrot.slane %v3910, 5
      %v4744 = vsel %vm1438, %v4742, %v4743
      %v4745 = vrot.slane %v4657, 5
      %v4746 = vrot.slane %v4745, 4
      %v4747 = vrot.slane %v3912, 5
      %v4748 = vsel %vm1438, %v4746, %v4747
      %v4749 = vrot.slane %v4747, 4
      %v4750 = vrot.slane %v3913, 5
      %v4751 = vsel %vm1438, %v4749, %v4750
      %v4752 = vrot.slane %v4658, 5
      %v4753 = vrot.slane %v4752, 4
      %v4754 = vrot.slane %v3915, 5
      %v4755 = vsel %vm1438, %v4753, %v4754
      %v4756 = vrot.slane %v4754, 4
      %v4757 = vrot.slane %v3916, 5
      %v4758 = vsel %vm1438, %v4756, %v4757
      %v4759 = vrot.slane %v4659, 5
      %v4760 = vrot.slane %v4759, 4
      %v4761 = vrot.slane %v3918, 5
      %v4762 = vsel %vm1438, %v4760, %v4761
      %v4763 = vrot.slane %v4761, 4
      %v4764 = vrot.slane %v3919, 5
      %v4765 = vsel %vm1438, %v4763, %v4764
      %v4766 = vrot.slane %v4660, 5
      %v4767 = vrot.slane %v4766, 4
      %v4768 = vrot.slane %v3921, 5
      %v4769 = vsel %vm1438, %v4767, %v4768
      %v4770 = vrot.slane %v4768, 4
      %v4771 = vrot.slane %v3922, 5
      %v4772 = vsel %vm1438, %v4770, %v4771
      %v4773 = vrot.slane %v4661, 5
      %v4774 = vrot.slane %v4773, 4
      %v4775 = vrot.slane %v3924, 5
      %v4776 = vsel %vm1438, %v4774, %v4775
      %v4777 = vrot.slane %v4775, 4
      %v4778 = vrot.slane %v3925, 5
      %v4779 = vsel %vm1438, %v4777, %v4778
      %v4780 = vrot.slane %v4662, 5
      %v4781 = vrot.slane %v4780, 4
      %v4782 = vrot.slane %v3927, 5
      %v4783 = vsel %vm1438, %v4781, %v4782
      %v4784 = vrot.slane %v4782, 4
      %v4785 = vrot.slane %v3928, 5
      %v4786 = vsel %vm1438, %v4784, %v4785
      %v4787 = vrot.slane %v4663, 5
      %v4788 = vrot.slane %v4787, 4
      %v4789 = vrot.slane %v3930, 5
      %v4790 = vsel %vm1438, %v4788, %v4789
      %v4791 = vrot.slane %v4789, 4
      %v4792 = vrot.slane %v3931, 5
      %v4793 = vsel %vm1438, %v4791, %v4792
      %v4794 = vrot.slane %v4664, 5
      %v4795 = vrot.slane %v4794, 4
      %v4796 = vrot.slane %v3933, 5
      %v4797 = vsel %vm1438, %v4795, %v4796
      %v4798 = vrot.slane %v4796, 4
      %v4799 = vrot.slane %v3934, 5
      %v4800 = vsel %vm1438, %v4798, %v4799
      %v4801 = vrot.slane %v4665, 5
      %v4802 = vrot.slane %v4801, 4
      %v4803 = vrot.slane %v3936, 5
      %v4804 = vsel %vm1438, %v4802, %v4803
      %v4805 = vrot.slane %v4803, 4
      %v4806 = vrot.slane %v3937, 5
      %v4807 = vsel %vm1438, %v4805, %v4806
      %v4808 = vrot.slane %v4666, 5
      %v4809 = vrot.slane %v4808, 4
      %v4810 = vrot.slane %v3939, 5
      %v4811 = vsel %vm1438, %v4809, %v4810
      %v4812 = vrot.slane %v4810, 4
      %v4813 = vrot.slane %v3940, 5
      %v4814 = vsel %vm1438, %v4812, %v4813
      %v4815 = vrot.slane %v4667, 5
      %v4816 = vrot.slane %v4815, 4
      %v4817 = vrot.slane %v3942, 5
      %v4818 = vsel %vm1438, %v4816, %v4817
      %v4819 = vrot.slane %v4817, 4
      %v4820 = vrot.slane %v3943, 5
      %v4821 = vsel %vm1438, %v4819, %v4820
      %v4822 = vrot.slane %v4668, 5
      %v4823 = vrot.slane %v4822, 4
      %v4824 = vrot.slane %v3945, 5
      %v4825 = vsel %vm1438, %v4823, %v4824
      %v4826 = vrot.slane %v4824, 4
      %v4827 = vrot.slane %v3946, 5
      %v4828 = vsel %vm1438, %v4826, %v4827
      %s4829 = scalar_lea.vmem %s210, 512
      %v4830 = vld [vmem:[%s4829] sm:$0xf]
      %v4831 = vld [vmem:[%s4829 + $0x4] sm:$0xf]
      %v4832 = vld [vmem:[%s4829 + $0x8] sm:$0xf]
      %v4833 = vld [vmem:[%s4829 + $0xc] sm:$0xf]
      %v4834 = vld [vmem:[%s4829 + $0x10] sm:$0xf]
      %v4835 = vld [vmem:[%s4829 + $0x14] sm:$0xf]
      %v4836 = vld [vmem:[%s4829 + $0x18] sm:$0xf]
      %v4837 = vld [vmem:[%s4829 + $0x1c] sm:$0xf]
      %v4838 = vld [vmem:[%s4829 + $0x20] sm:$0xf]
      %v4839 = vld [vmem:[%s4829 + $0x24] sm:$0xf]
      %v4840 = vld [vmem:[%s4829 + $0x28] sm:$0xf]
      %v4841 = vld [vmem:[%s4829 + $0x2c] sm:$0xf]
      %v4842 = vld [vmem:[%s4829 + $0x30] sm:$0xf]
      %v4843 = vld [vmem:[%s4829 + $0x34] sm:$0xf]
      %v4844 = vld [vmem:[%s4829 + $0x38] sm:$0xf]
      %v4845 = vld [vmem:[%s4829 + $0x3c] sm:$0xf]
      %v4846 = vunpack.c.l.b16 %v4720
      %v4847 = vunpack.c.l.b16 %v4723
      %v4848 = vunpack.c.l.b16 %v4727
      %v4849 = vunpack.c.l.b16 %v4730
      %v4850 = vunpack.c.l.b16 %v4734
      %v4851 = vunpack.c.l.b16 %v4737
      %v4852 = vunpack.c.l.b16 %v4741
      %v4853 = vunpack.c.l.b16 %v4744
      %v4854 = vunpack.c.l.b16 %v4748
      %v4855 = vunpack.c.l.b16 %v4751
      %v4856 = vunpack.c.l.b16 %v4755
      %v4857 = vunpack.c.l.b16 %v4758
      %v4858 = vunpack.c.l.b16 %v4762
      %v4859 = vunpack.c.l.b16 %v4765
      %v4860 = vunpack.c.l.b16 %v4769
      %v4861 = vunpack.c.l.b16 %v4772
      %v4862 = vunpack.c.l.b16 %v4776
      %v4863 = vunpack.c.l.b16 %v4779
      %v4864 = vunpack.c.l.b16 %v4783
      %v4865 = vunpack.c.l.b16 %v4786
      %v4866 = vunpack.c.l.b16 %v4790
      %v4867 = vunpack.c.l.b16 %v4793
      %v4868 = vunpack.c.l.b16 %v4797
      %v4869 = vunpack.c.l.b16 %v4800
      %v4870 = vunpack.c.l.b16 %v4804
      %v4871 = vunpack.c.l.b16 %v4807
      %v4872 = vunpack.c.l.b16 %v4811
      %v4873 = vunpack.c.l.b16 %v4814
      %v4874 = vunpack.c.l.b16 %v4818
      %v4875 = vunpack.c.l.b16 %v4821
      %v4876 = vunpack.c.l.b16 %v4825
      %v4877 = vunpack.c.l.b16 %v4828
      %v4878 = vpack.c.b16 %v4847, %v4846
      %v4879 = vpack.c.b16 %v4849, %v4848
      %v4880 = vpack.c.b16 %v4851, %v4850
      %v4881 = vpack.c.b16 %v4853, %v4852
      %v4882 = vpack.c.b16 %v4855, %v4854
      %v4883 = vpack.c.b16 %v4857, %v4856
      %v4884 = vpack.c.b16 %v4859, %v4858
      %v4885 = vpack.c.b16 %v4861, %v4860
      %v4886 = vpack.c.b16 %v4863, %v4862
      %v4887 = vpack.c.b16 %v4865, %v4864
      %v4888 = vpack.c.b16 %v4867, %v4866
      %v4889 = vpack.c.b16 %v4869, %v4868
      %v4890 = vpack.c.b16 %v4871, %v4870
      %v4891 = vpack.c.b16 %v4873, %v4872
      %v4892 = vpack.c.b16 %v4875, %v4874
      %v4893 = vpack.c.b16 %v4877, %v4876
      %v4926 = vunpack.c.l.b16 %v4830
      %v4927 = vunpack.c.l.b16 %v4831
      %v4928 = vunpack.c.l.b16 %v4832
      %v4929 = vunpack.c.l.b16 %v4833
      %v4930 = vunpack.c.l.b16 %v4834
      %v4931 = vunpack.c.l.b16 %v4835
      %v4932 = vunpack.c.l.b16 %v4836
      %v4933 = vunpack.c.l.b16 %v4837
      %v4934 = vunpack.c.l.b16 %v4838
      %v4935 = vunpack.c.l.b16 %v4839
      %v4936 = vunpack.c.l.b16 %v4840
      %v4937 = vunpack.c.l.b16 %v4841
      %v4938 = vunpack.c.l.b16 %v4842
      %v4939 = vunpack.c.l.b16 %v4843
      %v4940 = vunpack.c.l.b16 %v4844
      %v4941 = vunpack.c.l.b16 %v4845
      %v4942 = vpack.c.b16 %v4927, %v4926
      %v4943 = vpack.c.b16 %v4929, %v4928
      %v4944 = vpack.c.b16 %v4931, %v4930
      %v4945 = vpack.c.b16 %v4933, %v4932
      %v4946 = vpack.c.b16 %v4935, %v4934
      %v4947 = vpack.c.b16 %v4937, %v4936
      %v4948 = vpack.c.b16 %v4939, %v4938
      %v4949 = vpack.c.b16 %v4941, %v4940
      %4958 = vmatprep.subr.bf16.mxu0 0
      %4959 = vmatpush1.bf16.msra.mxu0 %v4949
      %4960 = vmatprep.subr.bf16.mxu0 0
      %4961 = vmatpush1.bf16.msra.mxu0 %v4948
      %4962 = vmatprep.subr.bf16.mxu0 0
      %4963 = vmatpush1.bf16.msra.mxu0 %v4947
      %4964 = vmatprep.subr.bf16.mxu0 0
      %4965 = vmatpush1.bf16.msra.mxu0 %v4946
      %4966 = vmatprep.subr.bf16.mxu0 0
      %4967 = vmatpush1.bf16.msra.mxu0 %v4945
      %4968 = vmatprep.subr.bf16.mxu0 0
      %4969 = vmatpush1.bf16.msra.mxu0 %v4944
      %4970 = vmatprep.subr.bf16.mxu0 0
      %4971 = vmatpush1.bf16.msra.mxu0 %v4943
      %4972 = vmatprep.subr.bf16.mxu0 0
      %4973 = vmatpush1.bf16.msra.mxu0 %v4942
      %4974 = vmatprep.subr.bf16.mxu0 0
      %4975 = vmatpush2.bf16.msra.mxu0 0
      %4976 = vmatprep.subr.bf16.mxu0 0
      %4977 = vmatpush2.bf16.msra.mxu0 0
      %4978 = vmatprep.subr.bf16.mxu0 0
      %4979 = vmatpush2.bf16.msra.mxu0 0
      %4980 = vmatprep.subr.bf16.mxu0 0
      %4981 = vmatpush2.bf16.msra.mxu0 0
      %4982 = vmatprep.subr.bf16.mxu0 0
      %4983 = vmatpush2.bf16.msra.mxu0 0
      %4984 = vmatprep.subr.bf16.mxu0 0
      %4985 = vmatpush2.bf16.msra.mxu0 0
      %4986 = vmatprep.subr.bf16.mxu0 0
      %4987 = vmatpush2.bf16.msra.mxu0 0
      %4988 = vmatprep.subr.bf16.mxu0 0
      %4989 = vmatpush2.bf16.msra.mxu0 0
      %4990 = vmatprep.mubr.bf16.mxu0 0
      %4991 = vmatmul.mubr.bf16.gmra.mxu0 %v4878
      %v4992 = vpop.f32.mrf.mxu0
      %v4993 = vadd.f32 0.0, %v4992
      %v4994 = vpop.f32.mrf.mxu0
      %v4995 = vpop.f32.mrf.mxu0
      %v4996 = vadd.f32 0.0, %v4995
      %v4997 = vpop.f32.mrf.mxu0
      %4998 = vmatprep.mubr.bf16.mxu0 0
      %4999 = vmatmul.mubr.bf16.gmra.mxu0 %v4879
      %v5000 = vpop.f32.mrf.mxu0
      %v5001 = vadd.f32 0.0, %v5000
      %v5002 = vpop.f32.mrf.mxu0
      %v5003 = vpop.f32.mrf.mxu0
      %v5004 = vadd.f32 0.0, %v5003
      %v5005 = vpop.f32.mrf.mxu0
      %5006 = vmatprep.mubr.bf16.mxu0 0
      %5007 = vmatmul.mubr.bf16.gmra.mxu0 %v4880
      %v5008 = vpop.f32.mrf.mxu0
      %v5009 = vadd.f32 0.0, %v5008
      %v5010 = vpop.f32.mrf.mxu0
      %v5011 = vpop.f32.mrf.mxu0
      %v5012 = vadd.f32 0.0, %v5011
      %v5013 = vpop.f32.mrf.mxu0
      %5014 = vmatprep.mubr.bf16.mxu0 0
      %5015 = vmatmul.mubr.bf16.gmra.mxu0 %v4881
      %v5016 = vpop.f32.mrf.mxu0
      %v5017 = vadd.f32 0.0, %v5016
      %v5018 = vpop.f32.mrf.mxu0
      %v5019 = vpop.f32.mrf.mxu0
      %v5020 = vadd.f32 0.0, %v5019
      %v5021 = vpop.f32.mrf.mxu0
      %5022 = vmatprep.mubr.bf16.mxu0 0
      %5023 = vmatmul.mubr.bf16.gmra.mxu0 %v4882
      %v5024 = vpop.f32.mrf.mxu0
      %v5025 = vadd.f32 0.0, %v5024
      %v5026 = vpop.f32.mrf.mxu0
      %v5027 = vpop.f32.mrf.mxu0
      %v5028 = vadd.f32 0.0, %v5027
      %v5029 = vpop.f32.mrf.mxu0
      %5030 = vmatprep.mubr.bf16.mxu0 0
      %5031 = vmatmul.mubr.bf16.gmra.mxu0 %v4883
      %v5032 = vpop.f32.mrf.mxu0
      %v5033 = vadd.f32 0.0, %v5032
      %v5034 = vpop.f32.mrf.mxu0
      %v5035 = vpop.f32.mrf.mxu0
      %v5036 = vadd.f32 0.0, %v5035
      %v5037 = vpop.f32.mrf.mxu0
      %5038 = vmatprep.mubr.bf16.mxu0 0
      %5039 = vmatmul.mubr.bf16.gmra.mxu0 %v4884
      %v5040 = vpop.f32.mrf.mxu0
      %v5041 = vadd.f32 0.0, %v5040
      %v5042 = vpop.f32.mrf.mxu0
      %v5043 = vpop.f32.mrf.mxu0
      %v5044 = vadd.f32 0.0, %v5043
      %v5045 = vpop.f32.mrf.mxu0
      %5046 = vmatprep.mubr.bf16.mxu0 0
      %5047 = vmatmul.mubr.bf16.gmra.mxu0 %v4885
      %v5048 = vpop.f32.mrf.mxu0
      %v5049 = vadd.f32 0.0, %v5048
      %v5050 = vpop.f32.mrf.mxu0
      %v5051 = vpop.f32.mrf.mxu0
      %v5052 = vadd.f32 0.0, %v5051
      %v5053 = vpop.f32.mrf.mxu0
      %5054 = vmatprep.mubr.bf16.mxu0 0
      %5055 = vmatmul.mubr.bf16.gmra.mxu0 %v4886
      %v5056 = vpop.f32.mrf.mxu0
      %v5057 = vadd.f32 0.0, %v5056
      %v5058 = vpop.f32.mrf.mxu0
      %v5059 = vpop.f32.mrf.mxu0
      %v5060 = vadd.f32 0.0, %v5059
      %v5061 = vpop.f32.mrf.mxu0
      %5062 = vmatprep.mubr.bf16.mxu0 0
      %5063 = vmatmul.mubr.bf16.gmra.mxu0 %v4887
      %v5064 = vpop.f32.mrf.mxu0
      %v5065 = vadd.f32 0.0, %v5064
      %v5066 = vpop.f32.mrf.mxu0
      %v5067 = vpop.f32.mrf.mxu0
      %v5068 = vadd.f32 0.0, %v5067
      %v5069 = vpop.f32.mrf.mxu0
      %5070 = vmatprep.mubr.bf16.mxu0 0
      %5071 = vmatmul.mubr.bf16.gmra.mxu0 %v4888
      %v5072 = vpop.f32.mrf.mxu0
      %v5073 = vadd.f32 0.0, %v5072
      %v5074 = vpop.f32.mrf.mxu0
      %v5075 = vpop.f32.mrf.mxu0
      %v5076 = vadd.f32 0.0, %v5075
      %v5077 = vpop.f32.mrf.mxu0
      %5078 = vmatprep.mubr.bf16.mxu0 0
      %5079 = vmatmul.mubr.bf16.gmra.mxu0 %v4889
      %v5080 = vpop.f32.mrf.mxu0
      %v5081 = vadd.f32 0.0, %v5080
      %v5082 = vpop.f32.mrf.mxu0
      %v5083 = vpop.f32.mrf.mxu0
      %v5084 = vadd.f32 0.0, %v5083
      %v5085 = vpop.f32.mrf.mxu0
      %5086 = vmatprep.mubr.bf16.mxu0 0
      %5087 = vmatmul.mubr.bf16.gmra.mxu0 %v4890
      %v5088 = vpop.f32.mrf.mxu0
      %v5089 = vadd.f32 0.0, %v5088
      %v5090 = vpop.f32.mrf.mxu0
      %v5091 = vpop.f32.mrf.mxu0
      %v5092 = vadd.f32 0.0, %v5091
      %v5093 = vpop.f32.mrf.mxu0
      %5094 = vmatprep.mubr.bf16.mxu0 0
      %5095 = vmatmul.mubr.bf16.gmra.mxu0 %v4891
      %v5096 = vpop.f32.mrf.mxu0
      %v5097 = vadd.f32 0.0, %v5096
      %v5098 = vpop.f32.mrf.mxu0
      %v5099 = vpop.f32.mrf.mxu0
      %v5100 = vadd.f32 0.0, %v5099
      %v5101 = vpop.f32.mrf.mxu0
      %5102 = vmatprep.mubr.bf16.mxu0 0
      %5103 = vmatmul.mubr.bf16.gmra.mxu0 %v4892
      %v5104 = vpop.f32.mrf.mxu0
      %v5105 = vadd.f32 0.0, %v5104
      %v5106 = vpop.f32.mrf.mxu0
      %v5107 = vpop.f32.mrf.mxu0
      %v5108 = vadd.f32 0.0, %v5107
      %v5109 = vpop.f32.mrf.mxu0
      %5110 = vmatprep.mubr.bf16.mxu0 0
      %5111 = vmatmul.mubr.bf16.gmra.mxu0 %v4893
      %v5112 = vpop.f32.mrf.mxu0
      %v5113 = vadd.f32 0.0, %v5112
      %v5114 = vpop.f32.mrf.mxu0
      %v5115 = vpop.f32.mrf.mxu0
      %v5116 = vadd.f32 0.0, %v5115
      %v5117 = vpop.f32.mrf.mxu0
      %5118 = vdwg.mxu0
      %v5119 = vadd.f32 %v4621, %v4993
      %v5120 = vadd.f32 %v4622, %v4996
      %v5121 = vadd.f32 %v4623, %v5001
      %v5122 = vadd.f32 %v4624, %v5004
      %v5123 = vadd.f32 %v4625, %v5009
      %v5124 = vadd.f32 %v4626, %v5012
      %v5125 = vadd.f32 %v4627, %v5017
      %v5126 = vadd.f32 %v4628, %v5020
      %v5127 = vadd.f32 %v4629, %v5025
      %v5128 = vadd.f32 %v4630, %v5028
      %v5129 = vadd.f32 %v4631, %v5033
      %v5130 = vadd.f32 %v4632, %v5036
      %v5131 = vadd.f32 %v4633, %v5041
      %v5132 = vadd.f32 %v4634, %v5044
      %v5133 = vadd.f32 %v4635, %v5049
      %v5134 = vadd.f32 %v4636, %v5052
      %v5135 = vadd.f32 %v4637, %v5057
      %v5136 = vadd.f32 %v4638, %v5060
      %v5137 = vadd.f32 %v4639, %v5065
      %v5138 = vadd.f32 %v4640, %v5068
      %v5139 = vadd.f32 %v4641, %v5073
      %v5140 = vadd.f32 %v4642, %v5076
      %v5141 = vadd.f32 %v4643, %v5081
      %v5142 = vadd.f32 %v4644, %v5084
      %v5143 = vadd.f32 %v4645, %v5089
      %v5144 = vadd.f32 %v4646, %v5092
      %v5145 = vadd.f32 %v4647, %v5097
      %v5146 = vadd.f32 %v4648, %v5100
      %v5147 = vadd.f32 %v4649, %v5105
      %v5148 = vadd.f32 %v4650, %v5108
      %v5149 = vadd.f32 %v4651, %v5113
      %v5150 = vadd.f32 %v4652, %v5116
      %v5151 = vmax.f32 %v5119, 0.0
      %v5152 = vmax.f32 %v5120, 0.0
      %v5153 = vmax.f32 %v5121, 0.0
      %v5154 = vmax.f32 %v5122, 0.0
      %v5155 = vmax.f32 %v5123, 0.0
      %v5156 = vmax.f32 %v5124, 0.0
      %v5157 = vmax.f32 %v5125, 0.0
      %v5158 = vmax.f32 %v5126, 0.0
      %v5159 = vmax.f32 %v5127, 0.0
      %v5160 = vmax.f32 %v5128, 0.0
      %v5161 = vmax.f32 %v5129, 0.0
      %v5162 = vmax.f32 %v5130, 0.0
      %v5163 = vmax.f32 %v5131, 0.0
      %v5164 = vmax.f32 %v5132, 0.0
      %v5165 = vmax.f32 %v5133, 0.0
      %v5166 = vmax.f32 %v5134, 0.0
      %v5167 = vmax.f32 %v5135, 0.0
      %v5168 = vmax.f32 %v5136, 0.0
      %v5169 = vmax.f32 %v5137, 0.0
      %v5170 = vmax.f32 %v5138, 0.0
      %v5171 = vmax.f32 %v5139, 0.0
      %v5172 = vmax.f32 %v5140, 0.0
      %v5173 = vmax.f32 %v5141, 0.0
      %v5174 = vmax.f32 %v5142, 0.0
      %v5175 = vmax.f32 %v5143, 0.0
      %v5176 = vmax.f32 %v5144, 0.0
      %v5177 = vmax.f32 %v5145, 0.0
      %v5178 = vmax.f32 %v5146, 0.0
      %v5179 = vmax.f32 %v5147, 0.0
      %v5180 = vmax.f32 %v5148, 0.0
      %v5181 = vmax.f32 %v5149, 0.0
      %v5182 = vmax.f32 %v5150, 0.0
      %v5183 = vpack.c.bf16 %v5152, %v5151
      %v5184 = vpack.c.bf16 %v5154, %v5153
      %v5185 = vpack.c.bf16 %v5156, %v5155
      %v5186 = vpack.c.bf16 %v5158, %v5157
      %v5187 = vpack.c.bf16 %v5160, %v5159
      %v5188 = vpack.c.bf16 %v5162, %v5161
      %v5189 = vpack.c.bf16 %v5164, %v5163
      %v5190 = vpack.c.bf16 %v5166, %v5165
      %v5191 = vpack.c.bf16 %v5168, %v5167
      %v5192 = vpack.c.bf16 %v5170, %v5169
      %v5193 = vpack.c.bf16 %v5172, %v5171
      %v5194 = vpack.c.bf16 %v5174, %v5173
      %v5195 = vpack.c.bf16 %v5176, %v5175
      %v5196 = vpack.c.bf16 %v5178, %v5177
      %v5197 = vpack.c.bf16 %v5180, %v5179
      %v5198 = vpack.c.bf16 %v5182, %v5181
      %v5215 = vunpack.c.l.b16 %v5183
      %v5216 = vunpack.c.h.b16 %v5183
      %v5217 = vunpack.c.l.b16 %v5184
      %v5218 = vunpack.c.h.b16 %v5184
      %v5219 = vunpack.c.l.b16 %v5185
      %v5220 = vunpack.c.h.b16 %v5185
      %v5221 = vunpack.c.l.b16 %v5186
      %v5222 = vunpack.c.h.b16 %v5186
      %v5223 = vunpack.c.l.b16 %v5187
      %v5224 = vunpack.c.h.b16 %v5187
      %v5225 = vunpack.c.l.b16 %v5188
      %v5226 = vunpack.c.h.b16 %v5188
      %v5227 = vunpack.c.l.b16 %v5189
      %v5228 = vunpack.c.h.b16 %v5189
      %v5229 = vunpack.c.l.b16 %v5190
      %v5230 = vunpack.c.h.b16 %v5190
      %v5231 = vunpack.c.l.b16 %v5191
      %v5232 = vunpack.c.h.b16 %v5191
      %v5233 = vunpack.c.l.b16 %v5192
      %v5234 = vunpack.c.h.b16 %v5192
      %v5235 = vunpack.c.l.b16 %v5193
      %v5236 = vunpack.c.h.b16 %v5193
      %v5237 = vunpack.c.l.b16 %v5194
      %v5238 = vunpack.c.h.b16 %v5194
      %v5239 = vunpack.c.l.b16 %v5195
      %v5240 = vunpack.c.h.b16 %v5195
      %v5241 = vunpack.c.l.b16 %v5196
      %v5242 = vunpack.c.h.b16 %v5196
      %v5243 = vunpack.c.l.b16 %v5197
      %v5244 = vunpack.c.h.b16 %v5197
      %v5245 = vunpack.c.l.b16 %v5198
      %v5246 = vunpack.c.h.b16 %v5198
      %v5247 = vpack.c.b16 %v5215, %v5215
      %v5248 = vpack.c.b16 %v5216, %v5216
      %v5249 = vpack.c.b16 %v5217, %v5217
      %v5250 = vpack.c.b16 %v5218, %v5218
      %v5251 = vpack.c.b16 %v5219, %v5219
      %v5252 = vpack.c.b16 %v5220, %v5220
      %v5253 = vpack.c.b16 %v5221, %v5221
      %v5254 = vpack.c.b16 %v5222, %v5222
      %v5255 = vpack.c.b16 %v5223, %v5223
      %v5256 = vpack.c.b16 %v5224, %v5224
      %v5257 = vpack.c.b16 %v5225, %v5225
      %v5258 = vpack.c.b16 %v5226, %v5226
      %v5259 = vpack.c.b16 %v5227, %v5227
      %v5260 = vpack.c.b16 %v5228, %v5228
      %v5261 = vpack.c.b16 %v5229, %v5229
      %v5262 = vpack.c.b16 %v5230, %v5230
      %v5263 = vpack.c.b16 %v5231, %v5231
      %v5264 = vpack.c.b16 %v5232, %v5232
      %v5265 = vpack.c.b16 %v5233, %v5233
      %v5266 = vpack.c.b16 %v5234, %v5234
      %v5267 = vpack.c.b16 %v5235, %v5235
      %v5268 = vpack.c.b16 %v5236, %v5236
      %v5269 = vpack.c.b16 %v5237, %v5237
      %v5270 = vpack.c.b16 %v5238, %v5238
      %v5271 = vpack.c.b16 %v5239, %v5239
      %v5272 = vpack.c.b16 %v5240, %v5240
      %v5273 = vpack.c.b16 %v5241, %v5241
      %v5274 = vpack.c.b16 %v5242, %v5242
      %v5275 = vpack.c.b16 %v5243, %v5243
      %v5276 = vpack.c.b16 %v5244, %v5244
      %v5277 = vpack.c.b16 %v5245, %v5245
      %v5278 = vpack.c.b16 %v5246, %v5246
      %5311 = vst [vmem:[%s221] sm:$0xf] %v5247
      %5312 = vst [vmem:[%s221 + $0x4] sm:$0xf] %v5248
      %5313 = vst [vmem:[%s221 + $0x8] sm:$0xf] %v5249
      %5314 = vst [vmem:[%s221 + $0xc] sm:$0xf] %v5250
      %5315 = vst [vmem:[%s221 + $0x10] sm:$0xf] %v5251
      %5316 = vst [vmem:[%s221 + $0x14] sm:$0xf] %v5252
      %5317 = vst [vmem:[%s221 + $0x18] sm:$0xf] %v5253
      %5318 = vst [vmem:[%s221 + $0x1c] sm:$0xf] %v5254
      %5319 = vst [vmem:[%s221 + $0x20] sm:$0xf] %v5255
      %5320 = vst [vmem:[%s221 + $0x24] sm:$0xf] %v5256
      %5321 = vst [vmem:[%s221 + $0x28] sm:$0xf] %v5257
      %5322 = vst [vmem:[%s221 + $0x2c] sm:$0xf] %v5258
      %5323 = vst [vmem:[%s221 + $0x30] sm:$0xf] %v5259
      %5324 = vst [vmem:[%s221 + $0x34] sm:$0xf] %v5260
      %5325 = vst [vmem:[%s221 + $0x38] sm:$0xf] %v5261
      %5326 = vst [vmem:[%s221 + $0x3c] sm:$0xf] %v5262
      %5327 = vst [vmem:[%s221 + $0x40] sm:$0xf] %v5263
      %5328 = vst [vmem:[%s221 + $0x44] sm:$0xf] %v5264
      %5329 = vst [vmem:[%s221 + $0x48] sm:$0xf] %v5265
      %5330 = vst [vmem:[%s221 + $0x4c] sm:$0xf] %v5266
      %5331 = vst [vmem:[%s221 + $0x50] sm:$0xf] %v5267
      %5332 = vst [vmem:[%s221 + $0x54] sm:$0xf] %v5268
      %5333 = vst [vmem:[%s221 + $0x58] sm:$0xf] %v5269
      %5334 = vst [vmem:[%s221 + $0x5c] sm:$0xf] %v5270
      %5335 = vst [vmem:[%s221 + $0x60] sm:$0xf] %v5271
      %5336 = vst [vmem:[%s221 + $0x64] sm:$0xf] %v5272
      %5337 = vst [vmem:[%s221 + $0x68] sm:$0xf] %v5273
      %5338 = vst [vmem:[%s221 + $0x6c] sm:$0xf] %v5274
      %5339 = vst [vmem:[%s221 + $0x70] sm:$0xf] %v5275
      %5340 = vst [vmem:[%s221 + $0x74] sm:$0xf] %v5276
      %5341 = vst [vmem:[%s221 + $0x78] sm:$0xf] %v5277
      %5342 = vst [vmem:[%s221 + $0x7c] sm:$0xf] %v5278
      %p5343 = scmp.lt.s32.totalorder %s18, 1
      %s5344 = scalar_select %p5343, %s18, 1
      %p5345 = scmp.lt.s32.totalorder %s19, 0
      %s5346 = scalar_select %p5345, %s19, 0
      %s5347 = smul.addr %s5344, 32
      %s5348 = sadd.s32 %s5346, %s5347
      %s5349 = smul.addr %s5348, 4
      %s5350 = scalar_lea.vmem %s3, %s5349
      // Predicated region
      $region33: #{basic_block_apply.2} parent=31 // pred_check
        %p5351 = pneg %p124
      $region34: #{basic_block_apply.2} parent=31 // pred_check_branch
        %5353 = sbr.rel (%p5351) target = $region36
      $region35: #{basic_block_apply.2} parent=31 // pred_region
        _
      $region36: #{basic_block_apply.2} parent=31 // pred_fallthru
        _
    $region32: #{basic_block_apply.2} parent=5 // pred_fallthru
      _
    %p5354 = scmp.le.s32.totalorder 2, %s9
    // Predicated region
    $region37: #{basic_block_apply.2} parent=5 // pred_check
      %p5355 = pneg %p5354
    $region38: #{basic_block_apply.2} parent=5 // pred_check_branch
      %5357 = sbr.rel (%p5355) target = $region40
    $region39: #{basic_block_apply.2} parent=5 // pred_region
      %s5358 = ssub.s32 %s9, 2
      // Predicated region
      $region41: #{basic_block_apply.2} parent=39 // pred_check
        %p5359 = pneg %p130
      $region42: #{basic_block_apply.2} parent=39 // pred_check_branch
        %5361 = sbr.rel (%p5359) target = $region44
      $region43: #{basic_block_apply.2} parent=39 // pred_region
        %p5362 = scmp.lt.s32.totalorder %s20, 1
        %s5363 = scalar_select %p5362, %s20, 1
        %p5364 = scmp.lt.s32.totalorder %s21, 0
        %s5365 = scalar_select %p5364, %s21, 0
        %s5366 = smul.addr %s5363, 32
        %s5367 = sadd.s32 %s5365, %s5366
        %s5368 = smul.addr %s5367, 4
        %s5369 = scalar_lea.vmem %s3, %s5368
      $region44: #{basic_block_apply.2} parent=39 // pred_fallthru
        _
    $region40: #{basic_block_apply.2} parent=5 // pred_fallthru
      _
  $region6: #{basic_block_apply.2} parent=0 // loop_footer
    %s13 = sadd.s32 1, %s9
  $region7: #{basic_block_apply.2} parent=0 // loop_footer_branch
    %8 = sbr.rel target = $region3
  $region8: #{basic_block_apply.2} parent=0 // loop_exit
    _

</llo_original>
